<compile_context>
chip_gen: v5e
topology: v5e:2x2
jax: 0.10.0
libtpu: 0.0.40
codegen_flags: <defaults>
</compile_context>

<pallas_src>
import math
import numpy as np
import jax
import jax.numpy as jnp
from jax.experimental import pallas as pl
from jax.experimental.pallas import tpu as pltpu

# ----------------------------- model hyper-parameters -----------------------------
HIDDEN      = 32          # transformer.d_model
LATENT      = 32          # self.latent_dim
NUM_QUERIES = 8
STATE_DIM   = 8
QPOS_DIM    = 8
ACTION_DIM  = 8
NHEADS      = 4
HEAD_DIM    = HIDDEN // NHEADS
DFF         = 64          # feed-forward dim
BS          = 2
NUM_CAM     = 1
IMG_C, IMG_H, IMG_W = 3, 16, 16
BB_CH       = 16          # backbone num_channels
POOL        = 4           # backbone downsample factor
FEAT_H, FEAT_W = IMG_H // POOL, IMG_W // POOL
HW          = FEAT_H * FEAT_W
ACT_SEQ     = NUM_QUERIES
L_CVAE      = 2 + ACT_SEQ          # cls + qpos + action tokens
L_MEM       = 2 + HW               # latent + proprio + image tokens
HEAD_OUT    = STATE_DIM + 1        # fused action_head + is_pad_head columns

_SM_SCALE  = 1.0 / math.sqrt(HEAD_DIM)
_MXU_DTYPE = jnp.bfloat16          # MXU operand dtype (v6e/v7x native); accum stays f32.


# ============================ packed-parameter layouts ============================
def _make_layout(entries):
    """Static row layout for a row-stacked parameter slab (8-align multi-row blocks)."""
    off, table = 0, {}
    for name, rows in entries:
        if rows >= 8 and off % 8:
            off += 8 - off % 8
        table[name] = (off, rows)
        off += rows
    if off % 8:
        off += 8 - off % 8
    return table, off


_W32_ENTRIES = [
    ("cls", 1),
    ("act_w", ACTION_DIM), ("act_b", 1),
    ("joint_w", QPOS_DIM), ("joint_b", 1),
    ("lat_out_w", LATENT), ("lat_out_b", 1),
    ("img_w", IMG_C), ("img_b", 1),                 # backbone 1x1 folded with input_proj
    ("robot_w", QPOS_DIM), ("robot_b", 1),
    # CVAE-style transformer encoder layer
    ("cvae_posq", L_CVAE), ("cvae_posk", L_CVAE), ("cvae_bv", 1),
    ("cvae_wo", HIDDEN), ("cvae_bo", 1),
    ("cvae_w2", DFF), ("cvae_b2", 1),
    ("cvae_ln1g", 1), ("cvae_ln1b", 1), ("cvae_ln2g", 1), ("cvae_ln2b", 1),
    # main transformer encoder layer
    ("enc_posq", L_MEM), ("enc_posk", L_MEM), ("enc_bv", 1),
    ("enc_wo", HIDDEN), ("enc_bo", 1),
    ("enc_w2", DFF), ("enc_b2", 1),
    ("enc_ln1g", 1), ("enc_ln1b", 1), ("enc_ln2g", 1), ("enc_ln2b", 1),
    # decoder layer (self-attn sub-layer constant-folded into dec_tgt_init)
    ("dec_tgt_init", 1),
    ("dec_qeq", NUM_QUERIES), ("dec_posk", L_MEM), ("dec_bv", 1),
    ("dec_wq", HIDDEN), ("dec_wo", HIDDEN), ("dec_bo", 1),
    ("dec_w2", DFF), ("dec_b2", 1),
    ("dec_ln2g", 1), ("dec_ln2b", 1), ("dec_ln3g", 1), ("dec_ln3b", 1),
    # fused action_head / is_pad_head, zero-padded to HIDDEN columns (cols[:9] valid)
    ("head_w", HIDDEN), ("head_b", 1),
]
_W64_ENTRIES = [
    ("lat_proj_w", HIDDEN), ("lat_proj_b", 1),      # latent_proj -> [mu | logvar]
    ("cvae_w1", HIDDEN), ("cvae_b1", 1),
    ("enc_w1", HIDDEN), ("enc_b1", 1),
    ("dec_w1", HIDDEN), ("dec_b1", 1),
    ("dec_wkv", HIDDEN),                            # decoder cross-attn [Wk | Wv]
]
_W96_ENTRIES = [("cvae_wqkv", HIDDEN), ("enc_wqkv", HIDDEN)]   # fused [Wq | Wk | Wv]

_L32, W32_ROWS = _make_layout(_W32_ENTRIES)
_L64, W64_ROWS = _make_layout(_W64_ENTRIES)
_L96, W96_ROWS = _make_layout(_W96_ENTRIES)


# =============================== in-kernel helpers ================================
def _rows(ref, layout, name):
    s, n = layout[name]
    return ref[s:s + n, :]


def _mm(a, b):
    """Standard matmul, bf16 MXU operands, f32 accumulation."""
    return jnp.dot(a.astype(_MXU_DTYPE), b.astype(_MXU_DTYPE),
                   preferred_element_type=jnp.float32)


def _mm_nt(a, b):
    """Contract the last dims of both operands (A @ B^T)."""
    return jax.lax.dot_general(a.astype(_MXU_DTYPE), b.astype(_MXU_DTYPE),
                               (((1,), (1,)), ((), ())),
                               preferred_element_type=jnp.float32)


def _ln(x, g, b):
    mu = jnp.mean(x, axis=-1, keepdims=True)
    var = jnp.mean(jnp.square(x - mu), axis=-1, keepdims=True)
    return (x - mu) * jax.lax.rsqrt(var + 1e-5) * g + b


def _ffn(x, w1, b1, w2, b2):
    h = jnp.maximum(_mm(x, w1) + b1, 0.0)
    return _mm(h, w2) + b2


def _attend(q, k, v, wo, bo, key_bias=None):
    """Per-head scores/softmax on full-width q/k/v; single fused output projection."""
    ctx = []
    for h in range(NHEADS):
        sl = slice(h * HEAD_DIM, (h + 1) * HEAD_DIM)
        s = _mm_nt(q[:, sl], k[:, sl]) * _SM_SCALE
        if key_bias is not None:
            s = s + key_bias                                   # (1, Lk) key-padding bias
        s = s - jnp.max(s, axis=-1, keepdims=True)
        e = jnp.exp(s)
        p = e * pl.reciprocal(jnp.sum(e, axis=-1, keepdims=True), approx=True)
        ctx.append(_mm(p, v[:, sl]))
    return _mm(jnp.concatenate(ctx, axis=-1), wo) + bo


def _self_attn(x, wqkv, posq, posk, bv, wo, bo, key_bias=None):
    """q = k = x + pos, v = x.  pos@Wq+bq / pos@Wk+bk are host precomputed (posq/posk)."""
    qkv = _mm(x, wqkv)                                         # one fused (L,D)x(D,3D)
    q = qkv[:, :HIDDEN] + posq
    k = qkv[:, HIDDEN:2 * HIDDEN] + posk
    v = qkv[:, 2 * HIDDEN:] + bv
    return _attend(q, k, v, wo, bo, key_bias)


# ============================ per-batch fused forward =============================
def _forward_one(act, qpos, eps, kbias, img, poolT, w32, w64, w96):
    r32 = lambda n: _rows(w32, _L32, n)
    r64 = lambda n: _rows(w64, _L64, n)
    r96 = lambda n: _rows(w96, _L96, n)

    # ---------------- CVAE encoder (training branch) ----------------
    act_emb  = _mm(act,  r32("act_w"))   + r32("act_b")                  # (SEQ, D)
    qpos_emb = _mm(qpos, r32("joint_w")) + r32("joint_b")                # (1, D)
    x = jnp.concatenate([r32("cls"), qpos_emb, act_emb], axis=0)         # (L_CVAE, D)

    attn = _self_attn(x, r96("cvae_wqkv"), r32("cvae_posq"), r32("cvae_posk"),
                      r32("cvae_bv"), r32("cvae_wo"), r32("cvae_bo"), key_bias=kbias)
    x = _ln(x + attn, r32("cvae_ln1g"), r32("cvae_ln1b"))
    x = _ln(x + _ffn(x, r64("cvae_w1"), r64("cvae_b1"), r32("cvae_w2"), r32("cvae_b2")),
            r32("cvae_ln2g"), r32("cvae_ln2b"))

    cls_out = x[0:1, :]
    lat = _mm(cls_out, r64("lat_proj_w")) + r64("lat_proj_b")            # (1, 2*LATENT)
    mu = lat[:, :LATENT]
    logvar = lat[:, LATENT:]
    z = mu + jnp.exp(logvar * 0.5) * eps                                 # reparametrize
    latent_input = _mm(z, r32("lat_out_w")) + r32("lat_out_b")           # (1, D)

    # ---------------- image path + token assembly ----------------
    pooled = _mm_nt(poolT, img)                                          # 4x4 avg-pool -> (HW, C)
    src_img = _mm(pooled, r32("img_w")) + r32("img_b")                   # folded 1x1 projs (HW, D)
    prop = _mm(qpos, r32("robot_w")) + r32("robot_b")                    # (1, D)
    src = jnp.concatenate([latent_input, prop, src_img], axis=0)         # (L_MEM, D)

    # ---------------- transformer encoder layer (post-norm) ----------------
    attn = _self_attn(src, r96("enc_wqkv"), r32("enc_posq"), r32("enc_posk"),
                      r32("enc_bv"), r32("enc_wo"), r32("enc_bo"))
    src = _ln(src + attn, r32("enc_ln1g"), r32("enc_ln1b"))
    memory = _ln(src + _ffn(src, r64("enc_w1"), r64("enc_b1"), r32("enc_w2"), r32("enc_b2")),
                 r32("enc_ln2g"), r32("enc_ln2b"))

    # ---------------- transformer decoder layer ----------------
    # Self-attention sub-layer constant-folded: tgt==0 => output is LN1(b_v@Wo+bo) per row.
    tgt = jnp.broadcast_to(r32("dec_tgt_init"), (NUM_QUERIES, HIDDEN))
    q = _mm(tgt, r32("dec_wq")) + r32("dec_qeq")                         # qe@Wq+bq precomputed
    kv = _mm(memory, r64("dec_wkv"))                                     # fused [k|v] projection
    k = kv[:, :HIDDEN] + r32("dec_posk")                                 # pos@Wk+bk precomputed
    v = kv[:, HIDDEN:] + r32("dec_bv")
    a2 = _attend(q, k, v, r32("dec_wo"), r32("dec_bo"))
    tgt = _ln(tgt + a2, r32("dec_ln2g"), r32("dec_ln2b"))
    hs = _ln(tgt + _ffn(tgt, r64("dec_w1"), r64("dec_b1"), r32("dec_w2"), r32("dec_b2")),
             r32("dec_ln3g"), r32("dec_ln3b"))

    # ---------------- fused output heads ----------------
    head = _mm(hs, r32("head_w")) + r32("head_b")                        # (NQ, 32), cols[:9] valid
    a_hat = head[:, :STATE_DIM]
    pad_hat = head[:, STATE_DIM:STATE_DIM + 1]
    return a_hat, pad_hat, mu, logvar


def _make_kernel(batch_in_kernel):
    batches = range(BS) if batch_in_kernel else (0,)

    def kernel(actions_ref, qpos_ref, eps_ref, kbias_ref, img_ref,
               poolT_ref, w32_ref, w64_ref, w96_ref,
               a_hat_ref, pad_ref, mu_ref, logvar_ref):
        poolT = poolT_ref[...]
        for b in batches:                                                # static loop / grid slice
            a_hat, pad_hat, mu, logvar = _forward_one(
                actions_ref[b], qpos_ref[b], eps_ref[b], kbias_ref[b], img_ref[b],
                poolT, w32_ref, w64_ref, w96_ref)
            a_hat_ref[b] = a_hat
            pad_ref[b] = pad_hat
            mu_ref[b] = mu
            logvar_ref[b] = logvar

    return kernel


# ================================ pallas_call wrapper =============================
def _detect_batch_grid():
    # v7x has 2 TensorCores/chip: shard the batch across them with a parallel grid.
    # Single-TC generations (v5e/v6e) stay gridless (no per-step grid overhead).
    try:
        kind = jax.devices()[0].device_kind.lower()
    except Exception:
        return False
    return ("v7" in kind) or ("7x" in kind)


_USE_BATCH_GRID = _detect_batch_grid()


def _detrvae_pallas(packed, actions, qpos3, eps3, kbias3, img_flat):
    inputs = (actions, qpos3, eps3, kbias3, img_flat,
              packed["poolT"], packed["w32"], packed["w64"], packed["w96"])
    out_shape = (jax.ShapeDtypeStruct((BS, NUM_QUERIES, STATE_DIM), jnp.float32),
                 jax.ShapeDtypeStruct((BS, NUM_QUERIES, 1), jnp.float32),
                 jax.ShapeDtypeStruct((BS, 1, LATENT), jnp.float32),
                 jax.ShapeDtypeStruct((BS, 1, LATENT), jnp.float32))

    if _USE_BATCH_GRID:
        def dspec(shape):                        # per-batch data: block (1, ...) at index b
            nd = len(shape)
            return pl.BlockSpec((1,) + tuple(shape[1:]),
                                lambda b: (b,) + (0,) * (nd - 1))

        def fspec(shape):                        # full-array block (weights / pool matrix)
            nd = len(shape)
            return pl.BlockSpec(tuple(shape), lambda b: (0,) * nd)

        in_specs = ([dspec(x.shape) for x in inputs[:5]]
                    + [fspec(x.shape) for x in inputs[5:]])
        out_specs = tuple(dspec(s.shape) for s in out_shape)
        return pl.pallas_call(
            _make_kernel(batch_in_kernel=False),
            grid=(BS,),
            in_specs=in_specs,
            out_specs=out_specs,
            out_shape=out_shape,
            compiler_params=pltpu.CompilerParams(dimension_semantics=("parallel",)),
        )(*inputs)

    vm = pl.BlockSpec(memory_space=pltpu.MemorySpace.VMEM)
    return pl.pallas_call(
        _make_kernel(batch_in_kernel=True),
        in_specs=[vm] * len(inputs),
        out_specs=(vm,) * len(out_shape),
        out_shape=out_shape,
    )(*inputs)


# =============================== DETRVAE forward ==================================
def detrvae_forward(packed, qpos, image, env_state, actions, is_pad, rng):
    del env_state                                                 # unused (backbone path)
    bs = qpos.shape[0]
    qpos3 = qpos.astype(jnp.float32)[:, None, :]                  # (bs, 1, 8)
    actions = actions.astype(jnp.float32)                         # (bs, SEQ, 8)
    eps3 = jax.random.normal(rng, (bs, 1, LATENT), jnp.float32)   # reparametrize noise
    kbias3 = jnp.concatenate(
        [jnp.zeros((bs, 1, 2), jnp.float32),
         jnp.where(is_pad, -1e9, 0.0).astype(jnp.float32)[:, None, :]],
        axis=-1)                                                  # (bs, 1, L_CVAE)
    # single camera: (bs, 1, C, H, W) -> (bs, C, H*W) is a free reshape
    img_flat = image.astype(jnp.float32).reshape(bs, IMG_C, IMG_H * IMG_W)

    a_hat, is_pad_hat, mu3, lv3 = _detrvae_pallas(packed, actions, qpos3, eps3,
                                                  kbias3, img_flat)
    return a_hat, is_pad_hat, (mu3[:, 0, :], lv3[:, 0, :])


# =============================== positional tables ================================
def get_sinusoid_encoding_table(n_position, d_hid):
    table = np.array([[pos / np.power(10000, 2 * (j // 2) / d_hid) for j in range(d_hid)]
                      for pos in range(n_position)])
    table[:, 0::2] = np.sin(table[:, 0::2])
    table[:, 1::2] = np.cos(table[:, 1::2])
    return jnp.asarray(table, jnp.float32)                        # (n_pos, d_hid)


def sine_pos_flat(Hf, Wf, d):
    """DETR PositionEmbeddingSine (normalized), flattened row-major to (Hf*Wf, d)."""
    npf = d // 2
    scale = 2 * math.pi
    y = np.cumsum(np.ones((Hf, Wf), np.float32), axis=0)
    x = np.cumsum(np.ones((Hf, Wf), np.float32), axis=1)
    eps = 1e-6
    y = y / (y[-1:, :] + eps) * scale
    x = x / (x[:, -1:] + eps) * scale
    dim_t = 10000.0 ** (2 * (np.arange(npf) // 2) / npf)
    pos_x = x[:, :, None] / dim_t
    pos_y = y[:, :, None] / dim_t
    pos_x = np.stack([np.sin(pos_x[:, :, 0::2]), np.cos(pos_x[:, :, 1::2])], axis=3).reshape(Hf, Wf, npf)
    pos_y = np.stack([np.sin(pos_y[:, :, 0::2]), np.cos(pos_y[:, :, 1::2])], axis=3).reshape(Hf, Wf, npf)
    pos = np.concatenate([pos_y, pos_x], axis=2).reshape(Hf * Wf, d)
    return jnp.asarray(pos, jnp.float32)


def _pool_matrix_T():
    """(HW, H*W) matrix: 4x4 average pooling of a row-major flattened feature map."""
    P = np.zeros((HW, IMG_H * IMG_W), np.float32)
    inv = 1.0 / (POOL * POOL)
    for fy in range(FEAT_H):
        for fx in range(FEAT_W):
            p_idx = fy * FEAT_W + fx
            for dy in range(POOL):
                for dx in range(POOL):
                    P[p_idx, (fy * POOL + dy) * IMG_W + (fx * POOL + dx)] = inv
    return P


# =============================== parameter init ===================================
def _dense(key, fin, fout):
    return jax.random.normal(key, (fin, fout), jnp.float32) * 0.02


def _row(n):
    return jnp.zeros((1, n), jnp.float32)


def init_attn(key, d):
    kq, kk, kv, ko = jax.random.split(key, 4)
    return dict(wq=_dense(kq, d, d), wk=_dense(kk, d, d), wv=_dense(kv, d, d),
                wo=_dense(ko, d, d), bq=_row(d), bk=_row(d), bv=_row(d), bo=_row(d))


def init_enc_layer(key, d, dff):
    k1, k2, k3 = jax.random.split(key, 3)
    layer = init_attn(k1, d)
    layer.update(w1=_dense(k2, d, dff), b1=_row(dff),
                 w2=_dense(k3, dff, d), b2=_row(d),
                 ln1_g=jnp.ones((1, d), jnp.float32), ln1_b=_row(d),
                 ln2_g=jnp.ones((1, d), jnp.float32), ln2_b=_row(d))
    return layer


def init_dec_layer(key, d, dff):
    k1, k2, k3, k4 = jax.random.split(key, 4)
    layer = {("self_" + k): v for k, v in init_attn(k1, d).items()}
    layer.update({("cross_" + k): v for k, v in init_attn(k2, d).items()})
    layer.update(w1=_dense(k3, d, dff), b1=_row(dff),
                 w2=_dense(k4, dff, d), b2=_row(d),
                 ln1_g=jnp.ones((1, d), jnp.float32), ln1_b=_row(d),
                 ln2_g=jnp.ones((1, d), jnp.float32), ln2_b=_row(d),
                 ln3_g=jnp.ones((1, d), jnp.float32), ln3_b=_row(d))
    return layer


def init_params(key):
    ks = iter(jax.random.split(key, 20))
    p = {}
    p["action_head_w"] = _dense(next(ks), HIDDEN, STATE_DIM); p["action_head_b"] = _row(STATE_DIM)
    p["is_pad_head_w"] = _dense(next(ks), HIDDEN, 1);          p["is_pad_head_b"] = _row(1)
    p["query_embed"] = jax.random.normal(next(ks), (NUM_QUERIES, HIDDEN), jnp.float32) * 0.02
    p["input_proj_w"] = _dense(next(ks), BB_CH, HIDDEN);       p["input_proj_b"] = _row(HIDDEN)
    p["input_proj_robot_state_w"] = _dense(next(ks), QPOS_DIM, HIDDEN)
    p["input_proj_robot_state_b"] = _row(HIDDEN)
    p["cls_embed"] = jax.random.normal(next(ks), (1, HIDDEN), jnp.float32) * 0.02
    p["encoder_action_proj_w"] = _dense(next(ks), ACTION_DIM, HIDDEN)
    p["encoder_action_proj_b"] = _row(HIDDEN)
    p["encoder_joint_proj_w"] = _dense(next(ks), QPOS_DIM, HIDDEN)
    p["encoder_joint_proj_b"] = _row(HIDDEN)
    p["latent_proj_w"] = _dense(next(ks), HIDDEN, 2 * LATENT); p["latent_proj_b"] = _row(2 * LATENT)
    p["latent_out_proj_w"] = _dense(next(ks), LATENT, HIDDEN); p["latent_out_proj_b"] = _row(HIDDEN)
    p["additional_pos_embed"] = jax.random.normal(next(ks), (2, HIDDEN), jnp.float32) * 0.02
    p["pos_table"] = get_sinusoid_encoding_table(1 + 1 + NUM_QUERIES, HIDDEN)   # (L_CVAE, D)
    p["pos_img"] = sine_pos_flat(FEAT_H, FEAT_W, HIDDEN)                        # (HW, D)
    p["backbone_w"] = _dense(next(ks), IMG_C, BB_CH); p["backbone_b"] = _row(BB_CH)
    p["cvae_enc"] = init_enc_layer(next(ks), HIDDEN, DFF)
    p["enc"] = init_enc_layer(next(ks), HIDDEN, DFF)
    p["dec"] = init_dec_layer(next(ks), HIDDEN, DFF)
    return p


# ======================= host-side packing / precomputation ======================
def _ln_np(x, g, b):
    mu = x.mean(-1, keepdims=True)
    var = ((x - mu) ** 2).mean(-1, keepdims=True)
    return (x - mu) / np.sqrt(var + 1e-5) * g + b


def pack_params(p):
    """Pack all parameters into 3 row-stacked slabs + pool matrix (run once, eagerly)."""
    def A(x):
        return np.asarray(jax.device_get(x), np.float32)

    pos_cvae = A(p["pos_table"])                                                  # (L_CVAE, D)
    pos_mem = np.concatenate([A(p["additional_pos_embed"]), A(p["pos_img"])], 0)  # (L_MEM, D)
    qe = A(p["query_embed"])                                                      # (NQ, D)

    w32 = np.zeros((W32_ROWS, HIDDEN), np.float32)
    w64 = np.zeros((W64_ROWS, DFF), np.float32)
    w96 = np.zeros((W96_ROWS, 3 * HIDDEN), np.float32)

    def put(slab, layout, name, val):
        s, n = layout[name]
        v = np.asarray(jax.device_get(val), np.float32).reshape(n, -1)
        slab[s:s + n, :v.shape[1]] = v

    # embeddings & simple projections
    put(w32, _L32, "cls", p["cls_embed"])
    put(w32, _L32, "act_w", p["encoder_action_proj_w"]); put(w32, _L32, "act_b", p["encoder_action_proj_b"])
    put(w32, _L32, "joint_w", p["encoder_joint_proj_w"]); put(w32, _L32, "joint_b", p["encoder_joint_proj_b"])
    put(w32, _L32, "lat_out_w", p["latent_out_proj_w"]); put(w32, _L32, "lat_out_b", p["latent_out_proj_b"])
    img_w = A(p["backbone_w"]) @ A(p["input_proj_w"])                             # fold 1x1 projs
    img_b = A(p["backbone_b"]) @ A(p["input_proj_w"]) + A(p["input_proj_b"])
    put(w32, _L32, "img_w", img_w); put(w32, _L32, "img_b", img_b)
    put(w32, _L32, "robot_w", p["input_proj_robot_state_w"])
    put(w32, _L32, "robot_b", p["input_proj_robot_state_b"])

    put(w64, _L64, "lat_proj_w", p["latent_proj_w"]); put(w64, _L64, "lat_proj_b", p["latent_proj_b"])

    def pack_enc(prefix, a, pos):
        put(w96, _L96, prefix + "_wqkv", np.concatenate([A(a["wq"]), A(a["wk"]), A(a["wv"])], 1))
        put(w32, _L32, prefix + "_posq", pos @ A(a["wq"]) + A(a["bq"]))
        put(w32, _L32, prefix + "_posk", pos @ A(a["wk"]) + A(a["bk"]))
        put(w32, _L32, prefix + "_bv", a["bv"])
        put(w32, _L32, prefix + "_wo", a["wo"]); put(w32, _L32, prefix + "_bo", a["bo"])
        put(w64, _L64, prefix + "_w1", a["w1"]); put(w64, _L64, prefix + "_b1", a["b1"])
        put(w32, _L32, prefix + "_w2", a["w2"]); put(w32, _L32, prefix + "_b2", a["b2"])
        put(w32, _L32, prefix + "_ln1g", a["ln1_g"]); put(w32, _L32, prefix + "_ln1b", a["ln1_b"])
        put(w32, _L32, prefix + "_ln2g", a["ln2_g"]); put(w32, _L32, prefix + "_ln2b", a["ln2_b"])

    pack_enc("cvae", p["cvae_enc"], pos_cvae)
    pack_enc("enc", p["enc"], pos_mem)

    d = p["dec"]
    # decoder self-attention constant fold (valid because tgt starts at zeros every forward)
    self_out = A(d["self_bv"]) @ A(d["self_wo"]) + A(d["self_bo"])
    put(w32, _L32, "dec_tgt_init", _ln_np(self_out, A(d["ln1_g"]), A(d["ln1_b"])))
    put(w32, _L32, "dec_qeq", qe @ A(d["cross_wq"]) + A(d["cross_bq"]))
    put(w32, _L32, "dec_posk", pos_mem @ A(d["cross_wk"]) + A(d["cross_bk"]))
    put(w32, _L32, "dec_bv", d["cross_bv"])
    put(w32, _L32, "dec_wq", d["cross_wq"])
    put(w64, _L64, "dec_wkv", np.concatenate([A(d["cross_wk"]), A(d["cross_wv"])], 1))
    put(w32, _L32, "dec_wo", d["cross_wo"]); put(w32, _L32, "dec_bo", d["cross_bo"])
    put(w64, _L64, "dec_w1", d["w1"]); put(w64, _L64, "dec_b1", d["b1"])
    put(w32, _L32, "dec_w2", d["w2"]); put(w32, _L32, "dec_b2", d["b2"])
    put(w32, _L32, "dec_ln2g", d["ln2_g"]); put(w32, _L32, "dec_ln2b", d["ln2_b"])
    put(w32, _L32, "dec_ln3g", d["ln3_g"]); put(w32, _L32, "dec_ln3b", d["ln3_b"])

    # fused output heads
    head_w = np.concatenate([A(p["action_head_w"]), A(p["is_pad_head_w"])], 1)    # (D, 9)
    head_b = np.concatenate([A(p["action_head_b"]), A(p["is_pad_head_b"])], 1)    # (1, 9)
    put(w32, _L32, "head_w", head_w); put(w32, _L32, "head_b", head_b)

    return dict(w32=jnp.asarray(w32), w64=jnp.asarray(w64), w96=jnp.asarray(w96),
                poolT=jnp.asarray(_pool_matrix_T()))


# =============================== main ============================================
if __name__ == "__main__":
    root = jax.random.PRNGKey(0)
    kp, kq, ki, ka, ke = jax.random.split(root, 5)
    params = init_params(kp)
    packed = pack_params(params)

    qpos = jax.random.normal(kq, (BS, QPOS_DIM), jnp.float32)
    image = jax.random.normal(ki, (BS, NUM_CAM, IMG_C, IMG_H, IMG_W), jnp.float32)
    actions = jax.random.normal(ka, (BS, ACT_SEQ, ACTION_DIM), jnp.float32)
    is_pad = jnp.broadcast_to(jnp.arange(ACT_SEQ)[None, :] >= (ACT_SEQ - 2), (BS, ACT_SEQ))

    fwd = jax.jit(detrvae_forward)
    a_hat, is_pad_hat, (mu, logvar) = fwd(packed, qpos, image, None, actions, is_pad, ke)
    jax.block_until_ready((a_hat, is_pad_hat, mu, logvar))

    assert a_hat.shape == (BS, NUM_QUERIES, STATE_DIM)
    assert is_pad_hat.shape == (BS, NUM_QUERIES, 1)
    assert mu.shape == (BS, LATENT) and logvar.shape == (BS, LATENT)
    print("KERNEL_OK")
</pallas_src>

<mosaic_0001>
module attributes {stable_mosaic.version = 11 : i64} {
  func.func @kernel(%arg0: memref<2x8x8xf32, #tpu.memory_space<vmem>>, %arg1: memref<2x1x8xf32, #tpu.memory_space<vmem>>, %arg2: memref<2x1x32xf32, #tpu.memory_space<vmem>>, %arg3: memref<2x1x10xf32, #tpu.memory_space<vmem>>, %arg4: memref<2x3x256xf32, #tpu.memory_space<vmem>>, %arg5: memref<16x256xf32, #tpu.memory_space<vmem>>, %arg6: memref<616x32xf32, #tpu.memory_space<vmem>>, %arg7: memref<192x64xf32, #tpu.memory_space<vmem>>, %arg8: memref<64x96xf32, #tpu.memory_space<vmem>>, %arg9: memref<2x8x8xf32, #tpu.memory_space<vmem>>, %arg10: memref<2x8x1xf32, #tpu.memory_space<vmem>>, %arg11: memref<2x1x32xf32, #tpu.memory_space<vmem>>, %arg12: memref<2x1x32xf32, #tpu.memory_space<vmem>>) attributes {dimension_semantics = [], scalar_prefetch = 0 : i64, scratch_operands = 0 : i64, tpu.core_type = #tpu.core_type<tc>} {
    %c0 = arith.constant 0 : index
    %c0_0 = arith.constant 0 : index
    %0 = vector.load %arg5[%c0, %c0_0] : memref<16x256xf32, #tpu.memory_space<vmem>>, vector<16x256xf32>
    %c0_1 = arith.constant 0 : index
    %c0_2 = arith.constant 0 : index
    %c0_3 = arith.constant 0 : index
    %1 = vector.load %arg0[%c0_1, %c0_2, %c0_3] : memref<2x8x8xf32, #tpu.memory_space<vmem>>, vector<1x8x8xf32>
    %2 = vector.shape_cast %1 : vector<1x8x8xf32> to vector<8x8xf32>
    %c0_4 = arith.constant 0 : index
    %c0_5 = arith.constant 0 : index
    %c0_6 = arith.constant 0 : index
    %3 = vector.load %arg1[%c0_4, %c0_5, %c0_6] : memref<2x1x8xf32, #tpu.memory_space<vmem>>, vector<1x1x8xf32>
    %4 = vector.shape_cast %3 : vector<1x1x8xf32> to vector<1x8xf32>
    %c0_7 = arith.constant 0 : index
    %c0_8 = arith.constant 0 : index
    %c0_9 = arith.constant 0 : index
    %5 = vector.load %arg2[%c0_7, %c0_8, %c0_9] : memref<2x1x32xf32, #tpu.memory_space<vmem>>, vector<1x1x32xf32>
    %6 = vector.shape_cast %5 : vector<1x1x32xf32> to vector<1x32xf32>
    %c0_10 = arith.constant 0 : index
    %c0_11 = arith.constant 0 : index
    %c0_12 = arith.constant 0 : index
    %7 = vector.load %arg3[%c0_10, %c0_11, %c0_12] : memref<2x1x10xf32, #tpu.memory_space<vmem>>, vector<1x1x10xf32>
    %8 = vector.shape_cast %7 : vector<1x1x10xf32> to vector<1x10xf32>
    %c0_13 = arith.constant 0 : index
    %c0_14 = arith.constant 0 : index
    %c0_15 = arith.constant 0 : index
    %9 = vector.load %arg4[%c0_13, %c0_14, %c0_15] : memref<2x3x256xf32, #tpu.memory_space<vmem>>, vector<1x3x256xf32>
    %10 = vector.shape_cast %9 : vector<1x3x256xf32> to vector<3x256xf32>
    %c8 = arith.constant 8 : index
    %c0_16 = arith.constant 0 : index
    %11 = vector.load %arg6[%c8, %c0_16] : memref<616x32xf32, #tpu.memory_space<vmem>>, vector<8x32xf32>
    %12 = arith.truncf %2 : vector<8x8xf32> to vector<8x8xbf16>
    %13 = arith.truncf %11 : vector<8x32xf32> to vector<8x32xbf16>
    %cst = arith.constant dense<0.000000e+00> : vector<8x32xf32>
    %14 = tpu.matmul %12, %13, %cst {dimension_numbers = #tpu.dot_dimension_numbers<[1], [0], [0], [1], [0, 0, 1, 1], [], []>} : vector<8x8xbf16>, vector<8x32xbf16>, vector<8x32xf32> -> vector<8x32xf32>
    %c16 = arith.constant 16 : index
    %c0_17 = arith.constant 0 : index
    %15 = vector.load %arg6[%c16, %c0_17] : memref<616x32xf32, #tpu.memory_space<vmem>>, vector<1x32xf32>
    %16 = vector.broadcast %15 : vector<1x32xf32> to vector<8x32xf32>
    %17 = arith.addf %14, %16 : vector<8x32xf32>
    %c24 = arith.constant 24 : index
    %c0_18 = arith.constant 0 : index
    %18 = vector.load %arg6[%c24, %c0_18] : memref<616x32xf32, #tpu.memory_space<vmem>>, vector<8x32xf32>
    %19 = arith.truncf %4 : vector<1x8xf32> to vector<1x8xbf16>
    %20 = arith.truncf %18 : vector<8x32xf32> to vector<8x32xbf16>
    %cst_19 = arith.constant dense<0.000000e+00> : vector<1x32xf32>
    %21 = tpu.matmul %19, %20, %cst_19 {dimension_numbers = #tpu.dot_dimension_numbers<[1], [0], [0], [1], [0, 0, 1, 1], [], []>} : vector<1x8xbf16>, vector<8x32xbf16>, vector<1x32xf32> -> vector<1x32xf32>
    %c32 = arith.constant 32 : index
    %c0_20 = arith.constant 0 : index
    %22 = vector.load %arg6[%c32, %c0_20] : memref<616x32xf32, #tpu.memory_space<vmem>>, vector<1x32xf32>
    %23 = arith.addf %21, %22 : vector<1x32xf32>
    %c0_21 = arith.constant 0 : index
    %c0_22 = arith.constant 0 : index
    %24 = vector.load %arg6[%c0_21, %c0_22] : memref<616x32xf32, #tpu.memory_space<vmem>>, vector<1x32xf32>
    %25 = tpu.concatenate %24, %23, %17 in 0 : vector<1x32xf32>, vector<1x32xf32>, vector<8x32xf32> -> vector<10x32xf32>
    %c0_23 = arith.constant 0 : index
    %c0_24 = arith.constant 0 : index
    %26 = vector.load %arg8[%c0_23, %c0_24] : memref<64x96xf32, #tpu.memory_space<vmem>>, vector<32x96xf32>
    %c96 = arith.constant 96 : index
    %c0_25 = arith.constant 0 : index
    %27 = vector.load %arg6[%c96, %c0_25] : memref<616x32xf32, #tpu.memory_space<vmem>>, vector<10x32xf32>
    %c112 = arith.constant 112 : index
    %c0_26 = arith.constant 0 : index
    %28 = vector.load %arg6[%c112, %c0_26] : memref<616x32xf32, #tpu.memory_space<vmem>>, vector<10x32xf32>
    %c122 = arith.constant 122 : index
    %c0_27 = arith.constant 0 : index
    %29 = vector.load %arg6[%c122, %c0_27] : memref<616x32xf32, #tpu.memory_space<vmem>>, vector<1x32xf32>
    %c128 = arith.constant 128 : index
    %c0_28 = arith.constant 0 : index
    %30 = vector.load %arg6[%c128, %c0_28] : memref<616x32xf32, #tpu.memory_space<vmem>>, vector<32x32xf32>
    %c160 = arith.constant 160 : index
    %c0_29 = arith.constant 0 : index
    %31 = vector.load %arg6[%c160, %c0_29] : memref<616x32xf32, #tpu.memory_space<vmem>>, vector<1x32xf32>
    %32 = arith.truncf %25 : vector<10x32xf32> to vector<10x32xbf16>
    %33 = arith.truncf %26 : vector<32x96xf32> to vector<32x96xbf16>
    %cst_30 = arith.constant dense<0.000000e+00> : vector<10x96xf32>
    %34 = tpu.matmul %32, %33, %cst_30 {dimension_numbers = #tpu.dot_dimension_numbers<[1], [0], [0], [1], [0, 0, 1, 1], [], []>} : vector<10x32xbf16>, vector<32x96xbf16>, vector<10x96xf32> -> vector<10x96xf32>
    %35 = vector.extract_strided_slice %34 {offsets = [0, 0], sizes = [10, 32], strides = [1, 1]} : vector<10x96xf32> to vector<10x32xf32>
    %36 = arith.addf %35, %27 : vector<10x32xf32>
    %37 = vector.extract_strided_slice %34 {offsets = [0, 32], sizes = [10, 32], strides = [1, 1]} : vector<10x96xf32> to vector<10x32xf32>
    %38 = arith.addf %37, %28 : vector<10x32xf32>
    %39 = vector.extract_strided_slice %34 {offsets = [0, 64], sizes = [10, 32], strides = [1, 1]} : vector<10x96xf32> to vector<10x32xf32>
    %40 = vector.broadcast %29 : vector<1x32xf32> to vector<10x32xf32>
    %41 = arith.addf %39, %40 : vector<10x32xf32>
    %42 = vector.extract_strided_slice %36 {offsets = [0, 0], sizes = [10, 8], strides = [1, 1]} : vector<10x32xf32> to vector<10x8xf32>
    %43 = vector.extract_strided_slice %38 {offsets = [0, 0], sizes = [10, 8], strides = [1, 1]} : vector<10x32xf32> to vector<10x8xf32>
    %44 = arith.truncf %42 : vector<10x8xf32> to vector<10x8xbf16>
    %45 = arith.truncf %43 : vector<10x8xf32> to vector<10x8xbf16>
    %cst_31 = arith.constant dense<0.000000e+00> : vector<10x10xf32>
    %46 = tpu.matmul %44, %45, %cst_31 {dimension_numbers = #tpu.dot_dimension_numbers<[1], [1], [0], [0], [0, 0, 1, 0], [], []>} : vector<10x8xbf16>, vector<10x8xbf16>, vector<10x10xf32> -> vector<10x10xf32>
    %cst_32 = arith.constant 0.353553385 : f32
    %47 = vector.broadcast %cst_32 : f32 to vector<10x10xf32>
    %48 = arith.mulf %46, %47 : vector<10x10xf32>
    %49 = vector.broadcast %8 : vector<1x10xf32> to vector<10x10xf32>
    %50 = arith.addf %48, %49 : vector<10x10xf32>
    %cst_33 = arith.constant dense<0xFF800000> : vector<10xf32>
    %51 = vector.multi_reduction <maximumf>, %50, %cst_33 [1] : vector<10x10xf32> to vector<10xf32>
    %52 = vector.shape_cast %51 : vector<10xf32> to vector<10x1xf32>
    %53 = vector.broadcast %52 : vector<10x1xf32> to vector<10x10xf32>
    %54 = arith.subf %50, %53 : vector<10x10xf32>
    %55 = math.exp %54 : vector<10x10xf32>
    %cst_34 = arith.constant dense<0.000000e+00> : vector<10xf32>
    %56 = vector.multi_reduction <add>, %55, %cst_34 [1] : vector<10x10xf32> to vector<10xf32>
    %57 = vector.shape_cast %56 : vector<10xf32> to vector<10x1xf32>
    %58 = tpu.reciprocal %57 {approx = true} : vector<10x1xf32> -> vector<10x1xf32>
    %59 = vector.broadcast %58 : vector<10x1xf32> to vector<10x10xf32>
    %60 = arith.mulf %55, %59 : vector<10x10xf32>
    %61 = vector.extract_strided_slice %41 {offsets = [0, 0], sizes = [10, 8], strides = [1, 1]} : vector<10x32xf32> to vector<10x8xf32>
    %62 = arith.truncf %60 : vector<10x10xf32> to vector<10x10xbf16>
    %63 = arith.truncf %61 : vector<10x8xf32> to vector<10x8xbf16>
    %cst_35 = arith.constant dense<0.000000e+00> : vector<10x8xf32>
    %64 = tpu.matmul %62, %63, %cst_35 {dimension_numbers = #tpu.dot_dimension_numbers<[1], [0], [0], [1], [0, 0, 1, 1], [], []>} : vector<10x10xbf16>, vector<10x8xbf16>, vector<10x8xf32> -> vector<10x8xf32>
    %65 = vector.extract_strided_slice %36 {offsets = [0, 8], sizes = [10, 8], strides = [1, 1]} : vector<10x32xf32> to vector<10x8xf32>
    %66 = vector.extract_strided_slice %38 {offsets = [0, 8], sizes = [10, 8], strides = [1, 1]} : vector<10x32xf32> to vector<10x8xf32>
    %67 = arith.truncf %65 : vector<10x8xf32> to vector<10x8xbf16>
    %68 = arith.truncf %66 : vector<10x8xf32> to vector<10x8xbf16>
    %cst_36 = arith.constant dense<0.000000e+00> : vector<10x10xf32>
    %69 = tpu.matmul %67, %68, %cst_36 {dimension_numbers = #tpu.dot_dimension_numbers<[1], [1], [0], [0], [0, 0, 1, 0], [], []>} : vector<10x8xbf16>, vector<10x8xbf16>, vector<10x10xf32> -> vector<10x10xf32>
    %cst_37 = arith.constant 0.353553385 : f32
    %70 = vector.broadcast %cst_37 : f32 to vector<10x10xf32>
    %71 = arith.mulf %69, %70 : vector<10x10xf32>
    %72 = vector.broadcast %8 : vector<1x10xf32> to vector<10x10xf32>
    %73 = arith.addf %71, %72 : vector<10x10xf32>
    %cst_38 = arith.constant dense<0xFF800000> : vector<10xf32>
    %74 = vector.multi_reduction <maximumf>, %73, %cst_38 [1] : vector<10x10xf32> to vector<10xf32>
    %75 = vector.shape_cast %74 : vector<10xf32> to vector<10x1xf32>
    %76 = vector.broadcast %75 : vector<10x1xf32> to vector<10x10xf32>
    %77 = arith.subf %73, %76 : vector<10x10xf32>
    %78 = math.exp %77 : vector<10x10xf32>
    %cst_39 = arith.constant dense<0.000000e+00> : vector<10xf32>
    %79 = vector.multi_reduction <add>, %78, %cst_39 [1] : vector<10x10xf32> to vector<10xf32>
    %80 = vector.shape_cast %79 : vector<10xf32> to vector<10x1xf32>
    %81 = tpu.reciprocal %80 {approx = true} : vector<10x1xf32> -> vector<10x1xf32>
    %82 = vector.broadcast %81 : vector<10x1xf32> to vector<10x10xf32>
    %83 = arith.mulf %78, %82 : vector<10x10xf32>
    %84 = vector.extract_strided_slice %41 {offsets = [0, 8], sizes = [10, 8], strides = [1, 1]} : vector<10x32xf32> to vector<10x8xf32>
    %85 = arith.truncf %83 : vector<10x10xf32> to vector<10x10xbf16>
    %86 = arith.truncf %84 : vector<10x8xf32> to vector<10x8xbf16>
    %cst_40 = arith.constant dense<0.000000e+00> : vector<10x8xf32>
    %87 = tpu.matmul %85, %86, %cst_40 {dimension_numbers = #tpu.dot_dimension_numbers<[1], [0], [0], [1], [0, 0, 1, 1], [], []>} : vector<10x10xbf16>, vector<10x8xbf16>, vector<10x8xf32> -> vector<10x8xf32>
    %88 = vector.extract_strided_slice %36 {offsets = [0, 16], sizes = [10, 8], strides = [1, 1]} : vector<10x32xf32> to vector<10x8xf32>
    %89 = vector.extract_strided_slice %38 {offsets = [0, 16], sizes = [10, 8], strides = [1, 1]} : vector<10x32xf32> to vector<10x8xf32>
    %90 = arith.truncf %88 : vector<10x8xf32> to vector<10x8xbf16>
    %91 = arith.truncf %89 : vector<10x8xf32> to vector<10x8xbf16>
    %cst_41 = arith.constant dense<0.000000e+00> : vector<10x10xf32>
    %92 = tpu.matmul %90, %91, %cst_41 {dimension_numbers = #tpu.dot_dimension_numbers<[1], [1], [0], [0], [0, 0, 1, 0], [], []>} : vector<10x8xbf16>, vector<10x8xbf16>, vector<10x10xf32> -> vector<10x10xf32>
    %cst_42 = arith.constant 0.353553385 : f32
    %93 = vector.broadcast %cst_42 : f32 to vector<10x10xf32>
    %94 = arith.mulf %92, %93 : vector<10x10xf32>
    %95 = vector.broadcast %8 : vector<1x10xf32> to vector<10x10xf32>
    %96 = arith.addf %94, %95 : vector<10x10xf32>
    %cst_43 = arith.constant dense<0xFF800000> : vector<10xf32>
    %97 = vector.multi_reduction <maximumf>, %96, %cst_43 [1] : vector<10x10xf32> to vector<10xf32>
    %98 = vector.shape_cast %97 : vector<10xf32> to vector<10x1xf32>
    %99 = vector.broadcast %98 : vector<10x1xf32> to vector<10x10xf32>
    %100 = arith.subf %96, %99 : vector<10x10xf32>
    %101 = math.exp %100 : vector<10x10xf32>
    %cst_44 = arith.constant dense<0.000000e+00> : vector<10xf32>
    %102 = vector.multi_reduction <add>, %101, %cst_44 [1] : vector<10x10xf32> to vector<10xf32>
    %103 = vector.shape_cast %102 : vector<10xf32> to vector<10x1xf32>
    %104 = tpu.reciprocal %103 {approx = true} : vector<10x1xf32> -> vector<10x1xf32>
    %105 = vector.broadcast %104 : vector<10x1xf32> to vector<10x10xf32>
    %106 = arith.mulf %101, %105 : vector<10x10xf32>
    %107 = vector.extract_strided_slice %41 {offsets = [0, 16], sizes = [10, 8], strides = [1, 1]} : vector<10x32xf32> to vector<10x8xf32>
    %108 = arith.truncf %106 : vector<10x10xf32> to vector<10x10xbf16>
    %109 = arith.truncf %107 : vector<10x8xf32> to vector<10x8xbf16>
    %cst_45 = arith.constant dense<0.000000e+00> : vector<10x8xf32>
    %110 = tpu.matmul %108, %109, %cst_45 {dimension_numbers = #tpu.dot_dimension_numbers<[1], [0], [0], [1], [0, 0, 1, 1], [], []>} : vector<10x10xbf16>, vector<10x8xbf16>, vector<10x8xf32> -> vector<10x8xf32>
    %111 = vector.extract_strided_slice %36 {offsets = [0, 24], sizes = [10, 8], strides = [1, 1]} : vector<10x32xf32> to vector<10x8xf32>
    %112 = vector.extract_strided_slice %38 {offsets = [0, 24], sizes = [10, 8], strides = [1, 1]} : vector<10x32xf32> to vector<10x8xf32>
    %113 = arith.truncf %111 : vector<10x8xf32> to vector<10x8xbf16>
    %114 = arith.truncf %112 : vector<10x8xf32> to vector<10x8xbf16>
    %cst_46 = arith.constant dense<0.000000e+00> : vector<10x10xf32>
    %115 = tpu.matmul %113, %114, %cst_46 {dimension_numbers = #tpu.dot_dimension_numbers<[1], [1], [0], [0], [0, 0, 1, 0], [], []>} : vector<10x8xbf16>, vector<10x8xbf16>, vector<10x10xf32> -> vector<10x10xf32>
    %cst_47 = arith.constant 0.353553385 : f32
    %116 = vector.broadcast %cst_47 : f32 to vector<10x10xf32>
    %117 = arith.mulf %115, %116 : vector<10x10xf32>
    %118 = vector.broadcast %8 : vector<1x10xf32> to vector<10x10xf32>
    %119 = arith.addf %117, %118 : vector<10x10xf32>
    %cst_48 = arith.constant dense<0xFF800000> : vector<10xf32>
    %120 = vector.multi_reduction <maximumf>, %119, %cst_48 [1] : vector<10x10xf32> to vector<10xf32>
    %121 = vector.shape_cast %120 : vector<10xf32> to vector<10x1xf32>
    %122 = vector.broadcast %121 : vector<10x1xf32> to vector<10x10xf32>
    %123 = arith.subf %119, %122 : vector<10x10xf32>
    %124 = math.exp %123 : vector<10x10xf32>
    %cst_49 = arith.constant dense<0.000000e+00> : vector<10xf32>
    %125 = vector.multi_reduction <add>, %124, %cst_49 [1] : vector<10x10xf32> to vector<10xf32>
    %126 = vector.shape_cast %125 : vector<10xf32> to vector<10x1xf32>
    %127 = tpu.reciprocal %126 {approx = true} : vector<10x1xf32> -> vector<10x1xf32>
    %128 = vector.broadcast %127 : vector<10x1xf32> to vector<10x10xf32>
    %129 = arith.mulf %124, %128 : vector<10x10xf32>
    %130 = vector.extract_strided_slice %41 {offsets = [0, 24], sizes = [10, 8], strides = [1, 1]} : vector<10x32xf32> to vector<10x8xf32>
    %131 = arith.truncf %129 : vector<10x10xf32> to vector<10x10xbf16>
    %132 = arith.truncf %130 : vector<10x8xf32> to vector<10x8xbf16>
    %cst_50 = arith.constant dense<0.000000e+00> : vector<10x8xf32>
    %133 = tpu.matmul %131, %132, %cst_50 {dimension_numbers = #tpu.dot_dimension_numbers<[1], [0], [0], [1], [0, 0, 1, 1], [], []>} : vector<10x10xbf16>, vector<10x8xbf16>, vector<10x8xf32> -> vector<10x8xf32>
    %134 = tpu.concatenate %64, %87, %110, %133 in 1 : vector<10x8xf32>, vector<10x8xf32>, vector<10x8xf32>, vector<10x8xf32> -> vector<10x32xf32>
    %135 = arith.truncf %134 : vector<10x32xf32> to vector<10x32xbf16>
    %136 = arith.truncf %30 : vector<32x32xf32> to vector<32x32xbf16>
    %cst_51 = arith.constant dense<0.000000e+00> : vector<10x32xf32>
    %137 = tpu.matmul %135, %136, %cst_51 {dimension_numbers = #tpu.dot_dimension_numbers<[1], [0], [0], [1], [0, 0, 1, 1], [], []>} : vector<10x32xbf16>, vector<32x32xbf16>, vector<10x32xf32> -> vector<10x32xf32>
    %138 = vector.broadcast %31 : vector<1x32xf32> to vector<10x32xf32>
    %139 = arith.addf %137, %138 : vector<10x32xf32>
    %140 = arith.addf %25, %139 : vector<10x32xf32>
    %c233 = arith.constant 233 : index
    %c0_52 = arith.constant 0 : index
    %141 = vector.load %arg6[%c233, %c0_52] : memref<616x32xf32, #tpu.memory_space<vmem>>, vector<1x32xf32>
    %c234 = arith.constant 234 : index
    %c0_53 = arith.constant 0 : index
    %142 = vector.load %arg6[%c234, %c0_53] : memref<616x32xf32, #tpu.memory_space<vmem>>, vector<1x32xf32>
    %cst_54 = arith.constant dense<0.000000e+00> : vector<10xf32>
    %143 = vector.multi_reduction <add>, %140, %cst_54 [1] : vector<10x32xf32> to vector<10xf32>
    %144 = vector.shape_cast %143 : vector<10xf32> to vector<10x1xf32>
    %cst_55 = arith.constant 3.200000e+01 : f32
    %145 = vector.broadcast %cst_55 : f32 to vector<10x1xf32>
    %146 = arith.divf %144, %145 : vector<10x1xf32>
    %147 = vector.broadcast %146 : vector<10x1xf32> to vector<10x32xf32>
    %148 = arith.subf %140, %147 : vector<10x32xf32>
    %149 = arith.mulf %148, %148 : vector<10x32xf32>
    %cst_56 = arith.constant dense<0.000000e+00> : vector<10xf32>
    %150 = vector.multi_reduction <add>, %149, %cst_56 [1] : vector<10x32xf32> to vector<10xf32>
    %151 = vector.shape_cast %150 : vector<10xf32> to vector<10x1xf32>
    %cst_57 = arith.constant 3.200000e+01 : f32
    %152 = vector.broadcast %cst_57 : f32 to vector<10x1xf32>
    %153 = arith.divf %151, %152 : vector<10x1xf32>
    %154 = vector.broadcast %146 : vector<10x1xf32> to vector<10x32xf32>
    %155 = arith.subf %140, %154 : vector<10x32xf32>
    %cst_58 = arith.constant 9.99999974E-6 : f32
    %156 = vector.broadcast %cst_58 : f32 to vector<10x1xf32>
    %157 = arith.addf %153, %156 : vector<10x1xf32>
    %158 = math.rsqrt %157 : vector<10x1xf32>
    %159 = vector.broadcast %158 : vector<10x1xf32> to vector<10x32xf32>
    %160 = arith.mulf %155, %159 : vector<10x32xf32>
    %161 = vector.broadcast %141 : vector<1x32xf32> to vector<10x32xf32>
    %162 = arith.mulf %160, %161 : vector<10x32xf32>
    %163 = vector.broadcast %142 : vector<1x32xf32> to vector<10x32xf32>
    %164 = arith.addf %162, %163 : vector<10x32xf32>
    %c40 = arith.constant 40 : index
    %c0_59 = arith.constant 0 : index
    %165 = vector.load %arg7[%c40, %c0_59] : memref<192x64xf32, #tpu.memory_space<vmem>>, vector<32x64xf32>
    %c72 = arith.constant 72 : index
    %c0_60 = arith.constant 0 : index
    %166 = vector.load %arg7[%c72, %c0_60] : memref<192x64xf32, #tpu.memory_space<vmem>>, vector<1x64xf32>
    %c168 = arith.constant 168 : index
    %c0_61 = arith.constant 0 : index
    %167 = vector.load %arg6[%c168, %c0_61] : memref<616x32xf32, #tpu.memory_space<vmem>>, vector<64x32xf32>
    %c232 = arith.constant 232 : index
    %c0_62 = arith.constant 0 : index
    %168 = vector.load %arg6[%c232, %c0_62] : memref<616x32xf32, #tpu.memory_space<vmem>>, vector<1x32xf32>
    %169 = arith.truncf %164 : vector<10x32xf32> to vector<10x32xbf16>
    %170 = arith.truncf %165 : vector<32x64xf32> to vector<32x64xbf16>
    %cst_63 = arith.constant dense<0.000000e+00> : vector<10x64xf32>
    %171 = tpu.matmul %169, %170, %cst_63 {dimension_numbers = #tpu.dot_dimension_numbers<[1], [0], [0], [1], [0, 0, 1, 1], [], []>} : vector<10x32xbf16>, vector<32x64xbf16>, vector<10x64xf32> -> vector<10x64xf32>
    %172 = vector.broadcast %166 : vector<1x64xf32> to vector<10x64xf32>
    %173 = arith.addf %171, %172 : vector<10x64xf32>
    %cst_64 = arith.constant 0.000000e+00 : f32
    %174 = vector.broadcast %cst_64 : f32 to vector<10x64xf32>
    %175 = arith.maximumf %173, %174 : vector<10x64xf32>
    %176 = arith.truncf %175 : vector<10x64xf32> to vector<10x64xbf16>
    %177 = arith.truncf %167 : vector<64x32xf32> to vector<64x32xbf16>
    %cst_65 = arith.constant dense<0.000000e+00> : vector<10x32xf32>
    %178 = tpu.matmul %176, %177, %cst_65 {dimension_numbers = #tpu.dot_dimension_numbers<[1], [0], [0], [1], [0, 0, 1, 1], [], []>} : vector<10x64xbf16>, vector<64x32xbf16>, vector<10x32xf32> -> vector<10x32xf32>
    %179 = vector.broadcast %168 : vector<1x32xf32> to vector<10x32xf32>
    %180 = arith.addf %178, %179 : vector<10x32xf32>
    %181 = arith.addf %164, %180 : vector<10x32xf32>
    %c235 = arith.constant 235 : index
    %c0_66 = arith.constant 0 : index
    %182 = vector.load %arg6[%c235, %c0_66] : memref<616x32xf32, #tpu.memory_space<vmem>>, vector<1x32xf32>
    %c236 = arith.constant 236 : index
    %c0_67 = arith.constant 0 : index
    %183 = vector.load %arg6[%c236, %c0_67] : memref<616x32xf32, #tpu.memory_space<vmem>>, vector<1x32xf32>
    %cst_68 = arith.constant dense<0.000000e+00> : vector<10xf32>
    %184 = vector.multi_reduction <add>, %181, %cst_68 [1] : vector<10x32xf32> to vector<10xf32>
    %185 = vector.shape_cast %184 : vector<10xf32> to vector<10x1xf32>
    %cst_69 = arith.constant 3.200000e+01 : f32
    %186 = vector.broadcast %cst_69 : f32 to vector<10x1xf32>
    %187 = arith.divf %185, %186 : vector<10x1xf32>
    %188 = vector.broadcast %187 : vector<10x1xf32> to vector<10x32xf32>
    %189 = arith.subf %181, %188 : vector<10x32xf32>
    %190 = arith.mulf %189, %189 : vector<10x32xf32>
    %cst_70 = arith.constant dense<0.000000e+00> : vector<10xf32>
    %191 = vector.multi_reduction <add>, %190, %cst_70 [1] : vector<10x32xf32> to vector<10xf32>
    %192 = vector.shape_cast %191 : vector<10xf32> to vector<10x1xf32>
    %cst_71 = arith.constant 3.200000e+01 : f32
    %193 = vector.broadcast %cst_71 : f32 to vector<10x1xf32>
    %194 = arith.divf %192, %193 : vector<10x1xf32>
    %195 = vector.broadcast %187 : vector<10x1xf32> to vector<10x32xf32>
    %196 = arith.subf %181, %195 : vector<10x32xf32>
    %cst_72 = arith.constant 9.99999974E-6 : f32
    %197 = vector.broadcast %cst_72 : f32 to vector<10x1xf32>
    %198 = arith.addf %194, %197 : vector<10x1xf32>
    %199 = math.rsqrt %198 : vector<10x1xf32>
    %200 = vector.broadcast %199 : vector<10x1xf32> to vector<10x32xf32>
    %201 = arith.mulf %196, %200 : vector<10x32xf32>
    %202 = vector.broadcast %182 : vector<1x32xf32> to vector<10x32xf32>
    %203 = arith.mulf %201, %202 : vector<10x32xf32>
    %204 = vector.broadcast %183 : vector<1x32xf32> to vector<10x32xf32>
    %205 = arith.addf %203, %204 : vector<10x32xf32>
    %206 = vector.extract_strided_slice %205 {offsets = [0, 0], sizes = [1, 32], strides = [1, 1]} : vector<10x32xf32> to vector<1x32xf32>
    %c0_73 = arith.constant 0 : index
    %c0_74 = arith.constant 0 : index
    %207 = vector.load %arg7[%c0_73, %c0_74] : memref<192x64xf32, #tpu.memory_space<vmem>>, vector<32x64xf32>
    %208 = arith.truncf %206 : vector<1x32xf32> to vector<1x32xbf16>
    %209 = arith.truncf %207 : vector<32x64xf32> to vector<32x64xbf16>
    %cst_75 = arith.constant dense<0.000000e+00> : vector<1x64xf32>
    %210 = tpu.matmul %208, %209, %cst_75 {dimension_numbers = #tpu.dot_dimension_numbers<[1], [0], [0], [1], [0, 0, 1, 1], [], []>} : vector<1x32xbf16>, vector<32x64xbf16>, vector<1x64xf32> -> vector<1x64xf32>
    %c32_76 = arith.constant 32 : index
    %c0_77 = arith.constant 0 : index
    %211 = vector.load %arg7[%c32_76, %c0_77] : memref<192x64xf32, #tpu.memory_space<vmem>>, vector<1x64xf32>
    %212 = arith.addf %210, %211 : vector<1x64xf32>
    %213 = vector.extract_strided_slice %212 {offsets = [0, 0], sizes = [1, 32], strides = [1, 1]} : vector<1x64xf32> to vector<1x32xf32>
    %214 = vector.extract_strided_slice %212 {offsets = [0, 32], sizes = [1, 32], strides = [1, 1]} : vector<1x64xf32> to vector<1x32xf32>
    %cst_78 = arith.constant 5.000000e-01 : f32
    %215 = vector.broadcast %cst_78 : f32 to vector<1x32xf32>
    %216 = arith.mulf %214, %215 : vector<1x32xf32>
    %217 = math.exp %216 : vector<1x32xf32>
    %218 = arith.mulf %217, %6 : vector<1x32xf32>
    %219 = arith.addf %213, %218 : vector<1x32xf32>
    %c40_79 = arith.constant 40 : index
    %c0_80 = arith.constant 0 : index
    %220 = vector.load %arg6[%c40_79, %c0_80] : memref<616x32xf32, #tpu.memory_space<vmem>>, vector<32x32xf32>
    %221 = arith.truncf %219 : vector<1x32xf32> to vector<1x32xbf16>
    %222 = arith.truncf %220 : vector<32x32xf32> to vector<32x32xbf16>
    %cst_81 = arith.constant dense<0.000000e+00> : vector<1x32xf32>
    %223 = tpu.matmul %221, %222, %cst_81 {dimension_numbers = #tpu.dot_dimension_numbers<[1], [0], [0], [1], [0, 0, 1, 1], [], []>} : vector<1x32xbf16>, vector<32x32xbf16>, vector<1x32xf32> -> vector<1x32xf32>
    %c72_82 = arith.constant 72 : index
    %c0_83 = arith.constant 0 : index
    %224 = vector.load %arg6[%c72_82, %c0_83] : memref<616x32xf32, #tpu.memory_space<vmem>>, vector<1x32xf32>
    %225 = arith.addf %223, %224 : vector<1x32xf32>
    %226 = arith.truncf %0 : vector<16x256xf32> to vector<16x256xbf16>
    %227 = arith.truncf %10 : vector<3x256xf32> to vector<3x256xbf16>
    %cst_84 = arith.constant dense<0.000000e+00> : vector<16x3xf32>
    %228 = tpu.matmul %226, %227, %cst_84 {dimension_numbers = #tpu.dot_dimension_numbers<[1], [1], [0], [0], [0, 0, 1, 0], [], []>} : vector<16x256xbf16>, vector<3x256xbf16>, vector<16x3xf32> -> vector<16x3xf32>
    %c73 = arith.constant 73 : index
    %c0_85 = arith.constant 0 : index
    %229 = vector.load %arg6[%c73, %c0_85] : memref<616x32xf32, #tpu.memory_space<vmem>>, vector<3x32xf32>
    %230 = arith.truncf %228 : vector<16x3xf32> to vector<16x3xbf16>
    %231 = arith.truncf %229 : vector<3x32xf32> to vector<3x32xbf16>
    %cst_86 = arith.constant dense<0.000000e+00> : vector<16x32xf32>
    %232 = tpu.matmul %230, %231, %cst_86 {dimension_numbers = #tpu.dot_dimension_numbers<[1], [0], [0], [1], [0, 0, 1, 1], [], []>} : vector<16x3xbf16>, vector<3x32xbf16>, vector<16x32xf32> -> vector<16x32xf32>
    %c76 = arith.constant 76 : index
    %c0_87 = arith.constant 0 : index
    %233 = vector.load %arg6[%c76, %c0_87] : memref<616x32xf32, #tpu.memory_space<vmem>>, vector<1x32xf32>
    %234 = vector.broadcast %233 : vector<1x32xf32> to vector<16x32xf32>
    %235 = arith.addf %232, %234 : vector<16x32xf32>
    %c80 = arith.constant 80 : index
    %c0_88 = arith.constant 0 : index
    %236 = vector.load %arg6[%c80, %c0_88] : memref<616x32xf32, #tpu.memory_space<vmem>>, vector<8x32xf32>
    %237 = arith.truncf %4 : vector<1x8xf32> to vector<1x8xbf16>
    %238 = arith.truncf %236 : vector<8x32xf32> to vector<8x32xbf16>
    %cst_89 = arith.constant dense<0.000000e+00> : vector<1x32xf32>
    %239 = tpu.matmul %237, %238, %cst_89 {dimension_numbers = #tpu.dot_dimension_numbers<[1], [0], [0], [1], [0, 0, 1, 1], [], []>} : vector<1x8xbf16>, vector<8x32xbf16>, vector<1x32xf32> -> vector<1x32xf32>
    %c88 = arith.constant 88 : index
    %c0_90 = arith.constant 0 : index
    %240 = vector.load %arg6[%c88, %c0_90] : memref<616x32xf32, #tpu.memory_space<vmem>>, vector<1x32xf32>
    %241 = arith.addf %239, %240 : vector<1x32xf32>
    %242 = tpu.concatenate %225, %241, %235 in 0 : vector<1x32xf32>, vector<1x32xf32>, vector<16x32xf32> -> vector<18x32xf32>
    %c32_91 = arith.constant 32 : index
    %c0_92 = arith.constant 0 : index
    %243 = vector.load %arg8[%c32_91, %c0_92] : memref<64x96xf32, #tpu.memory_space<vmem>>, vector<32x96xf32>
    %c240 = arith.constant 240 : index
    %c0_93 = arith.constant 0 : index
    %244 = vector.load %arg6[%c240, %c0_93] : memref<616x32xf32, #tpu.memory_space<vmem>>, vector<18x32xf32>
    %c264 = arith.constant 264 : index
    %c0_94 = arith.constant 0 : index
    %245 = vector.load %arg6[%c264, %c0_94] : memref<616x32xf32, #tpu.memory_space<vmem>>, vector<18x32xf32>
    %c282 = arith.constant 282 : index
    %c0_95 = arith.constant 0 : index
    %246 = vector.load %arg6[%c282, %c0_95] : memref<616x32xf32, #tpu.memory_space<vmem>>, vector<1x32xf32>
    %c288 = arith.constant 288 : index
    %c0_96 = arith.constant 0 : index
    %247 = vector.load %arg6[%c288, %c0_96] : memref<616x32xf32, #tpu.memory_space<vmem>>, vector<32x32xf32>
    %c320 = arith.constant 320 : index
    %c0_97 = arith.constant 0 : index
    %248 = vector.load %arg6[%c320, %c0_97] : memref<616x32xf32, #tpu.memory_space<vmem>>, vector<1x32xf32>
    %249 = arith.truncf %242 : vector<18x32xf32> to vector<18x32xbf16>
    %250 = arith.truncf %243 : vector<32x96xf32> to vector<32x96xbf16>
    %cst_98 = arith.constant dense<0.000000e+00> : vector<18x96xf32>
    %251 = tpu.matmul %249, %250, %cst_98 {dimension_numbers = #tpu.dot_dimension_numbers<[1], [0], [0], [1], [0, 0, 1, 1], [], []>} : vector<18x32xbf16>, vector<32x96xbf16>, vector<18x96xf32> -> vector<18x96xf32>
    %252 = vector.extract_strided_slice %251 {offsets = [0, 0], sizes = [18, 32], strides = [1, 1]} : vector<18x96xf32> to vector<18x32xf32>
    %253 = arith.addf %252, %244 : vector<18x32xf32>
    %254 = vector.extract_strided_slice %251 {offsets = [0, 32], sizes = [18, 32], strides = [1, 1]} : vector<18x96xf32> to vector<18x32xf32>
    %255 = arith.addf %254, %245 : vector<18x32xf32>
    %256 = vector.extract_strided_slice %251 {offsets = [0, 64], sizes = [18, 32], strides = [1, 1]} : vector<18x96xf32> to vector<18x32xf32>
    %257 = vector.broadcast %246 : vector<1x32xf32> to vector<18x32xf32>
    %258 = arith.addf %256, %257 : vector<18x32xf32>
    %259 = vector.extract_strided_slice %253 {offsets = [0, 0], sizes = [18, 8], strides = [1, 1]} : vector<18x32xf32> to vector<18x8xf32>
    %260 = vector.extract_strided_slice %255 {offsets = [0, 0], sizes = [18, 8], strides = [1, 1]} : vector<18x32xf32> to vector<18x8xf32>
    %261 = arith.truncf %259 : vector<18x8xf32> to vector<18x8xbf16>
    %262 = arith.truncf %260 : vector<18x8xf32> to vector<18x8xbf16>
    %cst_99 = arith.constant dense<0.000000e+00> : vector<18x18xf32>
    %263 = tpu.matmul %261, %262, %cst_99 {dimension_numbers = #tpu.dot_dimension_numbers<[1], [1], [0], [0], [0, 0, 1, 0], [], []>} : vector<18x8xbf16>, vector<18x8xbf16>, vector<18x18xf32> -> vector<18x18xf32>
    %cst_100 = arith.constant 0.353553385 : f32
    %264 = vector.broadcast %cst_100 : f32 to vector<18x18xf32>
    %265 = arith.mulf %263, %264 : vector<18x18xf32>
    %cst_101 = arith.constant dense<0xFF800000> : vector<18xf32>
    %266 = vector.multi_reduction <maximumf>, %265, %cst_101 [1] : vector<18x18xf32> to vector<18xf32>
    %267 = vector.shape_cast %266 : vector<18xf32> to vector<18x1xf32>
    %268 = vector.broadcast %267 : vector<18x1xf32> to vector<18x18xf32>
    %269 = arith.subf %265, %268 : vector<18x18xf32>
    %270 = math.exp %269 : vector<18x18xf32>
    %cst_102 = arith.constant dense<0.000000e+00> : vector<18xf32>
    %271 = vector.multi_reduction <add>, %270, %cst_102 [1] : vector<18x18xf32> to vector<18xf32>
    %272 = vector.shape_cast %271 : vector<18xf32> to vector<18x1xf32>
    %273 = tpu.reciprocal %272 {approx = true} : vector<18x1xf32> -> vector<18x1xf32>
    %274 = vector.broadcast %273 : vector<18x1xf32> to vector<18x18xf32>
    %275 = arith.mulf %270, %274 : vector<18x18xf32>
    %276 = vector.extract_strided_slice %258 {offsets = [0, 0], sizes = [18, 8], strides = [1, 1]} : vector<18x32xf32> to vector<18x8xf32>
    %277 = arith.truncf %275 : vector<18x18xf32> to vector<18x18xbf16>
    %278 = arith.truncf %276 : vector<18x8xf32> to vector<18x8xbf16>
    %cst_103 = arith.constant dense<0.000000e+00> : vector<18x8xf32>
    %279 = tpu.matmul %277, %278, %cst_103 {dimension_numbers = #tpu.dot_dimension_numbers<[1], [0], [0], [1], [0, 0, 1, 1], [], []>} : vector<18x18xbf16>, vector<18x8xbf16>, vector<18x8xf32> -> vector<18x8xf32>
    %280 = vector.extract_strided_slice %253 {offsets = [0, 8], sizes = [18, 8], strides = [1, 1]} : vector<18x32xf32> to vector<18x8xf32>
    %281 = vector.extract_strided_slice %255 {offsets = [0, 8], sizes = [18, 8], strides = [1, 1]} : vector<18x32xf32> to vector<18x8xf32>
    %282 = arith.truncf %280 : vector<18x8xf32> to vector<18x8xbf16>
    %283 = arith.truncf %281 : vector<18x8xf32> to vector<18x8xbf16>
    %cst_104 = arith.constant dense<0.000000e+00> : vector<18x18xf32>
    %284 = tpu.matmul %282, %283, %cst_104 {dimension_numbers = #tpu.dot_dimension_numbers<[1], [1], [0], [0], [0, 0, 1, 0], [], []>} : vector<18x8xbf16>, vector<18x8xbf16>, vector<18x18xf32> -> vector<18x18xf32>
    %cst_105 = arith.constant 0.353553385 : f32
    %285 = vector.broadcast %cst_105 : f32 to vector<18x18xf32>
    %286 = arith.mulf %284, %285 : vector<18x18xf32>
    %cst_106 = arith.constant dense<0xFF800000> : vector<18xf32>
    %287 = vector.multi_reduction <maximumf>, %286, %cst_106 [1] : vector<18x18xf32> to vector<18xf32>
    %288 = vector.shape_cast %287 : vector<18xf32> to vector<18x1xf32>
    %289 = vector.broadcast %288 : vector<18x1xf32> to vector<18x18xf32>
    %290 = arith.subf %286, %289 : vector<18x18xf32>
    %291 = math.exp %290 : vector<18x18xf32>
    %cst_107 = arith.constant dense<0.000000e+00> : vector<18xf32>
    %292 = vector.multi_reduction <add>, %291, %cst_107 [1] : vector<18x18xf32> to vector<18xf32>
    %293 = vector.shape_cast %292 : vector<18xf32> to vector<18x1xf32>
    %294 = tpu.reciprocal %293 {approx = true} : vector<18x1xf32> -> vector<18x1xf32>
    %295 = vector.broadcast %294 : vector<18x1xf32> to vector<18x18xf32>
    %296 = arith.mulf %291, %295 : vector<18x18xf32>
    %297 = vector.extract_strided_slice %258 {offsets = [0, 8], sizes = [18, 8], strides = [1, 1]} : vector<18x32xf32> to vector<18x8xf32>
    %298 = arith.truncf %296 : vector<18x18xf32> to vector<18x18xbf16>
    %299 = arith.truncf %297 : vector<18x8xf32> to vector<18x8xbf16>
    %cst_108 = arith.constant dense<0.000000e+00> : vector<18x8xf32>
    %300 = tpu.matmul %298, %299, %cst_108 {dimension_numbers = #tpu.dot_dimension_numbers<[1], [0], [0], [1], [0, 0, 1, 1], [], []>} : vector<18x18xbf16>, vector<18x8xbf16>, vector<18x8xf32> -> vector<18x8xf32>
    %301 = vector.extract_strided_slice %253 {offsets = [0, 16], sizes = [18, 8], strides = [1, 1]} : vector<18x32xf32> to vector<18x8xf32>
    %302 = vector.extract_strided_slice %255 {offsets = [0, 16], sizes = [18, 8], strides = [1, 1]} : vector<18x32xf32> to vector<18x8xf32>
    %303 = arith.truncf %301 : vector<18x8xf32> to vector<18x8xbf16>
    %304 = arith.truncf %302 : vector<18x8xf32> to vector<18x8xbf16>
    %cst_109 = arith.constant dense<0.000000e+00> : vector<18x18xf32>
    %305 = tpu.matmul %303, %304, %cst_109 {dimension_numbers = #tpu.dot_dimension_numbers<[1], [1], [0], [0], [0, 0, 1, 0], [], []>} : vector<18x8xbf16>, vector<18x8xbf16>, vector<18x18xf32> -> vector<18x18xf32>
    %cst_110 = arith.constant 0.353553385 : f32
    %306 = vector.broadcast %cst_110 : f32 to vector<18x18xf32>
    %307 = arith.mulf %305, %306 : vector<18x18xf32>
    %cst_111 = arith.constant dense<0xFF800000> : vector<18xf32>
    %308 = vector.multi_reduction <maximumf>, %307, %cst_111 [1] : vector<18x18xf32> to vector<18xf32>
    %309 = vector.shape_cast %308 : vector<18xf32> to vector<18x1xf32>
    %310 = vector.broadcast %309 : vector<18x1xf32> to vector<18x18xf32>
    %311 = arith.subf %307, %310 : vector<18x18xf32>
    %312 = math.exp %311 : vector<18x18xf32>
    %cst_112 = arith.constant dense<0.000000e+00> : vector<18xf32>
    %313 = vector.multi_reduction <add>, %312, %cst_112 [1] : vector<18x18xf32> to vector<18xf32>
    %314 = vector.shape_cast %313 : vector<18xf32> to vector<18x1xf32>
    %315 = tpu.reciprocal %314 {approx = true} : vector<18x1xf32> -> vector<18x1xf32>
    %316 = vector.broadcast %315 : vector<18x1xf32> to vector<18x18xf32>
    %317 = arith.mulf %312, %316 : vector<18x18xf32>
    %318 = vector.extract_strided_slice %258 {offsets = [0, 16], sizes = [18, 8], strides = [1, 1]} : vector<18x32xf32> to vector<18x8xf32>
    %319 = arith.truncf %317 : vector<18x18xf32> to vector<18x18xbf16>
    %320 = arith.truncf %318 : vector<18x8xf32> to vector<18x8xbf16>
    %cst_113 = arith.constant dense<0.000000e+00> : vector<18x8xf32>
    %321 = tpu.matmul %319, %320, %cst_113 {dimension_numbers = #tpu.dot_dimension_numbers<[1], [0], [0], [1], [0, 0, 1, 1], [], []>} : vector<18x18xbf16>, vector<18x8xbf16>, vector<18x8xf32> -> vector<18x8xf32>
    %322 = vector.extract_strided_slice %253 {offsets = [0, 24], sizes = [18, 8], strides = [1, 1]} : vector<18x32xf32> to vector<18x8xf32>
    %323 = vector.extract_strided_slice %255 {offsets = [0, 24], sizes = [18, 8], strides = [1, 1]} : vector<18x32xf32> to vector<18x8xf32>
    %324 = arith.truncf %322 : vector<18x8xf32> to vector<18x8xbf16>
    %325 = arith.truncf %323 : vector<18x8xf32> to vector<18x8xbf16>
    %cst_114 = arith.constant dense<0.000000e+00> : vector<18x18xf32>
    %326 = tpu.matmul %324, %325, %cst_114 {dimension_numbers = #tpu.dot_dimension_numbers<[1], [1], [0], [0], [0, 0, 1, 0], [], []>} : vector<18x8xbf16>, vector<18x8xbf16>, vector<18x18xf32> -> vector<18x18xf32>
    %cst_115 = arith.constant 0.353553385 : f32
    %327 = vector.broadcast %cst_115 : f32 to vector<18x18xf32>
    %328 = arith.mulf %326, %327 : vector<18x18xf32>
    %cst_116 = arith.constant dense<0xFF800000> : vector<18xf32>
    %329 = vector.multi_reduction <maximumf>, %328, %cst_116 [1] : vector<18x18xf32> to vector<18xf32>
    %330 = vector.shape_cast %329 : vector<18xf32> to vector<18x1xf32>
    %331 = vector.broadcast %330 : vector<18x1xf32> to vector<18x18xf32>
    %332 = arith.subf %328, %331 : vector<18x18xf32>
    %333 = math.exp %332 : vector<18x18xf32>
    %cst_117 = arith.constant dense<0.000000e+00> : vector<18xf32>
    %334 = vector.multi_reduction <add>, %333, %cst_117 [1] : vector<18x18xf32> to vector<18xf32>
    %335 = vector.shape_cast %334 : vector<18xf32> to vector<18x1xf32>
    %336 = tpu.reciprocal %335 {approx = true} : vector<18x1xf32> -> vector<18x1xf32>
    %337 = vector.broadcast %336 : vector<18x1xf32> to vector<18x18xf32>
    %338 = arith.mulf %333, %337 : vector<18x18xf32>
    %339 = vector.extract_strided_slice %258 {offsets = [0, 24], sizes = [18, 8], strides = [1, 1]} : vector<18x32xf32> to vector<18x8xf32>
    %340 = arith.truncf %338 : vector<18x18xf32> to vector<18x18xbf16>
    %341 = arith.truncf %339 : vector<18x8xf32> to vector<18x8xbf16>
    %cst_118 = arith.constant dense<0.000000e+00> : vector<18x8xf32>
    %342 = tpu.matmul %340, %341, %cst_118 {dimension_numbers = #tpu.dot_dimension_numbers<[1], [0], [0], [1], [0, 0, 1, 1], [], []>} : vector<18x18xbf16>, vector<18x8xbf16>, vector<18x8xf32> -> vector<18x8xf32>
    %343 = tpu.concatenate %279, %300, %321, %342 in 1 : vector<18x8xf32>, vector<18x8xf32>, vector<18x8xf32>, vector<18x8xf32> -> vector<18x32xf32>
    %344 = arith.truncf %343 : vector<18x32xf32> to vector<18x32xbf16>
    %345 = arith.truncf %247 : vector<32x32xf32> to vector<32x32xbf16>
    %cst_119 = arith.constant dense<0.000000e+00> : vector<18x32xf32>
    %346 = tpu.matmul %344, %345, %cst_119 {dimension_numbers = #tpu.dot_dimension_numbers<[1], [0], [0], [1], [0, 0, 1, 1], [], []>} : vector<18x32xbf16>, vector<32x32xbf16>, vector<18x32xf32> -> vector<18x32xf32>
    %347 = vector.broadcast %248 : vector<1x32xf32> to vector<18x32xf32>
    %348 = arith.addf %346, %347 : vector<18x32xf32>
    %349 = arith.addf %242, %348 : vector<18x32xf32>
    %c393 = arith.constant 393 : index
    %c0_120 = arith.constant 0 : index
    %350 = vector.load %arg6[%c393, %c0_120] : memref<616x32xf32, #tpu.memory_space<vmem>>, vector<1x32xf32>
    %c394 = arith.constant 394 : index
    %c0_121 = arith.constant 0 : index
    %351 = vector.load %arg6[%c394, %c0_121] : memref<616x32xf32, #tpu.memory_space<vmem>>, vector<1x32xf32>
    %cst_122 = arith.constant dense<0.000000e+00> : vector<18xf32>
    %352 = vector.multi_reduction <add>, %349, %cst_122 [1] : vector<18x32xf32> to vector<18xf32>
    %353 = vector.shape_cast %352 : vector<18xf32> to vector<18x1xf32>
    %cst_123 = arith.constant 3.200000e+01 : f32
    %354 = vector.broadcast %cst_123 : f32 to vector<18x1xf32>
    %355 = arith.divf %353, %354 : vector<18x1xf32>
    %356 = vector.broadcast %355 : vector<18x1xf32> to vector<18x32xf32>
    %357 = arith.subf %349, %356 : vector<18x32xf32>
    %358 = arith.mulf %357, %357 : vector<18x32xf32>
    %cst_124 = arith.constant dense<0.000000e+00> : vector<18xf32>
    %359 = vector.multi_reduction <add>, %358, %cst_124 [1] : vector<18x32xf32> to vector<18xf32>
    %360 = vector.shape_cast %359 : vector<18xf32> to vector<18x1xf32>
    %cst_125 = arith.constant 3.200000e+01 : f32
    %361 = vector.broadcast %cst_125 : f32 to vector<18x1xf32>
    %362 = arith.divf %360, %361 : vector<18x1xf32>
    %363 = vector.broadcast %355 : vector<18x1xf32> to vector<18x32xf32>
    %364 = arith.subf %349, %363 : vector<18x32xf32>
    %cst_126 = arith.constant 9.99999974E-6 : f32
    %365 = vector.broadcast %cst_126 : f32 to vector<18x1xf32>
    %366 = arith.addf %362, %365 : vector<18x1xf32>
    %367 = math.rsqrt %366 : vector<18x1xf32>
    %368 = vector.broadcast %367 : vector<18x1xf32> to vector<18x32xf32>
    %369 = arith.mulf %364, %368 : vector<18x32xf32>
    %370 = vector.broadcast %350 : vector<1x32xf32> to vector<18x32xf32>
    %371 = arith.mulf %369, %370 : vector<18x32xf32>
    %372 = vector.broadcast %351 : vector<1x32xf32> to vector<18x32xf32>
    %373 = arith.addf %371, %372 : vector<18x32xf32>
    %c80_127 = arith.constant 80 : index
    %c0_128 = arith.constant 0 : index
    %374 = vector.load %arg7[%c80_127, %c0_128] : memref<192x64xf32, #tpu.memory_space<vmem>>, vector<32x64xf32>
    %c112_129 = arith.constant 112 : index
    %c0_130 = arith.constant 0 : index
    %375 = vector.load %arg7[%c112_129, %c0_130] : memref<192x64xf32, #tpu.memory_space<vmem>>, vector<1x64xf32>
    %c328 = arith.constant 328 : index
    %c0_131 = arith.constant 0 : index
    %376 = vector.load %arg6[%c328, %c0_131] : memref<616x32xf32, #tpu.memory_space<vmem>>, vector<64x32xf32>
    %c392 = arith.constant 392 : index
    %c0_132 = arith.constant 0 : index
    %377 = vector.load %arg6[%c392, %c0_132] : memref<616x32xf32, #tpu.memory_space<vmem>>, vector<1x32xf32>
    %378 = arith.truncf %373 : vector<18x32xf32> to vector<18x32xbf16>
    %379 = arith.truncf %374 : vector<32x64xf32> to vector<32x64xbf16>
    %cst_133 = arith.constant dense<0.000000e+00> : vector<18x64xf32>
    %380 = tpu.matmul %378, %379, %cst_133 {dimension_numbers = #tpu.dot_dimension_numbers<[1], [0], [0], [1], [0, 0, 1, 1], [], []>} : vector<18x32xbf16>, vector<32x64xbf16>, vector<18x64xf32> -> vector<18x64xf32>
    %381 = vector.broadcast %375 : vector<1x64xf32> to vector<18x64xf32>
    %382 = arith.addf %380, %381 : vector<18x64xf32>
    %cst_134 = arith.constant 0.000000e+00 : f32
    %383 = vector.broadcast %cst_134 : f32 to vector<18x64xf32>
    %384 = arith.maximumf %382, %383 : vector<18x64xf32>
    %385 = arith.truncf %384 : vector<18x64xf32> to vector<18x64xbf16>
    %386 = arith.truncf %376 : vector<64x32xf32> to vector<64x32xbf16>
    %cst_135 = arith.constant dense<0.000000e+00> : vector<18x32xf32>
    %387 = tpu.matmul %385, %386, %cst_135 {dimension_numbers = #tpu.dot_dimension_numbers<[1], [0], [0], [1], [0, 0, 1, 1], [], []>} : vector<18x64xbf16>, vector<64x32xbf16>, vector<18x32xf32> -> vector<18x32xf32>
    %388 = vector.broadcast %377 : vector<1x32xf32> to vector<18x32xf32>
    %389 = arith.addf %387, %388 : vector<18x32xf32>
    %390 = arith.addf %373, %389 : vector<18x32xf32>
    %c395 = arith.constant 395 : index
    %c0_136 = arith.constant 0 : index
    %391 = vector.load %arg6[%c395, %c0_136] : memref<616x32xf32, #tpu.memory_space<vmem>>, vector<1x32xf32>
    %c396 = arith.constant 396 : index
    %c0_137 = arith.constant 0 : index
    %392 = vector.load %arg6[%c396, %c0_137] : memref<616x32xf32, #tpu.memory_space<vmem>>, vector<1x32xf32>
    %cst_138 = arith.constant dense<0.000000e+00> : vector<18xf32>
    %393 = vector.multi_reduction <add>, %390, %cst_138 [1] : vector<18x32xf32> to vector<18xf32>
    %394 = vector.shape_cast %393 : vector<18xf32> to vector<18x1xf32>
    %cst_139 = arith.constant 3.200000e+01 : f32
    %395 = vector.broadcast %cst_139 : f32 to vector<18x1xf32>
    %396 = arith.divf %394, %395 : vector<18x1xf32>
    %397 = vector.broadcast %396 : vector<18x1xf32> to vector<18x32xf32>
    %398 = arith.subf %390, %397 : vector<18x32xf32>
    %399 = arith.mulf %398, %398 : vector<18x32xf32>
    %cst_140 = arith.constant dense<0.000000e+00> : vector<18xf32>
    %400 = vector.multi_reduction <add>, %399, %cst_140 [1] : vector<18x32xf32> to vector<18xf32>
    %401 = vector.shape_cast %400 : vector<18xf32> to vector<18x1xf32>
    %cst_141 = arith.constant 3.200000e+01 : f32
    %402 = vector.broadcast %cst_141 : f32 to vector<18x1xf32>
    %403 = arith.divf %401, %402 : vector<18x1xf32>
    %404 = vector.broadcast %396 : vector<18x1xf32> to vector<18x32xf32>
    %405 = arith.subf %390, %404 : vector<18x32xf32>
    %cst_142 = arith.constant 9.99999974E-6 : f32
    %406 = vector.broadcast %cst_142 : f32 to vector<18x1xf32>
    %407 = arith.addf %403, %406 : vector<18x1xf32>
    %408 = math.rsqrt %407 : vector<18x1xf32>
    %409 = vector.broadcast %408 : vector<18x1xf32> to vector<18x32xf32>
    %410 = arith.mulf %405, %409 : vector<18x32xf32>
    %411 = vector.broadcast %391 : vector<1x32xf32> to vector<18x32xf32>
    %412 = arith.mulf %410, %411 : vector<18x32xf32>
    %413 = vector.broadcast %392 : vector<1x32xf32> to vector<18x32xf32>
    %414 = arith.addf %412, %413 : vector<18x32xf32>
    %c397 = arith.constant 397 : index
    %c0_143 = arith.constant 0 : index
    %415 = vector.load %arg6[%c397, %c0_143] : memref<616x32xf32, #tpu.memory_space<vmem>>, vector<1x32xf32>
    %416 = vector.shape_cast %415 : vector<1x32xf32> to vector<1x32xf32>
    %417 = vector.broadcast %416 : vector<1x32xf32> to vector<8x32xf32>
    %c432 = arith.constant 432 : index
    %c0_144 = arith.constant 0 : index
    %418 = vector.load %arg6[%c432, %c0_144] : memref<616x32xf32, #tpu.memory_space<vmem>>, vector<32x32xf32>
    %419 = arith.truncf %417 : vector<8x32xf32> to vector<8x32xbf16>
    %420 = arith.truncf %418 : vector<32x32xf32> to vector<32x32xbf16>
    %cst_145 = arith.constant dense<0.000000e+00> : vector<8x32xf32>
    %421 = tpu.matmul %419, %420, %cst_145 {dimension_numbers = #tpu.dot_dimension_numbers<[1], [0], [0], [1], [0, 0, 1, 1], [], []>} : vector<8x32xbf16>, vector<32x32xbf16>, vector<8x32xf32> -> vector<8x32xf32>
    %c400 = arith.constant 400 : index
    %c0_146 = arith.constant 0 : index
    %422 = vector.load %arg6[%c400, %c0_146] : memref<616x32xf32, #tpu.memory_space<vmem>>, vector<8x32xf32>
    %423 = arith.addf %421, %422 : vector<8x32xf32>
    %c160_147 = arith.constant 160 : index
    %c0_148 = arith.constant 0 : index
    %424 = vector.load %arg7[%c160_147, %c0_148] : memref<192x64xf32, #tpu.memory_space<vmem>>, vector<32x64xf32>
    %425 = arith.truncf %414 : vector<18x32xf32> to vector<18x32xbf16>
    %426 = arith.truncf %424 : vector<32x64xf32> to vector<32x64xbf16>
    %cst_149 = arith.constant dense<0.000000e+00> : vector<18x64xf32>
    %427 = tpu.matmul %425, %426, %cst_149 {dimension_numbers = #tpu.dot_dimension_numbers<[1], [0], [0], [1], [0, 0, 1, 1], [], []>} : vector<18x32xbf16>, vector<32x64xbf16>, vector<18x64xf32> -> vector<18x64xf32>
    %428 = vector.extract_strided_slice %427 {offsets = [0, 0], sizes = [18, 32], strides = [1, 1]} : vector<18x64xf32> to vector<18x32xf32>
    %c408 = arith.constant 408 : index
    %c0_150 = arith.constant 0 : index
    %429 = vector.load %arg6[%c408, %c0_150] : memref<616x32xf32, #tpu.memory_space<vmem>>, vector<18x32xf32>
    %430 = arith.addf %428, %429 : vector<18x32xf32>
    %431 = vector.extract_strided_slice %427 {offsets = [0, 32], sizes = [18, 32], strides = [1, 1]} : vector<18x64xf32> to vector<18x32xf32>
    %c426 = arith.constant 426 : index
    %c0_151 = arith.constant 0 : index
    %432 = vector.load %arg6[%c426, %c0_151] : memref<616x32xf32, #tpu.memory_space<vmem>>, vector<1x32xf32>
    %433 = vector.broadcast %432 : vector<1x32xf32> to vector<18x32xf32>
    %434 = arith.addf %431, %433 : vector<18x32xf32>
    %c464 = arith.constant 464 : index
    %c0_152 = arith.constant 0 : index
    %435 = vector.load %arg6[%c464, %c0_152] : memref<616x32xf32, #tpu.memory_space<vmem>>, vector<32x32xf32>
    %c496 = arith.constant 496 : index
    %c0_153 = arith.constant 0 : index
    %436 = vector.load %arg6[%c496, %c0_153] : memref<616x32xf32, #tpu.memory_space<vmem>>, vector<1x32xf32>
    %437 = vector.extract_strided_slice %423 {offsets = [0, 0], sizes = [8, 8], strides = [1, 1]} : vector<8x32xf32> to vector<8x8xf32>
    %438 = vector.extract_strided_slice %430 {offsets = [0, 0], sizes = [18, 8], strides = [1, 1]} : vector<18x32xf32> to vector<18x8xf32>
    %439 = arith.truncf %437 : vector<8x8xf32> to vector<8x8xbf16>
    %440 = arith.truncf %438 : vector<18x8xf32> to vector<18x8xbf16>
    %cst_154 = arith.constant dense<0.000000e+00> : vector<8x18xf32>
    %441 = tpu.matmul %439, %440, %cst_154 {dimension_numbers = #tpu.dot_dimension_numbers<[1], [1], [0], [0], [0, 0, 1, 0], [], []>} : vector<8x8xbf16>, vector<18x8xbf16>, vector<8x18xf32> -> vector<8x18xf32>
    %cst_155 = arith.constant 0.353553385 : f32
    %442 = vector.broadcast %cst_155 : f32 to vector<8x18xf32>
    %443 = arith.mulf %441, %442 : vector<8x18xf32>
    %cst_156 = arith.constant dense<0xFF800000> : vector<8xf32>
    %444 = vector.multi_reduction <maximumf>, %443, %cst_156 [1] : vector<8x18xf32> to vector<8xf32>
    %445 = vector.shape_cast %444 : vector<8xf32> to vector<8x1xf32>
    %446 = vector.broadcast %445 : vector<8x1xf32> to vector<8x18xf32>
    %447 = arith.subf %443, %446 : vector<8x18xf32>
    %448 = math.exp %447 : vector<8x18xf32>
    %cst_157 = arith.constant dense<0.000000e+00> : vector<8xf32>
    %449 = vector.multi_reduction <add>, %448, %cst_157 [1] : vector<8x18xf32> to vector<8xf32>
    %450 = vector.shape_cast %449 : vector<8xf32> to vector<8x1xf32>
    %451 = tpu.reciprocal %450 {approx = true} : vector<8x1xf32> -> vector<8x1xf32>
    %452 = vector.broadcast %451 : vector<8x1xf32> to vector<8x18xf32>
    %453 = arith.mulf %448, %452 : vector<8x18xf32>
    %454 = vector.extract_strided_slice %434 {offsets = [0, 0], sizes = [18, 8], strides = [1, 1]} : vector<18x32xf32> to vector<18x8xf32>
    %455 = arith.truncf %453 : vector<8x18xf32> to vector<8x18xbf16>
    %456 = arith.truncf %454 : vector<18x8xf32> to vector<18x8xbf16>
    %cst_158 = arith.constant dense<0.000000e+00> : vector<8x8xf32>
    %457 = tpu.matmul %455, %456, %cst_158 {dimension_numbers = #tpu.dot_dimension_numbers<[1], [0], [0], [1], [0, 0, 1, 1], [], []>} : vector<8x18xbf16>, vector<18x8xbf16>, vector<8x8xf32> -> vector<8x8xf32>
    %458 = vector.extract_strided_slice %423 {offsets = [0, 8], sizes = [8, 8], strides = [1, 1]} : vector<8x32xf32> to vector<8x8xf32>
    %459 = vector.extract_strided_slice %430 {offsets = [0, 8], sizes = [18, 8], strides = [1, 1]} : vector<18x32xf32> to vector<18x8xf32>
    %460 = arith.truncf %458 : vector<8x8xf32> to vector<8x8xbf16>
    %461 = arith.truncf %459 : vector<18x8xf32> to vector<18x8xbf16>
    %cst_159 = arith.constant dense<0.000000e+00> : vector<8x18xf32>
    %462 = tpu.matmul %460, %461, %cst_159 {dimension_numbers = #tpu.dot_dimension_numbers<[1], [1], [0], [0], [0, 0, 1, 0], [], []>} : vector<8x8xbf16>, vector<18x8xbf16>, vector<8x18xf32> -> vector<8x18xf32>
    %cst_160 = arith.constant 0.353553385 : f32
    %463 = vector.broadcast %cst_160 : f32 to vector<8x18xf32>
    %464 = arith.mulf %462, %463 : vector<8x18xf32>
    %cst_161 = arith.constant dense<0xFF800000> : vector<8xf32>
    %465 = vector.multi_reduction <maximumf>, %464, %cst_161 [1] : vector<8x18xf32> to vector<8xf32>
    %466 = vector.shape_cast %465 : vector<8xf32> to vector<8x1xf32>
    %467 = vector.broadcast %466 : vector<8x1xf32> to vector<8x18xf32>
    %468 = arith.subf %464, %467 : vector<8x18xf32>
    %469 = math.exp %468 : vector<8x18xf32>
    %cst_162 = arith.constant dense<0.000000e+00> : vector<8xf32>
    %470 = vector.multi_reduction <add>, %469, %cst_162 [1] : vector<8x18xf32> to vector<8xf32>
    %471 = vector.shape_cast %470 : vector<8xf32> to vector<8x1xf32>
    %472 = tpu.reciprocal %471 {approx = true} : vector<8x1xf32> -> vector<8x1xf32>
    %473 = vector.broadcast %472 : vector<8x1xf32> to vector<8x18xf32>
    %474 = arith.mulf %469, %473 : vector<8x18xf32>
    %475 = vector.extract_strided_slice %434 {offsets = [0, 8], sizes = [18, 8], strides = [1, 1]} : vector<18x32xf32> to vector<18x8xf32>
    %476 = arith.truncf %474 : vector<8x18xf32> to vector<8x18xbf16>
    %477 = arith.truncf %475 : vector<18x8xf32> to vector<18x8xbf16>
    %cst_163 = arith.constant dense<0.000000e+00> : vector<8x8xf32>
    %478 = tpu.matmul %476, %477, %cst_163 {dimension_numbers = #tpu.dot_dimension_numbers<[1], [0], [0], [1], [0, 0, 1, 1], [], []>} : vector<8x18xbf16>, vector<18x8xbf16>, vector<8x8xf32> -> vector<8x8xf32>
    %479 = vector.extract_strided_slice %423 {offsets = [0, 16], sizes = [8, 8], strides = [1, 1]} : vector<8x32xf32> to vector<8x8xf32>
    %480 = vector.extract_strided_slice %430 {offsets = [0, 16], sizes = [18, 8], strides = [1, 1]} : vector<18x32xf32> to vector<18x8xf32>
    %481 = arith.truncf %479 : vector<8x8xf32> to vector<8x8xbf16>
    %482 = arith.truncf %480 : vector<18x8xf32> to vector<18x8xbf16>
    %cst_164 = arith.constant dense<0.000000e+00> : vector<8x18xf32>
    %483 = tpu.matmul %481, %482, %cst_164 {dimension_numbers = #tpu.dot_dimension_numbers<[1], [1], [0], [0], [0, 0, 1, 0], [], []>} : vector<8x8xbf16>, vector<18x8xbf16>, vector<8x18xf32> -> vector<8x18xf32>
    %cst_165 = arith.constant 0.353553385 : f32
    %484 = vector.broadcast %cst_165 : f32 to vector<8x18xf32>
    %485 = arith.mulf %483, %484 : vector<8x18xf32>
    %cst_166 = arith.constant dense<0xFF800000> : vector<8xf32>
    %486 = vector.multi_reduction <maximumf>, %485, %cst_166 [1] : vector<8x18xf32> to vector<8xf32>
    %487 = vector.shape_cast %486 : vector<8xf32> to vector<8x1xf32>
    %488 = vector.broadcast %487 : vector<8x1xf32> to vector<8x18xf32>
    %489 = arith.subf %485, %488 : vector<8x18xf32>
    %490 = math.exp %489 : vector<8x18xf32>
    %cst_167 = arith.constant dense<0.000000e+00> : vector<8xf32>
    %491 = vector.multi_reduction <add>, %490, %cst_167 [1] : vector<8x18xf32> to vector<8xf32>
    %492 = vector.shape_cast %491 : vector<8xf32> to vector<8x1xf32>
    %493 = tpu.reciprocal %492 {approx = true} : vector<8x1xf32> -> vector<8x1xf32>
    %494 = vector.broadcast %493 : vector<8x1xf32> to vector<8x18xf32>
    %495 = arith.mulf %490, %494 : vector<8x18xf32>
    %496 = vector.extract_strided_slice %434 {offsets = [0, 16], sizes = [18, 8], strides = [1, 1]} : vector<18x32xf32> to vector<18x8xf32>
    %497 = arith.truncf %495 : vector<8x18xf32> to vector<8x18xbf16>
    %498 = arith.truncf %496 : vector<18x8xf32> to vector<18x8xbf16>
    %cst_168 = arith.constant dense<0.000000e+00> : vector<8x8xf32>
    %499 = tpu.matmul %497, %498, %cst_168 {dimension_numbers = #tpu.dot_dimension_numbers<[1], [0], [0], [1], [0, 0, 1, 1], [], []>} : vector<8x18xbf16>, vector<18x8xbf16>, vector<8x8xf32> -> vector<8x8xf32>
    %500 = vector.extract_strided_slice %423 {offsets = [0, 24], sizes = [8, 8], strides = [1, 1]} : vector<8x32xf32> to vector<8x8xf32>
    %501 = vector.extract_strided_slice %430 {offsets = [0, 24], sizes = [18, 8], strides = [1, 1]} : vector<18x32xf32> to vector<18x8xf32>
    %502 = arith.truncf %500 : vector<8x8xf32> to vector<8x8xbf16>
    %503 = arith.truncf %501 : vector<18x8xf32> to vector<18x8xbf16>
    %cst_169 = arith.constant dense<0.000000e+00> : vector<8x18xf32>
    %504 = tpu.matmul %502, %503, %cst_169 {dimension_numbers = #tpu.dot_dimension_numbers<[1], [1], [0], [0], [0, 0, 1, 0], [], []>} : vector<8x8xbf16>, vector<18x8xbf16>, vector<8x18xf32> -> vector<8x18xf32>
    %cst_170 = arith.constant 0.353553385 : f32
    %505 = vector.broadcast %cst_170 : f32 to vector<8x18xf32>
    %506 = arith.mulf %504, %505 : vector<8x18xf32>
    %cst_171 = arith.constant dense<0xFF800000> : vector<8xf32>
    %507 = vector.multi_reduction <maximumf>, %506, %cst_171 [1] : vector<8x18xf32> to vector<8xf32>
    %508 = vector.shape_cast %507 : vector<8xf32> to vector<8x1xf32>
    %509 = vector.broadcast %508 : vector<8x1xf32> to vector<8x18xf32>
    %510 = arith.subf %506, %509 : vector<8x18xf32>
    %511 = math.exp %510 : vector<8x18xf32>
    %cst_172 = arith.constant dense<0.000000e+00> : vector<8xf32>
    %512 = vector.multi_reduction <add>, %511, %cst_172 [1] : vector<8x18xf32> to vector<8xf32>
    %513 = vector.shape_cast %512 : vector<8xf32> to vector<8x1xf32>
    %514 = tpu.reciprocal %513 {approx = true} : vector<8x1xf32> -> vector<8x1xf32>
    %515 = vector.broadcast %514 : vector<8x1xf32> to vector<8x18xf32>
    %516 = arith.mulf %511, %515 : vector<8x18xf32>
    %517 = vector.extract_strided_slice %434 {offsets = [0, 24], sizes = [18, 8], strides = [1, 1]} : vector<18x32xf32> to vector<18x8xf32>
    %518 = arith.truncf %516 : vector<8x18xf32> to vector<8x18xbf16>
    %519 = arith.truncf %517 : vector<18x8xf32> to vector<18x8xbf16>
    %cst_173 = arith.constant dense<0.000000e+00> : vector<8x8xf32>
    %520 = tpu.matmul %518, %519, %cst_173 {dimension_numbers = #tpu.dot_dimension_numbers<[1], [0], [0], [1], [0, 0, 1, 1], [], []>} : vector<8x18xbf16>, vector<18x8xbf16>, vector<8x8xf32> -> vector<8x8xf32>
    %521 = tpu.concatenate %457, %478, %499, %520 in 1 : vector<8x8xf32>, vector<8x8xf32>, vector<8x8xf32>, vector<8x8xf32> -> vector<8x32xf32>
    %522 = arith.truncf %521 : vector<8x32xf32> to vector<8x32xbf16>
    %523 = arith.truncf %435 : vector<32x32xf32> to vector<32x32xbf16>
    %cst_174 = arith.constant dense<0.000000e+00> : vector<8x32xf32>
    %524 = tpu.matmul %522, %523, %cst_174 {dimension_numbers = #tpu.dot_dimension_numbers<[1], [0], [0], [1], [0, 0, 1, 1], [], []>} : vector<8x32xbf16>, vector<32x32xbf16>, vector<8x32xf32> -> vector<8x32xf32>
    %525 = vector.broadcast %436 : vector<1x32xf32> to vector<8x32xf32>
    %526 = arith.addf %524, %525 : vector<8x32xf32>
    %527 = arith.addf %417, %526 : vector<8x32xf32>
    %c569 = arith.constant 569 : index
    %c0_175 = arith.constant 0 : index
    %528 = vector.load %arg6[%c569, %c0_175] : memref<616x32xf32, #tpu.memory_space<vmem>>, vector<1x32xf32>
    %c570 = arith.constant 570 : index
    %c0_176 = arith.constant 0 : index
    %529 = vector.load %arg6[%c570, %c0_176] : memref<616x32xf32, #tpu.memory_space<vmem>>, vector<1x32xf32>
    %cst_177 = arith.constant dense<0.000000e+00> : vector<8xf32>
    %530 = vector.multi_reduction <add>, %527, %cst_177 [1] : vector<8x32xf32> to vector<8xf32>
    %531 = vector.shape_cast %530 : vector<8xf32> to vector<8x1xf32>
    %cst_178 = arith.constant 3.200000e+01 : f32
    %532 = vector.broadcast %cst_178 : f32 to vector<8x1xf32>
    %533 = arith.divf %531, %532 : vector<8x1xf32>
    %534 = vector.broadcast %533 : vector<8x1xf32> to vector<8x32xf32>
    %535 = arith.subf %527, %534 : vector<8x32xf32>
    %536 = arith.mulf %535, %535 : vector<8x32xf32>
    %cst_179 = arith.constant dense<0.000000e+00> : vector<8xf32>
    %537 = vector.multi_reduction <add>, %536, %cst_179 [1] : vector<8x32xf32> to vector<8xf32>
    %538 = vector.shape_cast %537 : vector<8xf32> to vector<8x1xf32>
    %cst_180 = arith.constant 3.200000e+01 : f32
    %539 = vector.broadcast %cst_180 : f32 to vector<8x1xf32>
    %540 = arith.divf %538, %539 : vector<8x1xf32>
    %541 = vector.broadcast %533 : vector<8x1xf32> to vector<8x32xf32>
    %542 = arith.subf %527, %541 : vector<8x32xf32>
    %cst_181 = arith.constant 9.99999974E-6 : f32
    %543 = vector.broadcast %cst_181 : f32 to vector<8x1xf32>
    %544 = arith.addf %540, %543 : vector<8x1xf32>
    %545 = math.rsqrt %544 : vector<8x1xf32>
    %546 = vector.broadcast %545 : vector<8x1xf32> to vector<8x32xf32>
    %547 = arith.mulf %542, %546 : vector<8x32xf32>
    %548 = vector.broadcast %528 : vector<1x32xf32> to vector<8x32xf32>
    %549 = arith.mulf %547, %548 : vector<8x32xf32>
    %550 = vector.broadcast %529 : vector<1x32xf32> to vector<8x32xf32>
    %551 = arith.addf %549, %550 : vector<8x32xf32>
    %c120 = arith.constant 120 : index
    %c0_182 = arith.constant 0 : index
    %552 = vector.load %arg7[%c120, %c0_182] : memref<192x64xf32, #tpu.memory_space<vmem>>, vector<32x64xf32>
    %c152 = arith.constant 152 : index
    %c0_183 = arith.constant 0 : index
    %553 = vector.load %arg7[%c152, %c0_183] : memref<192x64xf32, #tpu.memory_space<vmem>>, vector<1x64xf32>
    %c504 = arith.constant 504 : index
    %c0_184 = arith.constant 0 : index
    %554 = vector.load %arg6[%c504, %c0_184] : memref<616x32xf32, #tpu.memory_space<vmem>>, vector<64x32xf32>
    %c568 = arith.constant 568 : index
    %c0_185 = arith.constant 0 : index
    %555 = vector.load %arg6[%c568, %c0_185] : memref<616x32xf32, #tpu.memory_space<vmem>>, vector<1x32xf32>
    %556 = arith.truncf %551 : vector<8x32xf32> to vector<8x32xbf16>
    %557 = arith.truncf %552 : vector<32x64xf32> to vector<32x64xbf16>
    %cst_186 = arith.constant dense<0.000000e+00> : vector<8x64xf32>
    %558 = tpu.matmul %556, %557, %cst_186 {dimension_numbers = #tpu.dot_dimension_numbers<[1], [0], [0], [1], [0, 0, 1, 1], [], []>} : vector<8x32xbf16>, vector<32x64xbf16>, vector<8x64xf32> -> vector<8x64xf32>
    %559 = vector.broadcast %553 : vector<1x64xf32> to vector<8x64xf32>
    %560 = arith.addf %558, %559 : vector<8x64xf32>
    %cst_187 = arith.constant 0.000000e+00 : f32
    %561 = vector.broadcast %cst_187 : f32 to vector<8x64xf32>
    %562 = arith.maximumf %560, %561 : vector<8x64xf32>
    %563 = arith.truncf %562 : vector<8x64xf32> to vector<8x64xbf16>
    %564 = arith.truncf %554 : vector<64x32xf32> to vector<64x32xbf16>
    %cst_188 = arith.constant dense<0.000000e+00> : vector<8x32xf32>
    %565 = tpu.matmul %563, %564, %cst_188 {dimension_numbers = #tpu.dot_dimension_numbers<[1], [0], [0], [1], [0, 0, 1, 1], [], []>} : vector<8x64xbf16>, vector<64x32xbf16>, vector<8x32xf32> -> vector<8x32xf32>
    %566 = vector.broadcast %555 : vector<1x32xf32> to vector<8x32xf32>
    %567 = arith.addf %565, %566 : vector<8x32xf32>
    %568 = arith.addf %551, %567 : vector<8x32xf32>
    %c571 = arith.constant 571 : index
    %c0_189 = arith.constant 0 : index
    %569 = vector.load %arg6[%c571, %c0_189] : memref<616x32xf32, #tpu.memory_space<vmem>>, vector<1x32xf32>
    %c572 = arith.constant 572 : index
    %c0_190 = arith.constant 0 : index
    %570 = vector.load %arg6[%c572, %c0_190] : memref<616x32xf32, #tpu.memory_space<vmem>>, vector<1x32xf32>
    %cst_191 = arith.constant dense<0.000000e+00> : vector<8xf32>
    %571 = vector.multi_reduction <add>, %568, %cst_191 [1] : vector<8x32xf32> to vector<8xf32>
    %572 = vector.shape_cast %571 : vector<8xf32> to vector<8x1xf32>
    %cst_192 = arith.constant 3.200000e+01 : f32
    %573 = vector.broadcast %cst_192 : f32 to vector<8x1xf32>
    %574 = arith.divf %572, %573 : vector<8x1xf32>
    %575 = vector.broadcast %574 : vector<8x1xf32> to vector<8x32xf32>
    %576 = arith.subf %568, %575 : vector<8x32xf32>
    %577 = arith.mulf %576, %576 : vector<8x32xf32>
    %cst_193 = arith.constant dense<0.000000e+00> : vector<8xf32>
    %578 = vector.multi_reduction <add>, %577, %cst_193 [1] : vector<8x32xf32> to vector<8xf32>
    %579 = vector.shape_cast %578 : vector<8xf32> to vector<8x1xf32>
    %cst_194 = arith.constant 3.200000e+01 : f32
    %580 = vector.broadcast %cst_194 : f32 to vector<8x1xf32>
    %581 = arith.divf %579, %580 : vector<8x1xf32>
    %582 = vector.broadcast %574 : vector<8x1xf32> to vector<8x32xf32>
    %583 = arith.subf %568, %582 : vector<8x32xf32>
    %cst_195 = arith.constant 9.99999974E-6 : f32
    %584 = vector.broadcast %cst_195 : f32 to vector<8x1xf32>
    %585 = arith.addf %581, %584 : vector<8x1xf32>
    %586 = math.rsqrt %585 : vector<8x1xf32>
    %587 = vector.broadcast %586 : vector<8x1xf32> to vector<8x32xf32>
    %588 = arith.mulf %583, %587 : vector<8x32xf32>
    %589 = vector.broadcast %569 : vector<1x32xf32> to vector<8x32xf32>
    %590 = arith.mulf %588, %589 : vector<8x32xf32>
    %591 = vector.broadcast %570 : vector<1x32xf32> to vector<8x32xf32>
    %592 = arith.addf %590, %591 : vector<8x32xf32>
    %c576 = arith.constant 576 : index
    %c0_196 = arith.constant 0 : index
    %593 = vector.load %arg6[%c576, %c0_196] : memref<616x32xf32, #tpu.memory_space<vmem>>, vector<32x32xf32>
    %594 = arith.truncf %592 : vector<8x32xf32> to vector<8x32xbf16>
    %595 = arith.truncf %593 : vector<32x32xf32> to vector<32x32xbf16>
    %cst_197 = arith.constant dense<0.000000e+00> : vector<8x32xf32>
    %596 = tpu.matmul %594, %595, %cst_197 {dimension_numbers = #tpu.dot_dimension_numbers<[1], [0], [0], [1], [0, 0, 1, 1], [], []>} : vector<8x32xbf16>, vector<32x32xbf16>, vector<8x32xf32> -> vector<8x32xf32>
    %c608 = arith.constant 608 : index
    %c0_198 = arith.constant 0 : index
    %597 = vector.load %arg6[%c608, %c0_198] : memref<616x32xf32, #tpu.memory_space<vmem>>, vector<1x32xf32>
    %598 = vector.broadcast %597 : vector<1x32xf32> to vector<8x32xf32>
    %599 = arith.addf %596, %598 : vector<8x32xf32>
    %600 = vector.extract_strided_slice %599 {offsets = [0, 0], sizes = [8, 8], strides = [1, 1]} : vector<8x32xf32> to vector<8x8xf32>
    %601 = vector.extract_strided_slice %599 {offsets = [0, 8], sizes = [8, 1], strides = [1, 1]} : vector<8x32xf32> to vector<8x1xf32>
    %c0_199 = arith.constant 0 : index
    %c0_200 = arith.constant 0 : index
    %c0_201 = arith.constant 0 : index
    %602 = vector.load %arg9[%c0_199, %c0_200, %c0_201] : memref<2x8x8xf32, #tpu.memory_space<vmem>>, vector<1x8x8xf32>
    %603 = vector.shape_cast %602 : vector<1x8x8xf32> to vector<8x8xf32>
    %604 = vector.shape_cast %600 : vector<8x8xf32> to vector<1x8x8xf32>
    tpu.vector_store %arg9[%c0_199, %c0_200, %c0_201], %604 {strides = array<i32>} : memref<2x8x8xf32, #tpu.memory_space<vmem>>, vector<1x8x8xf32>,
    %c0_202 = arith.constant 0 : index
    %c0_203 = arith.constant 0 : index
    %c0_204 = arith.constant 0 : index
    %605 = vector.load %arg10[%c0_202, %c0_203, %c0_204] : memref<2x8x1xf32, #tpu.memory_space<vmem>>, vector<1x8x1xf32>
    %606 = vector.shape_cast %605 : vector<1x8x1xf32> to vector<8x1xf32>
    %607 = vector.shape_cast %601 : vector<8x1xf32> to vector<1x8x1xf32>
    tpu.vector_store %arg10[%c0_202, %c0_203, %c0_204], %607 {strides = array<i32>} : memref<2x8x1xf32, #tpu.memory_space<vmem>>, vector<1x8x1xf32>,
    %c0_205 = arith.constant 0 : index
    %c0_206 = arith.constant 0 : index
    %c0_207 = arith.constant 0 : index
    %608 = vector.load %arg11[%c0_205, %c0_206, %c0_207] : memref<2x1x32xf32, #tpu.memory_space<vmem>>, vector<1x1x32xf32>
    %609 = vector.shape_cast %608 : vector<1x1x32xf32> to vector<1x32xf32>
    %610 = vector.shape_cast %213 : vector<1x32xf32> to vector<1x1x32xf32>
    tpu.vector_store %arg11[%c0_205, %c0_206, %c0_207], %610 {strides = array<i32>} : memref<2x1x32xf32, #tpu.memory_space<vmem>>, vector<1x1x32xf32>,
    %c0_208 = arith.constant 0 : index
    %c0_209 = arith.constant 0 : index
    %c0_210 = arith.constant 0 : index
    %611 = vector.load %arg12[%c0_208, %c0_209, %c0_210] : memref<2x1x32xf32, #tpu.memory_space<vmem>>, vector<1x1x32xf32>
    %612 = vector.shape_cast %611 : vector<1x1x32xf32> to vector<1x32xf32>
    %613 = vector.shape_cast %214 : vector<1x32xf32> to vector<1x1x32xf32>
    tpu.vector_store %arg12[%c0_208, %c0_209, %c0_210], %613 {strides = array<i32>} : memref<2x1x32xf32, #tpu.memory_space<vmem>>, vector<1x1x32xf32>,
    %c1 = arith.constant 1 : index
    %c0_211 = arith.constant 0 : index
    %c0_212 = arith.constant 0 : index
    %614 = vector.load %arg0[%c1, %c0_211, %c0_212] : memref<2x8x8xf32, #tpu.memory_space<vmem>>, vector<1x8x8xf32>
    %615 = vector.shape_cast %614 : vector<1x8x8xf32> to vector<8x8xf32>
    %c1_213 = arith.constant 1 : index
    %c0_214 = arith.constant 0 : index
    %c0_215 = arith.constant 0 : index
    %616 = vector.load %arg1[%c1_213, %c0_214, %c0_215] : memref<2x1x8xf32, #tpu.memory_space<vmem>>, vector<1x1x8xf32>
    %617 = vector.shape_cast %616 : vector<1x1x8xf32> to vector<1x8xf32>
    %c1_216 = arith.constant 1 : index
    %c0_217 = arith.constant 0 : index
    %c0_218 = arith.constant 0 : index
    %618 = vector.load %arg2[%c1_216, %c0_217, %c0_218] : memref<2x1x32xf32, #tpu.memory_space<vmem>>, vector<1x1x32xf32>
    %619 = vector.shape_cast %618 : vector<1x1x32xf32> to vector<1x32xf32>
    %c1_219 = arith.constant 1 : index
    %c0_220 = arith.constant 0 : index
    %c0_221 = arith.constant 0 : index
    %620 = vector.load %arg3[%c1_219, %c0_220, %c0_221] : memref<2x1x10xf32, #tpu.memory_space<vmem>>, vector<1x1x10xf32>
    %621 = vector.shape_cast %620 : vector<1x1x10xf32> to vector<1x10xf32>
    %c1_222 = arith.constant 1 : index
    %c0_223 = arith.constant 0 : index
    %c0_224 = arith.constant 0 : index
    %622 = vector.load %arg4[%c1_222, %c0_223, %c0_224] : memref<2x3x256xf32, #tpu.memory_space<vmem>>, vector<1x3x256xf32>
    %623 = vector.shape_cast %622 : vector<1x3x256xf32> to vector<3x256xf32>
    %c8_225 = arith.constant 8 : index
    %c0_226 = arith.constant 0 : index
    %624 = vector.load %arg6[%c8_225, %c0_226] : memref<616x32xf32, #tpu.memory_space<vmem>>, vector<8x32xf32>
    %625 = arith.truncf %615 : vector<8x8xf32> to vector<8x8xbf16>
    %626 = arith.truncf %624 : vector<8x32xf32> to vector<8x32xbf16>
    %cst_227 = arith.constant dense<0.000000e+00> : vector<8x32xf32>
    %627 = tpu.matmul %625, %626, %cst_227 {dimension_numbers = #tpu.dot_dimension_numbers<[1], [0], [0], [1], [0, 0, 1, 1], [], []>} : vector<8x8xbf16>, vector<8x32xbf16>, vector<8x32xf32> -> vector<8x32xf32>
    %c16_228 = arith.constant 16 : index
    %c0_229 = arith.constant 0 : index
    %628 = vector.load %arg6[%c16_228, %c0_229] : memref<616x32xf32, #tpu.memory_space<vmem>>, vector<1x32xf32>
    %629 = vector.broadcast %628 : vector<1x32xf32> to vector<8x32xf32>
    %630 = arith.addf %627, %629 : vector<8x32xf32>
    %c24_230 = arith.constant 24 : index
    %c0_231 = arith.constant 0 : index
    %631 = vector.load %arg6[%c24_230, %c0_231] : memref<616x32xf32, #tpu.memory_space<vmem>>, vector<8x32xf32>
    %632 = arith.truncf %617 : vector<1x8xf32> to vector<1x8xbf16>
    %633 = arith.truncf %631 : vector<8x32xf32> to vector<8x32xbf16>
    %cst_232 = arith.constant dense<0.000000e+00> : vector<1x32xf32>
    %634 = tpu.matmul %632, %633, %cst_232 {dimension_numbers = #tpu.dot_dimension_numbers<[1], [0], [0], [1], [0, 0, 1, 1], [], []>} : vector<1x8xbf16>, vector<8x32xbf16>, vector<1x32xf32> -> vector<1x32xf32>
    %c32_233 = arith.constant 32 : index
    %c0_234 = arith.constant 0 : index
    %635 = vector.load %arg6[%c32_233, %c0_234] : memref<616x32xf32, #tpu.memory_space<vmem>>, vector<1x32xf32>
    %636 = arith.addf %634, %635 : vector<1x32xf32>
    %c0_235 = arith.constant 0 : index
    %c0_236 = arith.constant 0 : index
    %637 = vector.load %arg6[%c0_235, %c0_236] : memref<616x32xf32, #tpu.memory_space<vmem>>, vector<1x32xf32>
    %638 = tpu.concatenate %637, %636, %630 in 0 : vector<1x32xf32>, vector<1x32xf32>, vector<8x32xf32> -> vector<10x32xf32>
    %c0_237 = arith.constant 0 : index
    %c0_238 = arith.constant 0 : index
    %639 = vector.load %arg8[%c0_237, %c0_238] : memref<64x96xf32, #tpu.memory_space<vmem>>, vector<32x96xf32>
    %c96_239 = arith.constant 96 : index
    %c0_240 = arith.constant 0 : index
    %640 = vector.load %arg6[%c96_239, %c0_240] : memref<616x32xf32, #tpu.memory_space<vmem>>, vector<10x32xf32>
    %c112_241 = arith.constant 112 : index
    %c0_242 = arith.constant 0 : index
    %641 = vector.load %arg6[%c112_241, %c0_242] : memref<616x32xf32, #tpu.memory_space<vmem>>, vector<10x32xf32>
    %c122_243 = arith.constant 122 : index
    %c0_244 = arith.constant 0 : index
    %642 = vector.load %arg6[%c122_243, %c0_244] : memref<616x32xf32, #tpu.memory_space<vmem>>, vector<1x32xf32>
    %c128_245 = arith.constant 128 : index
    %c0_246 = arith.constant 0 : index
    %643 = vector.load %arg6[%c128_245, %c0_246] : memref<616x32xf32, #tpu.memory_space<vmem>>, vector<32x32xf32>
    %c160_247 = arith.constant 160 : index
    %c0_248 = arith.constant 0 : index
    %644 = vector.load %arg6[%c160_247, %c0_248] : memref<616x32xf32, #tpu.memory_space<vmem>>, vector<1x32xf32>
    %645 = arith.truncf %638 : vector<10x32xf32> to vector<10x32xbf16>
    %646 = arith.truncf %639 : vector<32x96xf32> to vector<32x96xbf16>
    %cst_249 = arith.constant dense<0.000000e+00> : vector<10x96xf32>
    %647 = tpu.matmul %645, %646, %cst_249 {dimension_numbers = #tpu.dot_dimension_numbers<[1], [0], [0], [1], [0, 0, 1, 1], [], []>} : vector<10x32xbf16>, vector<32x96xbf16>, vector<10x96xf32> -> vector<10x96xf32>
    %648 = vector.extract_strided_slice %647 {offsets = [0, 0], sizes = [10, 32], strides = [1, 1]} : vector<10x96xf32> to vector<10x32xf32>
    %649 = arith.addf %648, %640 : vector<10x32xf32>
    %650 = vector.extract_strided_slice %647 {offsets = [0, 32], sizes = [10, 32], strides = [1, 1]} : vector<10x96xf32> to vector<10x32xf32>
    %651 = arith.addf %650, %641 : vector<10x32xf32>
    %652 = vector.extract_strided_slice %647 {offsets = [0, 64], sizes = [10, 32], strides = [1, 1]} : vector<10x96xf32> to vector<10x32xf32>
    %653 = vector.broadcast %642 : vector<1x32xf32> to vector<10x32xf32>
    %654 = arith.addf %652, %653 : vector<10x32xf32>
    %655 = vector.extract_strided_slice %649 {offsets = [0, 0], sizes = [10, 8], strides = [1, 1]} : vector<10x32xf32> to vector<10x8xf32>
    %656 = vector.extract_strided_slice %651 {offsets = [0, 0], sizes = [10, 8], strides = [1, 1]} : vector<10x32xf32> to vector<10x8xf32>
    %657 = arith.truncf %655 : vector<10x8xf32> to vector<10x8xbf16>
    %658 = arith.truncf %656 : vector<10x8xf32> to vector<10x8xbf16>
    %cst_250 = arith.constant dense<0.000000e+00> : vector<10x10xf32>
    %659 = tpu.matmul %657, %658, %cst_250 {dimension_numbers = #tpu.dot_dimension_numbers<[1], [1], [0], [0], [0, 0, 1, 0], [], []>} : vector<10x8xbf16>, vector<10x8xbf16>, vector<10x10xf32> -> vector<10x10xf32>
    %cst_251 = arith.constant 0.353553385 : f32
    %660 = vector.broadcast %cst_251 : f32 to vector<10x10xf32>
    %661 = arith.mulf %659, %660 : vector<10x10xf32>
    %662 = vector.broadcast %621 : vector<1x10xf32> to vector<10x10xf32>
    %663 = arith.addf %661, %662 : vector<10x10xf32>
    %cst_252 = arith.constant dense<0xFF800000> : vector<10xf32>
    %664 = vector.multi_reduction <maximumf>, %663, %cst_252 [1] : vector<10x10xf32> to vector<10xf32>
    %665 = vector.shape_cast %664 : vector<10xf32> to vector<10x1xf32>
    %666 = vector.broadcast %665 : vector<10x1xf32> to vector<10x10xf32>
    %667 = arith.subf %663, %666 : vector<10x10xf32>
    %668 = math.exp %667 : vector<10x10xf32>
    %cst_253 = arith.constant dense<0.000000e+00> : vector<10xf32>
    %669 = vector.multi_reduction <add>, %668, %cst_253 [1] : vector<10x10xf32> to vector<10xf32>
    %670 = vector.shape_cast %669 : vector<10xf32> to vector<10x1xf32>
    %671 = tpu.reciprocal %670 {approx = true} : vector<10x1xf32> -> vector<10x1xf32>
    %672 = vector.broadcast %671 : vector<10x1xf32> to vector<10x10xf32>
    %673 = arith.mulf %668, %672 : vector<10x10xf32>
    %674 = vector.extract_strided_slice %654 {offsets = [0, 0], sizes = [10, 8], strides = [1, 1]} : vector<10x32xf32> to vector<10x8xf32>
    %675 = arith.truncf %673 : vector<10x10xf32> to vector<10x10xbf16>
    %676 = arith.truncf %674 : vector<10x8xf32> to vector<10x8xbf16>
    %cst_254 = arith.constant dense<0.000000e+00> : vector<10x8xf32>
    %677 = tpu.matmul %675, %676, %cst_254 {dimension_numbers = #tpu.dot_dimension_numbers<[1], [0], [0], [1], [0, 0, 1, 1], [], []>} : vector<10x10xbf16>, vector<10x8xbf16>, vector<10x8xf32> -> vector<10x8xf32>
    %678 = vector.extract_strided_slice %649 {offsets = [0, 8], sizes = [10, 8], strides = [1, 1]} : vector<10x32xf32> to vector<10x8xf32>
    %679 = vector.extract_strided_slice %651 {offsets = [0, 8], sizes = [10, 8], strides = [1, 1]} : vector<10x32xf32> to vector<10x8xf32>
    %680 = arith.truncf %678 : vector<10x8xf32> to vector<10x8xbf16>
    %681 = arith.truncf %679 : vector<10x8xf32> to vector<10x8xbf16>
    %cst_255 = arith.constant dense<0.000000e+00> : vector<10x10xf32>
    %682 = tpu.matmul %680, %681, %cst_255 {dimension_numbers = #tpu.dot_dimension_numbers<[1], [1], [0], [0], [0, 0, 1, 0], [], []>} : vector<10x8xbf16>, vector<10x8xbf16>, vector<10x10xf32> -> vector<10x10xf32>
    %cst_256 = arith.constant 0.353553385 : f32
    %683 = vector.broadcast %cst_256 : f32 to vector<10x10xf32>
    %684 = arith.mulf %682, %683 : vector<10x10xf32>
    %685 = vector.broadcast %621 : vector<1x10xf32> to vector<10x10xf32>
    %686 = arith.addf %684, %685 : vector<10x10xf32>
    %cst_257 = arith.constant dense<0xFF800000> : vector<10xf32>
    %687 = vector.multi_reduction <maximumf>, %686, %cst_257 [1] : vector<10x10xf32> to vector<10xf32>
    %688 = vector.shape_cast %687 : vector<10xf32> to vector<10x1xf32>
    %689 = vector.broadcast %688 : vector<10x1xf32> to vector<10x10xf32>
    %690 = arith.subf %686, %689 : vector<10x10xf32>
    %691 = math.exp %690 : vector<10x10xf32>
    %cst_258 = arith.constant dense<0.000000e+00> : vector<10xf32>
    %692 = vector.multi_reduction <add>, %691, %cst_258 [1] : vector<10x10xf32> to vector<10xf32>
    %693 = vector.shape_cast %692 : vector<10xf32> to vector<10x1xf32>
    %694 = tpu.reciprocal %693 {approx = true} : vector<10x1xf32> -> vector<10x1xf32>
    %695 = vector.broadcast %694 : vector<10x1xf32> to vector<10x10xf32>
    %696 = arith.mulf %691, %695 : vector<10x10xf32>
    %697 = vector.extract_strided_slice %654 {offsets = [0, 8], sizes = [10, 8], strides = [1, 1]} : vector<10x32xf32> to vector<10x8xf32>
    %698 = arith.truncf %696 : vector<10x10xf32> to vector<10x10xbf16>
    %699 = arith.truncf %697 : vector<10x8xf32> to vector<10x8xbf16>
    %cst_259 = arith.constant dense<0.000000e+00> : vector<10x8xf32>
    %700 = tpu.matmul %698, %699, %cst_259 {dimension_numbers = #tpu.dot_dimension_numbers<[1], [0], [0], [1], [0, 0, 1, 1], [], []>} : vector<10x10xbf16>, vector<10x8xbf16>, vector<10x8xf32> -> vector<10x8xf32>
    %701 = vector.extract_strided_slice %649 {offsets = [0, 16], sizes = [10, 8], strides = [1, 1]} : vector<10x32xf32> to vector<10x8xf32>
    %702 = vector.extract_strided_slice %651 {offsets = [0, 16], sizes = [10, 8], strides = [1, 1]} : vector<10x32xf32> to vector<10x8xf32>
    %703 = arith.truncf %701 : vector<10x8xf32> to vector<10x8xbf16>
    %704 = arith.truncf %702 : vector<10x8xf32> to vector<10x8xbf16>
    %cst_260 = arith.constant dense<0.000000e+00> : vector<10x10xf32>
    %705 = tpu.matmul %703, %704, %cst_260 {dimension_numbers = #tpu.dot_dimension_numbers<[1], [1], [0], [0], [0, 0, 1, 0], [], []>} : vector<10x8xbf16>, vector<10x8xbf16>, vector<10x10xf32> -> vector<10x10xf32>
    %cst_261 = arith.constant 0.353553385 : f32
    %706 = vector.broadcast %cst_261 : f32 to vector<10x10xf32>
    %707 = arith.mulf %705, %706 : vector<10x10xf32>
    %708 = vector.broadcast %621 : vector<1x10xf32> to vector<10x10xf32>
    %709 = arith.addf %707, %708 : vector<10x10xf32>
    %cst_262 = arith.constant dense<0xFF800000> : vector<10xf32>
    %710 = vector.multi_reduction <maximumf>, %709, %cst_262 [1] : vector<10x10xf32> to vector<10xf32>
    %711 = vector.shape_cast %710 : vector<10xf32> to vector<10x1xf32>
    %712 = vector.broadcast %711 : vector<10x1xf32> to vector<10x10xf32>
    %713 = arith.subf %709, %712 : vector<10x10xf32>
    %714 = math.exp %713 : vector<10x10xf32>
    %cst_263 = arith.constant dense<0.000000e+00> : vector<10xf32>
    %715 = vector.multi_reduction <add>, %714, %cst_263 [1] : vector<10x10xf32> to vector<10xf32>
    %716 = vector.shape_cast %715 : vector<10xf32> to vector<10x1xf32>
    %717 = tpu.reciprocal %716 {approx = true} : vector<10x1xf32> -> vector<10x1xf32>
    %718 = vector.broadcast %717 : vector<10x1xf32> to vector<10x10xf32>
    %719 = arith.mulf %714, %718 : vector<10x10xf32>
    %720 = vector.extract_strided_slice %654 {offsets = [0, 16], sizes = [10, 8], strides = [1, 1]} : vector<10x32xf32> to vector<10x8xf32>
    %721 = arith.truncf %719 : vector<10x10xf32> to vector<10x10xbf16>
    %722 = arith.truncf %720 : vector<10x8xf32> to vector<10x8xbf16>
    %cst_264 = arith.constant dense<0.000000e+00> : vector<10x8xf32>
    %723 = tpu.matmul %721, %722, %cst_264 {dimension_numbers = #tpu.dot_dimension_numbers<[1], [0], [0], [1], [0, 0, 1, 1], [], []>} : vector<10x10xbf16>, vector<10x8xbf16>, vector<10x8xf32> -> vector<10x8xf32>
    %724 = vector.extract_strided_slice %649 {offsets = [0, 24], sizes = [10, 8], strides = [1, 1]} : vector<10x32xf32> to vector<10x8xf32>
    %725 = vector.extract_strided_slice %651 {offsets = [0, 24], sizes = [10, 8], strides = [1, 1]} : vector<10x32xf32> to vector<10x8xf32>
    %726 = arith.truncf %724 : vector<10x8xf32> to vector<10x8xbf16>
    %727 = arith.truncf %725 : vector<10x8xf32> to vector<10x8xbf16>
    %cst_265 = arith.constant dense<0.000000e+00> : vector<10x10xf32>
    %728 = tpu.matmul %726, %727, %cst_265 {dimension_numbers = #tpu.dot_dimension_numbers<[1], [1], [0], [0], [0, 0, 1, 0], [], []>} : vector<10x8xbf16>, vector<10x8xbf16>, vector<10x10xf32> -> vector<10x10xf32>
    %cst_266 = arith.constant 0.353553385 : f32
    %729 = vector.broadcast %cst_266 : f32 to vector<10x10xf32>
    %730 = arith.mulf %728, %729 : vector<10x10xf32>
    %731 = vector.broadcast %621 : vector<1x10xf32> to vector<10x10xf32>
    %732 = arith.addf %730, %731 : vector<10x10xf32>
    %cst_267 = arith.constant dense<0xFF800000> : vector<10xf32>
    %733 = vector.multi_reduction <maximumf>, %732, %cst_267 [1] : vector<10x10xf32> to vector<10xf32>
    %734 = vector.shape_cast %733 : vector<10xf32> to vector<10x1xf32>
    %735 = vector.broadcast %734 : vector<10x1xf32> to vector<10x10xf32>
    %736 = arith.subf %732, %735 : vector<10x10xf32>
    %737 = math.exp %736 : vector<10x10xf32>
    %cst_268 = arith.constant dense<0.000000e+00> : vector<10xf32>
    %738 = vector.multi_reduction <add>, %737, %cst_268 [1] : vector<10x10xf32> to vector<10xf32>
    %739 = vector.shape_cast %738 : vector<10xf32> to vector<10x1xf32>
    %740 = tpu.reciprocal %739 {approx = true} : vector<10x1xf32> -> vector<10x1xf32>
    %741 = vector.broadcast %740 : vector<10x1xf32> to vector<10x10xf32>
    %742 = arith.mulf %737, %741 : vector<10x10xf32>
    %743 = vector.extract_strided_slice %654 {offsets = [0, 24], sizes = [10, 8], strides = [1, 1]} : vector<10x32xf32> to vector<10x8xf32>
    %744 = arith.truncf %742 : vector<10x10xf32> to vector<10x10xbf16>
    %745 = arith.truncf %743 : vector<10x8xf32> to vector<10x8xbf16>
    %cst_269 = arith.constant dense<0.000000e+00> : vector<10x8xf32>
    %746 = tpu.matmul %744, %745, %cst_269 {dimension_numbers = #tpu.dot_dimension_numbers<[1], [0], [0], [1], [0, 0, 1, 1], [], []>} : vector<10x10xbf16>, vector<10x8xbf16>, vector<10x8xf32> -> vector<10x8xf32>
    %747 = tpu.concatenate %677, %700, %723, %746 in 1 : vector<10x8xf32>, vector<10x8xf32>, vector<10x8xf32>, vector<10x8xf32> -> vector<10x32xf32>
    %748 = arith.truncf %747 : vector<10x32xf32> to vector<10x32xbf16>
    %749 = arith.truncf %643 : vector<32x32xf32> to vector<32x32xbf16>
    %cst_270 = arith.constant dense<0.000000e+00> : vector<10x32xf32>
    %750 = tpu.matmul %748, %749, %cst_270 {dimension_numbers = #tpu.dot_dimension_numbers<[1], [0], [0], [1], [0, 0, 1, 1], [], []>} : vector<10x32xbf16>, vector<32x32xbf16>, vector<10x32xf32> -> vector<10x32xf32>
    %751 = vector.broadcast %644 : vector<1x32xf32> to vector<10x32xf32>
    %752 = arith.addf %750, %751 : vector<10x32xf32>
    %753 = arith.addf %638, %752 : vector<10x32xf32>
    %c233_271 = arith.constant 233 : index
    %c0_272 = arith.constant 0 : index
    %754 = vector.load %arg6[%c233_271, %c0_272] : memref<616x32xf32, #tpu.memory_space<vmem>>, vector<1x32xf32>
    %c234_273 = arith.constant 234 : index
    %c0_274 = arith.constant 0 : index
    %755 = vector.load %arg6[%c234_273, %c0_274] : memref<616x32xf32, #tpu.memory_space<vmem>>, vector<1x32xf32>
    %cst_275 = arith.constant dense<0.000000e+00> : vector<10xf32>
    %756 = vector.multi_reduction <add>, %753, %cst_275 [1] : vector<10x32xf32> to vector<10xf32>
    %757 = vector.shape_cast %756 : vector<10xf32> to vector<10x1xf32>
    %cst_276 = arith.constant 3.200000e+01 : f32
    %758 = vector.broadcast %cst_276 : f32 to vector<10x1xf32>
    %759 = arith.divf %757, %758 : vector<10x1xf32>
    %760 = vector.broadcast %759 : vector<10x1xf32> to vector<10x32xf32>
    %761 = arith.subf %753, %760 : vector<10x32xf32>
    %762 = arith.mulf %761, %761 : vector<10x32xf32>
    %cst_277 = arith.constant dense<0.000000e+00> : vector<10xf32>
    %763 = vector.multi_reduction <add>, %762, %cst_277 [1] : vector<10x32xf32> to vector<10xf32>
    %764 = vector.shape_cast %763 : vector<10xf32> to vector<10x1xf32>
    %cst_278 = arith.constant 3.200000e+01 : f32
    %765 = vector.broadcast %cst_278 : f32 to vector<10x1xf32>
    %766 = arith.divf %764, %765 : vector<10x1xf32>
    %767 = vector.broadcast %759 : vector<10x1xf32> to vector<10x32xf32>
    %768 = arith.subf %753, %767 : vector<10x32xf32>
    %cst_279 = arith.constant 9.99999974E-6 : f32
    %769 = vector.broadcast %cst_279 : f32 to vector<10x1xf32>
    %770 = arith.addf %766, %769 : vector<10x1xf32>
    %771 = math.rsqrt %770 : vector<10x1xf32>
    %772 = vector.broadcast %771 : vector<10x1xf32> to vector<10x32xf32>
    %773 = arith.mulf %768, %772 : vector<10x32xf32>
    %774 = vector.broadcast %754 : vector<1x32xf32> to vector<10x32xf32>
    %775 = arith.mulf %773, %774 : vector<10x32xf32>
    %776 = vector.broadcast %755 : vector<1x32xf32> to vector<10x32xf32>
    %777 = arith.addf %775, %776 : vector<10x32xf32>
    %c40_280 = arith.constant 40 : index
    %c0_281 = arith.constant 0 : index
    %778 = vector.load %arg7[%c40_280, %c0_281] : memref<192x64xf32, #tpu.memory_space<vmem>>, vector<32x64xf32>
    %c72_282 = arith.constant 72 : index
    %c0_283 = arith.constant 0 : index
    %779 = vector.load %arg7[%c72_282, %c0_283] : memref<192x64xf32, #tpu.memory_space<vmem>>, vector<1x64xf32>
    %c168_284 = arith.constant 168 : index
    %c0_285 = arith.constant 0 : index
    %780 = vector.load %arg6[%c168_284, %c0_285] : memref<616x32xf32, #tpu.memory_space<vmem>>, vector<64x32xf32>
    %c232_286 = arith.constant 232 : index
    %c0_287 = arith.constant 0 : index
    %781 = vector.load %arg6[%c232_286, %c0_287] : memref<616x32xf32, #tpu.memory_space<vmem>>, vector<1x32xf32>
    %782 = arith.truncf %777 : vector<10x32xf32> to vector<10x32xbf16>
    %783 = arith.truncf %778 : vector<32x64xf32> to vector<32x64xbf16>
    %cst_288 = arith.constant dense<0.000000e+00> : vector<10x64xf32>
    %784 = tpu.matmul %782, %783, %cst_288 {dimension_numbers = #tpu.dot_dimension_numbers<[1], [0], [0], [1], [0, 0, 1, 1], [], []>} : vector<10x32xbf16>, vector<32x64xbf16>, vector<10x64xf32> -> vector<10x64xf32>
    %785 = vector.broadcast %779 : vector<1x64xf32> to vector<10x64xf32>
    %786 = arith.addf %784, %785 : vector<10x64xf32>
    %cst_289 = arith.constant 0.000000e+00 : f32
    %787 = vector.broadcast %cst_289 : f32 to vector<10x64xf32>
    %788 = arith.maximumf %786, %787 : vector<10x64xf32>
    %789 = arith.truncf %788 : vector<10x64xf32> to vector<10x64xbf16>
    %790 = arith.truncf %780 : vector<64x32xf32> to vector<64x32xbf16>
    %cst_290 = arith.constant dense<0.000000e+00> : vector<10x32xf32>
    %791 = tpu.matmul %789, %790, %cst_290 {dimension_numbers = #tpu.dot_dimension_numbers<[1], [0], [0], [1], [0, 0, 1, 1], [], []>} : vector<10x64xbf16>, vector<64x32xbf16>, vector<10x32xf32> -> vector<10x32xf32>
    %792 = vector.broadcast %781 : vector<1x32xf32> to vector<10x32xf32>
    %793 = arith.addf %791, %792 : vector<10x32xf32>
    %794 = arith.addf %777, %793 : vector<10x32xf32>
    %c235_291 = arith.constant 235 : index
    %c0_292 = arith.constant 0 : index
    %795 = vector.load %arg6[%c235_291, %c0_292] : memref<616x32xf32, #tpu.memory_space<vmem>>, vector<1x32xf32>
    %c236_293 = arith.constant 236 : index
    %c0_294 = arith.constant 0 : index
    %796 = vector.load %arg6[%c236_293, %c0_294] : memref<616x32xf32, #tpu.memory_space<vmem>>, vector<1x32xf32>
    %cst_295 = arith.constant dense<0.000000e+00> : vector<10xf32>
    %797 = vector.multi_reduction <add>, %794, %cst_295 [1] : vector<10x32xf32> to vector<10xf32>
    %798 = vector.shape_cast %797 : vector<10xf32> to vector<10x1xf32>
    %cst_296 = arith.constant 3.200000e+01 : f32
    %799 = vector.broadcast %cst_296 : f32 to vector<10x1xf32>
    %800 = arith.divf %798, %799 : vector<10x1xf32>
    %801 = vector.broadcast %800 : vector<10x1xf32> to vector<10x32xf32>
    %802 = arith.subf %794, %801 : vector<10x32xf32>
    %803 = arith.mulf %802, %802 : vector<10x32xf32>
    %cst_297 = arith.constant dense<0.000000e+00> : vector<10xf32>
    %804 = vector.multi_reduction <add>, %803, %cst_297 [1] : vector<10x32xf32> to vector<10xf32>
    %805 = vector.shape_cast %804 : vector<10xf32> to vector<10x1xf32>
    %cst_298 = arith.constant 3.200000e+01 : f32
    %806 = vector.broadcast %cst_298 : f32 to vector<10x1xf32>
    %807 = arith.divf %805, %806 : vector<10x1xf32>
    %808 = vector.broadcast %800 : vector<10x1xf32> to vector<10x32xf32>
    %809 = arith.subf %794, %808 : vector<10x32xf32>
    %cst_299 = arith.constant 9.99999974E-6 : f32
    %810 = vector.broadcast %cst_299 : f32 to vector<10x1xf32>
    %811 = arith.addf %807, %810 : vector<10x1xf32>
    %812 = math.rsqrt %811 : vector<10x1xf32>
    %813 = vector.broadcast %812 : vector<10x1xf32> to vector<10x32xf32>
    %814 = arith.mulf %809, %813 : vector<10x32xf32>
    %815 = vector.broadcast %795 : vector<1x32xf32> to vector<10x32xf32>
    %816 = arith.mulf %814, %815 : vector<10x32xf32>
    %817 = vector.broadcast %796 : vector<1x32xf32> to vector<10x32xf32>
    %818 = arith.addf %816, %817 : vector<10x32xf32>
    %819 = vector.extract_strided_slice %818 {offsets = [0, 0], sizes = [1, 32], strides = [1, 1]} : vector<10x32xf32> to vector<1x32xf32>
    %c0_300 = arith.constant 0 : index
    %c0_301 = arith.constant 0 : index
    %820 = vector.load %arg7[%c0_300, %c0_301] : memref<192x64xf32, #tpu.memory_space<vmem>>, vector<32x64xf32>
    %821 = arith.truncf %819 : vector<1x32xf32> to vector<1x32xbf16>
    %822 = arith.truncf %820 : vector<32x64xf32> to vector<32x64xbf16>
    %cst_302 = arith.constant dense<0.000000e+00> : vector<1x64xf32>
    %823 = tpu.matmul %821, %822, %cst_302 {dimension_numbers = #tpu.dot_dimension_numbers<[1], [0], [0], [1], [0, 0, 1, 1], [], []>} : vector<1x32xbf16>, vector<32x64xbf16>, vector<1x64xf32> -> vector<1x64xf32>
    %c32_303 = arith.constant 32 : index
    %c0_304 = arith.constant 0 : index
    %824 = vector.load %arg7[%c32_303, %c0_304] : memref<192x64xf32, #tpu.memory_space<vmem>>, vector<1x64xf32>
    %825 = arith.addf %823, %824 : vector<1x64xf32>
    %826 = vector.extract_strided_slice %825 {offsets = [0, 0], sizes = [1, 32], strides = [1, 1]} : vector<1x64xf32> to vector<1x32xf32>
    %827 = vector.extract_strided_slice %825 {offsets = [0, 32], sizes = [1, 32], strides = [1, 1]} : vector<1x64xf32> to vector<1x32xf32>
    %cst_305 = arith.constant 5.000000e-01 : f32
    %828 = vector.broadcast %cst_305 : f32 to vector<1x32xf32>
    %829 = arith.mulf %827, %828 : vector<1x32xf32>
    %830 = math.exp %829 : vector<1x32xf32>
    %831 = arith.mulf %830, %619 : vector<1x32xf32>
    %832 = arith.addf %826, %831 : vector<1x32xf32>
    %c40_306 = arith.constant 40 : index
    %c0_307 = arith.constant 0 : index
    %833 = vector.load %arg6[%c40_306, %c0_307] : memref<616x32xf32, #tpu.memory_space<vmem>>, vector<32x32xf32>
    %834 = arith.truncf %832 : vector<1x32xf32> to vector<1x32xbf16>
    %835 = arith.truncf %833 : vector<32x32xf32> to vector<32x32xbf16>
    %cst_308 = arith.constant dense<0.000000e+00> : vector<1x32xf32>
    %836 = tpu.matmul %834, %835, %cst_308 {dimension_numbers = #tpu.dot_dimension_numbers<[1], [0], [0], [1], [0, 0, 1, 1], [], []>} : vector<1x32xbf16>, vector<32x32xbf16>, vector<1x32xf32> -> vector<1x32xf32>
    %c72_309 = arith.constant 72 : index
    %c0_310 = arith.constant 0 : index
    %837 = vector.load %arg6[%c72_309, %c0_310] : memref<616x32xf32, #tpu.memory_space<vmem>>, vector<1x32xf32>
    %838 = arith.addf %836, %837 : vector<1x32xf32>
    %839 = arith.truncf %0 : vector<16x256xf32> to vector<16x256xbf16>
    %840 = arith.truncf %623 : vector<3x256xf32> to vector<3x256xbf16>
    %cst_311 = arith.constant dense<0.000000e+00> : vector<16x3xf32>
    %841 = tpu.matmul %839, %840, %cst_311 {dimension_numbers = #tpu.dot_dimension_numbers<[1], [1], [0], [0], [0, 0, 1, 0], [], []>} : vector<16x256xbf16>, vector<3x256xbf16>, vector<16x3xf32> -> vector<16x3xf32>
    %c73_312 = arith.constant 73 : index
    %c0_313 = arith.constant 0 : index
    %842 = vector.load %arg6[%c73_312, %c0_313] : memref<616x32xf32, #tpu.memory_space<vmem>>, vector<3x32xf32>
    %843 = arith.truncf %841 : vector<16x3xf32> to vector<16x3xbf16>
    %844 = arith.truncf %842 : vector<3x32xf32> to vector<3x32xbf16>
    %cst_314 = arith.constant dense<0.000000e+00> : vector<16x32xf32>
    %845 = tpu.matmul %843, %844, %cst_314 {dimension_numbers = #tpu.dot_dimension_numbers<[1], [0], [0], [1], [0, 0, 1, 1], [], []>} : vector<16x3xbf16>, vector<3x32xbf16>, vector<16x32xf32> -> vector<16x32xf32>
    %c76_315 = arith.constant 76 : index
    %c0_316 = arith.constant 0 : index
    %846 = vector.load %arg6[%c76_315, %c0_316] : memref<616x32xf32, #tpu.memory_space<vmem>>, vector<1x32xf32>
    %847 = vector.broadcast %846 : vector<1x32xf32> to vector<16x32xf32>
    %848 = arith.addf %845, %847 : vector<16x32xf32>
    %c80_317 = arith.constant 80 : index
    %c0_318 = arith.constant 0 : index
    %849 = vector.load %arg6[%c80_317, %c0_318] : memref<616x32xf32, #tpu.memory_space<vmem>>, vector<8x32xf32>
    %850 = arith.truncf %617 : vector<1x8xf32> to vector<1x8xbf16>
    %851 = arith.truncf %849 : vector<8x32xf32> to vector<8x32xbf16>
    %cst_319 = arith.constant dense<0.000000e+00> : vector<1x32xf32>
    %852 = tpu.matmul %850, %851, %cst_319 {dimension_numbers = #tpu.dot_dimension_numbers<[1], [0], [0], [1], [0, 0, 1, 1], [], []>} : vector<1x8xbf16>, vector<8x32xbf16>, vector<1x32xf32> -> vector<1x32xf32>
    %c88_320 = arith.constant 88 : index
    %c0_321 = arith.constant 0 : index
    %853 = vector.load %arg6[%c88_320, %c0_321] : memref<616x32xf32, #tpu.memory_space<vmem>>, vector<1x32xf32>
    %854 = arith.addf %852, %853 : vector<1x32xf32>
    %855 = tpu.concatenate %838, %854, %848 in 0 : vector<1x32xf32>, vector<1x32xf32>, vector<16x32xf32> -> vector<18x32xf32>
    %c32_322 = arith.constant 32 : index
    %c0_323 = arith.constant 0 : index
    %856 = vector.load %arg8[%c32_322, %c0_323] : memref<64x96xf32, #tpu.memory_space<vmem>>, vector<32x96xf32>
    %c240_324 = arith.constant 240 : index
    %c0_325 = arith.constant 0 : index
    %857 = vector.load %arg6[%c240_324, %c0_325] : memref<616x32xf32, #tpu.memory_space<vmem>>, vector<18x32xf32>
    %c264_326 = arith.constant 264 : index
    %c0_327 = arith.constant 0 : index
    %858 = vector.load %arg6[%c264_326, %c0_327] : memref<616x32xf32, #tpu.memory_space<vmem>>, vector<18x32xf32>
    %c282_328 = arith.constant 282 : index
    %c0_329 = arith.constant 0 : index
    %859 = vector.load %arg6[%c282_328, %c0_329] : memref<616x32xf32, #tpu.memory_space<vmem>>, vector<1x32xf32>
    %c288_330 = arith.constant 288 : index
    %c0_331 = arith.constant 0 : index
    %860 = vector.load %arg6[%c288_330, %c0_331] : memref<616x32xf32, #tpu.memory_space<vmem>>, vector<32x32xf32>
    %c320_332 = arith.constant 320 : index
    %c0_333 = arith.constant 0 : index
    %861 = vector.load %arg6[%c320_332, %c0_333] : memref<616x32xf32, #tpu.memory_space<vmem>>, vector<1x32xf32>
    %862 = arith.truncf %855 : vector<18x32xf32> to vector<18x32xbf16>
    %863 = arith.truncf %856 : vector<32x96xf32> to vector<32x96xbf16>
    %cst_334 = arith.constant dense<0.000000e+00> : vector<18x96xf32>
    %864 = tpu.matmul %862, %863, %cst_334 {dimension_numbers = #tpu.dot_dimension_numbers<[1], [0], [0], [1], [0, 0, 1, 1], [], []>} : vector<18x32xbf16>, vector<32x96xbf16>, vector<18x96xf32> -> vector<18x96xf32>
    %865 = vector.extract_strided_slice %864 {offsets = [0, 0], sizes = [18, 32], strides = [1, 1]} : vector<18x96xf32> to vector<18x32xf32>
    %866 = arith.addf %865, %857 : vector<18x32xf32>
    %867 = vector.extract_strided_slice %864 {offsets = [0, 32], sizes = [18, 32], strides = [1, 1]} : vector<18x96xf32> to vector<18x32xf32>
    %868 = arith.addf %867, %858 : vector<18x32xf32>
    %869 = vector.extract_strided_slice %864 {offsets = [0, 64], sizes = [18, 32], strides = [1, 1]} : vector<18x96xf32> to vector<18x32xf32>
    %870 = vector.broadcast %859 : vector<1x32xf32> to vector<18x32xf32>
    %871 = arith.addf %869, %870 : vector<18x32xf32>
    %872 = vector.extract_strided_slice %866 {offsets = [0, 0], sizes = [18, 8], strides = [1, 1]} : vector<18x32xf32> to vector<18x8xf32>
    %873 = vector.extract_strided_slice %868 {offsets = [0, 0], sizes = [18, 8], strides = [1, 1]} : vector<18x32xf32> to vector<18x8xf32>
    %874 = arith.truncf %872 : vector<18x8xf32> to vector<18x8xbf16>
    %875 = arith.truncf %873 : vector<18x8xf32> to vector<18x8xbf16>
    %cst_335 = arith.constant dense<0.000000e+00> : vector<18x18xf32>
    %876 = tpu.matmul %874, %875, %cst_335 {dimension_numbers = #tpu.dot_dimension_numbers<[1], [1], [0], [0], [0, 0, 1, 0], [], []>} : vector<18x8xbf16>, vector<18x8xbf16>, vector<18x18xf32> -> vector<18x18xf32>
    %cst_336 = arith.constant 0.353553385 : f32
    %877 = vector.broadcast %cst_336 : f32 to vector<18x18xf32>
    %878 = arith.mulf %876, %877 : vector<18x18xf32>
    %cst_337 = arith.constant dense<0xFF800000> : vector<18xf32>
    %879 = vector.multi_reduction <maximumf>, %878, %cst_337 [1] : vector<18x18xf32> to vector<18xf32>
    %880 = vector.shape_cast %879 : vector<18xf32> to vector<18x1xf32>
    %881 = vector.broadcast %880 : vector<18x1xf32> to vector<18x18xf32>
    %882 = arith.subf %878, %881 : vector<18x18xf32>
    %883 = math.exp %882 : vector<18x18xf32>
    %cst_338 = arith.constant dense<0.000000e+00> : vector<18xf32>
    %884 = vector.multi_reduction <add>, %883, %cst_338 [1] : vector<18x18xf32> to vector<18xf32>
    %885 = vector.shape_cast %884 : vector<18xf32> to vector<18x1xf32>
    %886 = tpu.reciprocal %885 {approx = true} : vector<18x1xf32> -> vector<18x1xf32>
    %887 = vector.broadcast %886 : vector<18x1xf32> to vector<18x18xf32>
    %888 = arith.mulf %883, %887 : vector<18x18xf32>
    %889 = vector.extract_strided_slice %871 {offsets = [0, 0], sizes = [18, 8], strides = [1, 1]} : vector<18x32xf32> to vector<18x8xf32>
    %890 = arith.truncf %888 : vector<18x18xf32> to vector<18x18xbf16>
    %891 = arith.truncf %889 : vector<18x8xf32> to vector<18x8xbf16>
    %cst_339 = arith.constant dense<0.000000e+00> : vector<18x8xf32>
    %892 = tpu.matmul %890, %891, %cst_339 {dimension_numbers = #tpu.dot_dimension_numbers<[1], [0], [0], [1], [0, 0, 1, 1], [], []>} : vector<18x18xbf16>, vector<18x8xbf16>, vector<18x8xf32> -> vector<18x8xf32>
    %893 = vector.extract_strided_slice %866 {offsets = [0, 8], sizes = [18, 8], strides = [1, 1]} : vector<18x32xf32> to vector<18x8xf32>
    %894 = vector.extract_strided_slice %868 {offsets = [0, 8], sizes = [18, 8], strides = [1, 1]} : vector<18x32xf32> to vector<18x8xf32>
    %895 = arith.truncf %893 : vector<18x8xf32> to vector<18x8xbf16>
    %896 = arith.truncf %894 : vector<18x8xf32> to vector<18x8xbf16>
    %cst_340 = arith.constant dense<0.000000e+00> : vector<18x18xf32>
    %897 = tpu.matmul %895, %896, %cst_340 {dimension_numbers = #tpu.dot_dimension_numbers<[1], [1], [0], [0], [0, 0, 1, 0], [], []>} : vector<18x8xbf16>, vector<18x8xbf16>, vector<18x18xf32> -> vector<18x18xf32>
    %cst_341 = arith.constant 0.353553385 : f32
    %898 = vector.broadcast %cst_341 : f32 to vector<18x18xf32>
    %899 = arith.mulf %897, %898 : vector<18x18xf32>
    %cst_342 = arith.constant dense<0xFF800000> : vector<18xf32>
    %900 = vector.multi_reduction <maximumf>, %899, %cst_342 [1] : vector<18x18xf32> to vector<18xf32>
    %901 = vector.shape_cast %900 : vector<18xf32> to vector<18x1xf32>
    %902 = vector.broadcast %901 : vector<18x1xf32> to vector<18x18xf32>
    %903 = arith.subf %899, %902 : vector<18x18xf32>
    %904 = math.exp %903 : vector<18x18xf32>
    %cst_343 = arith.constant dense<0.000000e+00> : vector<18xf32>
    %905 = vector.multi_reduction <add>, %904, %cst_343 [1] : vector<18x18xf32> to vector<18xf32>
    %906 = vector.shape_cast %905 : vector<18xf32> to vector<18x1xf32>
    %907 = tpu.reciprocal %906 {approx = true} : vector<18x1xf32> -> vector<18x1xf32>
    %908 = vector.broadcast %907 : vector<18x1xf32> to vector<18x18xf32>
    %909 = arith.mulf %904, %908 : vector<18x18xf32>
    %910 = vector.extract_strided_slice %871 {offsets = [0, 8], sizes = [18, 8], strides = [1, 1]} : vector<18x32xf32> to vector<18x8xf32>
    %911 = arith.truncf %909 : vector<18x18xf32> to vector<18x18xbf16>
    %912 = arith.truncf %910 : vector<18x8xf32> to vector<18x8xbf16>
    %cst_344 = arith.constant dense<0.000000e+00> : vector<18x8xf32>
    %913 = tpu.matmul %911, %912, %cst_344 {dimension_numbers = #tpu.dot_dimension_numbers<[1], [0], [0], [1], [0, 0, 1, 1], [], []>} : vector<18x18xbf16>, vector<18x8xbf16>, vector<18x8xf32> -> vector<18x8xf32>
    %914 = vector.extract_strided_slice %866 {offsets = [0, 16], sizes = [18, 8], strides = [1, 1]} : vector<18x32xf32> to vector<18x8xf32>
    %915 = vector.extract_strided_slice %868 {offsets = [0, 16], sizes = [18, 8], strides = [1, 1]} : vector<18x32xf32> to vector<18x8xf32>
    %916 = arith.truncf %914 : vector<18x8xf32> to vector<18x8xbf16>
    %917 = arith.truncf %915 : vector<18x8xf32> to vector<18x8xbf16>
    %cst_345 = arith.constant dense<0.000000e+00> : vector<18x18xf32>
    %918 = tpu.matmul %916, %917, %cst_345 {dimension_numbers = #tpu.dot_dimension_numbers<[1], [1], [0], [0], [0, 0, 1, 0], [], []>} : vector<18x8xbf16>, vector<18x8xbf16>, vector<18x18xf32> -> vector<18x18xf32>
    %cst_346 = arith.constant 0.353553385 : f32
    %919 = vector.broadcast %cst_346 : f32 to vector<18x18xf32>
    %920 = arith.mulf %918, %919 : vector<18x18xf32>
    %cst_347 = arith.constant dense<0xFF800000> : vector<18xf32>
    %921 = vector.multi_reduction <maximumf>, %920, %cst_347 [1] : vector<18x18xf32> to vector<18xf32>
    %922 = vector.shape_cast %921 : vector<18xf32> to vector<18x1xf32>
    %923 = vector.broadcast %922 : vector<18x1xf32> to vector<18x18xf32>
    %924 = arith.subf %920, %923 : vector<18x18xf32>
    %925 = math.exp %924 : vector<18x18xf32>
    %cst_348 = arith.constant dense<0.000000e+00> : vector<18xf32>
    %926 = vector.multi_reduction <add>, %925, %cst_348 [1] : vector<18x18xf32> to vector<18xf32>
    %927 = vector.shape_cast %926 : vector<18xf32> to vector<18x1xf32>
    %928 = tpu.reciprocal %927 {approx = true} : vector<18x1xf32> -> vector<18x1xf32>
    %929 = vector.broadcast %928 : vector<18x1xf32> to vector<18x18xf32>
    %930 = arith.mulf %925, %929 : vector<18x18xf32>
    %931 = vector.extract_strided_slice %871 {offsets = [0, 16], sizes = [18, 8], strides = [1, 1]} : vector<18x32xf32> to vector<18x8xf32>
    %932 = arith.truncf %930 : vector<18x18xf32> to vector<18x18xbf16>
    %933 = arith.truncf %931 : vector<18x8xf32> to vector<18x8xbf16>
    %cst_349 = arith.constant dense<0.000000e+00> : vector<18x8xf32>
    %934 = tpu.matmul %932, %933, %cst_349 {dimension_numbers = #tpu.dot_dimension_numbers<[1], [0], [0], [1], [0, 0, 1, 1], [], []>} : vector<18x18xbf16>, vector<18x8xbf16>, vector<18x8xf32> -> vector<18x8xf32>
    %935 = vector.extract_strided_slice %866 {offsets = [0, 24], sizes = [18, 8], strides = [1, 1]} : vector<18x32xf32> to vector<18x8xf32>
    %936 = vector.extract_strided_slice %868 {offsets = [0, 24], sizes = [18, 8], strides = [1, 1]} : vector<18x32xf32> to vector<18x8xf32>
    %937 = arith.truncf %935 : vector<18x8xf32> to vector<18x8xbf16>
    %938 = arith.truncf %936 : vector<18x8xf32> to vector<18x8xbf16>
    %cst_350 = arith.constant dense<0.000000e+00> : vector<18x18xf32>
    %939 = tpu.matmul %937, %938, %cst_350 {dimension_numbers = #tpu.dot_dimension_numbers<[1], [1], [0], [0], [0, 0, 1, 0], [], []>} : vector<18x8xbf16>, vector<18x8xbf16>, vector<18x18xf32> -> vector<18x18xf32>
    %cst_351 = arith.constant 0.353553385 : f32
    %940 = vector.broadcast %cst_351 : f32 to vector<18x18xf32>
    %941 = arith.mulf %939, %940 : vector<18x18xf32>
    %cst_352 = arith.constant dense<0xFF800000> : vector<18xf32>
    %942 = vector.multi_reduction <maximumf>, %941, %cst_352 [1] : vector<18x18xf32> to vector<18xf32>
    %943 = vector.shape_cast %942 : vector<18xf32> to vector<18x1xf32>
    %944 = vector.broadcast %943 : vector<18x1xf32> to vector<18x18xf32>
    %945 = arith.subf %941, %944 : vector<18x18xf32>
    %946 = math.exp %945 : vector<18x18xf32>
    %cst_353 = arith.constant dense<0.000000e+00> : vector<18xf32>
    %947 = vector.multi_reduction <add>, %946, %cst_353 [1] : vector<18x18xf32> to vector<18xf32>
    %948 = vector.shape_cast %947 : vector<18xf32> to vector<18x1xf32>
    %949 = tpu.reciprocal %948 {approx = true} : vector<18x1xf32> -> vector<18x1xf32>
    %950 = vector.broadcast %949 : vector<18x1xf32> to vector<18x18xf32>
    %951 = arith.mulf %946, %950 : vector<18x18xf32>
    %952 = vector.extract_strided_slice %871 {offsets = [0, 24], sizes = [18, 8], strides = [1, 1]} : vector<18x32xf32> to vector<18x8xf32>
    %953 = arith.truncf %951 : vector<18x18xf32> to vector<18x18xbf16>
    %954 = arith.truncf %952 : vector<18x8xf32> to vector<18x8xbf16>
    %cst_354 = arith.constant dense<0.000000e+00> : vector<18x8xf32>
    %955 = tpu.matmul %953, %954, %cst_354 {dimension_numbers = #tpu.dot_dimension_numbers<[1], [0], [0], [1], [0, 0, 1, 1], [], []>} : vector<18x18xbf16>, vector<18x8xbf16>, vector<18x8xf32> -> vector<18x8xf32>
    %956 = tpu.concatenate %892, %913, %934, %955 in 1 : vector<18x8xf32>, vector<18x8xf32>, vector<18x8xf32>, vector<18x8xf32> -> vector<18x32xf32>
    %957 = arith.truncf %956 : vector<18x32xf32> to vector<18x32xbf16>
    %958 = arith.truncf %860 : vector<32x32xf32> to vector<32x32xbf16>
    %cst_355 = arith.constant dense<0.000000e+00> : vector<18x32xf32>
    %959 = tpu.matmul %957, %958, %cst_355 {dimension_numbers = #tpu.dot_dimension_numbers<[1], [0], [0], [1], [0, 0, 1, 1], [], []>} : vector<18x32xbf16>, vector<32x32xbf16>, vector<18x32xf32> -> vector<18x32xf32>
    %960 = vector.broadcast %861 : vector<1x32xf32> to vector<18x32xf32>
    %961 = arith.addf %959, %960 : vector<18x32xf32>
    %962 = arith.addf %855, %961 : vector<18x32xf32>
    %c393_356 = arith.constant 393 : index
    %c0_357 = arith.constant 0 : index
    %963 = vector.load %arg6[%c393_356, %c0_357] : memref<616x32xf32, #tpu.memory_space<vmem>>, vector<1x32xf32>
    %c394_358 = arith.constant 394 : index
    %c0_359 = arith.constant 0 : index
    %964 = vector.load %arg6[%c394_358, %c0_359] : memref<616x32xf32, #tpu.memory_space<vmem>>, vector<1x32xf32>
    %cst_360 = arith.constant dense<0.000000e+00> : vector<18xf32>
    %965 = vector.multi_reduction <add>, %962, %cst_360 [1] : vector<18x32xf32> to vector<18xf32>
    %966 = vector.shape_cast %965 : vector<18xf32> to vector<18x1xf32>
    %cst_361 = arith.constant 3.200000e+01 : f32
    %967 = vector.broadcast %cst_361 : f32 to vector<18x1xf32>
    %968 = arith.divf %966, %967 : vector<18x1xf32>
    %969 = vector.broadcast %968 : vector<18x1xf32> to vector<18x32xf32>
    %970 = arith.subf %962, %969 : vector<18x32xf32>
    %971 = arith.mulf %970, %970 : vector<18x32xf32>
    %cst_362 = arith.constant dense<0.000000e+00> : vector<18xf32>
    %972 = vector.multi_reduction <add>, %971, %cst_362 [1] : vector<18x32xf32> to vector<18xf32>
    %973 = vector.shape_cast %972 : vector<18xf32> to vector<18x1xf32>
    %cst_363 = arith.constant 3.200000e+01 : f32
    %974 = vector.broadcast %cst_363 : f32 to vector<18x1xf32>
    %975 = arith.divf %973, %974 : vector<18x1xf32>
    %976 = vector.broadcast %968 : vector<18x1xf32> to vector<18x32xf32>
    %977 = arith.subf %962, %976 : vector<18x32xf32>
    %cst_364 = arith.constant 9.99999974E-6 : f32
    %978 = vector.broadcast %cst_364 : f32 to vector<18x1xf32>
    %979 = arith.addf %975, %978 : vector<18x1xf32>
    %980 = math.rsqrt %979 : vector<18x1xf32>
    %981 = vector.broadcast %980 : vector<18x1xf32> to vector<18x32xf32>
    %982 = arith.mulf %977, %981 : vector<18x32xf32>
    %983 = vector.broadcast %963 : vector<1x32xf32> to vector<18x32xf32>
    %984 = arith.mulf %982, %983 : vector<18x32xf32>
    %985 = vector.broadcast %964 : vector<1x32xf32> to vector<18x32xf32>
    %986 = arith.addf %984, %985 : vector<18x32xf32>
    %c80_365 = arith.constant 80 : index
    %c0_366 = arith.constant 0 : index
    %987 = vector.load %arg7[%c80_365, %c0_366] : memref<192x64xf32, #tpu.memory_space<vmem>>, vector<32x64xf32>
    %c112_367 = arith.constant 112 : index
    %c0_368 = arith.constant 0 : index
    %988 = vector.load %arg7[%c112_367, %c0_368] : memref<192x64xf32, #tpu.memory_space<vmem>>, vector<1x64xf32>
    %c328_369 = arith.constant 328 : index
    %c0_370 = arith.constant 0 : index
    %989 = vector.load %arg6[%c328_369, %c0_370] : memref<616x32xf32, #tpu.memory_space<vmem>>, vector<64x32xf32>
    %c392_371 = arith.constant 392 : index
    %c0_372 = arith.constant 0 : index
    %990 = vector.load %arg6[%c392_371, %c0_372] : memref<616x32xf32, #tpu.memory_space<vmem>>, vector<1x32xf32>
    %991 = arith.truncf %986 : vector<18x32xf32> to vector<18x32xbf16>
    %992 = arith.truncf %987 : vector<32x64xf32> to vector<32x64xbf16>
    %cst_373 = arith.constant dense<0.000000e+00> : vector<18x64xf32>
    %993 = tpu.matmul %991, %992, %cst_373 {dimension_numbers = #tpu.dot_dimension_numbers<[1], [0], [0], [1], [0, 0, 1, 1], [], []>} : vector<18x32xbf16>, vector<32x64xbf16>, vector<18x64xf32> -> vector<18x64xf32>
    %994 = vector.broadcast %988 : vector<1x64xf32> to vector<18x64xf32>
    %995 = arith.addf %993, %994 : vector<18x64xf32>
    %cst_374 = arith.constant 0.000000e+00 : f32
    %996 = vector.broadcast %cst_374 : f32 to vector<18x64xf32>
    %997 = arith.maximumf %995, %996 : vector<18x64xf32>
    %998 = arith.truncf %997 : vector<18x64xf32> to vector<18x64xbf16>
    %999 = arith.truncf %989 : vector<64x32xf32> to vector<64x32xbf16>
    %cst_375 = arith.constant dense<0.000000e+00> : vector<18x32xf32>
    %1000 = tpu.matmul %998, %999, %cst_375 {dimension_numbers = #tpu.dot_dimension_numbers<[1], [0], [0], [1], [0, 0, 1, 1], [], []>} : vector<18x64xbf16>, vector<64x32xbf16>, vector<18x32xf32> -> vector<18x32xf32>
    %1001 = vector.broadcast %990 : vector<1x32xf32> to vector<18x32xf32>
    %1002 = arith.addf %1000, %1001 : vector<18x32xf32>
    %1003 = arith.addf %986, %1002 : vector<18x32xf32>
    %c395_376 = arith.constant 395 : index
    %c0_377 = arith.constant 0 : index
    %1004 = vector.load %arg6[%c395_376, %c0_377] : memref<616x32xf32, #tpu.memory_space<vmem>>, vector<1x32xf32>
    %c396_378 = arith.constant 396 : index
    %c0_379 = arith.constant 0 : index
    %1005 = vector.load %arg6[%c396_378, %c0_379] : memref<616x32xf32, #tpu.memory_space<vmem>>, vector<1x32xf32>
    %cst_380 = arith.constant dense<0.000000e+00> : vector<18xf32>
    %1006 = vector.multi_reduction <add>, %1003, %cst_380 [1] : vector<18x32xf32> to vector<18xf32>
    %1007 = vector.shape_cast %1006 : vector<18xf32> to vector<18x1xf32>
    %cst_381 = arith.constant 3.200000e+01 : f32
    %1008 = vector.broadcast %cst_381 : f32 to vector<18x1xf32>
    %1009 = arith.divf %1007, %1008 : vector<18x1xf32>
    %1010 = vector.broadcast %1009 : vector<18x1xf32> to vector<18x32xf32>
    %1011 = arith.subf %1003, %1010 : vector<18x32xf32>
    %1012 = arith.mulf %1011, %1011 : vector<18x32xf32>
    %cst_382 = arith.constant dense<0.000000e+00> : vector<18xf32>
    %1013 = vector.multi_reduction <add>, %1012, %cst_382 [1] : vector<18x32xf32> to vector<18xf32>
    %1014 = vector.shape_cast %1013 : vector<18xf32> to vector<18x1xf32>
    %cst_383 = arith.constant 3.200000e+01 : f32
    %1015 = vector.broadcast %cst_383 : f32 to vector<18x1xf32>
    %1016 = arith.divf %1014, %1015 : vector<18x1xf32>
    %1017 = vector.broadcast %1009 : vector<18x1xf32> to vector<18x32xf32>
    %1018 = arith.subf %1003, %1017 : vector<18x32xf32>
    %cst_384 = arith.constant 9.99999974E-6 : f32
    %1019 = vector.broadcast %cst_384 : f32 to vector<18x1xf32>
    %1020 = arith.addf %1016, %1019 : vector<18x1xf32>
    %1021 = math.rsqrt %1020 : vector<18x1xf32>
    %1022 = vector.broadcast %1021 : vector<18x1xf32> to vector<18x32xf32>
    %1023 = arith.mulf %1018, %1022 : vector<18x32xf32>
    %1024 = vector.broadcast %1004 : vector<1x32xf32> to vector<18x32xf32>
    %1025 = arith.mulf %1023, %1024 : vector<18x32xf32>
    %1026 = vector.broadcast %1005 : vector<1x32xf32> to vector<18x32xf32>
    %1027 = arith.addf %1025, %1026 : vector<18x32xf32>
    %c397_385 = arith.constant 397 : index
    %c0_386 = arith.constant 0 : index
    %1028 = vector.load %arg6[%c397_385, %c0_386] : memref<616x32xf32, #tpu.memory_space<vmem>>, vector<1x32xf32>
    %1029 = vector.shape_cast %1028 : vector<1x32xf32> to vector<1x32xf32>
    %1030 = vector.broadcast %1029 : vector<1x32xf32> to vector<8x32xf32>
    %c432_387 = arith.constant 432 : index
    %c0_388 = arith.constant 0 : index
    %1031 = vector.load %arg6[%c432_387, %c0_388] : memref<616x32xf32, #tpu.memory_space<vmem>>, vector<32x32xf32>
    %1032 = arith.truncf %1030 : vector<8x32xf32> to vector<8x32xbf16>
    %1033 = arith.truncf %1031 : vector<32x32xf32> to vector<32x32xbf16>
    %cst_389 = arith.constant dense<0.000000e+00> : vector<8x32xf32>
    %1034 = tpu.matmul %1032, %1033, %cst_389 {dimension_numbers = #tpu.dot_dimension_numbers<[1], [0], [0], [1], [0, 0, 1, 1], [], []>} : vector<8x32xbf16>, vector<32x32xbf16>, vector<8x32xf32> -> vector<8x32xf32>
    %c400_390 = arith.constant 400 : index
    %c0_391 = arith.constant 0 : index
    %1035 = vector.load %arg6[%c400_390, %c0_391] : memref<616x32xf32, #tpu.memory_space<vmem>>, vector<8x32xf32>
    %1036 = arith.addf %1034, %1035 : vector<8x32xf32>
    %c160_392 = arith.constant 160 : index
    %c0_393 = arith.constant 0 : index
    %1037 = vector.load %arg7[%c160_392, %c0_393] : memref<192x64xf32, #tpu.memory_space<vmem>>, vector<32x64xf32>
    %1038 = arith.truncf %1027 : vector<18x32xf32> to vector<18x32xbf16>
    %1039 = arith.truncf %1037 : vector<32x64xf32> to vector<32x64xbf16>
    %cst_394 = arith.constant dense<0.000000e+00> : vector<18x64xf32>
    %1040 = tpu.matmul %1038, %1039, %cst_394 {dimension_numbers = #tpu.dot_dimension_numbers<[1], [0], [0], [1], [0, 0, 1, 1], [], []>} : vector<18x32xbf16>, vector<32x64xbf16>, vector<18x64xf32> -> vector<18x64xf32>
    %1041 = vector.extract_strided_slice %1040 {offsets = [0, 0], sizes = [18, 32], strides = [1, 1]} : vector<18x64xf32> to vector<18x32xf32>
    %c408_395 = arith.constant 408 : index
    %c0_396 = arith.constant 0 : index
    %1042 = vector.load %arg6[%c408_395, %c0_396] : memref<616x32xf32, #tpu.memory_space<vmem>>, vector<18x32xf32>
    %1043 = arith.addf %1041, %1042 : vector<18x32xf32>
    %1044 = vector.extract_strided_slice %1040 {offsets = [0, 32], sizes = [18, 32], strides = [1, 1]} : vector<18x64xf32> to vector<18x32xf32>
    %c426_397 = arith.constant 426 : index
    %c0_398 = arith.constant 0 : index
    %1045 = vector.load %arg6[%c426_397, %c0_398] : memref<616x32xf32, #tpu.memory_space<vmem>>, vector<1x32xf32>
    %1046 = vector.broadcast %1045 : vector<1x32xf32> to vector<18x32xf32>
    %1047 = arith.addf %1044, %1046 : vector<18x32xf32>
    %c464_399 = arith.constant 464 : index
    %c0_400 = arith.constant 0 : index
    %1048 = vector.load %arg6[%c464_399, %c0_400] : memref<616x32xf32, #tpu.memory_space<vmem>>, vector<32x32xf32>
    %c496_401 = arith.constant 496 : index
    %c0_402 = arith.constant 0 : index
    %1049 = vector.load %arg6[%c496_401, %c0_402] : memref<616x32xf32, #tpu.memory_space<vmem>>, vector<1x32xf32>
    %1050 = vector.extract_strided_slice %1036 {offsets = [0, 0], sizes = [8, 8], strides = [1, 1]} : vector<8x32xf32> to vector<8x8xf32>
    %1051 = vector.extract_strided_slice %1043 {offsets = [0, 0], sizes = [18, 8], strides = [1, 1]} : vector<18x32xf32> to vector<18x8xf32>
    %1052 = arith.truncf %1050 : vector<8x8xf32> to vector<8x8xbf16>
    %1053 = arith.truncf %1051 : vector<18x8xf32> to vector<18x8xbf16>
    %cst_403 = arith.constant dense<0.000000e+00> : vector<8x18xf32>
    %1054 = tpu.matmul %1052, %1053, %cst_403 {dimension_numbers = #tpu.dot_dimension_numbers<[1], [1], [0], [0], [0, 0, 1, 0], [], []>} : vector<8x8xbf16>, vector<18x8xbf16>, vector<8x18xf32> -> vector<8x18xf32>
    %cst_404 = arith.constant 0.353553385 : f32
    %1055 = vector.broadcast %cst_404 : f32 to vector<8x18xf32>
    %1056 = arith.mulf %1054, %1055 : vector<8x18xf32>
    %cst_405 = arith.constant dense<0xFF800000> : vector<8xf32>
    %1057 = vector.multi_reduction <maximumf>, %1056, %cst_405 [1] : vector<8x18xf32> to vector<8xf32>
    %1058 = vector.shape_cast %1057 : vector<8xf32> to vector<8x1xf32>
    %1059 = vector.broadcast %1058 : vector<8x1xf32> to vector<8x18xf32>
    %1060 = arith.subf %1056, %1059 : vector<8x18xf32>
    %1061 = math.exp %1060 : vector<8x18xf32>
    %cst_406 = arith.constant dense<0.000000e+00> : vector<8xf32>
    %1062 = vector.multi_reduction <add>, %1061, %cst_406 [1] : vector<8x18xf32> to vector<8xf32>
    %1063 = vector.shape_cast %1062 : vector<8xf32> to vector<8x1xf32>
    %1064 = tpu.reciprocal %1063 {approx = true} : vector<8x1xf32> -> vector<8x1xf32>
    %1065 = vector.broadcast %1064 : vector<8x1xf32> to vector<8x18xf32>
    %1066 = arith.mulf %1061, %1065 : vector<8x18xf32>
    %1067 = vector.extract_strided_slice %1047 {offsets = [0, 0], sizes = [18, 8], strides = [1, 1]} : vector<18x32xf32> to vector<18x8xf32>
    %1068 = arith.truncf %1066 : vector<8x18xf32> to vector<8x18xbf16>
    %1069 = arith.truncf %1067 : vector<18x8xf32> to vector<18x8xbf16>
    %cst_407 = arith.constant dense<0.000000e+00> : vector<8x8xf32>
    %1070 = tpu.matmul %1068, %1069, %cst_407 {dimension_numbers = #tpu.dot_dimension_numbers<[1], [0], [0], [1], [0, 0, 1, 1], [], []>} : vector<8x18xbf16>, vector<18x8xbf16>, vector<8x8xf32> -> vector<8x8xf32>
    %1071 = vector.extract_strided_slice %1036 {offsets = [0, 8], sizes = [8, 8], strides = [1, 1]} : vector<8x32xf32> to vector<8x8xf32>
    %1072 = vector.extract_strided_slice %1043 {offsets = [0, 8], sizes = [18, 8], strides = [1, 1]} : vector<18x32xf32> to vector<18x8xf32>
    %1073 = arith.truncf %1071 : vector<8x8xf32> to vector<8x8xbf16>
    %1074 = arith.truncf %1072 : vector<18x8xf32> to vector<18x8xbf16>
    %cst_408 = arith.constant dense<0.000000e+00> : vector<8x18xf32>
    %1075 = tpu.matmul %1073, %1074, %cst_408 {dimension_numbers = #tpu.dot_dimension_numbers<[1], [1], [0], [0], [0, 0, 1, 0], [], []>} : vector<8x8xbf16>, vector<18x8xbf16>, vector<8x18xf32> -> vector<8x18xf32>
    %cst_409 = arith.constant 0.353553385 : f32
    %1076 = vector.broadcast %cst_409 : f32 to vector<8x18xf32>
    %1077 = arith.mulf %1075, %1076 : vector<8x18xf32>
    %cst_410 = arith.constant dense<0xFF800000> : vector<8xf32>
    %1078 = vector.multi_reduction <maximumf>, %1077, %cst_410 [1] : vector<8x18xf32> to vector<8xf32>
    %1079 = vector.shape_cast %1078 : vector<8xf32> to vector<8x1xf32>
    %1080 = vector.broadcast %1079 : vector<8x1xf32> to vector<8x18xf32>
    %1081 = arith.subf %1077, %1080 : vector<8x18xf32>
    %1082 = math.exp %1081 : vector<8x18xf32>
    %cst_411 = arith.constant dense<0.000000e+00> : vector<8xf32>
    %1083 = vector.multi_reduction <add>, %1082, %cst_411 [1] : vector<8x18xf32> to vector<8xf32>
    %1084 = vector.shape_cast %1083 : vector<8xf32> to vector<8x1xf32>
    %1085 = tpu.reciprocal %1084 {approx = true} : vector<8x1xf32> -> vector<8x1xf32>
    %1086 = vector.broadcast %1085 : vector<8x1xf32> to vector<8x18xf32>
    %1087 = arith.mulf %1082, %1086 : vector<8x18xf32>
    %1088 = vector.extract_strided_slice %1047 {offsets = [0, 8], sizes = [18, 8], strides = [1, 1]} : vector<18x32xf32> to vector<18x8xf32>
    %1089 = arith.truncf %1087 : vector<8x18xf32> to vector<8x18xbf16>
    %1090 = arith.truncf %1088 : vector<18x8xf32> to vector<18x8xbf16>
    %cst_412 = arith.constant dense<0.000000e+00> : vector<8x8xf32>
    %1091 = tpu.matmul %1089, %1090, %cst_412 {dimension_numbers = #tpu.dot_dimension_numbers<[1], [0], [0], [1], [0, 0, 1, 1], [], []>} : vector<8x18xbf16>, vector<18x8xbf16>, vector<8x8xf32> -> vector<8x8xf32>
    %1092 = vector.extract_strided_slice %1036 {offsets = [0, 16], sizes = [8, 8], strides = [1, 1]} : vector<8x32xf32> to vector<8x8xf32>
    %1093 = vector.extract_strided_slice %1043 {offsets = [0, 16], sizes = [18, 8], strides = [1, 1]} : vector<18x32xf32> to vector<18x8xf32>
    %1094 = arith.truncf %1092 : vector<8x8xf32> to vector<8x8xbf16>
    %1095 = arith.truncf %1093 : vector<18x8xf32> to vector<18x8xbf16>
    %cst_413 = arith.constant dense<0.000000e+00> : vector<8x18xf32>
    %1096 = tpu.matmul %1094, %1095, %cst_413 {dimension_numbers = #tpu.dot_dimension_numbers<[1], [1], [0], [0], [0, 0, 1, 0], [], []>} : vector<8x8xbf16>, vector<18x8xbf16>, vector<8x18xf32> -> vector<8x18xf32>
    %cst_414 = arith.constant 0.353553385 : f32
    %1097 = vector.broadcast %cst_414 : f32 to vector<8x18xf32>
    %1098 = arith.mulf %1096, %1097 : vector<8x18xf32>
    %cst_415 = arith.constant dense<0xFF800000> : vector<8xf32>
    %1099 = vector.multi_reduction <maximumf>, %1098, %cst_415 [1] : vector<8x18xf32> to vector<8xf32>
    %1100 = vector.shape_cast %1099 : vector<8xf32> to vector<8x1xf32>
    %1101 = vector.broadcast %1100 : vector<8x1xf32> to vector<8x18xf32>
    %1102 = arith.subf %1098, %1101 : vector<8x18xf32>
    %1103 = math.exp %1102 : vector<8x18xf32>
    %cst_416 = arith.constant dense<0.000000e+00> : vector<8xf32>
    %1104 = vector.multi_reduction <add>, %1103, %cst_416 [1] : vector<8x18xf32> to vector<8xf32>
    %1105 = vector.shape_cast %1104 : vector<8xf32> to vector<8x1xf32>
    %1106 = tpu.reciprocal %1105 {approx = true} : vector<8x1xf32> -> vector<8x1xf32>
    %1107 = vector.broadcast %1106 : vector<8x1xf32> to vector<8x18xf32>
    %1108 = arith.mulf %1103, %1107 : vector<8x18xf32>
    %1109 = vector.extract_strided_slice %1047 {offsets = [0, 16], sizes = [18, 8], strides = [1, 1]} : vector<18x32xf32> to vector<18x8xf32>
    %1110 = arith.truncf %1108 : vector<8x18xf32> to vector<8x18xbf16>
    %1111 = arith.truncf %1109 : vector<18x8xf32> to vector<18x8xbf16>
    %cst_417 = arith.constant dense<0.000000e+00> : vector<8x8xf32>
    %1112 = tpu.matmul %1110, %1111, %cst_417 {dimension_numbers = #tpu.dot_dimension_numbers<[1], [0], [0], [1], [0, 0, 1, 1], [], []>} : vector<8x18xbf16>, vector<18x8xbf16>, vector<8x8xf32> -> vector<8x8xf32>
    %1113 = vector.extract_strided_slice %1036 {offsets = [0, 24], sizes = [8, 8], strides = [1, 1]} : vector<8x32xf32> to vector<8x8xf32>
    %1114 = vector.extract_strided_slice %1043 {offsets = [0, 24], sizes = [18, 8], strides = [1, 1]} : vector<18x32xf32> to vector<18x8xf32>
    %1115 = arith.truncf %1113 : vector<8x8xf32> to vector<8x8xbf16>
    %1116 = arith.truncf %1114 : vector<18x8xf32> to vector<18x8xbf16>
    %cst_418 = arith.constant dense<0.000000e+00> : vector<8x18xf32>
    %1117 = tpu.matmul %1115, %1116, %cst_418 {dimension_numbers = #tpu.dot_dimension_numbers<[1], [1], [0], [0], [0, 0, 1, 0], [], []>} : vector<8x8xbf16>, vector<18x8xbf16>, vector<8x18xf32> -> vector<8x18xf32>
    %cst_419 = arith.constant 0.353553385 : f32
    %1118 = vector.broadcast %cst_419 : f32 to vector<8x18xf32>
    %1119 = arith.mulf %1117, %1118 : vector<8x18xf32>
    %cst_420 = arith.constant dense<0xFF800000> : vector<8xf32>
    %1120 = vector.multi_reduction <maximumf>, %1119, %cst_420 [1] : vector<8x18xf32> to vector<8xf32>
    %1121 = vector.shape_cast %1120 : vector<8xf32> to vector<8x1xf32>
    %1122 = vector.broadcast %1121 : vector<8x1xf32> to vector<8x18xf32>
    %1123 = arith.subf %1119, %1122 : vector<8x18xf32>
    %1124 = math.exp %1123 : vector<8x18xf32>
    %cst_421 = arith.constant dense<0.000000e+00> : vector<8xf32>
    %1125 = vector.multi_reduction <add>, %1124, %cst_421 [1] : vector<8x18xf32> to vector<8xf32>
    %1126 = vector.shape_cast %1125 : vector<8xf32> to vector<8x1xf32>
    %1127 = tpu.reciprocal %1126 {approx = true} : vector<8x1xf32> -> vector<8x1xf32>
    %1128 = vector.broadcast %1127 : vector<8x1xf32> to vector<8x18xf32>
    %1129 = arith.mulf %1124, %1128 : vector<8x18xf32>
    %1130 = vector.extract_strided_slice %1047 {offsets = [0, 24], sizes = [18, 8], strides = [1, 1]} : vector<18x32xf32> to vector<18x8xf32>
    %1131 = arith.truncf %1129 : vector<8x18xf32> to vector<8x18xbf16>
    %1132 = arith.truncf %1130 : vector<18x8xf32> to vector<18x8xbf16>
    %cst_422 = arith.constant dense<0.000000e+00> : vector<8x8xf32>
    %1133 = tpu.matmul %1131, %1132, %cst_422 {dimension_numbers = #tpu.dot_dimension_numbers<[1], [0], [0], [1], [0, 0, 1, 1], [], []>} : vector<8x18xbf16>, vector<18x8xbf16>, vector<8x8xf32> -> vector<8x8xf32>
    %1134 = tpu.concatenate %1070, %1091, %1112, %1133 in 1 : vector<8x8xf32>, vector<8x8xf32>, vector<8x8xf32>, vector<8x8xf32> -> vector<8x32xf32>
    %1135 = arith.truncf %1134 : vector<8x32xf32> to vector<8x32xbf16>
    %1136 = arith.truncf %1048 : vector<32x32xf32> to vector<32x32xbf16>
    %cst_423 = arith.constant dense<0.000000e+00> : vector<8x32xf32>
    %1137 = tpu.matmul %1135, %1136, %cst_423 {dimension_numbers = #tpu.dot_dimension_numbers<[1], [0], [0], [1], [0, 0, 1, 1], [], []>} : vector<8x32xbf16>, vector<32x32xbf16>, vector<8x32xf32> -> vector<8x32xf32>
    %1138 = vector.broadcast %1049 : vector<1x32xf32> to vector<8x32xf32>
    %1139 = arith.addf %1137, %1138 : vector<8x32xf32>
    %1140 = arith.addf %1030, %1139 : vector<8x32xf32>
    %c569_424 = arith.constant 569 : index
    %c0_425 = arith.constant 0 : index
    %1141 = vector.load %arg6[%c569_424, %c0_425] : memref<616x32xf32, #tpu.memory_space<vmem>>, vector<1x32xf32>
    %c570_426 = arith.constant 570 : index
    %c0_427 = arith.constant 0 : index
    %1142 = vector.load %arg6[%c570_426, %c0_427] : memref<616x32xf32, #tpu.memory_space<vmem>>, vector<1x32xf32>
    %cst_428 = arith.constant dense<0.000000e+00> : vector<8xf32>
    %1143 = vector.multi_reduction <add>, %1140, %cst_428 [1] : vector<8x32xf32> to vector<8xf32>
    %1144 = vector.shape_cast %1143 : vector<8xf32> to vector<8x1xf32>
    %cst_429 = arith.constant 3.200000e+01 : f32
    %1145 = vector.broadcast %cst_429 : f32 to vector<8x1xf32>
    %1146 = arith.divf %1144, %1145 : vector<8x1xf32>
    %1147 = vector.broadcast %1146 : vector<8x1xf32> to vector<8x32xf32>
    %1148 = arith.subf %1140, %1147 : vector<8x32xf32>
    %1149 = arith.mulf %1148, %1148 : vector<8x32xf32>
    %cst_430 = arith.constant dense<0.000000e+00> : vector<8xf32>
    %1150 = vector.multi_reduction <add>, %1149, %cst_430 [1] : vector<8x32xf32> to vector<8xf32>
    %1151 = vector.shape_cast %1150 : vector<8xf32> to vector<8x1xf32>
    %cst_431 = arith.constant 3.200000e+01 : f32
    %1152 = vector.broadcast %cst_431 : f32 to vector<8x1xf32>
    %1153 = arith.divf %1151, %1152 : vector<8x1xf32>
    %1154 = vector.broadcast %1146 : vector<8x1xf32> to vector<8x32xf32>
    %1155 = arith.subf %1140, %1154 : vector<8x32xf32>
    %cst_432 = arith.constant 9.99999974E-6 : f32
    %1156 = vector.broadcast %cst_432 : f32 to vector<8x1xf32>
    %1157 = arith.addf %1153, %1156 : vector<8x1xf32>
    %1158 = math.rsqrt %1157 : vector<8x1xf32>
    %1159 = vector.broadcast %1158 : vector<8x1xf32> to vector<8x32xf32>
    %1160 = arith.mulf %1155, %1159 : vector<8x32xf32>
    %1161 = vector.broadcast %1141 : vector<1x32xf32> to vector<8x32xf32>
    %1162 = arith.mulf %1160, %1161 : vector<8x32xf32>
    %1163 = vector.broadcast %1142 : vector<1x32xf32> to vector<8x32xf32>
    %1164 = arith.addf %1162, %1163 : vector<8x32xf32>
    %c120_433 = arith.constant 120 : index
    %c0_434 = arith.constant 0 : index
    %1165 = vector.load %arg7[%c120_433, %c0_434] : memref<192x64xf32, #tpu.memory_space<vmem>>, vector<32x64xf32>
    %c152_435 = arith.constant 152 : index
    %c0_436 = arith.constant 0 : index
    %1166 = vector.load %arg7[%c152_435, %c0_436] : memref<192x64xf32, #tpu.memory_space<vmem>>, vector<1x64xf32>
    %c504_437 = arith.constant 504 : index
    %c0_438 = arith.constant 0 : index
    %1167 = vector.load %arg6[%c504_437, %c0_438] : memref<616x32xf32, #tpu.memory_space<vmem>>, vector<64x32xf32>
    %c568_439 = arith.constant 568 : index
    %c0_440 = arith.constant 0 : index
    %1168 = vector.load %arg6[%c568_439, %c0_440] : memref<616x32xf32, #tpu.memory_space<vmem>>, vector<1x32xf32>
    %1169 = arith.truncf %1164 : vector<8x32xf32> to vector<8x32xbf16>
    %1170 = arith.truncf %1165 : vector<32x64xf32> to vector<32x64xbf16>
    %cst_441 = arith.constant dense<0.000000e+00> : vector<8x64xf32>
    %1171 = tpu.matmul %1169, %1170, %cst_441 {dimension_numbers = #tpu.dot_dimension_numbers<[1], [0], [0], [1], [0, 0, 1, 1], [], []>} : vector<8x32xbf16>, vector<32x64xbf16>, vector<8x64xf32> -> vector<8x64xf32>
    %1172 = vector.broadcast %1166 : vector<1x64xf32> to vector<8x64xf32>
    %1173 = arith.addf %1171, %1172 : vector<8x64xf32>
    %cst_442 = arith.constant 0.000000e+00 : f32
    %1174 = vector.broadcast %cst_442 : f32 to vector<8x64xf32>
    %1175 = arith.maximumf %1173, %1174 : vector<8x64xf32>
    %1176 = arith.truncf %1175 : vector<8x64xf32> to vector<8x64xbf16>
    %1177 = arith.truncf %1167 : vector<64x32xf32> to vector<64x32xbf16>
    %cst_443 = arith.constant dense<0.000000e+00> : vector<8x32xf32>
    %1178 = tpu.matmul %1176, %1177, %cst_443 {dimension_numbers = #tpu.dot_dimension_numbers<[1], [0], [0], [1], [0, 0, 1, 1], [], []>} : vector<8x64xbf16>, vector<64x32xbf16>, vector<8x32xf32> -> vector<8x32xf32>
    %1179 = vector.broadcast %1168 : vector<1x32xf32> to vector<8x32xf32>
    %1180 = arith.addf %1178, %1179 : vector<8x32xf32>
    %1181 = arith.addf %1164, %1180 : vector<8x32xf32>
    %c571_444 = arith.constant 571 : index
    %c0_445 = arith.constant 0 : index
    %1182 = vector.load %arg6[%c571_444, %c0_445] : memref<616x32xf32, #tpu.memory_space<vmem>>, vector<1x32xf32>
    %c572_446 = arith.constant 572 : index
    %c0_447 = arith.constant 0 : index
    %1183 = vector.load %arg6[%c572_446, %c0_447] : memref<616x32xf32, #tpu.memory_space<vmem>>, vector<1x32xf32>
    %cst_448 = arith.constant dense<0.000000e+00> : vector<8xf32>
    %1184 = vector.multi_reduction <add>, %1181, %cst_448 [1] : vector<8x32xf32> to vector<8xf32>
    %1185 = vector.shape_cast %1184 : vector<8xf32> to vector<8x1xf32>
    %cst_449 = arith.constant 3.200000e+01 : f32
    %1186 = vector.broadcast %cst_449 : f32 to vector<8x1xf32>
    %1187 = arith.divf %1185, %1186 : vector<8x1xf32>
    %1188 = vector.broadcast %1187 : vector<8x1xf32> to vector<8x32xf32>
    %1189 = arith.subf %1181, %1188 : vector<8x32xf32>
    %1190 = arith.mulf %1189, %1189 : vector<8x32xf32>
    %cst_450 = arith.constant dense<0.000000e+00> : vector<8xf32>
    %1191 = vector.multi_reduction <add>, %1190, %cst_450 [1] : vector<8x32xf32> to vector<8xf32>
    %1192 = vector.shape_cast %1191 : vector<8xf32> to vector<8x1xf32>
    %cst_451 = arith.constant 3.200000e+01 : f32
    %1193 = vector.broadcast %cst_451 : f32 to vector<8x1xf32>
    %1194 = arith.divf %1192, %1193 : vector<8x1xf32>
    %1195 = vector.broadcast %1187 : vector<8x1xf32> to vector<8x32xf32>
    %1196 = arith.subf %1181, %1195 : vector<8x32xf32>
    %cst_452 = arith.constant 9.99999974E-6 : f32
    %1197 = vector.broadcast %cst_452 : f32 to vector<8x1xf32>
    %1198 = arith.addf %1194, %1197 : vector<8x1xf32>
    %1199 = math.rsqrt %1198 : vector<8x1xf32>
    %1200 = vector.broadcast %1199 : vector<8x1xf32> to vector<8x32xf32>
    %1201 = arith.mulf %1196, %1200 : vector<8x32xf32>
    %1202 = vector.broadcast %1182 : vector<1x32xf32> to vector<8x32xf32>
    %1203 = arith.mulf %1201, %1202 : vector<8x32xf32>
    %1204 = vector.broadcast %1183 : vector<1x32xf32> to vector<8x32xf32>
    %1205 = arith.addf %1203, %1204 : vector<8x32xf32>
    %c576_453 = arith.constant 576 : index
    %c0_454 = arith.constant 0 : index
    %1206 = vector.load %arg6[%c576_453, %c0_454] : memref<616x32xf32, #tpu.memory_space<vmem>>, vector<32x32xf32>
    %1207 = arith.truncf %1205 : vector<8x32xf32> to vector<8x32xbf16>
    %1208 = arith.truncf %1206 : vector<32x32xf32> to vector<32x32xbf16>
    %cst_455 = arith.constant dense<0.000000e+00> : vector<8x32xf32>
    %1209 = tpu.matmul %1207, %1208, %cst_455 {dimension_numbers = #tpu.dot_dimension_numbers<[1], [0], [0], [1], [0, 0, 1, 1], [], []>} : vector<8x32xbf16>, vector<32x32xbf16>, vector<8x32xf32> -> vector<8x32xf32>
    %c608_456 = arith.constant 608 : index
    %c0_457 = arith.constant 0 : index
    %1210 = vector.load %arg6[%c608_456, %c0_457] : memref<616x32xf32, #tpu.memory_space<vmem>>, vector<1x32xf32>
    %1211 = vector.broadcast %1210 : vector<1x32xf32> to vector<8x32xf32>
    %1212 = arith.addf %1209, %1211 : vector<8x32xf32>
    %1213 = vector.extract_strided_slice %1212 {offsets = [0, 0], sizes = [8, 8], strides = [1, 1]} : vector<8x32xf32> to vector<8x8xf32>
    %1214 = vector.extract_strided_slice %1212 {offsets = [0, 8], sizes = [8, 1], strides = [1, 1]} : vector<8x32xf32> to vector<8x1xf32>
    %c1_458 = arith.constant 1 : index
    %c0_459 = arith.constant 0 : index
    %c0_460 = arith.constant 0 : index
    %1215 = vector.load %arg9[%c1_458, %c0_459, %c0_460] : memref<2x8x8xf32, #tpu.memory_space<vmem>>, vector<1x8x8xf32>
    %1216 = vector.shape_cast %1215 : vector<1x8x8xf32> to vector<8x8xf32>
    %1217 = vector.shape_cast %1213 : vector<8x8xf32> to vector<1x8x8xf32>
    tpu.vector_store %arg9[%c1_458, %c0_459, %c0_460], %1217 {strides = array<i32>} : memref<2x8x8xf32, #tpu.memory_space<vmem>>, vector<1x8x8xf32>,
    %c1_461 = arith.constant 1 : index
    %c0_462 = arith.constant 0 : index
    %c0_463 = arith.constant 0 : index
    %1218 = vector.load %arg10[%c1_461, %c0_462, %c0_463] : memref<2x8x1xf32, #tpu.memory_space<vmem>>, vector<1x8x1xf32>
    %1219 = vector.shape_cast %1218 : vector<1x8x1xf32> to vector<8x1xf32>
    %1220 = vector.shape_cast %1214 : vector<8x1xf32> to vector<1x8x1xf32>
    tpu.vector_store %arg10[%c1_461, %c0_462, %c0_463], %1220 {strides = array<i32>} : memref<2x8x1xf32, #tpu.memory_space<vmem>>, vector<1x8x1xf32>,
    %c1_464 = arith.constant 1 : index
    %c0_465 = arith.constant 0 : index
    %c0_466 = arith.constant 0 : index
    %1221 = vector.load %arg11[%c1_464, %c0_465, %c0_466] : memref<2x1x32xf32, #tpu.memory_space<vmem>>, vector<1x1x32xf32>
    %1222 = vector.shape_cast %1221 : vector<1x1x32xf32> to vector<1x32xf32>
    %1223 = vector.shape_cast %826 : vector<1x32xf32> to vector<1x1x32xf32>
    tpu.vector_store %arg11[%c1_464, %c0_465, %c0_466], %1223 {strides = array<i32>} : memref<2x1x32xf32, #tpu.memory_space<vmem>>, vector<1x1x32xf32>,
    %c1_467 = arith.constant 1 : index
    %c0_468 = arith.constant 0 : index
    %c0_469 = arith.constant 0 : index
    %1224 = vector.load %arg12[%c1_467, %c0_468, %c0_469] : memref<2x1x32xf32, #tpu.memory_space<vmem>>, vector<1x1x32xf32>
    %1225 = vector.shape_cast %1224 : vector<1x1x32xf32> to vector<1x32xf32>
    %1226 = vector.shape_cast %827 : vector<1x32xf32> to vector<1x1x32xf32>
    tpu.vector_store %arg12[%c1_467, %c0_468, %c0_469], %1226 {strides = array<i32>} : memref<2x1x32xf32, #tpu.memory_space<vmem>>, vector<1x1x32xf32>,
    return
  }
}

</mosaic_0001>

<llo_original>
// kernel: detrvae_forward.1
$region0: #{detrvae_forward.1}
  #allocation0 [shape = 'u32[]', space=smem, size = 0x4, offset = 0x4, fixed_abs, tag = 'smem constant byte address 0x4 - core index']
  #allocation1 [shape = 'u32[72,128]{1,0:T(1,128)}', space=vmem, size = 0x9000, scoped, tag = 'internal scratch']
  %s0 = inlined_call_operand.vmem [shape: f32[2,8,8], index: 0, kind: input, shape index: {}]
  %s1 = inlined_call_operand.vmem [shape: f32[2,1,8], index: 1, kind: input, shape index: {}]
  %s2 = inlined_call_operand.vmem [shape: f32[2,1,32], index: 2, kind: input, shape index: {}]
  %s3 = inlined_call_operand.vmem [shape: f32[2,1,10], index: 3, kind: input, shape index: {}]
  %s4 = inlined_call_operand.vmem [shape: f32[2,3,256], index: 4, kind: input, shape index: {}]
  %s5 = inlined_call_operand.vmem [shape: f32[16,256], index: 5, kind: input, shape index: {}]
  %s6 = inlined_call_operand.vmem [shape: f32[616,32], index: 6, kind: input, shape index: {}]
  %s7 = inlined_call_operand.vmem [shape: f32[192,64], index: 7, kind: input, shape index: {}]
  %s8 = inlined_call_operand.vmem [shape: f32[64,96], index: 8, kind: input, shape index: {}]
  %s9 = inlined_call_operand.hbm [shape: f32[2,8,8], index: 9, kind: output, shape index: {0}]
  %s10 = inlined_call_operand.vmem [shape: f32[2,8,1], index: 10, kind: output, shape index: {1}]
  %s11 = inlined_call_operand.hbm [shape: f32[2,1,32], index: 11, kind: output, shape index: {2}]
  %s12 = inlined_call_operand.hbm [shape: f32[2,1,32], index: 12, kind: output, shape index: {3}]
  %13 = xla_tuple %s9, %s10, %s11, %s12
  %s14 = sld [smem:[#allocation0]]
  $region70: #{detrvae_forward.1} parent=0
    _
  %s16 = ssub.s32 1, %s14
  %s17 = scalar_select 0, %s16, %s14
  $region1: #{detrvae_forward.1} parent=0
    #allocation2 [shape = 'u8[8192]{0}', space=vmem, size = 0x2000, scoped, tag = 'output window, operand 0, single buffered']
    #allocation3 [shape = 's32[1]{0}', space=sflag, size = 0x4, scoped, tag = 'scoped memory for detrvae_forward.1']
    #allocation4 [shape = 'u8[1024]{0}', space=vmem, size = 0x400, scoped, tag = 'output window, operand 2, single buffered']
    #allocation5 [shape = 's32[1]{0}', space=sflag, size = 0x4, scoped, tag = 'scoped memory for detrvae_forward.1']
    #allocation6 [shape = 'u8[1024]{0}', space=vmem, size = 0x400, scoped, tag = 'output window, operand 3, single buffered']
    %18 = vsyncpa [#allocation3], 0
    %19 = vsyncpa [#allocation5], 0
    // Predicated region
    $region2: #{detrvae_forward.1} parent=1 // pred_check
      _
    $region3: #{detrvae_forward.1} parent=1 // pred_check_branch
      %21 = sbr.rel (0) target = $region5
    $region4: #{detrvae_forward.1} parent=1 // pred_region
      _
    $region5: #{detrvae_forward.1} parent=1 // pred_fallthru
      _
    // Predicated region
    $region6: #{detrvae_forward.1} parent=1 // pred_check
      _
    $region7: #{detrvae_forward.1} parent=1 // pred_check_branch
      %23 = sbr.rel (0) target = $region9
    $region8: #{detrvae_forward.1} parent=1 // pred_region
      _
    $region9: #{detrvae_forward.1} parent=1 // pred_fallthru
      _
    // Predicated region
    $region10: #{detrvae_forward.1} parent=1 // pred_check
      _
    $region11: #{detrvae_forward.1} parent=1 // pred_check_branch
      %25 = sbr.rel (0) target = $region13
    $region12: #{detrvae_forward.1} parent=1 // pred_region
      _
    $region13: #{detrvae_forward.1} parent=1 // pred_fallthru
      _
    // Predicated region
    $region14: #{detrvae_forward.1} parent=1 // pred_check
      _
    $region15: #{detrvae_forward.1} parent=1 // pred_check_branch
      %27 = sbr.rel (0) target = $region17
    $region16: #{detrvae_forward.1} parent=1 // pred_region
      _
    $region17: #{detrvae_forward.1} parent=1 // pred_fallthru
      _
    // Predicated region
    $region18: #{detrvae_forward.1} parent=1 // pred_check
      _
    $region19: #{detrvae_forward.1} parent=1 // pred_check_branch
      %29 = sbr.rel (0) target = $region21
    $region20: #{detrvae_forward.1} parent=1 // pred_region
      _
    $region21: #{detrvae_forward.1} parent=1 // pred_fallthru
      _
    // Predicated region
    $region22: #{detrvae_forward.1} parent=1 // pred_check
      _
    $region23: #{detrvae_forward.1} parent=1 // pred_check_branch
      %31 = sbr.rel (0) target = $region25
    $region24: #{detrvae_forward.1} parent=1 // pred_region
      _
    $region25: #{detrvae_forward.1} parent=1 // pred_fallthru
      _
    // Predicated region
    $region26: #{detrvae_forward.1} parent=1 // pred_check
      _
    $region27: #{detrvae_forward.1} parent=1 // pred_check_branch
      %33 = sbr.rel (0) target = $region29
    $region28: #{detrvae_forward.1} parent=1 // pred_region
      _
    $region29: #{detrvae_forward.1} parent=1 // pred_fallthru
      _
    // Predicated region
    $region30: #{detrvae_forward.1} parent=1 // pred_check
      _
    $region31: #{detrvae_forward.1} parent=1 // pred_check_branch
      %35 = sbr.rel (0) target = $region33
    $region32: #{detrvae_forward.1} parent=1 // pred_region
      _
    $region33: #{detrvae_forward.1} parent=1 // pred_fallthru
      _
    // Predicated region
    $region34: #{detrvae_forward.1} parent=1 // pred_check
      _
    $region35: #{detrvae_forward.1} parent=1 // pred_check_branch
      %37 = sbr.rel (0) target = $region37
    $region36: #{detrvae_forward.1} parent=1 // pred_region
      _
    $region37: #{detrvae_forward.1} parent=1 // pred_fallthru
      _
    %v39 = vld [vmem:[%s5] sm:$0xff]
    %v40 = vld [vmem:[%s5 + $0x8] sm:$0xff]
    %v41 = vld [vmem:[%s5 + $0x10] sm:$0xff]
    %v42 = vld [vmem:[%s5 + $0x18] sm:$0xff]
    %v43 = vld [vmem:[%s0] sm:$0xff]
    %v44 = vld [vmem:[%s1] sm:$0x1]
    %v45 = vld [vmem:[%s2] sm:$0x1]
    %v46 = vld [vmem:[%s3] sm:$0x1]
    %v47 = vld [vmem:[%s4] sm:$0x77]
    %v48 = vld [vmem:[%s6 + $0x8] sm:$0xff]
    %v49 = vpack.c.bf16 %v43, %v43
    %v50 = vpack.c.bf16 %v48, %v48
    %v51 = vld [vmem:[%s6 + $0x10] sm:$0x1]
    %v52 = vperm.slane %v51, 0
    %vm53 = vcmask 64512
    %v55 = vsel %vm53, %v49, 0
    %vm57 = vcmask 1043456
    %v59 = vsel %vm57, %v50, 0
    %61 = vmatpush.bf16.msra.mxu0 0
    %62 = vmatpush.bf16.msra.mxu0 0
    %63 = vmatpush.bf16.msra.mxu0 0
    %64 = vmatpush.bf16.msra.mxu0 0
    %65 = vmatpush.bf16.msra.mxu0 0
    %66 = vmatpush.bf16.msra.mxu0 0
    %67 = vmatpush.bf16.msra.mxu0 0
    %68 = vmatpush.bf16.msra.mxu0 %v59
    %69 = vmatmul.bf16.gmra.mxu0 %v55
    %v70 = vpop.f32.mrf.mxu0
    %v71 = vadd.f32 %v52, %v70
    %v72 = vpop.f32.mrf.mxu0
    %73 = vdwg.mxu0
    %v74 = vld [vmem:[%s6 + $0x18] sm:$0xff]
    %v75 = vpack.c.bf16 %v44, %v44
    %v76 = vpack.c.bf16 %v74, %v74
    %v77 = vld [vmem:[%s6 + $0x20] sm:$0x1]
    %v79 = vsel %vm53, %v75, 0
    %v82 = vsel %vm57, %v76, 0
    %84 = vmatpush.bf16.msra.mxu0 0
    %85 = vmatpush.bf16.msra.mxu0 0
    %86 = vmatpush.bf16.msra.mxu0 0
    %87 = vmatpush.bf16.msra.mxu0 0
    %88 = vmatpush.bf16.msra.mxu0 0
    %89 = vmatpush.bf16.msra.mxu0 0
    %90 = vmatpush.bf16.msra.mxu0 0
    %91 = vmatpush.bf16.msra.mxu0 %v82
    %92 = vmatmul.bf16.gmra.mxu0 %v79
    %v93 = vpop.f32.mrf.mxu0
    %v94 = vadd.f32 %v77, %v93
    %v95 = vpop.f32.mrf.mxu0
    %96 = vdwg.mxu0
    %v97 = vld [vmem:[%s6] sm:$0x1]
    %v99 = vrot.slane %v94, 7
    %v102 = vrot.slane %v71, 6
    %vm104 = vcmask 1040384
    %v105 = vsel %vm104, %v97, %v99
    %vm106 = vcmask 1041408
    %v107 = vsel %vm106, %v105, %v102
    %v108 = vld [vmem:[%s8] sm:$0xff]
    %v109 = vld [vmem:[%s8 + $0x8] sm:$0xff]
    %v110 = vld [vmem:[%s8 + $0x10] sm:$0xff]
    %v111 = vld [vmem:[%s8 + $0x18] sm:$0xff]
    %v112 = vld [vmem:[%s6 + $0x60] sm:$0xff]
    %v113 = vld [vmem:[%s6 + $0x68] sm:$0x3]
    %v114 = vld [vmem:[%s6 + $0x70] sm:$0xff]
    %v115 = vld [vmem:[%s6 + $0x78] sm:$0x3]
    %v116 = vld [vmem:[%s6 + $0x7a] sm:$0x1]
    %v117 = vld [vmem:[%s6 + $0x80] sm:$0xff]
    %v118 = vld [vmem:[%s6 + $0x88] sm:$0xff]
    %v119 = vld [vmem:[%s6 + $0x90] sm:$0xff]
    %v120 = vld [vmem:[%s6 + $0x98] sm:$0xff]
    %v121 = vld [vmem:[%s6 + $0xa0] sm:$0x1]
    %v122 = vpack.c.bf16 %v102, %v107
    %v123 = vpack.c.bf16 %v109, %v108
    %v124 = vpack.c.bf16 %v111, %v110
    %vm125 = vcmask 261120
    %v127 = vsel %vm125, %v122, 0
    %129 = vmatpush.bf16.msra.mxu0 0
    %130 = vmatpush.bf16.msra.mxu0 0
    %131 = vmatpush.bf16.msra.mxu0 0
    %132 = vmatpush.bf16.msra.mxu0 0
    %133 = vmatpush.bf16.msra.mxu0 0
    %134 = vmatpush.bf16.msra.mxu0 0
    %135 = vmatpush.bf16.msra.mxu0 %v124
    %136 = vmatpush.bf16.msra.mxu0 %v123
    %137 = vmatmul.bf16.gmra.mxu0 %v127
    %v138 = vpop.f32.mrf.mxu0
    %v139 = vadd.f32 0.0, %v138
    %v140 = vpop.f32.mrf.mxu0
    %v141 = vadd.f32 0.0, %v140
    %142 = vdwg.mxu0
    %v143 = vadd.f32 %v139, %v112
    %v144 = vadd.f32 %v141, %v113
    %147 = vrot.lane.b32.xlu0 %v114, 32
    %v148 = vpop.permute.xlu0 %147
    %149 = vrot.lane.b32.xlu0 %v115, 32
    %v150 = vpop.permute.xlu0 %149
    %v153 = vadd.f32 %v139, %v148
    %v154 = vadd.f32 %v141, %v150
    %v155 = vperm.slane %v116, 0
    %157 = vrot.lane.b32.xlu0 %v155, 64
    %v158 = vpop.permute.xlu0 %157
    %v160 = vadd.f32 %v139, %v158
    %v161 = vadd.f32 %v141, %v158
    %v162 = vpack.c.bf16 %v144, %v143
    %v163 = vpack.c.bf16 %v154, %v153
    %165 = vrot.lane.b32.xlu0 %v163, 96
    %v166 = vpop.permute.xlu0 %165
    %v168 = vsel %vm53, %v162, 0
    %v171 = vsel %vm53, %v166, 0
    %173 = vmatpush.bf16.xpose.msra.mxu0 0
    %174 = vmatpush.bf16.xpose.msra.mxu0 0
    %175 = vmatpush.bf16.xpose.msra.mxu0 0
    %176 = vmatpush.bf16.xpose.msra.mxu0 0
    %177 = vmatpush.bf16.xpose.msra.mxu0 0
    %178 = vmatpush.bf16.xpose.msra.mxu0 0
    %179 = vmatpush.bf16.xpose.msra.mxu0 0
    %180 = vmatpush.bf16.xpose.msra.mxu0 %v171
    %181 = vmatmul.bf16.gmra.mxu0 %v168
    %v182 = vpop.f32.mrf.mxu0
    %v183 = vadd.f32 0.0, %v182
    %v184 = vpop.f32.mrf.mxu0
    %v185 = vadd.f32 0.0, %v184
    %186 = vdwg.mxu0
    %v187 = vmul.f32 %v183, 0.35355338
    %v188 = vmul.f32 %v185, 0.35355338
    %v190 = vperm.slane %v46, 0
    %v192 = vadd.f32 %v187, %v190
    %v193 = vadd.f32 %v188, %v190
    %vm194 = vcmask 80896
    %v195 = vsel %vm194, %v192, -inf
    %196 = vmax.xlane.f32.xlu0 %v195
    %v197 = vpop.xlane.xlu0 %196
    %vm198 = vcmask 74752
    %v199 = vsel %vm198, %v193, -inf
    %200 = vmax.xlane.f32.xlu0 %v199
    %v201 = vpop.xlane.xlu0 %200
    %v202 = vsub.f32 %v192, %v197
    %v203 = vsub.f32 %v193, %v201
    %v204 = vmul.f32 %v202, 1.442695
    %v205 = vpow.pop %v204
    %v206 = vmul.f32 %v203, 1.442695
    %v207 = vpow.pop %v206
    %v208 = vsel %vm194, %v205, 0.0
    %209 = vadd.xlane.f32.xlu0 %v208
    %v210 = vpop.xlane.xlu0 %209
    %v211 = vsel %vm198, %v207, 0.0
    %212 = vadd.xlane.f32.xlu0 %v211
    %v213 = vpop.xlane.xlu0 %212
    %v214 = vrcp.pop %v210
    %v215 = vrcp.pop %v213
    %v216 = vmul.f32 %v205, %v214
    %v217 = vmul.f32 %v207, %v215
    %v218 = vpack.c.bf16 %v217, %v216
    %v219 = vpack.c.bf16 %v161, %v160
    %221 = vrot.lane.b32.xlu0 %v219, 64
    %v222 = vpop.permute.xlu0 %221
    %v224 = vsel %vm194, %v218, 0
    %vm226 = vcmask 1044480
    %v228 = vsel %vm226, %v222, 0
    %230 = vmatpush.bf16.msra.mxu0 0
    %231 = vmatpush.bf16.msra.mxu0 0
    %232 = vmatpush.bf16.msra.mxu0 0
    %233 = vmatpush.bf16.msra.mxu0 0
    %234 = vmatpush.bf16.msra.mxu0 0
    %235 = vmatpush.bf16.msra.mxu0 0
    %236 = vmatpush.bf16.msra.mxu0 0
    %237 = vmatpush.bf16.msra.mxu0 %v228
    %238 = vmatmul.bf16.gmra.mxu0 %v224
    %v239 = vpop.f32.mrf.mxu0
    %v240 = vadd.f32 0.0, %v239
    %v241 = vpop.f32.mrf.mxu0
    %v242 = vadd.f32 0.0, %v241
    %243 = vdwg.mxu0
    %245 = vrot.lane.b32.xlu0 %v162, 120
    %v246 = vpop.permute.xlu0 %245
    %247 = vrot.lane.b32.xlu0 %v163, 88
    %v248 = vpop.permute.xlu0 %247
    %v250 = vsel %vm53, %v246, 0
    %v253 = vsel %vm53, %v248, 0
    %255 = vmatpush.bf16.xpose.msra.mxu0 0
    %256 = vmatpush.bf16.xpose.msra.mxu0 0
    %257 = vmatpush.bf16.xpose.msra.mxu0 0
    %258 = vmatpush.bf16.xpose.msra.mxu0 0
    %259 = vmatpush.bf16.xpose.msra.mxu0 0
    %260 = vmatpush.bf16.xpose.msra.mxu0 0
    %261 = vmatpush.bf16.xpose.msra.mxu0 0
    %262 = vmatpush.bf16.xpose.msra.mxu0 %v253
    %263 = vmatmul.bf16.gmra.mxu0 %v250
    %v264 = vpop.f32.mrf.mxu0
    %v265 = vadd.f32 0.0, %v264
    %v266 = vpop.f32.mrf.mxu0
    %v267 = vadd.f32 0.0, %v266
    %268 = vdwg.mxu0
    %v269 = vmul.f32 %v265, 0.35355338
    %v270 = vmul.f32 %v267, 0.35355338
    %v271 = vadd.f32 %v269, %v190
    %v272 = vadd.f32 %v270, %v190
    %v273 = vsel %vm194, %v271, -inf
    %274 = vmax.xlane.f32.xlu0 %v273
    %v275 = vpop.xlane.xlu0 %274
    %v276 = vsel %vm198, %v272, -inf
    %277 = vmax.xlane.f32.xlu0 %v276
    %v278 = vpop.xlane.xlu0 %277
    %v279 = vsub.f32 %v271, %v275
    %v280 = vsub.f32 %v272, %v278
    %v281 = vmul.f32 %v279, 1.442695
    %v282 = vpow.pop %v281
    %v283 = vmul.f32 %v280, 1.442695
    %v284 = vpow.pop %v283
    %v285 = vsel %vm194, %v282, 0.0
    %286 = vadd.xlane.f32.xlu0 %v285
    %v287 = vpop.xlane.xlu0 %286
    %v288 = vsel %vm198, %v284, 0.0
    %289 = vadd.xlane.f32.xlu0 %v288
    %v290 = vpop.xlane.xlu0 %289
    %v291 = vrcp.pop %v287
    %v292 = vrcp.pop %v290
    %v293 = vmul.f32 %v282, %v291
    %v294 = vmul.f32 %v284, %v292
    %v295 = vpack.c.bf16 %v294, %v293
    %296 = vrot.lane.b32.xlu0 %v219, 56
    %v297 = vpop.permute.xlu0 %296
    %v299 = vsel %vm194, %v295, 0
    %v302 = vsel %vm226, %v297, 0
    %304 = vmatpush.bf16.msra.mxu0 0
    %305 = vmatpush.bf16.msra.mxu0 0
    %306 = vmatpush.bf16.msra.mxu0 0
    %307 = vmatpush.bf16.msra.mxu0 0
    %308 = vmatpush.bf16.msra.mxu0 0
    %309 = vmatpush.bf16.msra.mxu0 0
    %310 = vmatpush.bf16.msra.mxu0 0
    %311 = vmatpush.bf16.msra.mxu0 %v302
    %312 = vmatmul.bf16.gmra.mxu0 %v299
    %v313 = vpop.f32.mrf.mxu0
    %v314 = vadd.f32 0.0, %v313
    %v315 = vpop.f32.mrf.mxu0
    %v316 = vadd.f32 0.0, %v315
    %317 = vdwg.mxu0
    %318 = vrot.lane.b32.xlu0 %v162, 112
    %v319 = vpop.permute.xlu0 %318
    %320 = vrot.lane.b32.xlu0 %v163, 80
    %v321 = vpop.permute.xlu0 %320
    %v323 = vsel %vm53, %v319, 0
    %v326 = vsel %vm53, %v321, 0
    %328 = vmatpush.bf16.xpose.msra.mxu0 0
    %329 = vmatpush.bf16.xpose.msra.mxu0 0
    %330 = vmatpush.bf16.xpose.msra.mxu0 0
    %331 = vmatpush.bf16.xpose.msra.mxu0 0
    %332 = vmatpush.bf16.xpose.msra.mxu0 0
    %333 = vmatpush.bf16.xpose.msra.mxu0 0
    %334 = vmatpush.bf16.xpose.msra.mxu0 0
    %335 = vmatpush.bf16.xpose.msra.mxu0 %v326
    %336 = vmatmul.bf16.gmra.mxu0 %v323
    %v337 = vpop.f32.mrf.mxu0
    %v338 = vadd.f32 0.0, %v337
    %v339 = vpop.f32.mrf.mxu0
    %v340 = vadd.f32 0.0, %v339
    %341 = vdwg.mxu0
    %v342 = vmul.f32 %v338, 0.35355338
    %v343 = vmul.f32 %v340, 0.35355338
    %v344 = vadd.f32 %v342, %v190
    %v345 = vadd.f32 %v343, %v190
    %v346 = vsel %vm194, %v344, -inf
    %347 = vmax.xlane.f32.xlu0 %v346
    %v348 = vpop.xlane.xlu0 %347
    %v349 = vsel %vm198, %v345, -inf
    %350 = vmax.xlane.f32.xlu0 %v349
    %v351 = vpop.xlane.xlu0 %350
    %v352 = vsub.f32 %v344, %v348
    %v353 = vsub.f32 %v345, %v351
    %v354 = vmul.f32 %v352, 1.442695
    %v355 = vpow.pop %v354
    %v356 = vmul.f32 %v353, 1.442695
    %v357 = vpow.pop %v356
    %v358 = vsel %vm194, %v355, 0.0
    %359 = vadd.xlane.f32.xlu0 %v358
    %v360 = vpop.xlane.xlu0 %359
    %v361 = vsel %vm198, %v357, 0.0
    %362 = vadd.xlane.f32.xlu0 %v361
    %v363 = vpop.xlane.xlu0 %362
    %v364 = vrcp.pop %v360
    %v365 = vrcp.pop %v363
    %v366 = vmul.f32 %v355, %v364
    %v367 = vmul.f32 %v357, %v365
    %v368 = vpack.c.bf16 %v367, %v366
    %369 = vrot.lane.b32.xlu0 %v219, 48
    %v370 = vpop.permute.xlu0 %369
    %v372 = vsel %vm194, %v368, 0
    %v375 = vsel %vm226, %v370, 0
    %377 = vmatpush.bf16.msra.mxu0 0
    %378 = vmatpush.bf16.msra.mxu0 0
    %379 = vmatpush.bf16.msra.mxu0 0
    %380 = vmatpush.bf16.msra.mxu0 0
    %381 = vmatpush.bf16.msra.mxu0 0
    %382 = vmatpush.bf16.msra.mxu0 0
    %383 = vmatpush.bf16.msra.mxu0 0
    %384 = vmatpush.bf16.msra.mxu0 %v375
    %385 = vmatmul.bf16.gmra.mxu0 %v372
    %v386 = vpop.f32.mrf.mxu0
    %v387 = vadd.f32 0.0, %v386
    %v388 = vpop.f32.mrf.mxu0
    %v389 = vadd.f32 0.0, %v388
    %390 = vdwg.mxu0
    %391 = vrot.lane.b32.xlu0 %v162, 104
    %v392 = vpop.permute.xlu0 %391
    %393 = vrot.lane.b32.xlu0 %v163, 72
    %v394 = vpop.permute.xlu0 %393
    %v396 = vsel %vm53, %v392, 0
    %v399 = vsel %vm53, %v394, 0
    %401 = vmatpush.bf16.xpose.msra.mxu0 0
    %402 = vmatpush.bf16.xpose.msra.mxu0 0
    %403 = vmatpush.bf16.xpose.msra.mxu0 0
    %404 = vmatpush.bf16.xpose.msra.mxu0 0
    %405 = vmatpush.bf16.xpose.msra.mxu0 0
    %406 = vmatpush.bf16.xpose.msra.mxu0 0
    %407 = vmatpush.bf16.xpose.msra.mxu0 0
    %408 = vmatpush.bf16.xpose.msra.mxu0 %v399
    %409 = vmatmul.bf16.gmra.mxu0 %v396
    %v410 = vpop.f32.mrf.mxu0
    %v411 = vadd.f32 0.0, %v410
    %v412 = vpop.f32.mrf.mxu0
    %v413 = vadd.f32 0.0, %v412
    %414 = vdwg.mxu0
    %v415 = vmul.f32 %v411, 0.35355338
    %v416 = vmul.f32 %v413, 0.35355338
    %v417 = vadd.f32 %v415, %v190
    %v418 = vadd.f32 %v416, %v190
    %v419 = vsel %vm194, %v417, -inf
    %420 = vmax.xlane.f32.xlu0 %v419
    %v421 = vpop.xlane.xlu0 %420
    %v422 = vsel %vm198, %v418, -inf
    %423 = vmax.xlane.f32.xlu0 %v422
    %v424 = vpop.xlane.xlu0 %423
    %v425 = vsub.f32 %v417, %v421
    %v426 = vsub.f32 %v418, %v424
    %v427 = vmul.f32 %v425, 1.442695
    %v428 = vpow.pop %v427
    %v429 = vmul.f32 %v426, 1.442695
    %v430 = vpow.pop %v429
    %v431 = vsel %vm194, %v428, 0.0
    %432 = vadd.xlane.f32.xlu0 %v431
    %v433 = vpop.xlane.xlu0 %432
    %v434 = vsel %vm198, %v430, 0.0
    %435 = vadd.xlane.f32.xlu0 %v434
    %v436 = vpop.xlane.xlu0 %435
    %v437 = vrcp.pop %v433
    %v438 = vrcp.pop %v436
    %v439 = vmul.f32 %v428, %v437
    %v440 = vmul.f32 %v430, %v438
    %v441 = vpack.c.bf16 %v440, %v439
    %442 = vrot.lane.b32.xlu0 %v219, 40
    %v443 = vpop.permute.xlu0 %442
    %v445 = vsel %vm194, %v441, 0
    %v448 = vsel %vm226, %v443, 0
    %450 = vmatpush.bf16.msra.mxu0 0
    %451 = vmatpush.bf16.msra.mxu0 0
    %452 = vmatpush.bf16.msra.mxu0 0
    %453 = vmatpush.bf16.msra.mxu0 0
    %454 = vmatpush.bf16.msra.mxu0 0
    %455 = vmatpush.bf16.msra.mxu0 0
    %456 = vmatpush.bf16.msra.mxu0 0
    %457 = vmatpush.bf16.msra.mxu0 %v448
    %458 = vmatmul.bf16.gmra.mxu0 %v445
    %v459 = vpop.f32.mrf.mxu0
    %v460 = vadd.f32 0.0, %v459
    %v461 = vpop.f32.mrf.mxu0
    %v462 = vadd.f32 0.0, %v461
    %463 = vdwg.mxu0
    %466 = vrot.lane.b32.xlu0 %v314, 8
    %v467 = vpop.permute.xlu0 %466
    %468 = vrot.lane.b32.xlu0 %v316, 8
    %v469 = vpop.permute.xlu0 %468
    %474 = vrot.lane.b32.xlu0 %v387, 16
    %v475 = vpop.permute.xlu0 %474
    %476 = vrot.lane.b32.xlu0 %v389, 16
    %v477 = vpop.permute.xlu0 %476
    %482 = vrot.lane.b32.xlu0 %v460, 24
    %v483 = vpop.permute.xlu0 %482
    %484 = vrot.lane.b32.xlu0 %v462, 24
    %v485 = vpop.permute.xlu0 %484
    %v488 = vsel %vm53, %v240, %v467
    %v489 = vsel %vm53, %v242, %v469
    %vm490 = vcmask 130048
    %v491 = vsel %vm490, %v488, %v475
    %v492 = vsel %vm490, %v489, %v477
    %vm493 = vcmask 195584
    %v494 = vsel %vm493, %v491, %v483
    %v495 = vsel %vm493, %v492, %v485
    %v496 = vpack.c.bf16 %v495, %v494
    %v497 = vpack.c.bf16 %v118, %v117
    %v498 = vpack.c.bf16 %v120, %v119
    %v499 = vperm.slane %v121, 0
    %v501 = vsel %vm125, %v496, 0
    %503 = vmatpush.bf16.msra.mxu0 0
    %504 = vmatpush.bf16.msra.mxu0 0
    %505 = vmatpush.bf16.msra.mxu0 0
    %506 = vmatpush.bf16.msra.mxu0 0
    %507 = vmatpush.bf16.msra.mxu0 0
    %508 = vmatpush.bf16.msra.mxu0 0
    %509 = vmatpush.bf16.msra.mxu0 %v498
    %510 = vmatpush.bf16.msra.mxu0 %v497
    %511 = vmatmul.bf16.gmra.mxu0 %v501
    %v512 = vpop.f32.mrf.mxu0
    %v513 = vadd.f32 %v499, %v512
    %v514 = vpop.f32.mrf.mxu0
    %v515 = vadd.f32 %v499, %v514
    %516 = vdwg.mxu0
    %v517 = vadd.f32 %v107, %v513
    %v518 = vadd.f32 %v102, %v515
    %v519 = vld [vmem:[%s6 + $0xe9] sm:$0x1]
    %v520 = vld [vmem:[%s6 + $0xea] sm:$0x1]
    %v521 = vsel %vm125, %v517, 0.0
    %522 = vadd.xlane.f32.xlu0 %v521
    %v523 = vpop.xlane.xlu0 %522
    %vm524 = vcmask 254976
    %v525 = vsel %vm524, %v518, 0.0
    %526 = vadd.xlane.f32.xlu0 %v525
    %v527 = vpop.xlane.xlu0 %526
    %v528 = vrcp.pop 32.0
    %v529 = vmul.f32 32.0, %v528
    %v530 = vsub.f32 1.0, %v529
    %v531 = vmul.f32 %v528, %v530
    %v532 = vadd.f32 %v528, %v531
    %vm533 = vweird.f32 %v528
    %v534 = vsel %vm533, %v528, %v532
    %v535 = vmul.f32 %v523, %v534
    %v536 = vmul.f32 %v527, %v534
    %v537 = vsub.f32 %v517, %v535
    %v538 = vsub.f32 %v518, %v536
    %v539 = vmul.f32 %v537, %v537
    %v540 = vmul.f32 %v538, %v538
    %v541 = vsel %vm125, %v539, 0.0
    %542 = vadd.xlane.f32.xlu0 %v541
    %v543 = vpop.xlane.xlu0 %542
    %v544 = vsel %vm524, %v540, 0.0
    %545 = vadd.xlane.f32.xlu0 %v544
    %v546 = vpop.xlane.xlu0 %545
    %v547 = vmul.f32 %v543, %v534
    %v548 = vmul.f32 %v546, %v534
    %v549 = vadd.f32 %v547, 1e-05
    %v550 = vadd.f32 %v548, 1e-05
    %v551 = vrsqrt.pop %v549
    %v552 = vmul.f32 %v551, %v549
    %v553 = vmul.f32 %v552, %v551
    %v554 = vmul.f32 0.5, %v553
    %v555 = vsub.f32 1.5, %v554
    %v556 = vmul.f32 %v551, %v555
    %vm557 = vweird.f32 %v549
    %vm558 = vweird.f32 %v551
    %vm559 = vmor %vm557, %vm558
    %v560 = vsel %vm559, %v551, %v556
    %v561 = vrsqrt.pop %v550
    %v562 = vmul.f32 %v561, %v550
    %v563 = vmul.f32 %v562, %v561
    %v564 = vmul.f32 0.5, %v563
    %v565 = vsub.f32 1.5, %v564
    %v566 = vmul.f32 %v561, %v565
    %vm567 = vweird.f32 %v550
    %vm568 = vweird.f32 %v561
    %vm569 = vmor %vm567, %vm568
    %v570 = vsel %vm569, %v561, %v566
    %v571 = vmul.f32 %v537, %v560
    %v572 = vmul.f32 %v538, %v570
    %v573 = vperm.slane %v519, 0
    %v574 = vmul.f32 %v571, %v573
    %v575 = vmul.f32 %v572, %v573
    %v576 = vperm.slane %v520, 0
    %v577 = vadd.f32 %v574, %v576
    %v578 = vadd.f32 %v575, %v576
    %v579 = vld [vmem:[%s7 + $0x28] sm:$0xff]
    %v580 = vld [vmem:[%s7 + $0x30] sm:$0xff]
    %v581 = vld [vmem:[%s7 + $0x38] sm:$0xff]
    %v582 = vld [vmem:[%s7 + $0x40] sm:$0xff]
    %v583 = vld [vmem:[%s7 + $0x48] sm:$0x1]
    %v584 = vld [vmem:[%s6 + $0xa8] sm:$0xff]
    %v585 = vld [vmem:[%s6 + $0xb0] sm:$0xff]
    %v586 = vld [vmem:[%s6 + $0xb8] sm:$0xff]
    %v587 = vld [vmem:[%s6 + $0xc0] sm:$0xff]
    %v588 = vld [vmem:[%s6 + $0xc8] sm:$0xff]
    %v589 = vld [vmem:[%s6 + $0xd0] sm:$0xff]
    %v590 = vld [vmem:[%s6 + $0xd8] sm:$0xff]
    %v591 = vld [vmem:[%s6 + $0xe0] sm:$0xff]
    %v592 = vld [vmem:[%s6 + $0xe8] sm:$0x1]
    %v593 = vpack.c.bf16 %v578, %v577
    %v594 = vpack.c.bf16 %v580, %v579
    %v595 = vpack.c.bf16 %v582, %v581
    %v596 = vperm.slane %v583, 0
    %v598 = vsel %vm125, %v593, 0
    %600 = vmatpush.bf16.msra.mxu0 0
    %601 = vmatpush.bf16.msra.mxu0 0
    %602 = vmatpush.bf16.msra.mxu0 0
    %603 = vmatpush.bf16.msra.mxu0 0
    %604 = vmatpush.bf16.msra.mxu0 0
    %605 = vmatpush.bf16.msra.mxu0 0
    %606 = vmatpush.bf16.msra.mxu0 %v595
    %607 = vmatpush.bf16.msra.mxu0 %v594
    %608 = vmatmul.bf16.gmra.mxu0 %v598
    %v609 = vpop.f32.mrf.mxu0
    %v610 = vadd.f32 %v596, %v609
    %v611 = vpop.f32.mrf.mxu0
    %v612 = vadd.f32 %v596, %v611
    %613 = vdwg.mxu0
    %v614 = vmax.f32 %v610, 0.0
    %v615 = vmax.f32 %v612, 0.0
    %v616 = vpack.c.bf16 %v615, %v614
    %v617 = vpack.c.bf16 %v585, %v584
    %v618 = vpack.c.bf16 %v587, %v586
    %v619 = vpack.c.bf16 %v589, %v588
    %v620 = vpack.c.bf16 %v591, %v590
    %v621 = vperm.slane %v592, 0
    %vm622 = vcmask 523264
    %v624 = vsel %vm622, %v616, 0
    %626 = vmatpush.bf16.msra.mxu0 0
    %627 = vmatpush.bf16.msra.mxu0 0
    %628 = vmatpush.bf16.msra.mxu0 0
    %629 = vmatpush.bf16.msra.mxu0 0
    %630 = vmatpush.bf16.msra.mxu0 %v620
    %631 = vmatpush.bf16.msra.mxu0 %v619
    %632 = vmatpush.bf16.msra.mxu0 %v618
    %633 = vmatpush.bf16.msra.mxu0 %v617
    %634 = vmatmul.bf16.gmra.mxu0 %v624
    %v635 = vpop.f32.mrf.mxu0
    %v636 = vadd.f32 %v621, %v635
    %v637 = vpop.f32.mrf.mxu0
    %638 = vdwg.mxu0
    %v639 = vadd.f32 %v577, %v636
    %v640 = vld [vmem:[%s6 + $0xeb] sm:$0x1]
    %v641 = vld [vmem:[%s6 + $0xec] sm:$0x1]
    %v642 = vsel %vm125, %v639, 0.0
    %643 = vadd.xlane.f32.xlu0 %v642
    %v644 = vpop.xlane.xlu0 %643
    %v645 = vmul.f32 %v644, %v534
    %v646 = vsub.f32 %v639, %v645
    %v647 = vmul.f32 %v646, %v646
    %v648 = vsel %vm125, %v647, 0.0
    %649 = vadd.xlane.f32.xlu0 %v648
    %v650 = vpop.xlane.xlu0 %649
    %v651 = vmul.f32 %v650, %v534
    %v652 = vadd.f32 %v651, 1e-05
    %v653 = vrsqrt.pop %v652
    %v654 = vmul.f32 %v653, %v652
    %v655 = vmul.f32 %v654, %v653
    %v656 = vmul.f32 0.5, %v655
    %v657 = vsub.f32 1.5, %v656
    %v658 = vmul.f32 %v653, %v657
    %vm659 = vweird.f32 %v652
    %vm660 = vweird.f32 %v653
    %vm661 = vmor %vm659, %vm660
    %v662 = vsel %vm661, %v653, %v658
    %v663 = vmul.f32 %v646, %v662
    %v664 = vperm.slane %v640, 0
    %v665 = vmul.f32 %v663, %v664
    %v666 = vperm.slane %v641, 0
    %v667 = vadd.f32 %v665, %v666
    %v668 = vld [vmem:[%s7] sm:$0xff]
    %v669 = vld [vmem:[%s7 + $0x8] sm:$0xff]
    %v670 = vld [vmem:[%s7 + $0x10] sm:$0xff]
    %v671 = vld [vmem:[%s7 + $0x18] sm:$0xff]
    %v672 = vpack.c.bf16 %v667, %v667
    %v673 = vpack.c.bf16 %v669, %v668
    %v674 = vpack.c.bf16 %v671, %v670
    %v675 = vld [vmem:[%s7 + $0x20] sm:$0x1]
    %v677 = vsel %vm125, %v672, 0
    %679 = vmatpush.bf16.msra.mxu0 0
    %680 = vmatpush.bf16.msra.mxu0 0
    %681 = vmatpush.bf16.msra.mxu0 0
    %682 = vmatpush.bf16.msra.mxu0 0
    %683 = vmatpush.bf16.msra.mxu0 0
    %684 = vmatpush.bf16.msra.mxu0 0
    %685 = vmatpush.bf16.msra.mxu0 %v674
    %686 = vmatpush.bf16.msra.mxu0 %v673
    %687 = vmatmul.bf16.gmra.mxu0 %v677
    %v688 = vpop.f32.mrf.mxu0
    %v689 = vadd.f32 %v675, %v688
    %v690 = vpop.f32.mrf.mxu0
    %691 = vdwg.mxu0
    %v692 = vmul.f32 %v689, 0.5
    %v693 = vmul.f32 %v692, 1.442695
    %v694 = vpow.pop %v693
    %v696 = vperm.slane %v45, 0
    %697 = vrot.lane.b32.xlu0 %v696, 32
    %v698 = vpop.permute.xlu0 %697
    %v700 = vmul.f32 %v694, %v698
    %702 = vrot.lane.b32.xlu0 %v700, 96
    %v703 = vpop.permute.xlu0 %702
    %v705 = vadd.f32 %v689, %v703
    %v706 = vld [vmem:[%s6 + $0x28] sm:$0xff]
    %v707 = vld [vmem:[%s6 + $0x30] sm:$0xff]
    %v708 = vld [vmem:[%s6 + $0x38] sm:$0xff]
    %v709 = vld [vmem:[%s6 + $0x40] sm:$0xff]
    %v710 = vpack.c.bf16 %v705, %v705
    %v711 = vpack.c.bf16 %v707, %v706
    %v712 = vpack.c.bf16 %v709, %v708
    %v713 = vld [vmem:[%s6 + $0x48] sm:$0x1]
    %v715 = vsel %vm125, %v710, 0
    %717 = vmatpush.bf16.msra.mxu0 0
    %718 = vmatpush.bf16.msra.mxu0 0
    %719 = vmatpush.bf16.msra.mxu0 0
    %720 = vmatpush.bf16.msra.mxu0 0
    %721 = vmatpush.bf16.msra.mxu0 0
    %722 = vmatpush.bf16.msra.mxu0 0
    %723 = vmatpush.bf16.msra.mxu0 %v712
    %724 = vmatpush.bf16.msra.mxu0 %v711
    %725 = vmatmul.bf16.gmra.mxu0 %v715
    %v726 = vpop.f32.mrf.mxu0
    %v727 = vadd.f32 %v713, %v726
    %v728 = vpop.f32.mrf.mxu0
    %729 = vdwg.mxu0
    %v730 = vpack.c.bf16 %v41, %v39
    %v731 = vpack.c.bf16 %v42, %v40
    %733 = vst [vmem:[#allocation1] ss:$2 sm:$0xff] %v47
    %v734 = vld.sshfl [vmem:[#allocation1] sm:$0xff pattern:$0x75316420]
    %v735 = vld.sshfl [vmem:[#allocation1 + $0x8] sm:$0xff pattern:$0x75316420]
    %v738 = vpack.c.bf16 %v734, %v734
    %v739 = vpack.c.bf16 %v735, %v735
    %740 = vmatpush.bf16.xpose.msra.mxu0 0
    %741 = vmatpush.bf16.xpose.msra.mxu0 0
    %742 = vmatpush.bf16.xpose.msra.mxu0 0
    %743 = vmatpush.bf16.xpose.msra.mxu0 0
    %744 = vmatpush.bf16.xpose.msra.mxu0 0
    %745 = vmatpush.bf16.xpose.msra.mxu0 0
    %746 = vmatpush.bf16.xpose.msra.mxu0 0
    %747 = vmatpush.bf16.xpose.msra.mxu0 %v738
    %748 = vmatmul.bf16.gmra.mxu0 %v730
    %v749 = vpop.f32.mrf.mxu0
    %v750 = vadd.f32 0.0, %v749
    %v751 = vpop.f32.mrf.mxu0
    %v752 = vadd.f32 0.0, %v751
    %753 = vdwg.mxu0
    %754 = vmatpush.bf16.xpose.msra.mxu0 0
    %755 = vmatpush.bf16.xpose.msra.mxu0 0
    %756 = vmatpush.bf16.xpose.msra.mxu0 0
    %757 = vmatpush.bf16.xpose.msra.mxu0 0
    %758 = vmatpush.bf16.xpose.msra.mxu0 0
    %759 = vmatpush.bf16.xpose.msra.mxu0 0
    %760 = vmatpush.bf16.xpose.msra.mxu0 0
    %761 = vmatpush.bf16.xpose.msra.mxu0 %v739
    %762 = vmatmul.bf16.gmra.mxu0 %v731
    %v763 = vpop.f32.mrf.mxu0
    %v764 = vadd.f32 %v750, %v763
    %v765 = vpop.f32.mrf.mxu0
    %v766 = vadd.f32 %v752, %v765
    %767 = vdwg.mxu0
    %v768 = vld [vmem:[%s6 + $0x49] sm:$0x7]
    %v769 = vpack.c.bf16 %v766, %v764
    %v770 = vpack.c.bf16 %v768, %v768
    %v771 = vld [vmem:[%s6 + $0x4c] sm:$0x1]
    %v772 = vperm.slane %v771, 0
    %vm773 = vcmask 23552
    %v775 = vsel %vm773, %v769, 0
    %v777 = vsel %vm104, 4294967295, 65535
    %v778 = vsel %vm106, %v777, 0
    %v780 = vand.u32 %v770, %v778
    %782 = vmatpush.bf16.msra.mxu0 0
    %783 = vmatpush.bf16.msra.mxu0 0
    %784 = vmatpush.bf16.msra.mxu0 0
    %785 = vmatpush.bf16.msra.mxu0 0
    %786 = vmatpush.bf16.msra.mxu0 0
    %787 = vmatpush.bf16.msra.mxu0 0
    %788 = vmatpush.bf16.msra.mxu0 0
    %789 = vmatpush.bf16.msra.mxu0 %v780
    %790 = vmatmul.bf16.gmra.mxu0 %v775
    %v791 = vpop.f32.mrf.mxu0
    %v792 = vadd.f32 %v772, %v791
    %v793 = vpop.f32.mrf.mxu0
    %v794 = vadd.f32 %v772, %v793
    %795 = vdwg.mxu0
    %v796 = vld [vmem:[%s6 + $0x50] sm:$0xff]
    %v797 = vpack.c.bf16 %v796, %v796
    %v798 = vld [vmem:[%s6 + $0x58] sm:$0x1]
    %v800 = vsel %vm57, %v797, 0
    %802 = vmatpush.bf16.msra.mxu0 0
    %803 = vmatpush.bf16.msra.mxu0 0
    %804 = vmatpush.bf16.msra.mxu0 0
    %805 = vmatpush.bf16.msra.mxu0 0
    %806 = vmatpush.bf16.msra.mxu0 0
    %807 = vmatpush.bf16.msra.mxu0 0
    %808 = vmatpush.bf16.msra.mxu0 0
    %809 = vmatpush.bf16.msra.mxu0 %v800
    %810 = vmatmul.bf16.gmra.mxu0 %v79
    %v811 = vpop.f32.mrf.mxu0
    %v812 = vadd.f32 %v798, %v811
    %v813 = vpop.f32.mrf.mxu0
    %814 = vdwg.mxu0
    %v816 = vrot.slane %v812, 7
    %v820 = vrot.slane %v792, 6
    %v821 = vrot.slane %v794, 6
    %v822 = vsel %vm106, %v820, %v821
    %v826 = vsel %vm104, %v727, %v816
    %v827 = vsel %vm106, %v826, %v820
    %v828 = vld [vmem:[%s8 + $0x20] sm:$0xff]
    %v829 = vld [vmem:[%s8 + $0x28] sm:$0xff]
    %v830 = vld [vmem:[%s8 + $0x30] sm:$0xff]
    %v831 = vld [vmem:[%s8 + $0x38] sm:$0xff]
    %v832 = vld [vmem:[%s6 + $0xf0] sm:$0xff]
    %v833 = vld [vmem:[%s6 + $0xf8] sm:$0xff]
    %v834 = vld [vmem:[%s6 + $0x100] sm:$0x3]
    %v835 = vld [vmem:[%s6 + $0x108] sm:$0xff]
    %v836 = vld [vmem:[%s6 + $0x110] sm:$0xff]
    %v837 = vld [vmem:[%s6 + $0x118] sm:$0x3]
    %v838 = vld [vmem:[%s6 + $0x11a] sm:$0x1]
    %v839 = vld [vmem:[%s6 + $0x120] sm:$0xff]
    %v840 = vld [vmem:[%s6 + $0x128] sm:$0xff]
    %v841 = vld [vmem:[%s6 + $0x130] sm:$0xff]
    %v842 = vld [vmem:[%s6 + $0x138] sm:$0xff]
    %v843 = vld [vmem:[%s6 + $0x140] sm:$0x1]
    %v844 = vpack.c.bf16 %v822, %v827
    %v845 = vpack.c.bf16 %v821, %v821
    %v846 = vpack.c.bf16 %v829, %v828
    %v847 = vpack.c.bf16 %v831, %v830
    %v849 = vsel %vm125, %v844, 0
    %v852 = vsel %vm125, %v845, 0
    %854 = vmatpush.bf16.msra.mxu0 0
    %855 = vmatpush.bf16.msra.mxu0 0
    %856 = vmatpush.bf16.msra.mxu0 0
    %857 = vmatpush.bf16.msra.mxu0 0
    %858 = vmatpush.bf16.msra.mxu0 0
    %859 = vmatpush.bf16.msra.mxu0 0
    %860 = vmatpush.bf16.msra.mxu0 %v847
    %861 = vmatpush.bf16.msra.mxu0 %v846
    %862 = vmatmul.bf16.gmra.mxu0 %v849
    %v863 = vpop.f32.mrf.mxu0
    %v864 = vadd.f32 0.0, %v863
    %v865 = vpop.f32.mrf.mxu0
    %v866 = vadd.f32 0.0, %v865
    %867 = vmatmul.bf16.gmra.mxu0 %v852
    %v868 = vpop.f32.mrf.mxu0
    %v869 = vadd.f32 0.0, %v868
    %v870 = vpop.f32.mrf.mxu0
    %871 = vdwg.mxu0
    %v872 = vadd.f32 %v864, %v832
    %v873 = vadd.f32 %v866, %v833
    %v874 = vadd.f32 %v869, %v834
    %878 = vrot.lane.b32.xlu0 %v835, 32
    %v879 = vpop.permute.xlu0 %878
    %880 = vrot.lane.b32.xlu0 %v836, 32
    %v881 = vpop.permute.xlu0 %880
    %882 = vrot.lane.b32.xlu0 %v837, 32
    %v883 = vpop.permute.xlu0 %882
    %v887 = vadd.f32 %v864, %v879
    %v888 = vadd.f32 %v866, %v881
    %v889 = vadd.f32 %v869, %v883
    %v890 = vperm.slane %v838, 0
    %892 = vrot.lane.b32.xlu0 %v890, 64
    %v893 = vpop.permute.xlu0 %892
    %v895 = vadd.f32 %v864, %v893
    %v896 = vadd.f32 %v866, %v893
    %v897 = vadd.f32 %v869, %v893
    %v898 = vpack.c.bf16 %v873, %v872
    %v899 = vpack.c.bf16 %v874, %v874
    %v900 = vpack.c.bf16 %v888, %v887
    %v901 = vpack.c.bf16 %v889, %v889
    %904 = vrot.lane.b32.xlu0 %v900, 96
    %v905 = vpop.permute.xlu0 %904
    %906 = vrot.lane.b32.xlu0 %v901, 96
    %v907 = vpop.permute.xlu0 %906
    %v909 = vsel %vm53, %v898, 0
    %v912 = vsel %vm53, %v899, 0
    %v915 = vsel %vm53, %v905, 0
    %v918 = vsel %vm53, %v907, 0
    %920 = vmatpush.bf16.xpose.msra.mxu0 0
    %921 = vmatpush.bf16.xpose.msra.mxu0 0
    %922 = vmatpush.bf16.xpose.msra.mxu0 0
    %923 = vmatpush.bf16.xpose.msra.mxu0 0
    %924 = vmatpush.bf16.xpose.msra.mxu0 0
    %925 = vmatpush.bf16.xpose.msra.mxu0 0
    %926 = vmatpush.bf16.xpose.msra.mxu0 %v918
    %927 = vmatpush.bf16.xpose.msra.mxu0 %v915
    %928 = vmatmul.bf16.gmra.mxu0 %v909
    %v929 = vpop.f32.mrf.mxu0
    %v930 = vadd.f32 0.0, %v929
    %v931 = vpop.f32.mrf.mxu0
    %v932 = vadd.f32 0.0, %v931
    %933 = vmatmul.bf16.gmra.mxu0 %v912
    %v934 = vpop.f32.mrf.mxu0
    %v935 = vadd.f32 0.0, %v934
    %v936 = vpop.f32.mrf.mxu0
    %937 = vdwg.mxu0
    %v938 = vmul.f32 %v930, 0.35355338
    %v939 = vmul.f32 %v932, 0.35355338
    %v940 = vmul.f32 %v935, 0.35355338
    %vm941 = vcmask 146432
    %v942 = vsel %vm941, %v938, -inf
    %943 = vmax.xlane.f32.xlu0 %v942
    %v944 = vpop.xlane.xlu0 %943
    %v945 = vsel %vm941, %v939, -inf
    %946 = vmax.xlane.f32.xlu0 %v945
    %v947 = vpop.xlane.xlu0 %946
    %vm948 = vcmask 140288
    %v949 = vsel %vm948, %v940, -inf
    %950 = vmax.xlane.f32.xlu0 %v949
    %v951 = vpop.xlane.xlu0 %950
    %v952 = vsub.f32 %v938, %v944
    %v953 = vsub.f32 %v939, %v947
    %v954 = vsub.f32 %v940, %v951
    %v955 = vmul.f32 %v952, 1.442695
    %v956 = vpow.pop %v955
    %v957 = vmul.f32 %v953, 1.442695
    %v958 = vpow.pop %v957
    %v959 = vmul.f32 %v954, 1.442695
    %v960 = vpow.pop %v959
    %v961 = vsel %vm941, %v956, 0.0
    %962 = vadd.xlane.f32.xlu0 %v961
    %v963 = vpop.xlane.xlu0 %962
    %v964 = vsel %vm941, %v958, 0.0
    %965 = vadd.xlane.f32.xlu0 %v964
    %v966 = vpop.xlane.xlu0 %965
    %v967 = vsel %vm948, %v960, 0.0
    %968 = vadd.xlane.f32.xlu0 %v967
    %v969 = vpop.xlane.xlu0 %968
    %v970 = vrcp.pop %v963
    %v971 = vrcp.pop %v966
    %v972 = vrcp.pop %v969
    %v973 = vmul.f32 %v956, %v970
    %v974 = vmul.f32 %v958, %v971
    %v975 = vmul.f32 %v960, %v972
    %v976 = vpack.c.bf16 %v974, %v973
    %v977 = vpack.c.bf16 %v975, %v975
    %v978 = vpack.c.bf16 %v896, %v895
    %v979 = vpack.c.bf16 %v897, %v897
    %982 = vrot.lane.b32.xlu0 %v978, 64
    %v983 = vpop.permute.xlu0 %982
    %984 = vrot.lane.b32.xlu0 %v979, 64
    %v985 = vpop.permute.xlu0 %984
    %v988 = vsel %vm941, %v976, 0
    %v991 = vsel %vm941, %v977, 0
    %v994 = vsel %vm104, %v985, 0
    %996 = vmatpush.bf16.msra.mxu0 0
    %997 = vmatpush.bf16.msra.mxu0 0
    %998 = vmatpush.bf16.msra.mxu0 0
    %999 = vmatpush.bf16.msra.mxu0 0
    %1000 = vmatpush.bf16.msra.mxu0 0
    %1001 = vmatpush.bf16.msra.mxu0 0
    %1002 = vmatpush.bf16.msra.mxu0 %v994
    %1003 = vmatpush.bf16.msra.mxu0 %v983
    %1004 = vmatmul.bf16.gmra.mxu0 %v988
    %v1005 = vpop.f32.mrf.mxu0
    %v1006 = vadd.f32 0.0, %v1005
    %v1007 = vpop.f32.mrf.mxu0
    %v1008 = vadd.f32 0.0, %v1007
    %1009 = vmatmul.bf16.gmra.mxu0 %v991
    %v1010 = vpop.f32.mrf.mxu0
    %v1011 = vadd.f32 0.0, %v1010
    %v1012 = vpop.f32.mrf.mxu0
    %1013 = vdwg.mxu0
    %1016 = vrot.lane.b32.xlu0 %v898, 120
    %v1017 = vpop.permute.xlu0 %1016
    %1018 = vrot.lane.b32.xlu0 %v899, 120
    %v1019 = vpop.permute.xlu0 %1018
    %1020 = vrot.lane.b32.xlu0 %v900, 88
    %v1021 = vpop.permute.xlu0 %1020
    %1022 = vrot.lane.b32.xlu0 %v901, 88
    %v1023 = vpop.permute.xlu0 %1022
    %v1025 = vsel %vm53, %v1017, 0
    %v1028 = vsel %vm53, %v1019, 0
    %v1031 = vsel %vm53, %v1021, 0
    %v1034 = vsel %vm53, %v1023, 0
    %1036 = vmatpush.bf16.xpose.msra.mxu0 0
    %1037 = vmatpush.bf16.xpose.msra.mxu0 0
    %1038 = vmatpush.bf16.xpose.msra.mxu0 0
    %1039 = vmatpush.bf16.xpose.msra.mxu0 0
    %1040 = vmatpush.bf16.xpose.msra.mxu0 0
    %1041 = vmatpush.bf16.xpose.msra.mxu0 0
    %1042 = vmatpush.bf16.xpose.msra.mxu0 %v1034
    %1043 = vmatpush.bf16.xpose.msra.mxu0 %v1031
    %1044 = vmatmul.bf16.gmra.mxu0 %v1025
    %v1045 = vpop.f32.mrf.mxu0
    %v1046 = vadd.f32 0.0, %v1045
    %v1047 = vpop.f32.mrf.mxu0
    %v1048 = vadd.f32 0.0, %v1047
    %1049 = vmatmul.bf16.gmra.mxu0 %v1028
    %v1050 = vpop.f32.mrf.mxu0
    %v1051 = vadd.f32 0.0, %v1050
    %v1052 = vpop.f32.mrf.mxu0
    %1053 = vdwg.mxu0
    %v1054 = vmul.f32 %v1046, 0.35355338
    %v1055 = vmul.f32 %v1048, 0.35355338
    %v1056 = vmul.f32 %v1051, 0.35355338
    %v1057 = vsel %vm941, %v1054, -inf
    %1058 = vmax.xlane.f32.xlu0 %v1057
    %v1059 = vpop.xlane.xlu0 %1058
    %v1060 = vsel %vm941, %v1055, -inf
    %1061 = vmax.xlane.f32.xlu0 %v1060
    %v1062 = vpop.xlane.xlu0 %1061
    %v1063 = vsel %vm948, %v1056, -inf
    %1064 = vmax.xlane.f32.xlu0 %v1063
    %v1065 = vpop.xlane.xlu0 %1064
    %v1066 = vsub.f32 %v1054, %v1059
    %v1067 = vsub.f32 %v1055, %v1062
    %v1068 = vsub.f32 %v1056, %v1065
    %v1069 = vmul.f32 %v1066, 1.442695
    %v1070 = vpow.pop %v1069
    %v1071 = vmul.f32 %v1067, 1.442695
    %v1072 = vpow.pop %v1071
    %v1073 = vmul.f32 %v1068, 1.442695
    %v1074 = vpow.pop %v1073
    %v1075 = vsel %vm941, %v1070, 0.0
    %1076 = vadd.xlane.f32.xlu0 %v1075
    %v1077 = vpop.xlane.xlu0 %1076
    %v1078 = vsel %vm941, %v1072, 0.0
    %1079 = vadd.xlane.f32.xlu0 %v1078
    %v1080 = vpop.xlane.xlu0 %1079
    %v1081 = vsel %vm948, %v1074, 0.0
    %1082 = vadd.xlane.f32.xlu0 %v1081
    %v1083 = vpop.xlane.xlu0 %1082
    %v1084 = vrcp.pop %v1077
    %v1085 = vrcp.pop %v1080
    %v1086 = vrcp.pop %v1083
    %v1087 = vmul.f32 %v1070, %v1084
    %v1088 = vmul.f32 %v1072, %v1085
    %v1089 = vmul.f32 %v1074, %v1086
    %v1090 = vpack.c.bf16 %v1088, %v1087
    %v1091 = vpack.c.bf16 %v1089, %v1089
    %1092 = vrot.lane.b32.xlu0 %v978, 56
    %v1093 = vpop.permute.xlu0 %1092
    %1094 = vrot.lane.b32.xlu0 %v979, 56
    %v1095 = vpop.permute.xlu0 %1094
    %v1098 = vsel %vm941, %v1090, 0
    %v1101 = vsel %vm941, %v1091, 0
    %v1104 = vsel %vm104, %v1095, 0
    %1106 = vmatpush.bf16.msra.mxu0 0
    %1107 = vmatpush.bf16.msra.mxu0 0
    %1108 = vmatpush.bf16.msra.mxu0 0
    %1109 = vmatpush.bf16.msra.mxu0 0
    %1110 = vmatpush.bf16.msra.mxu0 0
    %1111 = vmatpush.bf16.msra.mxu0 0
    %1112 = vmatpush.bf16.msra.mxu0 %v1104
    %1113 = vmatpush.bf16.msra.mxu0 %v1093
    %1114 = vmatmul.bf16.gmra.mxu0 %v1098
    %v1115 = vpop.f32.mrf.mxu0
    %v1116 = vadd.f32 0.0, %v1115
    %v1117 = vpop.f32.mrf.mxu0
    %v1118 = vadd.f32 0.0, %v1117
    %1119 = vmatmul.bf16.gmra.mxu0 %v1101
    %v1120 = vpop.f32.mrf.mxu0
    %v1121 = vadd.f32 0.0, %v1120
    %v1122 = vpop.f32.mrf.mxu0
    %1123 = vdwg.mxu0
    %1124 = vrot.lane.b32.xlu0 %v898, 112
    %v1125 = vpop.permute.xlu0 %1124
    %1126 = vrot.lane.b32.xlu0 %v899, 112
    %v1127 = vpop.permute.xlu0 %1126
    %1128 = vrot.lane.b32.xlu0 %v900, 80
    %v1129 = vpop.permute.xlu0 %1128
    %1130 = vrot.lane.b32.xlu0 %v901, 80
    %v1131 = vpop.permute.xlu0 %1130
    %v1133 = vsel %vm53, %v1125, 0
    %v1136 = vsel %vm53, %v1127, 0
    %v1139 = vsel %vm53, %v1129, 0
    %v1142 = vsel %vm53, %v1131, 0
    %1144 = vmatpush.bf16.xpose.msra.mxu0 0
    %1145 = vmatpush.bf16.xpose.msra.mxu0 0
    %1146 = vmatpush.bf16.xpose.msra.mxu0 0
    %1147 = vmatpush.bf16.xpose.msra.mxu0 0
    %1148 = vmatpush.bf16.xpose.msra.mxu0 0
    %1149 = vmatpush.bf16.xpose.msra.mxu0 0
    %1150 = vmatpush.bf16.xpose.msra.mxu0 %v1142
    %1151 = vmatpush.bf16.xpose.msra.mxu0 %v1139
    %1152 = vmatmul.bf16.gmra.mxu0 %v1133
    %v1153 = vpop.f32.mrf.mxu0
    %v1154 = vadd.f32 0.0, %v1153
    %v1155 = vpop.f32.mrf.mxu0
    %v1156 = vadd.f32 0.0, %v1155
    %1157 = vmatmul.bf16.gmra.mxu0 %v1136
    %v1158 = vpop.f32.mrf.mxu0
    %v1159 = vadd.f32 0.0, %v1158
    %v1160 = vpop.f32.mrf.mxu0
    %1161 = vdwg.mxu0
    %v1162 = vmul.f32 %v1154, 0.35355338
    %v1163 = vmul.f32 %v1156, 0.35355338
    %v1164 = vmul.f32 %v1159, 0.35355338
    %v1165 = vsel %vm941, %v1162, -inf
    %1166 = vmax.xlane.f32.xlu0 %v1165
    %v1167 = vpop.xlane.xlu0 %1166
    %v1168 = vsel %vm941, %v1163, -inf
    %1169 = vmax.xlane.f32.xlu0 %v1168
    %v1170 = vpop.xlane.xlu0 %1169
    %v1171 = vsel %vm948, %v1164, -inf
    %1172 = vmax.xlane.f32.xlu0 %v1171
    %v1173 = vpop.xlane.xlu0 %1172
    %v1174 = vsub.f32 %v1162, %v1167
    %v1175 = vsub.f32 %v1163, %v1170
    %v1176 = vsub.f32 %v1164, %v1173
    %v1177 = vmul.f32 %v1174, 1.442695
    %v1178 = vpow.pop %v1177
    %v1179 = vmul.f32 %v1175, 1.442695
    %v1180 = vpow.pop %v1179
    %v1181 = vmul.f32 %v1176, 1.442695
    %v1182 = vpow.pop %v1181
    %v1183 = vsel %vm941, %v1178, 0.0
    %1184 = vadd.xlane.f32.xlu0 %v1183
    %v1185 = vpop.xlane.xlu0 %1184
    %v1186 = vsel %vm941, %v1180, 0.0
    %1187 = vadd.xlane.f32.xlu0 %v1186
    %v1188 = vpop.xlane.xlu0 %1187
    %v1189 = vsel %vm948, %v1182, 0.0
    %1190 = vadd.xlane.f32.xlu0 %v1189
    %v1191 = vpop.xlane.xlu0 %1190
    %v1192 = vrcp.pop %v1185
    %v1193 = vrcp.pop %v1188
    %v1194 = vrcp.pop %v1191
    %v1195 = vmul.f32 %v1178, %v1192
    %v1196 = vmul.f32 %v1180, %v1193
    %v1197 = vmul.f32 %v1182, %v1194
    %v1198 = vpack.c.bf16 %v1196, %v1195
    %v1199 = vpack.c.bf16 %v1197, %v1197
    %1200 = vrot.lane.b32.xlu0 %v978, 48
    %v1201 = vpop.permute.xlu0 %1200
    %1202 = vrot.lane.b32.xlu0 %v979, 48
    %v1203 = vpop.permute.xlu0 %1202
    %v1206 = vsel %vm941, %v1198, 0
    %v1209 = vsel %vm941, %v1199, 0
    %v1212 = vsel %vm104, %v1203, 0
    %1214 = vmatpush.bf16.msra.mxu0 0
    %1215 = vmatpush.bf16.msra.mxu0 0
    %1216 = vmatpush.bf16.msra.mxu0 0
    %1217 = vmatpush.bf16.msra.mxu0 0
    %1218 = vmatpush.bf16.msra.mxu0 0
    %1219 = vmatpush.bf16.msra.mxu0 0
    %1220 = vmatpush.bf16.msra.mxu0 %v1212
    %1221 = vmatpush.bf16.msra.mxu0 %v1201
    %1222 = vmatmul.bf16.gmra.mxu0 %v1206
    %v1223 = vpop.f32.mrf.mxu0
    %v1224 = vadd.f32 0.0, %v1223
    %v1225 = vpop.f32.mrf.mxu0
    %v1226 = vadd.f32 0.0, %v1225
    %1227 = vmatmul.bf16.gmra.mxu0 %v1209
    %v1228 = vpop.f32.mrf.mxu0
    %v1229 = vadd.f32 0.0, %v1228
    %v1230 = vpop.f32.mrf.mxu0
    %1231 = vdwg.mxu0
    %1232 = vrot.lane.b32.xlu0 %v898, 104
    %v1233 = vpop.permute.xlu0 %1232
    %1234 = vrot.lane.b32.xlu0 %v899, 104
    %v1235 = vpop.permute.xlu0 %1234
    %1236 = vrot.lane.b32.xlu0 %v900, 72
    %v1237 = vpop.permute.xlu0 %1236
    %1238 = vrot.lane.b32.xlu0 %v901, 72
    %v1239 = vpop.permute.xlu0 %1238
    %v1241 = vsel %vm53, %v1233, 0
    %v1244 = vsel %vm53, %v1235, 0
    %v1247 = vsel %vm53, %v1237, 0
    %v1250 = vsel %vm53, %v1239, 0
    %1252 = vmatpush.bf16.xpose.msra.mxu0 0
    %1253 = vmatpush.bf16.xpose.msra.mxu0 0
    %1254 = vmatpush.bf16.xpose.msra.mxu0 0
    %1255 = vmatpush.bf16.xpose.msra.mxu0 0
    %1256 = vmatpush.bf16.xpose.msra.mxu0 0
    %1257 = vmatpush.bf16.xpose.msra.mxu0 0
    %1258 = vmatpush.bf16.xpose.msra.mxu0 %v1250
    %1259 = vmatpush.bf16.xpose.msra.mxu0 %v1247
    %1260 = vmatmul.bf16.gmra.mxu0 %v1241
    %v1261 = vpop.f32.mrf.mxu0
    %v1262 = vadd.f32 0.0, %v1261
    %v1263 = vpop.f32.mrf.mxu0
    %v1264 = vadd.f32 0.0, %v1263
    %1265 = vmatmul.bf16.gmra.mxu0 %v1244
    %v1266 = vpop.f32.mrf.mxu0
    %v1267 = vadd.f32 0.0, %v1266
    %v1268 = vpop.f32.mrf.mxu0
    %1269 = vdwg.mxu0
    %v1270 = vmul.f32 %v1262, 0.35355338
    %v1271 = vmul.f32 %v1264, 0.35355338
    %v1272 = vmul.f32 %v1267, 0.35355338
    %v1273 = vsel %vm941, %v1270, -inf
    %1274 = vmax.xlane.f32.xlu0 %v1273
    %v1275 = vpop.xlane.xlu0 %1274
    %v1276 = vsel %vm941, %v1271, -inf
    %1277 = vmax.xlane.f32.xlu0 %v1276
    %v1278 = vpop.xlane.xlu0 %1277
    %v1279 = vsel %vm948, %v1272, -inf
    %1280 = vmax.xlane.f32.xlu0 %v1279
    %v1281 = vpop.xlane.xlu0 %1280
    %v1282 = vsub.f32 %v1270, %v1275
    %v1283 = vsub.f32 %v1271, %v1278
    %v1284 = vsub.f32 %v1272, %v1281
    %v1285 = vmul.f32 %v1282, 1.442695
    %v1286 = vpow.pop %v1285
    %v1287 = vmul.f32 %v1283, 1.442695
    %v1288 = vpow.pop %v1287
    %v1289 = vmul.f32 %v1284, 1.442695
    %v1290 = vpow.pop %v1289
    %v1291 = vsel %vm941, %v1286, 0.0
    %1292 = vadd.xlane.f32.xlu0 %v1291
    %v1293 = vpop.xlane.xlu0 %1292
    %v1294 = vsel %vm941, %v1288, 0.0
    %1295 = vadd.xlane.f32.xlu0 %v1294
    %v1296 = vpop.xlane.xlu0 %1295
    %v1297 = vsel %vm948, %v1290, 0.0
    %1298 = vadd.xlane.f32.xlu0 %v1297
    %v1299 = vpop.xlane.xlu0 %1298
    %v1300 = vrcp.pop %v1293
    %v1301 = vrcp.pop %v1296
    %v1302 = vrcp.pop %v1299
    %v1303 = vmul.f32 %v1286, %v1300
    %v1304 = vmul.f32 %v1288, %v1301
    %v1305 = vmul.f32 %v1290, %v1302
    %v1306 = vpack.c.bf16 %v1304, %v1303
    %v1307 = vpack.c.bf16 %v1305, %v1305
    %1308 = vrot.lane.b32.xlu0 %v978, 40
    %v1309 = vpop.permute.xlu0 %1308
    %1310 = vrot.lane.b32.xlu0 %v979, 40
    %v1311 = vpop.permute.xlu0 %1310
    %v1314 = vsel %vm941, %v1306, 0
    %v1317 = vsel %vm941, %v1307, 0
    %v1320 = vsel %vm104, %v1311, 0
    %1322 = vmatpush.bf16.msra.mxu0 0
    %1323 = vmatpush.bf16.msra.mxu0 0
    %1324 = vmatpush.bf16.msra.mxu0 0
    %1325 = vmatpush.bf16.msra.mxu0 0
    %1326 = vmatpush.bf16.msra.mxu0 0
    %1327 = vmatpush.bf16.msra.mxu0 0
    %1328 = vmatpush.bf16.msra.mxu0 %v1320
    %1329 = vmatpush.bf16.msra.mxu0 %v1309
    %1330 = vmatmul.bf16.gmra.mxu0 %v1314
    %v1331 = vpop.f32.mrf.mxu0
    %v1332 = vadd.f32 0.0, %v1331
    %v1333 = vpop.f32.mrf.mxu0
    %v1334 = vadd.f32 0.0, %v1333
    %1335 = vmatmul.bf16.gmra.mxu0 %v1317
    %v1336 = vpop.f32.mrf.mxu0
    %v1337 = vadd.f32 0.0, %v1336
    %v1338 = vpop.f32.mrf.mxu0
    %1339 = vdwg.mxu0
    %1343 = vrot.lane.b32.xlu0 %v1116, 8
    %v1344 = vpop.permute.xlu0 %1343
    %1345 = vrot.lane.b32.xlu0 %v1118, 8
    %v1346 = vpop.permute.xlu0 %1345
    %1347 = vrot.lane.b32.xlu0 %v1121, 8
    %v1348 = vpop.permute.xlu0 %1347
    %1355 = vrot.lane.b32.xlu0 %v1224, 16
    %v1356 = vpop.permute.xlu0 %1355
    %1357 = vrot.lane.b32.xlu0 %v1226, 16
    %v1358 = vpop.permute.xlu0 %1357
    %1359 = vrot.lane.b32.xlu0 %v1229, 16
    %v1360 = vpop.permute.xlu0 %1359
    %1367 = vrot.lane.b32.xlu0 %v1332, 24
    %v1368 = vpop.permute.xlu0 %1367
    %1369 = vrot.lane.b32.xlu0 %v1334, 24
    %v1370 = vpop.permute.xlu0 %1369
    %1371 = vrot.lane.b32.xlu0 %v1337, 24
    %v1372 = vpop.permute.xlu0 %1371
    %v1376 = vsel %vm53, %v1006, %v1344
    %v1377 = vsel %vm53, %v1008, %v1346
    %v1378 = vsel %vm53, %v1011, %v1348
    %v1379 = vsel %vm490, %v1376, %v1356
    %v1380 = vsel %vm490, %v1377, %v1358
    %v1381 = vsel %vm490, %v1378, %v1360
    %v1382 = vsel %vm493, %v1379, %v1368
    %v1383 = vsel %vm493, %v1380, %v1370
    %v1384 = vsel %vm493, %v1381, %v1372
    %v1385 = vpack.c.bf16 %v1383, %v1382
    %v1386 = vpack.c.bf16 %v1384, %v1384
    %v1387 = vpack.c.bf16 %v840, %v839
    %v1388 = vpack.c.bf16 %v842, %v841
    %v1389 = vperm.slane %v843, 0
    %v1391 = vsel %vm125, %v1385, 0
    %v1394 = vsel %vm125, %v1386, 0
    %1396 = vmatpush.bf16.msra.mxu0 0
    %1397 = vmatpush.bf16.msra.mxu0 0
    %1398 = vmatpush.bf16.msra.mxu0 0
    %1399 = vmatpush.bf16.msra.mxu0 0
    %1400 = vmatpush.bf16.msra.mxu0 0
    %1401 = vmatpush.bf16.msra.mxu0 0
    %1402 = vmatpush.bf16.msra.mxu0 %v1388
    %1403 = vmatpush.bf16.msra.mxu0 %v1387
    %1404 = vmatmul.bf16.gmra.mxu0 %v1391
    %v1405 = vpop.f32.mrf.mxu0
    %v1406 = vadd.f32 %v1389, %v1405
    %v1407 = vpop.f32.mrf.mxu0
    %v1408 = vadd.f32 %v1389, %v1407
    %1409 = vmatmul.bf16.gmra.mxu0 %v1394
    %v1410 = vpop.f32.mrf.mxu0
    %v1411 = vadd.f32 %v1389, %v1410
    %v1412 = vpop.f32.mrf.mxu0
    %1413 = vdwg.mxu0
    %v1414 = vadd.f32 %v827, %v1406
    %v1415 = vadd.f32 %v822, %v1408
    %v1416 = vadd.f32 %v821, %v1411
    %v1417 = vld [vmem:[%s6 + $0x189] sm:$0x1]
    %v1418 = vld [vmem:[%s6 + $0x18a] sm:$0x1]
    %v1419 = vsel %vm125, %v1414, 0.0
    %1420 = vadd.xlane.f32.xlu0 %v1419
    %v1421 = vpop.xlane.xlu0 %1420
    %v1422 = vsel %vm125, %v1415, 0.0
    %1423 = vadd.xlane.f32.xlu0 %v1422
    %v1424 = vpop.xlane.xlu0 %1423
    %v1425 = vsel %vm524, %v1416, 0.0
    %1426 = vadd.xlane.f32.xlu0 %v1425
    %v1427 = vpop.xlane.xlu0 %1426
    %v1428 = vmul.f32 %v1421, %v534
    %v1429 = vmul.f32 %v1424, %v534
    %v1430 = vmul.f32 %v1427, %v534
    %v1431 = vsub.f32 %v1414, %v1428
    %v1432 = vsub.f32 %v1415, %v1429
    %v1433 = vsub.f32 %v1416, %v1430
    %v1434 = vmul.f32 %v1431, %v1431
    %v1435 = vmul.f32 %v1432, %v1432
    %v1436 = vmul.f32 %v1433, %v1433
    %v1437 = vsel %vm125, %v1434, 0.0
    %1438 = vadd.xlane.f32.xlu0 %v1437
    %v1439 = vpop.xlane.xlu0 %1438
    %v1440 = vsel %vm125, %v1435, 0.0
    %1441 = vadd.xlane.f32.xlu0 %v1440
    %v1442 = vpop.xlane.xlu0 %1441
    %v1443 = vsel %vm524, %v1436, 0.0
    %1444 = vadd.xlane.f32.xlu0 %v1443
    %v1445 = vpop.xlane.xlu0 %1444
    %v1446 = vmul.f32 %v1439, %v534
    %v1447 = vmul.f32 %v1442, %v534
    %v1448 = vmul.f32 %v1445, %v534
    %v1449 = vadd.f32 %v1446, 1e-05
    %v1450 = vadd.f32 %v1447, 1e-05
    %v1451 = vadd.f32 %v1448, 1e-05
    %v1452 = vrsqrt.pop %v1449
    %v1453 = vmul.f32 %v1452, %v1449
    %v1454 = vmul.f32 %v1453, %v1452
    %v1455 = vmul.f32 0.5, %v1454
    %v1456 = vsub.f32 1.5, %v1455
    %v1457 = vmul.f32 %v1452, %v1456
    %vm1458 = vweird.f32 %v1449
    %vm1459 = vweird.f32 %v1452
    %vm1460 = vmor %vm1458, %vm1459
    %v1461 = vsel %vm1460, %v1452, %v1457
    %v1462 = vrsqrt.pop %v1450
    %v1463 = vmul.f32 %v1462, %v1450
    %v1464 = vmul.f32 %v1463, %v1462
    %v1465 = vmul.f32 0.5, %v1464
    %v1466 = vsub.f32 1.5, %v1465
    %v1467 = vmul.f32 %v1462, %v1466
    %vm1468 = vweird.f32 %v1450
    %vm1469 = vweird.f32 %v1462
    %vm1470 = vmor %vm1468, %vm1469
    %v1471 = vsel %vm1470, %v1462, %v1467
    %v1472 = vrsqrt.pop %v1451
    %v1473 = vmul.f32 %v1472, %v1451
    %v1474 = vmul.f32 %v1473, %v1472
    %v1475 = vmul.f32 0.5, %v1474
    %v1476 = vsub.f32 1.5, %v1475
    %v1477 = vmul.f32 %v1472, %v1476
    %vm1478 = vweird.f32 %v1451
    %vm1479 = vweird.f32 %v1472
    %vm1480 = vmor %vm1478, %vm1479
    %v1481 = vsel %vm1480, %v1472, %v1477
    %v1482 = vmul.f32 %v1431, %v1461
    %v1483 = vmul.f32 %v1432, %v1471
    %v1484 = vmul.f32 %v1433, %v1481
    %v1485 = vperm.slane %v1417, 0
    %v1486 = vmul.f32 %v1482, %v1485
    %v1487 = vmul.f32 %v1483, %v1485
    %v1488 = vmul.f32 %v1484, %v1485
    %v1489 = vperm.slane %v1418, 0
    %v1490 = vadd.f32 %v1486, %v1489
    %v1491 = vadd.f32 %v1487, %v1489
    %v1492 = vadd.f32 %v1488, %v1489
    %v1493 = vld [vmem:[%s7 + $0x50] sm:$0xff]
    %v1494 = vld [vmem:[%s7 + $0x58] sm:$0xff]
    %v1495 = vld [vmem:[%s7 + $0x60] sm:$0xff]
    %v1496 = vld [vmem:[%s7 + $0x68] sm:$0xff]
    %v1497 = vld [vmem:[%s7 + $0x70] sm:$0x1]
    %v1498 = vld [vmem:[%s6 + $0x148] sm:$0xff]
    %v1499 = vld [vmem:[%s6 + $0x150] sm:$0xff]
    %v1500 = vld [vmem:[%s6 + $0x158] sm:$0xff]
    %v1501 = vld [vmem:[%s6 + $0x160] sm:$0xff]
    %v1502 = vld [vmem:[%s6 + $0x168] sm:$0xff]
    %v1503 = vld [vmem:[%s6 + $0x170] sm:$0xff]
    %v1504 = vld [vmem:[%s6 + $0x178] sm:$0xff]
    %v1505 = vld [vmem:[%s6 + $0x180] sm:$0xff]
    %v1506 = vld [vmem:[%s6 + $0x188] sm:$0x1]
    %v1507 = vpack.c.bf16 %v1491, %v1490
    %v1508 = vpack.c.bf16 %v1492, %v1492
    %v1509 = vpack.c.bf16 %v1494, %v1493
    %v1510 = vpack.c.bf16 %v1496, %v1495
    %v1511 = vperm.slane %v1497, 0
    %v1513 = vsel %vm125, %v1507, 0
    %v1516 = vsel %vm125, %v1508, 0
    %1518 = vmatpush.bf16.msra.mxu0 0
    %1519 = vmatpush.bf16.msra.mxu0 0
    %1520 = vmatpush.bf16.msra.mxu0 0
    %1521 = vmatpush.bf16.msra.mxu0 0
    %1522 = vmatpush.bf16.msra.mxu0 0
    %1523 = vmatpush.bf16.msra.mxu0 0
    %1524 = vmatpush.bf16.msra.mxu0 %v1510
    %1525 = vmatpush.bf16.msra.mxu0 %v1509
    %1526 = vmatmul.bf16.gmra.mxu0 %v1513
    %v1527 = vpop.f32.mrf.mxu0
    %v1528 = vadd.f32 %v1511, %v1527
    %v1529 = vpop.f32.mrf.mxu0
    %v1530 = vadd.f32 %v1511, %v1529
    %1531 = vmatmul.bf16.gmra.mxu0 %v1516
    %v1532 = vpop.f32.mrf.mxu0
    %v1533 = vadd.f32 %v1511, %v1532
    %v1534 = vpop.f32.mrf.mxu0
    %1535 = vdwg.mxu0
    %v1536 = vmax.f32 %v1528, 0.0
    %v1537 = vmax.f32 %v1530, 0.0
    %v1538 = vmax.f32 %v1533, 0.0
    %v1539 = vpack.c.bf16 %v1537, %v1536
    %v1540 = vpack.c.bf16 %v1538, %v1538
    %v1541 = vpack.c.bf16 %v1499, %v1498
    %v1542 = vpack.c.bf16 %v1501, %v1500
    %v1543 = vpack.c.bf16 %v1503, %v1502
    %v1544 = vpack.c.bf16 %v1505, %v1504
    %v1545 = vperm.slane %v1506, 0
    %v1547 = vsel %vm622, %v1539, 0
    %v1550 = vsel %vm622, %v1540, 0
    %1552 = vmatpush.bf16.msra.mxu0 0
    %1553 = vmatpush.bf16.msra.mxu0 0
    %1554 = vmatpush.bf16.msra.mxu0 0
    %1555 = vmatpush.bf16.msra.mxu0 0
    %1556 = vmatpush.bf16.msra.mxu0 %v1544
    %1557 = vmatpush.bf16.msra.mxu0 %v1543
    %1558 = vmatpush.bf16.msra.mxu0 %v1542
    %1559 = vmatpush.bf16.msra.mxu0 %v1541
    %1560 = vmatmul.bf16.gmra.mxu0 %v1547
    %v1561 = vpop.f32.mrf.mxu0
    %v1562 = vadd.f32 %v1545, %v1561
    %v1563 = vpop.f32.mrf.mxu0
    %v1564 = vadd.f32 %v1545, %v1563
    %1565 = vmatmul.bf16.gmra.mxu0 %v1550
    %v1566 = vpop.f32.mrf.mxu0
    %v1567 = vadd.f32 %v1545, %v1566
    %v1568 = vpop.f32.mrf.mxu0
    %1569 = vdwg.mxu0
    %v1570 = vadd.f32 %v1490, %v1562
    %v1571 = vadd.f32 %v1491, %v1564
    %v1572 = vadd.f32 %v1492, %v1567
    %v1573 = vld [vmem:[%s6 + $0x18b] sm:$0x1]
    %v1574 = vld [vmem:[%s6 + $0x18c] sm:$0x1]
    %v1575 = vsel %vm125, %v1570, 0.0
    %1576 = vadd.xlane.f32.xlu0 %v1575
    %v1577 = vpop.xlane.xlu0 %1576
    %v1578 = vsel %vm125, %v1571, 0.0
    %1579 = vadd.xlane.f32.xlu0 %v1578
    %v1580 = vpop.xlane.xlu0 %1579
    %v1581 = vsel %vm524, %v1572, 0.0
    %1582 = vadd.xlane.f32.xlu0 %v1581
    %v1583 = vpop.xlane.xlu0 %1582
    %v1584 = vmul.f32 %v1577, %v534
    %v1585 = vmul.f32 %v1580, %v534
    %v1586 = vmul.f32 %v1583, %v534
    %v1587 = vsub.f32 %v1570, %v1584
    %v1588 = vsub.f32 %v1571, %v1585
    %v1589 = vsub.f32 %v1572, %v1586
    %v1590 = vmul.f32 %v1587, %v1587
    %v1591 = vmul.f32 %v1588, %v1588
    %v1592 = vmul.f32 %v1589, %v1589
    %v1593 = vsel %vm125, %v1590, 0.0
    %1594 = vadd.xlane.f32.xlu0 %v1593
    %v1595 = vpop.xlane.xlu0 %1594
    %v1596 = vsel %vm125, %v1591, 0.0
    %1597 = vadd.xlane.f32.xlu0 %v1596
    %v1598 = vpop.xlane.xlu0 %1597
    %v1599 = vsel %vm524, %v1592, 0.0
    %1600 = vadd.xlane.f32.xlu0 %v1599
    %v1601 = vpop.xlane.xlu0 %1600
    %v1602 = vmul.f32 %v1595, %v534
    %v1603 = vmul.f32 %v1598, %v534
    %v1604 = vmul.f32 %v1601, %v534
    %v1605 = vadd.f32 %v1602, 1e-05
    %v1606 = vadd.f32 %v1603, 1e-05
    %v1607 = vadd.f32 %v1604, 1e-05
    %v1608 = vrsqrt.pop %v1605
    %v1609 = vmul.f32 %v1608, %v1605
    %v1610 = vmul.f32 %v1609, %v1608
    %v1611 = vmul.f32 0.5, %v1610
    %v1612 = vsub.f32 1.5, %v1611
    %v1613 = vmul.f32 %v1608, %v1612
    %vm1614 = vweird.f32 %v1605
    %vm1615 = vweird.f32 %v1608
    %vm1616 = vmor %vm1614, %vm1615
    %v1617 = vsel %vm1616, %v1608, %v1613
    %v1618 = vrsqrt.pop %v1606
    %v1619 = vmul.f32 %v1618, %v1606
    %v1620 = vmul.f32 %v1619, %v1618
    %v1621 = vmul.f32 0.5, %v1620
    %v1622 = vsub.f32 1.5, %v1621
    %v1623 = vmul.f32 %v1618, %v1622
    %vm1624 = vweird.f32 %v1606
    %vm1625 = vweird.f32 %v1618
    %vm1626 = vmor %vm1624, %vm1625
    %v1627 = vsel %vm1626, %v1618, %v1623
    %v1628 = vrsqrt.pop %v1607
    %v1629 = vmul.f32 %v1628, %v1607
    %v1630 = vmul.f32 %v1629, %v1628
    %v1631 = vmul.f32 0.5, %v1630
    %v1632 = vsub.f32 1.5, %v1631
    %v1633 = vmul.f32 %v1628, %v1632
    %vm1634 = vweird.f32 %v1607
    %vm1635 = vweird.f32 %v1628
    %vm1636 = vmor %vm1634, %vm1635
    %v1637 = vsel %vm1636, %v1628, %v1633
    %v1638 = vmul.f32 %v1587, %v1617
    %v1639 = vmul.f32 %v1588, %v1627
    %v1640 = vmul.f32 %v1589, %v1637
    %v1641 = vperm.slane %v1573, 0
    %v1642 = vmul.f32 %v1638, %v1641
    %v1643 = vmul.f32 %v1639, %v1641
    %v1644 = vmul.f32 %v1640, %v1641
    %v1645 = vperm.slane %v1574, 0
    %v1646 = vadd.f32 %v1642, %v1645
    %v1647 = vadd.f32 %v1643, %v1645
    %v1648 = vadd.f32 %v1644, %v1645
    %v1649 = vld [vmem:[%s6 + $0x18d] sm:$0x1]
    %v1650 = vperm.slane %v1649, 0
    %v1651 = vld [vmem:[%s6 + $0x1b0] sm:$0xff]
    %v1652 = vld [vmem:[%s6 + $0x1b8] sm:$0xff]
    %v1653 = vld [vmem:[%s6 + $0x1c0] sm:$0xff]
    %v1654 = vld [vmem:[%s6 + $0x1c8] sm:$0xff]
    %v1655 = vpack.c.bf16 %v1650, %v1650
    %v1656 = vpack.c.bf16 %v1652, %v1651
    %v1657 = vpack.c.bf16 %v1654, %v1653
    %v1658 = vld [vmem:[%s6 + $0x190] sm:$0xff]
    %v1660 = vsel %vm125, %v1655, 0
    %1662 = vmatpush.bf16.msra.mxu0 0
    %1663 = vmatpush.bf16.msra.mxu0 0
    %1664 = vmatpush.bf16.msra.mxu0 0
    %1665 = vmatpush.bf16.msra.mxu0 0
    %1666 = vmatpush.bf16.msra.mxu0 0
    %1667 = vmatpush.bf16.msra.mxu0 0
    %1668 = vmatpush.bf16.msra.mxu0 %v1657
    %1669 = vmatpush.bf16.msra.mxu0 %v1656
    %1670 = vmatmul.bf16.gmra.mxu0 %v1660
    %v1671 = vpop.f32.mrf.mxu0
    %v1672 = vadd.f32 %v1658, %v1671
    %v1673 = vpop.f32.mrf.mxu0
    %1674 = vdwg.mxu0
    %v1675 = vld [vmem:[%s7 + $0xa0] sm:$0xff]
    %v1676 = vld [vmem:[%s7 + $0xa8] sm:$0xff]
    %v1677 = vld [vmem:[%s7 + $0xb0] sm:$0xff]
    %v1678 = vld [vmem:[%s7 + $0xb8] sm:$0xff]
    %v1679 = vpack.c.bf16 %v1647, %v1646
    %v1680 = vpack.c.bf16 %v1648, %v1648
    %v1681 = vpack.c.bf16 %v1676, %v1675
    %v1682 = vpack.c.bf16 %v1678, %v1677
    %v1684 = vsel %vm125, %v1679, 0
    %v1687 = vsel %vm125, %v1680, 0
    %1689 = vmatpush.bf16.msra.mxu0 0
    %1690 = vmatpush.bf16.msra.mxu0 0
    %1691 = vmatpush.bf16.msra.mxu0 0
    %1692 = vmatpush.bf16.msra.mxu0 0
    %1693 = vmatpush.bf16.msra.mxu0 0
    %1694 = vmatpush.bf16.msra.mxu0 0
    %1695 = vmatpush.bf16.msra.mxu0 %v1682
    %1696 = vmatpush.bf16.msra.mxu0 %v1681
    %1697 = vmatmul.bf16.gmra.mxu0 %v1684
    %v1698 = vpop.f32.mrf.mxu0
    %v1699 = vadd.f32 0.0, %v1698
    %v1700 = vpop.f32.mrf.mxu0
    %v1701 = vadd.f32 0.0, %v1700
    %1702 = vmatmul.bf16.gmra.mxu0 %v1687
    %v1703 = vpop.f32.mrf.mxu0
    %v1704 = vadd.f32 0.0, %v1703
    %v1705 = vpop.f32.mrf.mxu0
    %1706 = vdwg.mxu0
    %v1707 = vld [vmem:[%s6 + $0x198] sm:$0xff]
    %v1708 = vld [vmem:[%s6 + $0x1a0] sm:$0xff]
    %v1709 = vld [vmem:[%s6 + $0x1a8] sm:$0x3]
    %v1710 = vadd.f32 %v1699, %v1707
    %v1711 = vadd.f32 %v1701, %v1708
    %v1712 = vadd.f32 %v1704, %v1709
    %v1713 = vld [vmem:[%s6 + $0x1aa] sm:$0x1]
    %v1714 = vperm.slane %v1713, 0
    %1716 = vrot.lane.b32.xlu0 %v1714, 32
    %v1717 = vpop.permute.xlu0 %1716
    %v1719 = vadd.f32 %v1699, %v1717
    %v1720 = vadd.f32 %v1701, %v1717
    %v1721 = vadd.f32 %v1704, %v1717
    %v1722 = vld [vmem:[%s6 + $0x1d0] sm:$0xff]
    %v1723 = vld [vmem:[%s6 + $0x1d8] sm:$0xff]
    %v1724 = vld [vmem:[%s6 + $0x1e0] sm:$0xff]
    %v1725 = vld [vmem:[%s6 + $0x1e8] sm:$0xff]
    %v1726 = vld [vmem:[%s6 + $0x1f0] sm:$0x1]
    %v1727 = vpack.c.bf16 %v1672, %v1672
    %v1728 = vpack.c.bf16 %v1711, %v1710
    %v1729 = vpack.c.bf16 %v1712, %v1712
    %v1731 = vsel %vm53, %v1727, 0
    %v1734 = vsel %vm53, %v1728, 0
    %v1737 = vsel %vm53, %v1729, 0
    %1739 = vmatpush.bf16.xpose.msra.mxu0 0
    %1740 = vmatpush.bf16.xpose.msra.mxu0 0
    %1741 = vmatpush.bf16.xpose.msra.mxu0 0
    %1742 = vmatpush.bf16.xpose.msra.mxu0 0
    %1743 = vmatpush.bf16.xpose.msra.mxu0 0
    %1744 = vmatpush.bf16.xpose.msra.mxu0 0
    %1745 = vmatpush.bf16.xpose.msra.mxu0 %v1737
    %1746 = vmatpush.bf16.xpose.msra.mxu0 %v1734
    %1747 = vmatmul.bf16.gmra.mxu0 %v1731
    %v1748 = vpop.f32.mrf.mxu0
    %v1749 = vadd.f32 0.0, %v1748
    %v1750 = vpop.f32.mrf.mxu0
    %1751 = vdwg.mxu0
    %v1752 = vmul.f32 %v1749, 0.35355338
    %v1753 = vsel %vm941, %v1752, -inf
    %1754 = vmax.xlane.f32.xlu0 %v1753
    %v1755 = vpop.xlane.xlu0 %1754
    %v1756 = vsub.f32 %v1752, %v1755
    %v1757 = vmul.f32 %v1756, 1.442695
    %v1758 = vpow.pop %v1757
    %v1759 = vsel %vm941, %v1758, 0.0
    %1760 = vadd.xlane.f32.xlu0 %v1759
    %v1761 = vpop.xlane.xlu0 %1760
    %v1762 = vrcp.pop %v1761
    %v1763 = vmul.f32 %v1758, %v1762
    %v1764 = vpack.c.bf16 %v1763, %v1763
    %v1765 = vpack.c.bf16 %v1720, %v1719
    %v1766 = vpack.c.bf16 %v1721, %v1721
    %1769 = vrot.lane.b32.xlu0 %v1765, 96
    %v1770 = vpop.permute.xlu0 %1769
    %1771 = vrot.lane.b32.xlu0 %v1766, 96
    %v1772 = vpop.permute.xlu0 %1771
    %v1775 = vsel %vm941, %v1764, 0
    %v1778 = vsel %vm104, %v1772, 0
    %1780 = vmatpush.bf16.msra.mxu0 0
    %1781 = vmatpush.bf16.msra.mxu0 0
    %1782 = vmatpush.bf16.msra.mxu0 0
    %1783 = vmatpush.bf16.msra.mxu0 0
    %1784 = vmatpush.bf16.msra.mxu0 0
    %1785 = vmatpush.bf16.msra.mxu0 0
    %1786 = vmatpush.bf16.msra.mxu0 %v1778
    %1787 = vmatpush.bf16.msra.mxu0 %v1770
    %1788 = vmatmul.bf16.gmra.mxu0 %v1775
    %v1789 = vpop.f32.mrf.mxu0
    %v1790 = vadd.f32 0.0, %v1789
    %v1791 = vpop.f32.mrf.mxu0
    %1792 = vdwg.mxu0
    %1794 = vrot.lane.b32.xlu0 %v1727, 120
    %v1795 = vpop.permute.xlu0 %1794
    %1798 = vrot.lane.b32.xlu0 %v1728, 120
    %v1799 = vpop.permute.xlu0 %1798
    %1800 = vrot.lane.b32.xlu0 %v1729, 120
    %v1801 = vpop.permute.xlu0 %1800
    %v1803 = vsel %vm53, %v1795, 0
    %v1806 = vsel %vm53, %v1799, 0
    %v1809 = vsel %vm53, %v1801, 0
    %1811 = vmatpush.bf16.xpose.msra.mxu0 0
    %1812 = vmatpush.bf16.xpose.msra.mxu0 0
    %1813 = vmatpush.bf16.xpose.msra.mxu0 0
    %1814 = vmatpush.bf16.xpose.msra.mxu0 0
    %1815 = vmatpush.bf16.xpose.msra.mxu0 0
    %1816 = vmatpush.bf16.xpose.msra.mxu0 0
    %1817 = vmatpush.bf16.xpose.msra.mxu0 %v1809
    %1818 = vmatpush.bf16.xpose.msra.mxu0 %v1806
    %1819 = vmatmul.bf16.gmra.mxu0 %v1803
    %v1820 = vpop.f32.mrf.mxu0
    %v1821 = vadd.f32 0.0, %v1820
    %v1822 = vpop.f32.mrf.mxu0
    %1823 = vdwg.mxu0
    %v1824 = vmul.f32 %v1821, 0.35355338
    %v1825 = vsel %vm941, %v1824, -inf
    %1826 = vmax.xlane.f32.xlu0 %v1825
    %v1827 = vpop.xlane.xlu0 %1826
    %v1828 = vsub.f32 %v1824, %v1827
    %v1829 = vmul.f32 %v1828, 1.442695
    %v1830 = vpow.pop %v1829
    %v1831 = vsel %vm941, %v1830, 0.0
    %1832 = vadd.xlane.f32.xlu0 %v1831
    %v1833 = vpop.xlane.xlu0 %1832
    %v1834 = vrcp.pop %v1833
    %v1835 = vmul.f32 %v1830, %v1834
    %v1836 = vpack.c.bf16 %v1835, %v1835
    %1837 = vrot.lane.b32.xlu0 %v1765, 88
    %v1838 = vpop.permute.xlu0 %1837
    %1839 = vrot.lane.b32.xlu0 %v1766, 88
    %v1840 = vpop.permute.xlu0 %1839
    %v1843 = vsel %vm941, %v1836, 0
    %v1846 = vsel %vm104, %v1840, 0
    %1848 = vmatpush.bf16.msra.mxu0 0
    %1849 = vmatpush.bf16.msra.mxu0 0
    %1850 = vmatpush.bf16.msra.mxu0 0
    %1851 = vmatpush.bf16.msra.mxu0 0
    %1852 = vmatpush.bf16.msra.mxu0 0
    %1853 = vmatpush.bf16.msra.mxu0 0
    %1854 = vmatpush.bf16.msra.mxu0 %v1846
    %1855 = vmatpush.bf16.msra.mxu0 %v1838
    %1856 = vmatmul.bf16.gmra.mxu0 %v1843
    %v1857 = vpop.f32.mrf.mxu0
    %v1858 = vadd.f32 0.0, %v1857
    %v1859 = vpop.f32.mrf.mxu0
    %1860 = vdwg.mxu0
    %1861 = vrot.lane.b32.xlu0 %v1727, 112
    %v1862 = vpop.permute.xlu0 %1861
    %1863 = vrot.lane.b32.xlu0 %v1728, 112
    %v1864 = vpop.permute.xlu0 %1863
    %1865 = vrot.lane.b32.xlu0 %v1729, 112
    %v1866 = vpop.permute.xlu0 %1865
    %v1868 = vsel %vm53, %v1862, 0
    %v1871 = vsel %vm53, %v1864, 0
    %v1874 = vsel %vm53, %v1866, 0
    %1876 = vmatpush.bf16.xpose.msra.mxu0 0
    %1877 = vmatpush.bf16.xpose.msra.mxu0 0
    %1878 = vmatpush.bf16.xpose.msra.mxu0 0
    %1879 = vmatpush.bf16.xpose.msra.mxu0 0
    %1880 = vmatpush.bf16.xpose.msra.mxu0 0
    %1881 = vmatpush.bf16.xpose.msra.mxu0 0
    %1882 = vmatpush.bf16.xpose.msra.mxu0 %v1874
    %1883 = vmatpush.bf16.xpose.msra.mxu0 %v1871
    %1884 = vmatmul.bf16.gmra.mxu0 %v1868
    %v1885 = vpop.f32.mrf.mxu0
    %v1886 = vadd.f32 0.0, %v1885
    %v1887 = vpop.f32.mrf.mxu0
    %1888 = vdwg.mxu0
    %v1889 = vmul.f32 %v1886, 0.35355338
    %v1890 = vsel %vm941, %v1889, -inf
    %1891 = vmax.xlane.f32.xlu0 %v1890
    %v1892 = vpop.xlane.xlu0 %1891
    %v1893 = vsub.f32 %v1889, %v1892
    %v1894 = vmul.f32 %v1893, 1.442695
    %v1895 = vpow.pop %v1894
    %v1896 = vsel %vm941, %v1895, 0.0
    %1897 = vadd.xlane.f32.xlu0 %v1896
    %v1898 = vpop.xlane.xlu0 %1897
    %v1899 = vrcp.pop %v1898
    %v1900 = vmul.f32 %v1895, %v1899
    %v1901 = vpack.c.bf16 %v1900, %v1900
    %1902 = vrot.lane.b32.xlu0 %v1765, 80
    %v1903 = vpop.permute.xlu0 %1902
    %1904 = vrot.lane.b32.xlu0 %v1766, 80
    %v1905 = vpop.permute.xlu0 %1904
    %v1908 = vsel %vm941, %v1901, 0
    %v1911 = vsel %vm104, %v1905, 0
    %1913 = vmatpush.bf16.msra.mxu0 0
    %1914 = vmatpush.bf16.msra.mxu0 0
    %1915 = vmatpush.bf16.msra.mxu0 0
    %1916 = vmatpush.bf16.msra.mxu0 0
    %1917 = vmatpush.bf16.msra.mxu0 0
    %1918 = vmatpush.bf16.msra.mxu0 0
    %1919 = vmatpush.bf16.msra.mxu0 %v1911
    %1920 = vmatpush.bf16.msra.mxu0 %v1903
    %1921 = vmatmul.bf16.gmra.mxu0 %v1908
    %v1922 = vpop.f32.mrf.mxu0
    %v1923 = vadd.f32 0.0, %v1922
    %v1924 = vpop.f32.mrf.mxu0
    %1925 = vdwg.mxu0
    %1926 = vrot.lane.b32.xlu0 %v1727, 104
    %v1927 = vpop.permute.xlu0 %1926
    %1928 = vrot.lane.b32.xlu0 %v1728, 104
    %v1929 = vpop.permute.xlu0 %1928
    %1930 = vrot.lane.b32.xlu0 %v1729, 104
    %v1931 = vpop.permute.xlu0 %1930
    %v1933 = vsel %vm53, %v1927, 0
    %v1936 = vsel %vm53, %v1929, 0
    %v1939 = vsel %vm53, %v1931, 0
    %1941 = vmatpush.bf16.xpose.msra.mxu0 0
    %1942 = vmatpush.bf16.xpose.msra.mxu0 0
    %1943 = vmatpush.bf16.xpose.msra.mxu0 0
    %1944 = vmatpush.bf16.xpose.msra.mxu0 0
    %1945 = vmatpush.bf16.xpose.msra.mxu0 0
    %1946 = vmatpush.bf16.xpose.msra.mxu0 0
    %1947 = vmatpush.bf16.xpose.msra.mxu0 %v1939
    %1948 = vmatpush.bf16.xpose.msra.mxu0 %v1936
    %1949 = vmatmul.bf16.gmra.mxu0 %v1933
    %v1950 = vpop.f32.mrf.mxu0
    %v1951 = vadd.f32 0.0, %v1950
    %v1952 = vpop.f32.mrf.mxu0
    %1953 = vdwg.mxu0
    %v1954 = vmul.f32 %v1951, 0.35355338
    %v1955 = vsel %vm941, %v1954, -inf
    %1956 = vmax.xlane.f32.xlu0 %v1955
    %v1957 = vpop.xlane.xlu0 %1956
    %v1958 = vsub.f32 %v1954, %v1957
    %v1959 = vmul.f32 %v1958, 1.442695
    %v1960 = vpow.pop %v1959
    %v1961 = vsel %vm941, %v1960, 0.0
    %1962 = vadd.xlane.f32.xlu0 %v1961
    %v1963 = vpop.xlane.xlu0 %1962
    %v1964 = vrcp.pop %v1963
    %v1965 = vmul.f32 %v1960, %v1964
    %v1966 = vpack.c.bf16 %v1965, %v1965
    %1967 = vrot.lane.b32.xlu0 %v1765, 72
    %v1968 = vpop.permute.xlu0 %1967
    %1969 = vrot.lane.b32.xlu0 %v1766, 72
    %v1970 = vpop.permute.xlu0 %1969
    %v1973 = vsel %vm941, %v1966, 0
    %v1976 = vsel %vm104, %v1970, 0
    %1978 = vmatpush.bf16.msra.mxu0 0
    %1979 = vmatpush.bf16.msra.mxu0 0
    %1980 = vmatpush.bf16.msra.mxu0 0
    %1981 = vmatpush.bf16.msra.mxu0 0
    %1982 = vmatpush.bf16.msra.mxu0 0
    %1983 = vmatpush.bf16.msra.mxu0 0
    %1984 = vmatpush.bf16.msra.mxu0 %v1976
    %1985 = vmatpush.bf16.msra.mxu0 %v1968
    %1986 = vmatmul.bf16.gmra.mxu0 %v1973
    %v1987 = vpop.f32.mrf.mxu0
    %v1988 = vadd.f32 0.0, %v1987
    %v1989 = vpop.f32.mrf.mxu0
    %1990 = vdwg.mxu0
    %1992 = vrot.lane.b32.xlu0 %v1858, 8
    %v1993 = vpop.permute.xlu0 %1992
    %1996 = vrot.lane.b32.xlu0 %v1923, 16
    %v1997 = vpop.permute.xlu0 %1996
    %2000 = vrot.lane.b32.xlu0 %v1988, 24
    %v2001 = vpop.permute.xlu0 %2000
    %v2003 = vsel %vm53, %v1790, %v1993
    %v2004 = vsel %vm490, %v2003, %v1997
    %v2005 = vsel %vm493, %v2004, %v2001
    %v2006 = vpack.c.bf16 %v2005, %v2005
    %v2007 = vpack.c.bf16 %v1723, %v1722
    %v2008 = vpack.c.bf16 %v1725, %v1724
    %v2009 = vperm.slane %v1726, 0
    %v2011 = vsel %vm125, %v2006, 0
    %2013 = vmatpush.bf16.msra.mxu0 0
    %2014 = vmatpush.bf16.msra.mxu0 0
    %2015 = vmatpush.bf16.msra.mxu0 0
    %2016 = vmatpush.bf16.msra.mxu0 0
    %2017 = vmatpush.bf16.msra.mxu0 0
    %2018 = vmatpush.bf16.msra.mxu0 0
    %2019 = vmatpush.bf16.msra.mxu0 %v2008
    %2020 = vmatpush.bf16.msra.mxu0 %v2007
    %2021 = vmatmul.bf16.gmra.mxu0 %v2011
    %v2022 = vpop.f32.mrf.mxu0
    %v2023 = vadd.f32 %v2009, %v2022
    %v2024 = vpop.f32.mrf.mxu0
    %2025 = vdwg.mxu0
    %v2026 = vadd.f32 %v1650, %v2023
    %v2027 = vld [vmem:[%s6 + $0x239] sm:$0x1]
    %v2028 = vld [vmem:[%s6 + $0x23a] sm:$0x1]
    %v2029 = vsel %vm125, %v2026, 0.0
    %2030 = vadd.xlane.f32.xlu0 %v2029
    %v2031 = vpop.xlane.xlu0 %2030
    %v2032 = vmul.f32 %v2031, %v534
    %v2033 = vsub.f32 %v2026, %v2032
    %v2034 = vmul.f32 %v2033, %v2033
    %v2035 = vsel %vm125, %v2034, 0.0
    %2036 = vadd.xlane.f32.xlu0 %v2035
    %v2037 = vpop.xlane.xlu0 %2036
    %v2038 = vmul.f32 %v2037, %v534
    %v2039 = vadd.f32 %v2038, 1e-05
    %v2040 = vrsqrt.pop %v2039
    %v2041 = vmul.f32 %v2040, %v2039
    %v2042 = vmul.f32 %v2041, %v2040
    %v2043 = vmul.f32 0.5, %v2042
    %v2044 = vsub.f32 1.5, %v2043
    %v2045 = vmul.f32 %v2040, %v2044
    %vm2046 = vweird.f32 %v2039
    %vm2047 = vweird.f32 %v2040
    %vm2048 = vmor %vm2046, %vm2047
    %v2049 = vsel %vm2048, %v2040, %v2045
    %v2050 = vmul.f32 %v2033, %v2049
    %v2051 = vperm.slane %v2027, 0
    %v2052 = vmul.f32 %v2050, %v2051
    %v2053 = vperm.slane %v2028, 0
    %v2054 = vadd.f32 %v2052, %v2053
    %v2055 = vld [vmem:[%s7 + $0x78] sm:$0xff]
    %v2056 = vld [vmem:[%s7 + $0x80] sm:$0xff]
    %v2057 = vld [vmem:[%s7 + $0x88] sm:$0xff]
    %v2058 = vld [vmem:[%s7 + $0x90] sm:$0xff]
    %v2059 = vld [vmem:[%s7 + $0x98] sm:$0x1]
    %v2060 = vld [vmem:[%s6 + $0x1f8] sm:$0xff]
    %v2061 = vld [vmem:[%s6 + $0x200] sm:$0xff]
    %v2062 = vld [vmem:[%s6 + $0x208] sm:$0xff]
    %v2063 = vld [vmem:[%s6 + $0x210] sm:$0xff]
    %v2064 = vld [vmem:[%s6 + $0x218] sm:$0xff]
    %v2065 = vld [vmem:[%s6 + $0x220] sm:$0xff]
    %v2066 = vld [vmem:[%s6 + $0x228] sm:$0xff]
    %v2067 = vld [vmem:[%s6 + $0x230] sm:$0xff]
    %v2068 = vld [vmem:[%s6 + $0x238] sm:$0x1]
    %v2069 = vpack.c.bf16 %v2054, %v2054
    %v2070 = vpack.c.bf16 %v2056, %v2055
    %v2071 = vpack.c.bf16 %v2058, %v2057
    %v2072 = vperm.slane %v2059, 0
    %v2074 = vsel %vm125, %v2069, 0
    %2076 = vmatpush.bf16.msra.mxu0 0
    %2077 = vmatpush.bf16.msra.mxu0 0
    %2078 = vmatpush.bf16.msra.mxu0 0
    %2079 = vmatpush.bf16.msra.mxu0 0
    %2080 = vmatpush.bf16.msra.mxu0 0
    %2081 = vmatpush.bf16.msra.mxu0 0
    %2082 = vmatpush.bf16.msra.mxu0 %v2071
    %2083 = vmatpush.bf16.msra.mxu0 %v2070
    %2084 = vmatmul.bf16.gmra.mxu0 %v2074
    %v2085 = vpop.f32.mrf.mxu0
    %v2086 = vadd.f32 %v2072, %v2085
    %v2087 = vpop.f32.mrf.mxu0
    %2088 = vdwg.mxu0
    %v2089 = vmax.f32 %v2086, 0.0
    %v2090 = vpack.c.bf16 %v2089, %v2089
    %v2091 = vpack.c.bf16 %v2061, %v2060
    %v2092 = vpack.c.bf16 %v2063, %v2062
    %v2093 = vpack.c.bf16 %v2065, %v2064
    %v2094 = vpack.c.bf16 %v2067, %v2066
    %v2095 = vperm.slane %v2068, 0
    %v2097 = vsel %vm622, %v2090, 0
    %2099 = vmatpush.bf16.msra.mxu0 0
    %2100 = vmatpush.bf16.msra.mxu0 0
    %2101 = vmatpush.bf16.msra.mxu0 0
    %2102 = vmatpush.bf16.msra.mxu0 0
    %2103 = vmatpush.bf16.msra.mxu0 %v2094
    %2104 = vmatpush.bf16.msra.mxu0 %v2093
    %2105 = vmatpush.bf16.msra.mxu0 %v2092
    %2106 = vmatpush.bf16.msra.mxu0 %v2091
    %2107 = vmatmul.bf16.gmra.mxu0 %v2097
    %v2108 = vpop.f32.mrf.mxu0
    %v2109 = vadd.f32 %v2095, %v2108
    %v2110 = vpop.f32.mrf.mxu0
    %2111 = vdwg.mxu0
    %v2112 = vadd.f32 %v2054, %v2109
    %v2113 = vld [vmem:[%s6 + $0x23b] sm:$0x1]
    %v2114 = vld [vmem:[%s6 + $0x23c] sm:$0x1]
    %v2115 = vsel %vm125, %v2112, 0.0
    %2116 = vadd.xlane.f32.xlu0 %v2115
    %v2117 = vpop.xlane.xlu0 %2116
    %v2118 = vmul.f32 %v2117, %v534
    %v2119 = vsub.f32 %v2112, %v2118
    %v2120 = vmul.f32 %v2119, %v2119
    %v2121 = vsel %vm125, %v2120, 0.0
    %2122 = vadd.xlane.f32.xlu0 %v2121
    %v2123 = vpop.xlane.xlu0 %2122
    %v2124 = vmul.f32 %v2123, %v534
    %v2125 = vadd.f32 %v2124, 1e-05
    %v2126 = vrsqrt.pop %v2125
    %v2127 = vmul.f32 %v2126, %v2125
    %v2128 = vmul.f32 %v2127, %v2126
    %v2129 = vmul.f32 0.5, %v2128
    %v2130 = vsub.f32 1.5, %v2129
    %v2131 = vmul.f32 %v2126, %v2130
    %vm2132 = vweird.f32 %v2125
    %vm2133 = vweird.f32 %v2126
    %vm2134 = vmor %vm2132, %vm2133
    %v2135 = vsel %vm2134, %v2126, %v2131
    %v2136 = vmul.f32 %v2119, %v2135
    %v2137 = vperm.slane %v2113, 0
    %v2138 = vmul.f32 %v2136, %v2137
    %v2139 = vperm.slane %v2114, 0
    %v2140 = vadd.f32 %v2138, %v2139
    %v2141 = vld [vmem:[%s6 + $0x240] sm:$0xff]
    %v2142 = vld [vmem:[%s6 + $0x248] sm:$0xff]
    %v2143 = vld [vmem:[%s6 + $0x250] sm:$0xff]
    %v2144 = vld [vmem:[%s6 + $0x258] sm:$0xff]
    %v2145 = vpack.c.bf16 %v2140, %v2140
    %v2146 = vpack.c.bf16 %v2142, %v2141
    %v2147 = vpack.c.bf16 %v2144, %v2143
    %v2148 = vld [vmem:[%s6 + $0x260] sm:$0x1]
    %v2149 = vperm.slane %v2148, 0
    %v2151 = vsel %vm125, %v2145, 0
    %2153 = vmatpush.bf16.msra.mxu0 0
    %2154 = vmatpush.bf16.msra.mxu0 0
    %2155 = vmatpush.bf16.msra.mxu0 0
    %2156 = vmatpush.bf16.msra.mxu0 0
    %2157 = vmatpush.bf16.msra.mxu0 0
    %2158 = vmatpush.bf16.msra.mxu0 0
    %2159 = vmatpush.bf16.msra.mxu0 %v2147
    %2160 = vmatpush.bf16.msra.mxu0 %v2146
    %2161 = vmatmul.bf16.gmra.mxu0 %v2151
    %v2162 = vpop.f32.mrf.mxu0
    %v2163 = vadd.f32 %v2149, %v2162
    %v2164 = vpop.f32.mrf.mxu0
    %2165 = vdwg.mxu0
    %2166 = vst.msk [vmem:[#allocation2] sm:$0xff] %vm53, %v2163
    %2168 = vrot.lane.b32.xlu0 %v2163, 120
    %v2169 = vpop.permute.xlu0 %2168
    %vm2171 = vcmask 7168
    %2172 = vst.msk [vmem:[%s10] sm:$0xff] %vm2171, %v2169
    %vm2173 = vcmask 253952
    %2174 = vst.msk [vmem:[#allocation4] sm:$0x1] %vm2173, %v689
    %2176 = vrot.lane.b32.xlu0 %v689, 96
    %v2177 = vpop.permute.xlu0 %2176
    %2179 = vst.msk [vmem:[#allocation6] sm:$0x1] %vm2173, %v2177
    %s2180 = scalar_lea.vmem %s0, 8
    %v2181 = vld [vmem:[%s2180] sm:$0xff]
    %s2182 = scalar_lea.vmem %s1, 1
    %v2183 = vld [vmem:[%s2182] sm:$0x1]
    %s2184 = scalar_lea.vmem %s2, 1
    %v2185 = vld [vmem:[%s2184] sm:$0x1]
    %s2186 = scalar_lea.vmem %s3, 1
    %v2187 = vld [vmem:[%s2186] sm:$0x1]
    %s2188 = scalar_lea.vmem %s4, 8
    %v2189 = vld [vmem:[%s2188] sm:$0x77]
    %v2190 = vld [vmem:[%s6 + $0x8] sm:$0xff]
    %v2191 = vpack.c.bf16 %v2181, %v2181
    %v2192 = vpack.c.bf16 %v2190, %v2190
    %v2193 = vld [vmem:[%s6 + $0x10] sm:$0x1]
    %v2194 = vperm.slane %v2193, 0
    %v2196 = vsel %vm53, %v2191, 0
    %v2199 = vsel %vm57, %v2192, 0
    %2201 = vmatpush.bf16.msra.mxu0 0
    %2202 = vmatpush.bf16.msra.mxu0 0
    %2203 = vmatpush.bf16.msra.mxu0 0
    %2204 = vmatpush.bf16.msra.mxu0 0
    %2205 = vmatpush.bf16.msra.mxu0 0
    %2206 = vmatpush.bf16.msra.mxu0 0
    %2207 = vmatpush.bf16.msra.mxu0 0
    %2208 = vmatpush.bf16.msra.mxu0 %v2199
    %2209 = vmatmul.bf16.gmra.mxu0 %v2196
    %v2210 = vpop.f32.mrf.mxu0
    %v2211 = vadd.f32 %v2194, %v2210
    %v2212 = vpop.f32.mrf.mxu0
    %2213 = vdwg.mxu0
    %v2214 = vld [vmem:[%s6 + $0x18] sm:$0xff]
    %v2215 = vpack.c.bf16 %v2183, %v2183
    %v2216 = vpack.c.bf16 %v2214, %v2214
    %v2217 = vld [vmem:[%s6 + $0x20] sm:$0x1]
    %v2219 = vsel %vm53, %v2215, 0
    %v2222 = vsel %vm57, %v2216, 0
    %2224 = vmatpush.bf16.msra.mxu0 0
    %2225 = vmatpush.bf16.msra.mxu0 0
    %2226 = vmatpush.bf16.msra.mxu0 0
    %2227 = vmatpush.bf16.msra.mxu0 0
    %2228 = vmatpush.bf16.msra.mxu0 0
    %2229 = vmatpush.bf16.msra.mxu0 0
    %2230 = vmatpush.bf16.msra.mxu0 0
    %2231 = vmatpush.bf16.msra.mxu0 %v2222
    %2232 = vmatmul.bf16.gmra.mxu0 %v2219
    %v2233 = vpop.f32.mrf.mxu0
    %v2234 = vadd.f32 %v2217, %v2233
    %v2235 = vpop.f32.mrf.mxu0
    %2236 = vdwg.mxu0
    %v2237 = vld [vmem:[%s6] sm:$0x1]
    %v2239 = vrot.slane %v2234, 7
    %v2242 = vrot.slane %v2211, 6
    %v2244 = vsel %vm104, %v2237, %v2239
    %v2245 = vsel %vm106, %v2244, %v2242
    %v2246 = vld [vmem:[%s8] sm:$0xff]
    %v2247 = vld [vmem:[%s8 + $0x8] sm:$0xff]
    %v2248 = vld [vmem:[%s8 + $0x10] sm:$0xff]
    %v2249 = vld [vmem:[%s8 + $0x18] sm:$0xff]
    %v2250 = vld [vmem:[%s6 + $0x60] sm:$0xff]
    %v2251 = vld [vmem:[%s6 + $0x68] sm:$0x3]
    %v2252 = vld [vmem:[%s6 + $0x70] sm:$0xff]
    %v2253 = vld [vmem:[%s6 + $0x78] sm:$0x3]
    %v2254 = vld [vmem:[%s6 + $0x7a] sm:$0x1]
    %v2255 = vld [vmem:[%s6 + $0x80] sm:$0xff]
    %v2256 = vld [vmem:[%s6 + $0x88] sm:$0xff]
    %v2257 = vld [vmem:[%s6 + $0x90] sm:$0xff]
    %v2258 = vld [vmem:[%s6 + $0x98] sm:$0xff]
    %v2259 = vld [vmem:[%s6 + $0xa0] sm:$0x1]
    %v2260 = vpack.c.bf16 %v2242, %v2245
    %v2261 = vpack.c.bf16 %v2247, %v2246
    %v2262 = vpack.c.bf16 %v2249, %v2248
    %v2264 = vsel %vm125, %v2260, 0
    %2266 = vmatpush.bf16.msra.mxu0 0
    %2267 = vmatpush.bf16.msra.mxu0 0
    %2268 = vmatpush.bf16.msra.mxu0 0
    %2269 = vmatpush.bf16.msra.mxu0 0
    %2270 = vmatpush.bf16.msra.mxu0 0
    %2271 = vmatpush.bf16.msra.mxu0 0
    %2272 = vmatpush.bf16.msra.mxu0 %v2262
    %2273 = vmatpush.bf16.msra.mxu0 %v2261
    %2274 = vmatmul.bf16.gmra.mxu0 %v2264
    %v2275 = vpop.f32.mrf.mxu0
    %v2276 = vadd.f32 0.0, %v2275
    %v2277 = vpop.f32.mrf.mxu0
    %v2278 = vadd.f32 0.0, %v2277
    %2279 = vdwg.mxu0
    %v2280 = vadd.f32 %v2276, %v2250
    %v2281 = vadd.f32 %v2278, %v2251
    %2284 = vrot.lane.b32.xlu0 %v2252, 32
    %v2285 = vpop.permute.xlu0 %2284
    %2286 = vrot.lane.b32.xlu0 %v2253, 32
    %v2287 = vpop.permute.xlu0 %2286
    %v2290 = vadd.f32 %v2276, %v2285
    %v2291 = vadd.f32 %v2278, %v2287
    %v2292 = vperm.slane %v2254, 0
    %2294 = vrot.lane.b32.xlu0 %v2292, 64
    %v2295 = vpop.permute.xlu0 %2294
    %v2297 = vadd.f32 %v2276, %v2295
    %v2298 = vadd.f32 %v2278, %v2295
    %v2299 = vpack.c.bf16 %v2281, %v2280
    %v2300 = vpack.c.bf16 %v2291, %v2290
    %2302 = vrot.lane.b32.xlu0 %v2300, 96
    %v2303 = vpop.permute.xlu0 %2302
    %v2305 = vsel %vm53, %v2299, 0
    %v2308 = vsel %vm53, %v2303, 0
    %2310 = vmatpush.bf16.xpose.msra.mxu0 0
    %2311 = vmatpush.bf16.xpose.msra.mxu0 0
    %2312 = vmatpush.bf16.xpose.msra.mxu0 0
    %2313 = vmatpush.bf16.xpose.msra.mxu0 0
    %2314 = vmatpush.bf16.xpose.msra.mxu0 0
    %2315 = vmatpush.bf16.xpose.msra.mxu0 0
    %2316 = vmatpush.bf16.xpose.msra.mxu0 0
    %2317 = vmatpush.bf16.xpose.msra.mxu0 %v2308
    %2318 = vmatmul.bf16.gmra.mxu0 %v2305
    %v2319 = vpop.f32.mrf.mxu0
    %v2320 = vadd.f32 0.0, %v2319
    %v2321 = vpop.f32.mrf.mxu0
    %v2322 = vadd.f32 0.0, %v2321
    %2323 = vdwg.mxu0
    %v2324 = vmul.f32 %v2320, 0.35355338
    %v2325 = vmul.f32 %v2322, 0.35355338
    %v2327 = vperm.slane %v2187, 0
    %v2329 = vadd.f32 %v2324, %v2327
    %v2330 = vadd.f32 %v2325, %v2327
    %v2331 = vsel %vm194, %v2329, -inf
    %2332 = vmax.xlane.f32.xlu0 %v2331
    %v2333 = vpop.xlane.xlu0 %2332
    %v2334 = vsel %vm198, %v2330, -inf
    %2335 = vmax.xlane.f32.xlu0 %v2334
    %v2336 = vpop.xlane.xlu0 %2335
    %v2337 = vsub.f32 %v2329, %v2333
    %v2338 = vsub.f32 %v2330, %v2336
    %v2339 = vmul.f32 %v2337, 1.442695
    %v2340 = vpow.pop %v2339
    %v2341 = vmul.f32 %v2338, 1.442695
    %v2342 = vpow.pop %v2341
    %v2343 = vsel %vm194, %v2340, 0.0
    %2344 = vadd.xlane.f32.xlu0 %v2343
    %v2345 = vpop.xlane.xlu0 %2344
    %v2346 = vsel %vm198, %v2342, 0.0
    %2347 = vadd.xlane.f32.xlu0 %v2346
    %v2348 = vpop.xlane.xlu0 %2347
    %v2349 = vrcp.pop %v2345
    %v2350 = vrcp.pop %v2348
    %v2351 = vmul.f32 %v2340, %v2349
    %v2352 = vmul.f32 %v2342, %v2350
    %v2353 = vpack.c.bf16 %v2352, %v2351
    %v2354 = vpack.c.bf16 %v2298, %v2297
    %2356 = vrot.lane.b32.xlu0 %v2354, 64
    %v2357 = vpop.permute.xlu0 %2356
    %v2359 = vsel %vm194, %v2353, 0
    %v2362 = vsel %vm226, %v2357, 0
    %2364 = vmatpush.bf16.msra.mxu0 0
    %2365 = vmatpush.bf16.msra.mxu0 0
    %2366 = vmatpush.bf16.msra.mxu0 0
    %2367 = vmatpush.bf16.msra.mxu0 0
    %2368 = vmatpush.bf16.msra.mxu0 0
    %2369 = vmatpush.bf16.msra.mxu0 0
    %2370 = vmatpush.bf16.msra.mxu0 0
    %2371 = vmatpush.bf16.msra.mxu0 %v2362
    %2372 = vmatmul.bf16.gmra.mxu0 %v2359
    %v2373 = vpop.f32.mrf.mxu0
    %v2374 = vadd.f32 0.0, %v2373
    %v2375 = vpop.f32.mrf.mxu0
    %v2376 = vadd.f32 0.0, %v2375
    %2377 = vdwg.mxu0
    %2379 = vrot.lane.b32.xlu0 %v2299, 120
    %v2380 = vpop.permute.xlu0 %2379
    %2381 = vrot.lane.b32.xlu0 %v2300, 88
    %v2382 = vpop.permute.xlu0 %2381
    %v2384 = vsel %vm53, %v2380, 0
    %v2387 = vsel %vm53, %v2382, 0
    %2389 = vmatpush.bf16.xpose.msra.mxu0 0
    %2390 = vmatpush.bf16.xpose.msra.mxu0 0
    %2391 = vmatpush.bf16.xpose.msra.mxu0 0
    %2392 = vmatpush.bf16.xpose.msra.mxu0 0
    %2393 = vmatpush.bf16.xpose.msra.mxu0 0
    %2394 = vmatpush.bf16.xpose.msra.mxu0 0
    %2395 = vmatpush.bf16.xpose.msra.mxu0 0
    %2396 = vmatpush.bf16.xpose.msra.mxu0 %v2387
    %2397 = vmatmul.bf16.gmra.mxu0 %v2384
    %v2398 = vpop.f32.mrf.mxu0
    %v2399 = vadd.f32 0.0, %v2398
    %v2400 = vpop.f32.mrf.mxu0
    %v2401 = vadd.f32 0.0, %v2400
    %2402 = vdwg.mxu0
    %v2403 = vmul.f32 %v2399, 0.35355338
    %v2404 = vmul.f32 %v2401, 0.35355338
    %v2405 = vadd.f32 %v2403, %v2327
    %v2406 = vadd.f32 %v2404, %v2327
    %v2407 = vsel %vm194, %v2405, -inf
    %2408 = vmax.xlane.f32.xlu0 %v2407
    %v2409 = vpop.xlane.xlu0 %2408
    %v2410 = vsel %vm198, %v2406, -inf
    %2411 = vmax.xlane.f32.xlu0 %v2410
    %v2412 = vpop.xlane.xlu0 %2411
    %v2413 = vsub.f32 %v2405, %v2409
    %v2414 = vsub.f32 %v2406, %v2412
    %v2415 = vmul.f32 %v2413, 1.442695
    %v2416 = vpow.pop %v2415
    %v2417 = vmul.f32 %v2414, 1.442695
    %v2418 = vpow.pop %v2417
    %v2419 = vsel %vm194, %v2416, 0.0
    %2420 = vadd.xlane.f32.xlu0 %v2419
    %v2421 = vpop.xlane.xlu0 %2420
    %v2422 = vsel %vm198, %v2418, 0.0
    %2423 = vadd.xlane.f32.xlu0 %v2422
    %v2424 = vpop.xlane.xlu0 %2423
    %v2425 = vrcp.pop %v2421
    %v2426 = vrcp.pop %v2424
    %v2427 = vmul.f32 %v2416, %v2425
    %v2428 = vmul.f32 %v2418, %v2426
    %v2429 = vpack.c.bf16 %v2428, %v2427
    %2430 = vrot.lane.b32.xlu0 %v2354, 56
    %v2431 = vpop.permute.xlu0 %2430
    %v2433 = vsel %vm194, %v2429, 0
    %v2436 = vsel %vm226, %v2431, 0
    %2438 = vmatpush.bf16.msra.mxu0 0
    %2439 = vmatpush.bf16.msra.mxu0 0
    %2440 = vmatpush.bf16.msra.mxu0 0
    %2441 = vmatpush.bf16.msra.mxu0 0
    %2442 = vmatpush.bf16.msra.mxu0 0
    %2443 = vmatpush.bf16.msra.mxu0 0
    %2444 = vmatpush.bf16.msra.mxu0 0
    %2445 = vmatpush.bf16.msra.mxu0 %v2436
    %2446 = vmatmul.bf16.gmra.mxu0 %v2433
    %v2447 = vpop.f32.mrf.mxu0
    %v2448 = vadd.f32 0.0, %v2447
    %v2449 = vpop.f32.mrf.mxu0
    %v2450 = vadd.f32 0.0, %v2449
    %2451 = vdwg.mxu0
    %2452 = vrot.lane.b32.xlu0 %v2299, 112
    %v2453 = vpop.permute.xlu0 %2452
    %2454 = vrot.lane.b32.xlu0 %v2300, 80
    %v2455 = vpop.permute.xlu0 %2454
    %v2457 = vsel %vm53, %v2453, 0
    %v2460 = vsel %vm53, %v2455, 0
    %2462 = vmatpush.bf16.xpose.msra.mxu0 0
    %2463 = vmatpush.bf16.xpose.msra.mxu0 0
    %2464 = vmatpush.bf16.xpose.msra.mxu0 0
    %2465 = vmatpush.bf16.xpose.msra.mxu0 0
    %2466 = vmatpush.bf16.xpose.msra.mxu0 0
    %2467 = vmatpush.bf16.xpose.msra.mxu0 0
    %2468 = vmatpush.bf16.xpose.msra.mxu0 0
    %2469 = vmatpush.bf16.xpose.msra.mxu0 %v2460
    %2470 = vmatmul.bf16.gmra.mxu0 %v2457
    %v2471 = vpop.f32.mrf.mxu0
    %v2472 = vadd.f32 0.0, %v2471
    %v2473 = vpop.f32.mrf.mxu0
    %v2474 = vadd.f32 0.0, %v2473
    %2475 = vdwg.mxu0
    %v2476 = vmul.f32 %v2472, 0.35355338
    %v2477 = vmul.f32 %v2474, 0.35355338
    %v2478 = vadd.f32 %v2476, %v2327
    %v2479 = vadd.f32 %v2477, %v2327
    %v2480 = vsel %vm194, %v2478, -inf
    %2481 = vmax.xlane.f32.xlu0 %v2480
    %v2482 = vpop.xlane.xlu0 %2481
    %v2483 = vsel %vm198, %v2479, -inf
    %2484 = vmax.xlane.f32.xlu0 %v2483
    %v2485 = vpop.xlane.xlu0 %2484
    %v2486 = vsub.f32 %v2478, %v2482
    %v2487 = vsub.f32 %v2479, %v2485
    %v2488 = vmul.f32 %v2486, 1.442695
    %v2489 = vpow.pop %v2488
    %v2490 = vmul.f32 %v2487, 1.442695
    %v2491 = vpow.pop %v2490
    %v2492 = vsel %vm194, %v2489, 0.0
    %2493 = vadd.xlane.f32.xlu0 %v2492
    %v2494 = vpop.xlane.xlu0 %2493
    %v2495 = vsel %vm198, %v2491, 0.0
    %2496 = vadd.xlane.f32.xlu0 %v2495
    %v2497 = vpop.xlane.xlu0 %2496
    %v2498 = vrcp.pop %v2494
    %v2499 = vrcp.pop %v2497
    %v2500 = vmul.f32 %v2489, %v2498
    %v2501 = vmul.f32 %v2491, %v2499
    %v2502 = vpack.c.bf16 %v2501, %v2500
    %2503 = vrot.lane.b32.xlu0 %v2354, 48
    %v2504 = vpop.permute.xlu0 %2503
    %v2506 = vsel %vm194, %v2502, 0
    %v2509 = vsel %vm226, %v2504, 0
    %2511 = vmatpush.bf16.msra.mxu0 0
    %2512 = vmatpush.bf16.msra.mxu0 0
    %2513 = vmatpush.bf16.msra.mxu0 0
    %2514 = vmatpush.bf16.msra.mxu0 0
    %2515 = vmatpush.bf16.msra.mxu0 0
    %2516 = vmatpush.bf16.msra.mxu0 0
    %2517 = vmatpush.bf16.msra.mxu0 0
    %2518 = vmatpush.bf16.msra.mxu0 %v2509
    %2519 = vmatmul.bf16.gmra.mxu0 %v2506
    %v2520 = vpop.f32.mrf.mxu0
    %v2521 = vadd.f32 0.0, %v2520
    %v2522 = vpop.f32.mrf.mxu0
    %v2523 = vadd.f32 0.0, %v2522
    %2524 = vdwg.mxu0
    %2525 = vrot.lane.b32.xlu0 %v2299, 104
    %v2526 = vpop.permute.xlu0 %2525
    %2527 = vrot.lane.b32.xlu0 %v2300, 72
    %v2528 = vpop.permute.xlu0 %2527
    %v2530 = vsel %vm53, %v2526, 0
    %v2533 = vsel %vm53, %v2528, 0
    %2535 = vmatpush.bf16.xpose.msra.mxu0 0
    %2536 = vmatpush.bf16.xpose.msra.mxu0 0
    %2537 = vmatpush.bf16.xpose.msra.mxu0 0
    %2538 = vmatpush.bf16.xpose.msra.mxu0 0
    %2539 = vmatpush.bf16.xpose.msra.mxu0 0
    %2540 = vmatpush.bf16.xpose.msra.mxu0 0
    %2541 = vmatpush.bf16.xpose.msra.mxu0 0
    %2542 = vmatpush.bf16.xpose.msra.mxu0 %v2533
    %2543 = vmatmul.bf16.gmra.mxu0 %v2530
    %v2544 = vpop.f32.mrf.mxu0
    %v2545 = vadd.f32 0.0, %v2544
    %v2546 = vpop.f32.mrf.mxu0
    %v2547 = vadd.f32 0.0, %v2546
    %2548 = vdwg.mxu0
    %v2549 = vmul.f32 %v2545, 0.35355338
    %v2550 = vmul.f32 %v2547, 0.35355338
    %v2551 = vadd.f32 %v2549, %v2327
    %v2552 = vadd.f32 %v2550, %v2327
    %v2553 = vsel %vm194, %v2551, -inf
    %2554 = vmax.xlane.f32.xlu0 %v2553
    %v2555 = vpop.xlane.xlu0 %2554
    %v2556 = vsel %vm198, %v2552, -inf
    %2557 = vmax.xlane.f32.xlu0 %v2556
    %v2558 = vpop.xlane.xlu0 %2557
    %v2559 = vsub.f32 %v2551, %v2555
    %v2560 = vsub.f32 %v2552, %v2558
    %v2561 = vmul.f32 %v2559, 1.442695
    %v2562 = vpow.pop %v2561
    %v2563 = vmul.f32 %v2560, 1.442695
    %v2564 = vpow.pop %v2563
    %v2565 = vsel %vm194, %v2562, 0.0
    %2566 = vadd.xlane.f32.xlu0 %v2565
    %v2567 = vpop.xlane.xlu0 %2566
    %v2568 = vsel %vm198, %v2564, 0.0
    %2569 = vadd.xlane.f32.xlu0 %v2568
    %v2570 = vpop.xlane.xlu0 %2569
    %v2571 = vrcp.pop %v2567
    %v2572 = vrcp.pop %v2570
    %v2573 = vmul.f32 %v2562, %v2571
    %v2574 = vmul.f32 %v2564, %v2572
    %v2575 = vpack.c.bf16 %v2574, %v2573
    %2576 = vrot.lane.b32.xlu0 %v2354, 40
    %v2577 = vpop.permute.xlu0 %2576
    %v2579 = vsel %vm194, %v2575, 0
    %v2582 = vsel %vm226, %v2577, 0
    %2584 = vmatpush.bf16.msra.mxu0 0
    %2585 = vmatpush.bf16.msra.mxu0 0
    %2586 = vmatpush.bf16.msra.mxu0 0
    %2587 = vmatpush.bf16.msra.mxu0 0
    %2588 = vmatpush.bf16.msra.mxu0 0
    %2589 = vmatpush.bf16.msra.mxu0 0
    %2590 = vmatpush.bf16.msra.mxu0 0
    %2591 = vmatpush.bf16.msra.mxu0 %v2582
    %2592 = vmatmul.bf16.gmra.mxu0 %v2579
    %v2593 = vpop.f32.mrf.mxu0
    %v2594 = vadd.f32 0.0, %v2593
    %v2595 = vpop.f32.mrf.mxu0
    %v2596 = vadd.f32 0.0, %v2595
    %2597 = vdwg.mxu0
    %2600 = vrot.lane.b32.xlu0 %v2448, 8
    %v2601 = vpop.permute.xlu0 %2600
    %2602 = vrot.lane.b32.xlu0 %v2450, 8
    %v2603 = vpop.permute.xlu0 %2602
    %2608 = vrot.lane.b32.xlu0 %v2521, 16
    %v2609 = vpop.permute.xlu0 %2608
    %2610 = vrot.lane.b32.xlu0 %v2523, 16
    %v2611 = vpop.permute.xlu0 %2610
    %2616 = vrot.lane.b32.xlu0 %v2594, 24
    %v2617 = vpop.permute.xlu0 %2616
    %2618 = vrot.lane.b32.xlu0 %v2596, 24
    %v2619 = vpop.permute.xlu0 %2618
    %v2622 = vsel %vm53, %v2374, %v2601
    %v2623 = vsel %vm53, %v2376, %v2603
    %v2624 = vsel %vm490, %v2622, %v2609
    %v2625 = vsel %vm490, %v2623, %v2611
    %v2626 = vsel %vm493, %v2624, %v2617
    %v2627 = vsel %vm493, %v2625, %v2619
    %v2628 = vpack.c.bf16 %v2627, %v2626
    %v2629 = vpack.c.bf16 %v2256, %v2255
    %v2630 = vpack.c.bf16 %v2258, %v2257
    %v2631 = vperm.slane %v2259, 0
    %v2633 = vsel %vm125, %v2628, 0
    %2635 = vmatpush.bf16.msra.mxu0 0
    %2636 = vmatpush.bf16.msra.mxu0 0
    %2637 = vmatpush.bf16.msra.mxu0 0
    %2638 = vmatpush.bf16.msra.mxu0 0
    %2639 = vmatpush.bf16.msra.mxu0 0
    %2640 = vmatpush.bf16.msra.mxu0 0
    %2641 = vmatpush.bf16.msra.mxu0 %v2630
    %2642 = vmatpush.bf16.msra.mxu0 %v2629
    %2643 = vmatmul.bf16.gmra.mxu0 %v2633
    %v2644 = vpop.f32.mrf.mxu0
    %v2645 = vadd.f32 %v2631, %v2644
    %v2646 = vpop.f32.mrf.mxu0
    %v2647 = vadd.f32 %v2631, %v2646
    %2648 = vdwg.mxu0
    %v2649 = vadd.f32 %v2245, %v2645
    %v2650 = vadd.f32 %v2242, %v2647
    %v2651 = vld [vmem:[%s6 + $0xe9] sm:$0x1]
    %v2652 = vld [vmem:[%s6 + $0xea] sm:$0x1]
    %v2653 = vsel %vm125, %v2649, 0.0
    %2654 = vadd.xlane.f32.xlu0 %v2653
    %v2655 = vpop.xlane.xlu0 %2654
    %v2656 = vsel %vm524, %v2650, 0.0
    %2657 = vadd.xlane.f32.xlu0 %v2656
    %v2658 = vpop.xlane.xlu0 %2657
    %v2659 = vmul.f32 %v2655, %v534
    %v2660 = vmul.f32 %v2658, %v534
    %v2661 = vsub.f32 %v2649, %v2659
    %v2662 = vsub.f32 %v2650, %v2660
    %v2663 = vmul.f32 %v2661, %v2661
    %v2664 = vmul.f32 %v2662, %v2662
    %v2665 = vsel %vm125, %v2663, 0.0
    %2666 = vadd.xlane.f32.xlu0 %v2665
    %v2667 = vpop.xlane.xlu0 %2666
    %v2668 = vsel %vm524, %v2664, 0.0
    %2669 = vadd.xlane.f32.xlu0 %v2668
    %v2670 = vpop.xlane.xlu0 %2669
    %v2671 = vmul.f32 %v2667, %v534
    %v2672 = vmul.f32 %v2670, %v534
    %v2673 = vadd.f32 %v2671, 1e-05
    %v2674 = vadd.f32 %v2672, 1e-05
    %v2675 = vrsqrt.pop %v2673
    %v2676 = vmul.f32 %v2675, %v2673
    %v2677 = vmul.f32 %v2676, %v2675
    %v2678 = vmul.f32 0.5, %v2677
    %v2679 = vsub.f32 1.5, %v2678
    %v2680 = vmul.f32 %v2675, %v2679
    %vm2681 = vweird.f32 %v2673
    %vm2682 = vweird.f32 %v2675
    %vm2683 = vmor %vm2681, %vm2682
    %v2684 = vsel %vm2683, %v2675, %v2680
    %v2685 = vrsqrt.pop %v2674
    %v2686 = vmul.f32 %v2685, %v2674
    %v2687 = vmul.f32 %v2686, %v2685
    %v2688 = vmul.f32 0.5, %v2687
    %v2689 = vsub.f32 1.5, %v2688
    %v2690 = vmul.f32 %v2685, %v2689
    %vm2691 = vweird.f32 %v2674
    %vm2692 = vweird.f32 %v2685
    %vm2693 = vmor %vm2691, %vm2692
    %v2694 = vsel %vm2693, %v2685, %v2690
    %v2695 = vmul.f32 %v2661, %v2684
    %v2696 = vmul.f32 %v2662, %v2694
    %v2697 = vperm.slane %v2651, 0
    %v2698 = vmul.f32 %v2695, %v2697
    %v2699 = vmul.f32 %v2696, %v2697
    %v2700 = vperm.slane %v2652, 0
    %v2701 = vadd.f32 %v2698, %v2700
    %v2702 = vadd.f32 %v2699, %v2700
    %v2703 = vld [vmem:[%s7 + $0x28] sm:$0xff]
    %v2704 = vld [vmem:[%s7 + $0x30] sm:$0xff]
    %v2705 = vld [vmem:[%s7 + $0x38] sm:$0xff]
    %v2706 = vld [vmem:[%s7 + $0x40] sm:$0xff]
    %v2707 = vld [vmem:[%s7 + $0x48] sm:$0x1]
    %v2708 = vld [vmem:[%s6 + $0xa8] sm:$0xff]
    %v2709 = vld [vmem:[%s6 + $0xb0] sm:$0xff]
    %v2710 = vld [vmem:[%s6 + $0xb8] sm:$0xff]
    %v2711 = vld [vmem:[%s6 + $0xc0] sm:$0xff]
    %v2712 = vld [vmem:[%s6 + $0xc8] sm:$0xff]
    %v2713 = vld [vmem:[%s6 + $0xd0] sm:$0xff]
    %v2714 = vld [vmem:[%s6 + $0xd8] sm:$0xff]
    %v2715 = vld [vmem:[%s6 + $0xe0] sm:$0xff]
    %v2716 = vld [vmem:[%s6 + $0xe8] sm:$0x1]
    %v2717 = vpack.c.bf16 %v2702, %v2701
    %v2718 = vpack.c.bf16 %v2704, %v2703
    %v2719 = vpack.c.bf16 %v2706, %v2705
    %v2720 = vperm.slane %v2707, 0
    %v2722 = vsel %vm125, %v2717, 0
    %2724 = vmatpush.bf16.msra.mxu0 0
    %2725 = vmatpush.bf16.msra.mxu0 0
    %2726 = vmatpush.bf16.msra.mxu0 0
    %2727 = vmatpush.bf16.msra.mxu0 0
    %2728 = vmatpush.bf16.msra.mxu0 0
    %2729 = vmatpush.bf16.msra.mxu0 0
    %2730 = vmatpush.bf16.msra.mxu0 %v2719
    %2731 = vmatpush.bf16.msra.mxu0 %v2718
    %2732 = vmatmul.bf16.gmra.mxu0 %v2722
    %v2733 = vpop.f32.mrf.mxu0
    %v2734 = vadd.f32 %v2720, %v2733
    %v2735 = vpop.f32.mrf.mxu0
    %v2736 = vadd.f32 %v2720, %v2735
    %2737 = vdwg.mxu0
    %v2738 = vmax.f32 %v2734, 0.0
    %v2739 = vmax.f32 %v2736, 0.0
    %v2740 = vpack.c.bf16 %v2739, %v2738
    %v2741 = vpack.c.bf16 %v2709, %v2708
    %v2742 = vpack.c.bf16 %v2711, %v2710
    %v2743 = vpack.c.bf16 %v2713, %v2712
    %v2744 = vpack.c.bf16 %v2715, %v2714
    %v2745 = vperm.slane %v2716, 0
    %v2747 = vsel %vm622, %v2740, 0
    %2749 = vmatpush.bf16.msra.mxu0 0
    %2750 = vmatpush.bf16.msra.mxu0 0
    %2751 = vmatpush.bf16.msra.mxu0 0
    %2752 = vmatpush.bf16.msra.mxu0 0
    %2753 = vmatpush.bf16.msra.mxu0 %v2744
    %2754 = vmatpush.bf16.msra.mxu0 %v2743
    %2755 = vmatpush.bf16.msra.mxu0 %v2742
    %2756 = vmatpush.bf16.msra.mxu0 %v2741
    %2757 = vmatmul.bf16.gmra.mxu0 %v2747
    %v2758 = vpop.f32.mrf.mxu0
    %v2759 = vadd.f32 %v2745, %v2758
    %v2760 = vpop.f32.mrf.mxu0
    %2761 = vdwg.mxu0
    %v2762 = vadd.f32 %v2701, %v2759
    %v2763 = vld [vmem:[%s6 + $0xeb] sm:$0x1]
    %v2764 = vld [vmem:[%s6 + $0xec] sm:$0x1]
    %v2765 = vsel %vm125, %v2762, 0.0
    %2766 = vadd.xlane.f32.xlu0 %v2765
    %v2767 = vpop.xlane.xlu0 %2766
    %v2768 = vmul.f32 %v2767, %v534
    %v2769 = vsub.f32 %v2762, %v2768
    %v2770 = vmul.f32 %v2769, %v2769
    %v2771 = vsel %vm125, %v2770, 0.0
    %2772 = vadd.xlane.f32.xlu0 %v2771
    %v2773 = vpop.xlane.xlu0 %2772
    %v2774 = vmul.f32 %v2773, %v534
    %v2775 = vadd.f32 %v2774, 1e-05
    %v2776 = vrsqrt.pop %v2775
    %v2777 = vmul.f32 %v2776, %v2775
    %v2778 = vmul.f32 %v2777, %v2776
    %v2779 = vmul.f32 0.5, %v2778
    %v2780 = vsub.f32 1.5, %v2779
    %v2781 = vmul.f32 %v2776, %v2780
    %vm2782 = vweird.f32 %v2775
    %vm2783 = vweird.f32 %v2776
    %vm2784 = vmor %vm2782, %vm2783
    %v2785 = vsel %vm2784, %v2776, %v2781
    %v2786 = vmul.f32 %v2769, %v2785
    %v2787 = vperm.slane %v2763, 0
    %v2788 = vmul.f32 %v2786, %v2787
    %v2789 = vperm.slane %v2764, 0
    %v2790 = vadd.f32 %v2788, %v2789
    %v2791 = vld [vmem:[%s7] sm:$0xff]
    %v2792 = vld [vmem:[%s7 + $0x8] sm:$0xff]
    %v2793 = vld [vmem:[%s7 + $0x10] sm:$0xff]
    %v2794 = vld [vmem:[%s7 + $0x18] sm:$0xff]
    %v2795 = vpack.c.bf16 %v2790, %v2790
    %v2796 = vpack.c.bf16 %v2792, %v2791
    %v2797 = vpack.c.bf16 %v2794, %v2793
    %v2798 = vld [vmem:[%s7 + $0x20] sm:$0x1]
    %v2800 = vsel %vm125, %v2795, 0
    %2802 = vmatpush.bf16.msra.mxu0 0
    %2803 = vmatpush.bf16.msra.mxu0 0
    %2804 = vmatpush.bf16.msra.mxu0 0
    %2805 = vmatpush.bf16.msra.mxu0 0
    %2806 = vmatpush.bf16.msra.mxu0 0
    %2807 = vmatpush.bf16.msra.mxu0 0
    %2808 = vmatpush.bf16.msra.mxu0 %v2797
    %2809 = vmatpush.bf16.msra.mxu0 %v2796
    %2810 = vmatmul.bf16.gmra.mxu0 %v2800
    %v2811 = vpop.f32.mrf.mxu0
    %v2812 = vadd.f32 %v2798, %v2811
    %v2813 = vpop.f32.mrf.mxu0
    %2814 = vdwg.mxu0
    %v2815 = vmul.f32 %v2812, 0.5
    %v2816 = vmul.f32 %v2815, 1.442695
    %v2817 = vpow.pop %v2816
    %v2819 = vperm.slane %v2185, 0
    %2820 = vrot.lane.b32.xlu0 %v2819, 32
    %v2821 = vpop.permute.xlu0 %2820
    %v2823 = vmul.f32 %v2817, %v2821
    %2825 = vrot.lane.b32.xlu0 %v2823, 96
    %v2826 = vpop.permute.xlu0 %2825
    %v2828 = vadd.f32 %v2812, %v2826
    %v2829 = vld [vmem:[%s6 + $0x28] sm:$0xff]
    %v2830 = vld [vmem:[%s6 + $0x30] sm:$0xff]
    %v2831 = vld [vmem:[%s6 + $0x38] sm:$0xff]
    %v2832 = vld [vmem:[%s6 + $0x40] sm:$0xff]
    %v2833 = vpack.c.bf16 %v2828, %v2828
    %v2834 = vpack.c.bf16 %v2830, %v2829
    %v2835 = vpack.c.bf16 %v2832, %v2831
    %v2836 = vld [vmem:[%s6 + $0x48] sm:$0x1]
    %v2838 = vsel %vm125, %v2833, 0
    %2840 = vmatpush.bf16.msra.mxu0 0
    %2841 = vmatpush.bf16.msra.mxu0 0
    %2842 = vmatpush.bf16.msra.mxu0 0
    %2843 = vmatpush.bf16.msra.mxu0 0
    %2844 = vmatpush.bf16.msra.mxu0 0
    %2845 = vmatpush.bf16.msra.mxu0 0
    %2846 = vmatpush.bf16.msra.mxu0 %v2835
    %2847 = vmatpush.bf16.msra.mxu0 %v2834
    %2848 = vmatmul.bf16.gmra.mxu0 %v2838
    %v2849 = vpop.f32.mrf.mxu0
    %v2850 = vadd.f32 %v2836, %v2849
    %v2851 = vpop.f32.mrf.mxu0
    %2852 = vdwg.mxu0
    %2854 = vst [vmem:[#allocation1] ss:$2 sm:$0xff] %v2189
    %v2855 = vld.sshfl [vmem:[#allocation1] sm:$0xff pattern:$0x75316420]
    %v2856 = vld.sshfl [vmem:[#allocation1 + $0x8] sm:$0xff pattern:$0x75316420]
    %v2859 = vpack.c.bf16 %v2855, %v2855
    %v2860 = vpack.c.bf16 %v2856, %v2856
    %2861 = vmatpush.bf16.xpose.msra.mxu0 0
    %2862 = vmatpush.bf16.xpose.msra.mxu0 0
    %2863 = vmatpush.bf16.xpose.msra.mxu0 0
    %2864 = vmatpush.bf16.xpose.msra.mxu0 0
    %2865 = vmatpush.bf16.xpose.msra.mxu0 0
    %2866 = vmatpush.bf16.xpose.msra.mxu0 0
    %2867 = vmatpush.bf16.xpose.msra.mxu0 0
    %2868 = vmatpush.bf16.xpose.msra.mxu0 %v2859
    %2869 = vmatmul.bf16.gmra.mxu0 %v730
    %v2870 = vpop.f32.mrf.mxu0
    %v2871 = vadd.f32 0.0, %v2870
    %v2872 = vpop.f32.mrf.mxu0
    %v2873 = vadd.f32 0.0, %v2872
    %2874 = vdwg.mxu0
    %2875 = vmatpush.bf16.xpose.msra.mxu0 0
    %2876 = vmatpush.bf16.xpose.msra.mxu0 0
    %2877 = vmatpush.bf16.xpose.msra.mxu0 0
    %2878 = vmatpush.bf16.xpose.msra.mxu0 0
    %2879 = vmatpush.bf16.xpose.msra.mxu0 0
    %2880 = vmatpush.bf16.xpose.msra.mxu0 0
    %2881 = vmatpush.bf16.xpose.msra.mxu0 0
    %2882 = vmatpush.bf16.xpose.msra.mxu0 %v2860
    %2883 = vmatmul.bf16.gmra.mxu0 %v731
    %v2884 = vpop.f32.mrf.mxu0
    %v2885 = vadd.f32 %v2871, %v2884
    %v2886 = vpop.f32.mrf.mxu0
    %v2887 = vadd.f32 %v2873, %v2886
    %2888 = vdwg.mxu0
    %v2889 = vld [vmem:[%s6 + $0x49] sm:$0x7]
    %v2890 = vpack.c.bf16 %v2887, %v2885
    %v2891 = vpack.c.bf16 %v2889, %v2889
    %v2892 = vld [vmem:[%s6 + $0x4c] sm:$0x1]
    %v2893 = vperm.slane %v2892, 0
    %v2895 = vsel %vm773, %v2890, 0
    %v2898 = vand.u32 %v2891, %v778
    %2900 = vmatpush.bf16.msra.mxu0 0
    %2901 = vmatpush.bf16.msra.mxu0 0
    %2902 = vmatpush.bf16.msra.mxu0 0
    %2903 = vmatpush.bf16.msra.mxu0 0
    %2904 = vmatpush.bf16.msra.mxu0 0
    %2905 = vmatpush.bf16.msra.mxu0 0
    %2906 = vmatpush.bf16.msra.mxu0 0
    %2907 = vmatpush.bf16.msra.mxu0 %v2898
    %2908 = vmatmul.bf16.gmra.mxu0 %v2895
    %v2909 = vpop.f32.mrf.mxu0
    %v2910 = vadd.f32 %v2893, %v2909
    %v2911 = vpop.f32.mrf.mxu0
    %v2912 = vadd.f32 %v2893, %v2911
    %2913 = vdwg.mxu0
    %v2914 = vld [vmem:[%s6 + $0x50] sm:$0xff]
    %v2915 = vpack.c.bf16 %v2914, %v2914
    %v2916 = vld [vmem:[%s6 + $0x58] sm:$0x1]
    %v2918 = vsel %vm57, %v2915, 0
    %2920 = vmatpush.bf16.msra.mxu0 0
    %2921 = vmatpush.bf16.msra.mxu0 0
    %2922 = vmatpush.bf16.msra.mxu0 0
    %2923 = vmatpush.bf16.msra.mxu0 0
    %2924 = vmatpush.bf16.msra.mxu0 0
    %2925 = vmatpush.bf16.msra.mxu0 0
    %2926 = vmatpush.bf16.msra.mxu0 0
    %2927 = vmatpush.bf16.msra.mxu0 %v2918
    %2928 = vmatmul.bf16.gmra.mxu0 %v2219
    %v2929 = vpop.f32.mrf.mxu0
    %v2930 = vadd.f32 %v2916, %v2929
    %v2931 = vpop.f32.mrf.mxu0
    %2932 = vdwg.mxu0
    %v2934 = vrot.slane %v2930, 7
    %v2938 = vrot.slane %v2910, 6
    %v2939 = vrot.slane %v2912, 6
    %v2940 = vsel %vm106, %v2938, %v2939
    %v2944 = vsel %vm104, %v2850, %v2934
    %v2945 = vsel %vm106, %v2944, %v2938
    %v2946 = vld [vmem:[%s8 + $0x20] sm:$0xff]
    %v2947 = vld [vmem:[%s8 + $0x28] sm:$0xff]
    %v2948 = vld [vmem:[%s8 + $0x30] sm:$0xff]
    %v2949 = vld [vmem:[%s8 + $0x38] sm:$0xff]
    %v2950 = vld [vmem:[%s6 + $0xf0] sm:$0xff]
    %v2951 = vld [vmem:[%s6 + $0xf8] sm:$0xff]
    %v2952 = vld [vmem:[%s6 + $0x100] sm:$0x3]
    %v2953 = vld [vmem:[%s6 + $0x108] sm:$0xff]
    %v2954 = vld [vmem:[%s6 + $0x110] sm:$0xff]
    %v2955 = vld [vmem:[%s6 + $0x118] sm:$0x3]
    %v2956 = vld [vmem:[%s6 + $0x11a] sm:$0x1]
    %v2957 = vld [vmem:[%s6 + $0x120] sm:$0xff]
    %v2958 = vld [vmem:[%s6 + $0x128] sm:$0xff]
    %v2959 = vld [vmem:[%s6 + $0x130] sm:$0xff]
    %v2960 = vld [vmem:[%s6 + $0x138] sm:$0xff]
    %v2961 = vld [vmem:[%s6 + $0x140] sm:$0x1]
    %v2962 = vpack.c.bf16 %v2940, %v2945
    %v2963 = vpack.c.bf16 %v2939, %v2939
    %v2964 = vpack.c.bf16 %v2947, %v2946
    %v2965 = vpack.c.bf16 %v2949, %v2948
    %v2967 = vsel %vm125, %v2962, 0
    %v2970 = vsel %vm125, %v2963, 0
    %2972 = vmatpush.bf16.msra.mxu0 0
    %2973 = vmatpush.bf16.msra.mxu0 0
    %2974 = vmatpush.bf16.msra.mxu0 0
    %2975 = vmatpush.bf16.msra.mxu0 0
    %2976 = vmatpush.bf16.msra.mxu0 0
    %2977 = vmatpush.bf16.msra.mxu0 0
    %2978 = vmatpush.bf16.msra.mxu0 %v2965
    %2979 = vmatpush.bf16.msra.mxu0 %v2964
    %2980 = vmatmul.bf16.gmra.mxu0 %v2967
    %v2981 = vpop.f32.mrf.mxu0
    %v2982 = vadd.f32 0.0, %v2981
    %v2983 = vpop.f32.mrf.mxu0
    %v2984 = vadd.f32 0.0, %v2983
    %2985 = vmatmul.bf16.gmra.mxu0 %v2970
    %v2986 = vpop.f32.mrf.mxu0
    %v2987 = vadd.f32 0.0, %v2986
    %v2988 = vpop.f32.mrf.mxu0
    %2989 = vdwg.mxu0
    %v2990 = vadd.f32 %v2982, %v2950
    %v2991 = vadd.f32 %v2984, %v2951
    %v2992 = vadd.f32 %v2987, %v2952
    %2996 = vrot.lane.b32.xlu0 %v2953, 32
    %v2997 = vpop.permute.xlu0 %2996
    %2998 = vrot.lane.b32.xlu0 %v2954, 32
    %v2999 = vpop.permute.xlu0 %2998
    %3000 = vrot.lane.b32.xlu0 %v2955, 32
    %v3001 = vpop.permute.xlu0 %3000
    %v3005 = vadd.f32 %v2982, %v2997
    %v3006 = vadd.f32 %v2984, %v2999
    %v3007 = vadd.f32 %v2987, %v3001
    %v3008 = vperm.slane %v2956, 0
    %3010 = vrot.lane.b32.xlu0 %v3008, 64
    %v3011 = vpop.permute.xlu0 %3010
    %v3013 = vadd.f32 %v2982, %v3011
    %v3014 = vadd.f32 %v2984, %v3011
    %v3015 = vadd.f32 %v2987, %v3011
    %v3016 = vpack.c.bf16 %v2991, %v2990
    %v3017 = vpack.c.bf16 %v2992, %v2992
    %v3018 = vpack.c.bf16 %v3006, %v3005
    %v3019 = vpack.c.bf16 %v3007, %v3007
    %3022 = vrot.lane.b32.xlu0 %v3018, 96
    %v3023 = vpop.permute.xlu0 %3022
    %3024 = vrot.lane.b32.xlu0 %v3019, 96
    %v3025 = vpop.permute.xlu0 %3024
    %v3027 = vsel %vm53, %v3016, 0
    %v3030 = vsel %vm53, %v3017, 0
    %v3033 = vsel %vm53, %v3023, 0
    %v3036 = vsel %vm53, %v3025, 0
    %3038 = vmatpush.bf16.xpose.msra.mxu0 0
    %3039 = vmatpush.bf16.xpose.msra.mxu0 0
    %3040 = vmatpush.bf16.xpose.msra.mxu0 0
    %3041 = vmatpush.bf16.xpose.msra.mxu0 0
    %3042 = vmatpush.bf16.xpose.msra.mxu0 0
    %3043 = vmatpush.bf16.xpose.msra.mxu0 0
    %3044 = vmatpush.bf16.xpose.msra.mxu0 %v3036
    %3045 = vmatpush.bf16.xpose.msra.mxu0 %v3033
    %3046 = vmatmul.bf16.gmra.mxu0 %v3027
    %v3047 = vpop.f32.mrf.mxu0
    %v3048 = vadd.f32 0.0, %v3047
    %v3049 = vpop.f32.mrf.mxu0
    %v3050 = vadd.f32 0.0, %v3049
    %3051 = vmatmul.bf16.gmra.mxu0 %v3030
    %v3052 = vpop.f32.mrf.mxu0
    %v3053 = vadd.f32 0.0, %v3052
    %v3054 = vpop.f32.mrf.mxu0
    %3055 = vdwg.mxu0
    %v3056 = vmul.f32 %v3048, 0.35355338
    %v3057 = vmul.f32 %v3050, 0.35355338
    %v3058 = vmul.f32 %v3053, 0.35355338
    %v3059 = vsel %vm941, %v3056, -inf
    %3060 = vmax.xlane.f32.xlu0 %v3059
    %v3061 = vpop.xlane.xlu0 %3060
    %v3062 = vsel %vm941, %v3057, -inf
    %3063 = vmax.xlane.f32.xlu0 %v3062
    %v3064 = vpop.xlane.xlu0 %3063
    %v3065 = vsel %vm948, %v3058, -inf
    %3066 = vmax.xlane.f32.xlu0 %v3065
    %v3067 = vpop.xlane.xlu0 %3066
    %v3068 = vsub.f32 %v3056, %v3061
    %v3069 = vsub.f32 %v3057, %v3064
    %v3070 = vsub.f32 %v3058, %v3067
    %v3071 = vmul.f32 %v3068, 1.442695
    %v3072 = vpow.pop %v3071
    %v3073 = vmul.f32 %v3069, 1.442695
    %v3074 = vpow.pop %v3073
    %v3075 = vmul.f32 %v3070, 1.442695
    %v3076 = vpow.pop %v3075
    %v3077 = vsel %vm941, %v3072, 0.0
    %3078 = vadd.xlane.f32.xlu0 %v3077
    %v3079 = vpop.xlane.xlu0 %3078
    %v3080 = vsel %vm941, %v3074, 0.0
    %3081 = vadd.xlane.f32.xlu0 %v3080
    %v3082 = vpop.xlane.xlu0 %3081
    %v3083 = vsel %vm948, %v3076, 0.0
    %3084 = vadd.xlane.f32.xlu0 %v3083
    %v3085 = vpop.xlane.xlu0 %3084
    %v3086 = vrcp.pop %v3079
    %v3087 = vrcp.pop %v3082
    %v3088 = vrcp.pop %v3085
    %v3089 = vmul.f32 %v3072, %v3086
    %v3090 = vmul.f32 %v3074, %v3087
    %v3091 = vmul.f32 %v3076, %v3088
    %v3092 = vpack.c.bf16 %v3090, %v3089
    %v3093 = vpack.c.bf16 %v3091, %v3091
    %v3094 = vpack.c.bf16 %v3014, %v3013
    %v3095 = vpack.c.bf16 %v3015, %v3015
    %3098 = vrot.lane.b32.xlu0 %v3094, 64
    %v3099 = vpop.permute.xlu0 %3098
    %3100 = vrot.lane.b32.xlu0 %v3095, 64
    %v3101 = vpop.permute.xlu0 %3100
    %v3104 = vsel %vm941, %v3092, 0
    %v3107 = vsel %vm941, %v3093, 0
    %v3110 = vsel %vm104, %v3101, 0
    %3112 = vmatpush.bf16.msra.mxu0 0
    %3113 = vmatpush.bf16.msra.mxu0 0
    %3114 = vmatpush.bf16.msra.mxu0 0
    %3115 = vmatpush.bf16.msra.mxu0 0
    %3116 = vmatpush.bf16.msra.mxu0 0
    %3117 = vmatpush.bf16.msra.mxu0 0
    %3118 = vmatpush.bf16.msra.mxu0 %v3110
    %3119 = vmatpush.bf16.msra.mxu0 %v3099
    %3120 = vmatmul.bf16.gmra.mxu0 %v3104
    %v3121 = vpop.f32.mrf.mxu0
    %v3122 = vadd.f32 0.0, %v3121
    %v3123 = vpop.f32.mrf.mxu0
    %v3124 = vadd.f32 0.0, %v3123
    %3125 = vmatmul.bf16.gmra.mxu0 %v3107
    %v3126 = vpop.f32.mrf.mxu0
    %v3127 = vadd.f32 0.0, %v3126
    %v3128 = vpop.f32.mrf.mxu0
    %3129 = vdwg.mxu0
    %3132 = vrot.lane.b32.xlu0 %v3016, 120
    %v3133 = vpop.permute.xlu0 %3132
    %3134 = vrot.lane.b32.xlu0 %v3017, 120
    %v3135 = vpop.permute.xlu0 %3134
    %3136 = vrot.lane.b32.xlu0 %v3018, 88
    %v3137 = vpop.permute.xlu0 %3136
    %3138 = vrot.lane.b32.xlu0 %v3019, 88
    %v3139 = vpop.permute.xlu0 %3138
    %v3141 = vsel %vm53, %v3133, 0
    %v3144 = vsel %vm53, %v3135, 0
    %v3147 = vsel %vm53, %v3137, 0
    %v3150 = vsel %vm53, %v3139, 0
    %3152 = vmatpush.bf16.xpose.msra.mxu0 0
    %3153 = vmatpush.bf16.xpose.msra.mxu0 0
    %3154 = vmatpush.bf16.xpose.msra.mxu0 0
    %3155 = vmatpush.bf16.xpose.msra.mxu0 0
    %3156 = vmatpush.bf16.xpose.msra.mxu0 0
    %3157 = vmatpush.bf16.xpose.msra.mxu0 0
    %3158 = vmatpush.bf16.xpose.msra.mxu0 %v3150
    %3159 = vmatpush.bf16.xpose.msra.mxu0 %v3147
    %3160 = vmatmul.bf16.gmra.mxu0 %v3141
    %v3161 = vpop.f32.mrf.mxu0
    %v3162 = vadd.f32 0.0, %v3161
    %v3163 = vpop.f32.mrf.mxu0
    %v3164 = vadd.f32 0.0, %v3163
    %3165 = vmatmul.bf16.gmra.mxu0 %v3144
    %v3166 = vpop.f32.mrf.mxu0
    %v3167 = vadd.f32 0.0, %v3166
    %v3168 = vpop.f32.mrf.mxu0
    %3169 = vdwg.mxu0
    %v3170 = vmul.f32 %v3162, 0.35355338
    %v3171 = vmul.f32 %v3164, 0.35355338
    %v3172 = vmul.f32 %v3167, 0.35355338
    %v3173 = vsel %vm941, %v3170, -inf
    %3174 = vmax.xlane.f32.xlu0 %v3173
    %v3175 = vpop.xlane.xlu0 %3174
    %v3176 = vsel %vm941, %v3171, -inf
    %3177 = vmax.xlane.f32.xlu0 %v3176
    %v3178 = vpop.xlane.xlu0 %3177
    %v3179 = vsel %vm948, %v3172, -inf
    %3180 = vmax.xlane.f32.xlu0 %v3179
    %v3181 = vpop.xlane.xlu0 %3180
    %v3182 = vsub.f32 %v3170, %v3175
    %v3183 = vsub.f32 %v3171, %v3178
    %v3184 = vsub.f32 %v3172, %v3181
    %v3185 = vmul.f32 %v3182, 1.442695
    %v3186 = vpow.pop %v3185
    %v3187 = vmul.f32 %v3183, 1.442695
    %v3188 = vpow.pop %v3187
    %v3189 = vmul.f32 %v3184, 1.442695
    %v3190 = vpow.pop %v3189
    %v3191 = vsel %vm941, %v3186, 0.0
    %3192 = vadd.xlane.f32.xlu0 %v3191
    %v3193 = vpop.xlane.xlu0 %3192
    %v3194 = vsel %vm941, %v3188, 0.0
    %3195 = vadd.xlane.f32.xlu0 %v3194
    %v3196 = vpop.xlane.xlu0 %3195
    %v3197 = vsel %vm948, %v3190, 0.0
    %3198 = vadd.xlane.f32.xlu0 %v3197
    %v3199 = vpop.xlane.xlu0 %3198
    %v3200 = vrcp.pop %v3193
    %v3201 = vrcp.pop %v3196
    %v3202 = vrcp.pop %v3199
    %v3203 = vmul.f32 %v3186, %v3200
    %v3204 = vmul.f32 %v3188, %v3201
    %v3205 = vmul.f32 %v3190, %v3202
    %v3206 = vpack.c.bf16 %v3204, %v3203
    %v3207 = vpack.c.bf16 %v3205, %v3205
    %3208 = vrot.lane.b32.xlu0 %v3094, 56
    %v3209 = vpop.permute.xlu0 %3208
    %3210 = vrot.lane.b32.xlu0 %v3095, 56
    %v3211 = vpop.permute.xlu0 %3210
    %v3214 = vsel %vm941, %v3206, 0
    %v3217 = vsel %vm941, %v3207, 0
    %v3220 = vsel %vm104, %v3211, 0
    %3222 = vmatpush.bf16.msra.mxu0 0
    %3223 = vmatpush.bf16.msra.mxu0 0
    %3224 = vmatpush.bf16.msra.mxu0 0
    %3225 = vmatpush.bf16.msra.mxu0 0
    %3226 = vmatpush.bf16.msra.mxu0 0
    %3227 = vmatpush.bf16.msra.mxu0 0
    %3228 = vmatpush.bf16.msra.mxu0 %v3220
    %3229 = vmatpush.bf16.msra.mxu0 %v3209
    %3230 = vmatmul.bf16.gmra.mxu0 %v3214
    %v3231 = vpop.f32.mrf.mxu0
    %v3232 = vadd.f32 0.0, %v3231
    %v3233 = vpop.f32.mrf.mxu0
    %v3234 = vadd.f32 0.0, %v3233
    %3235 = vmatmul.bf16.gmra.mxu0 %v3217
    %v3236 = vpop.f32.mrf.mxu0
    %v3237 = vadd.f32 0.0, %v3236
    %v3238 = vpop.f32.mrf.mxu0
    %3239 = vdwg.mxu0
    %3240 = vrot.lane.b32.xlu0 %v3016, 112
    %v3241 = vpop.permute.xlu0 %3240
    %3242 = vrot.lane.b32.xlu0 %v3017, 112
    %v3243 = vpop.permute.xlu0 %3242
    %3244 = vrot.lane.b32.xlu0 %v3018, 80
    %v3245 = vpop.permute.xlu0 %3244
    %3246 = vrot.lane.b32.xlu0 %v3019, 80
    %v3247 = vpop.permute.xlu0 %3246
    %v3249 = vsel %vm53, %v3241, 0
    %v3252 = vsel %vm53, %v3243, 0
    %v3255 = vsel %vm53, %v3245, 0
    %v3258 = vsel %vm53, %v3247, 0
    %3260 = vmatpush.bf16.xpose.msra.mxu0 0
    %3261 = vmatpush.bf16.xpose.msra.mxu0 0
    %3262 = vmatpush.bf16.xpose.msra.mxu0 0
    %3263 = vmatpush.bf16.xpose.msra.mxu0 0
    %3264 = vmatpush.bf16.xpose.msra.mxu0 0
    %3265 = vmatpush.bf16.xpose.msra.mxu0 0
    %3266 = vmatpush.bf16.xpose.msra.mxu0 %v3258
    %3267 = vmatpush.bf16.xpose.msra.mxu0 %v3255
    %3268 = vmatmul.bf16.gmra.mxu0 %v3249
    %v3269 = vpop.f32.mrf.mxu0
    %v3270 = vadd.f32 0.0, %v3269
    %v3271 = vpop.f32.mrf.mxu0
    %v3272 = vadd.f32 0.0, %v3271
    %3273 = vmatmul.bf16.gmra.mxu0 %v3252
    %v3274 = vpop.f32.mrf.mxu0
    %v3275 = vadd.f32 0.0, %v3274
    %v3276 = vpop.f32.mrf.mxu0
    %3277 = vdwg.mxu0
    %v3278 = vmul.f32 %v3270, 0.35355338
    %v3279 = vmul.f32 %v3272, 0.35355338
    %v3280 = vmul.f32 %v3275, 0.35355338
    %v3281 = vsel %vm941, %v3278, -inf
    %3282 = vmax.xlane.f32.xlu0 %v3281
    %v3283 = vpop.xlane.xlu0 %3282
    %v3284 = vsel %vm941, %v3279, -inf
    %3285 = vmax.xlane.f32.xlu0 %v3284
    %v3286 = vpop.xlane.xlu0 %3285
    %v3287 = vsel %vm948, %v3280, -inf
    %3288 = vmax.xlane.f32.xlu0 %v3287
    %v3289 = vpop.xlane.xlu0 %3288
    %v3290 = vsub.f32 %v3278, %v3283
    %v3291 = vsub.f32 %v3279, %v3286
    %v3292 = vsub.f32 %v3280, %v3289
    %v3293 = vmul.f32 %v3290, 1.442695
    %v3294 = vpow.pop %v3293
    %v3295 = vmul.f32 %v3291, 1.442695
    %v3296 = vpow.pop %v3295
    %v3297 = vmul.f32 %v3292, 1.442695
    %v3298 = vpow.pop %v3297
    %v3299 = vsel %vm941, %v3294, 0.0
    %3300 = vadd.xlane.f32.xlu0 %v3299
    %v3301 = vpop.xlane.xlu0 %3300
    %v3302 = vsel %vm941, %v3296, 0.0
    %3303 = vadd.xlane.f32.xlu0 %v3302
    %v3304 = vpop.xlane.xlu0 %3303
    %v3305 = vsel %vm948, %v3298, 0.0
    %3306 = vadd.xlane.f32.xlu0 %v3305
    %v3307 = vpop.xlane.xlu0 %3306
    %v3308 = vrcp.pop %v3301
    %v3309 = vrcp.pop %v3304
    %v3310 = vrcp.pop %v3307
    %v3311 = vmul.f32 %v3294, %v3308
    %v3312 = vmul.f32 %v3296, %v3309
    %v3313 = vmul.f32 %v3298, %v3310
    %v3314 = vpack.c.bf16 %v3312, %v3311
    %v3315 = vpack.c.bf16 %v3313, %v3313
    %3316 = vrot.lane.b32.xlu0 %v3094, 48
    %v3317 = vpop.permute.xlu0 %3316
    %3318 = vrot.lane.b32.xlu0 %v3095, 48
    %v3319 = vpop.permute.xlu0 %3318
    %v3322 = vsel %vm941, %v3314, 0
    %v3325 = vsel %vm941, %v3315, 0
    %v3328 = vsel %vm104, %v3319, 0
    %3330 = vmatpush.bf16.msra.mxu0 0
    %3331 = vmatpush.bf16.msra.mxu0 0
    %3332 = vmatpush.bf16.msra.mxu0 0
    %3333 = vmatpush.bf16.msra.mxu0 0
    %3334 = vmatpush.bf16.msra.mxu0 0
    %3335 = vmatpush.bf16.msra.mxu0 0
    %3336 = vmatpush.bf16.msra.mxu0 %v3328
    %3337 = vmatpush.bf16.msra.mxu0 %v3317
    %3338 = vmatmul.bf16.gmra.mxu0 %v3322
    %v3339 = vpop.f32.mrf.mxu0
    %v3340 = vadd.f32 0.0, %v3339
    %v3341 = vpop.f32.mrf.mxu0
    %v3342 = vadd.f32 0.0, %v3341
    %3343 = vmatmul.bf16.gmra.mxu0 %v3325
    %v3344 = vpop.f32.mrf.mxu0
    %v3345 = vadd.f32 0.0, %v3344
    %v3346 = vpop.f32.mrf.mxu0
    %3347 = vdwg.mxu0
    %3348 = vrot.lane.b32.xlu0 %v3016, 104
    %v3349 = vpop.permute.xlu0 %3348
    %3350 = vrot.lane.b32.xlu0 %v3017, 104
    %v3351 = vpop.permute.xlu0 %3350
    %3352 = vrot.lane.b32.xlu0 %v3018, 72
    %v3353 = vpop.permute.xlu0 %3352
    %3354 = vrot.lane.b32.xlu0 %v3019, 72
    %v3355 = vpop.permute.xlu0 %3354
    %v3357 = vsel %vm53, %v3349, 0
    %v3360 = vsel %vm53, %v3351, 0
    %v3363 = vsel %vm53, %v3353, 0
    %v3366 = vsel %vm53, %v3355, 0
    %3368 = vmatpush.bf16.xpose.msra.mxu0 0
    %3369 = vmatpush.bf16.xpose.msra.mxu0 0
    %3370 = vmatpush.bf16.xpose.msra.mxu0 0
    %3371 = vmatpush.bf16.xpose.msra.mxu0 0
    %3372 = vmatpush.bf16.xpose.msra.mxu0 0
    %3373 = vmatpush.bf16.xpose.msra.mxu0 0
    %3374 = vmatpush.bf16.xpose.msra.mxu0 %v3366
    %3375 = vmatpush.bf16.xpose.msra.mxu0 %v3363
    %3376 = vmatmul.bf16.gmra.mxu0 %v3357
    %v3377 = vpop.f32.mrf.mxu0
    %v3378 = vadd.f32 0.0, %v3377
    %v3379 = vpop.f32.mrf.mxu0
    %v3380 = vadd.f32 0.0, %v3379
    %3381 = vmatmul.bf16.gmra.mxu0 %v3360
    %v3382 = vpop.f32.mrf.mxu0
    %v3383 = vadd.f32 0.0, %v3382
    %v3384 = vpop.f32.mrf.mxu0
    %3385 = vdwg.mxu0
    %v3386 = vmul.f32 %v3378, 0.35355338
    %v3387 = vmul.f32 %v3380, 0.35355338
    %v3388 = vmul.f32 %v3383, 0.35355338
    %v3389 = vsel %vm941, %v3386, -inf
    %3390 = vmax.xlane.f32.xlu0 %v3389
    %v3391 = vpop.xlane.xlu0 %3390
    %v3392 = vsel %vm941, %v3387, -inf
    %3393 = vmax.xlane.f32.xlu0 %v3392
    %v3394 = vpop.xlane.xlu0 %3393
    %v3395 = vsel %vm948, %v3388, -inf
    %3396 = vmax.xlane.f32.xlu0 %v3395
    %v3397 = vpop.xlane.xlu0 %3396
    %v3398 = vsub.f32 %v3386, %v3391
    %v3399 = vsub.f32 %v3387, %v3394
    %v3400 = vsub.f32 %v3388, %v3397
    %v3401 = vmul.f32 %v3398, 1.442695
    %v3402 = vpow.pop %v3401
    %v3403 = vmul.f32 %v3399, 1.442695
    %v3404 = vpow.pop %v3403
    %v3405 = vmul.f32 %v3400, 1.442695
    %v3406 = vpow.pop %v3405
    %v3407 = vsel %vm941, %v3402, 0.0
    %3408 = vadd.xlane.f32.xlu0 %v3407
    %v3409 = vpop.xlane.xlu0 %3408
    %v3410 = vsel %vm941, %v3404, 0.0
    %3411 = vadd.xlane.f32.xlu0 %v3410
    %v3412 = vpop.xlane.xlu0 %3411
    %v3413 = vsel %vm948, %v3406, 0.0
    %3414 = vadd.xlane.f32.xlu0 %v3413
    %v3415 = vpop.xlane.xlu0 %3414
    %v3416 = vrcp.pop %v3409
    %v3417 = vrcp.pop %v3412
    %v3418 = vrcp.pop %v3415
    %v3419 = vmul.f32 %v3402, %v3416
    %v3420 = vmul.f32 %v3404, %v3417
    %v3421 = vmul.f32 %v3406, %v3418
    %v3422 = vpack.c.bf16 %v3420, %v3419
    %v3423 = vpack.c.bf16 %v3421, %v3421
    %3424 = vrot.lane.b32.xlu0 %v3094, 40
    %v3425 = vpop.permute.xlu0 %3424
    %3426 = vrot.lane.b32.xlu0 %v3095, 40
    %v3427 = vpop.permute.xlu0 %3426
    %v3430 = vsel %vm941, %v3422, 0
    %v3433 = vsel %vm941, %v3423, 0
    %v3436 = vsel %vm104, %v3427, 0
    %3438 = vmatpush.bf16.msra.mxu0 0
    %3439 = vmatpush.bf16.msra.mxu0 0
    %3440 = vmatpush.bf16.msra.mxu0 0
    %3441 = vmatpush.bf16.msra.mxu0 0
    %3442 = vmatpush.bf16.msra.mxu0 0
    %3443 = vmatpush.bf16.msra.mxu0 0
    %3444 = vmatpush.bf16.msra.mxu0 %v3436
    %3445 = vmatpush.bf16.msra.mxu0 %v3425
    %3446 = vmatmul.bf16.gmra.mxu0 %v3430
    %v3447 = vpop.f32.mrf.mxu0
    %v3448 = vadd.f32 0.0, %v3447
    %v3449 = vpop.f32.mrf.mxu0
    %v3450 = vadd.f32 0.0, %v3449
    %3451 = vmatmul.bf16.gmra.mxu0 %v3433
    %v3452 = vpop.f32.mrf.mxu0
    %v3453 = vadd.f32 0.0, %v3452
    %v3454 = vpop.f32.mrf.mxu0
    %3455 = vdwg.mxu0
    %3459 = vrot.lane.b32.xlu0 %v3232, 8
    %v3460 = vpop.permute.xlu0 %3459
    %3461 = vrot.lane.b32.xlu0 %v3234, 8
    %v3462 = vpop.permute.xlu0 %3461
    %3463 = vrot.lane.b32.xlu0 %v3237, 8
    %v3464 = vpop.permute.xlu0 %3463
    %3471 = vrot.lane.b32.xlu0 %v3340, 16
    %v3472 = vpop.permute.xlu0 %3471
    %3473 = vrot.lane.b32.xlu0 %v3342, 16
    %v3474 = vpop.permute.xlu0 %3473
    %3475 = vrot.lane.b32.xlu0 %v3345, 16
    %v3476 = vpop.permute.xlu0 %3475
    %3483 = vrot.lane.b32.xlu0 %v3448, 24
    %v3484 = vpop.permute.xlu0 %3483
    %3485 = vrot.lane.b32.xlu0 %v3450, 24
    %v3486 = vpop.permute.xlu0 %3485
    %3487 = vrot.lane.b32.xlu0 %v3453, 24
    %v3488 = vpop.permute.xlu0 %3487
    %v3492 = vsel %vm53, %v3122, %v3460
    %v3493 = vsel %vm53, %v3124, %v3462
    %v3494 = vsel %vm53, %v3127, %v3464
    %v3495 = vsel %vm490, %v3492, %v3472
    %v3496 = vsel %vm490, %v3493, %v3474
    %v3497 = vsel %vm490, %v3494, %v3476
    %v3498 = vsel %vm493, %v3495, %v3484
    %v3499 = vsel %vm493, %v3496, %v3486
    %v3500 = vsel %vm493, %v3497, %v3488
    %v3501 = vpack.c.bf16 %v3499, %v3498
    %v3502 = vpack.c.bf16 %v3500, %v3500
    %v3503 = vpack.c.bf16 %v2958, %v2957
    %v3504 = vpack.c.bf16 %v2960, %v2959
    %v3505 = vperm.slane %v2961, 0
    %v3507 = vsel %vm125, %v3501, 0
    %v3510 = vsel %vm125, %v3502, 0
    %3512 = vmatpush.bf16.msra.mxu0 0
    %3513 = vmatpush.bf16.msra.mxu0 0
    %3514 = vmatpush.bf16.msra.mxu0 0
    %3515 = vmatpush.bf16.msra.mxu0 0
    %3516 = vmatpush.bf16.msra.mxu0 0
    %3517 = vmatpush.bf16.msra.mxu0 0
    %3518 = vmatpush.bf16.msra.mxu0 %v3504
    %3519 = vmatpush.bf16.msra.mxu0 %v3503
    %3520 = vmatmul.bf16.gmra.mxu0 %v3507
    %v3521 = vpop.f32.mrf.mxu0
    %v3522 = vadd.f32 %v3505, %v3521
    %v3523 = vpop.f32.mrf.mxu0
    %v3524 = vadd.f32 %v3505, %v3523
    %3525 = vmatmul.bf16.gmra.mxu0 %v3510
    %v3526 = vpop.f32.mrf.mxu0
    %v3527 = vadd.f32 %v3505, %v3526
    %v3528 = vpop.f32.mrf.mxu0
    %3529 = vdwg.mxu0
    %v3530 = vadd.f32 %v2945, %v3522
    %v3531 = vadd.f32 %v2940, %v3524
    %v3532 = vadd.f32 %v2939, %v3527
    %v3533 = vld [vmem:[%s6 + $0x189] sm:$0x1]
    %v3534 = vld [vmem:[%s6 + $0x18a] sm:$0x1]
    %v3535 = vsel %vm125, %v3530, 0.0
    %3536 = vadd.xlane.f32.xlu0 %v3535
    %v3537 = vpop.xlane.xlu0 %3536
    %v3538 = vsel %vm125, %v3531, 0.0
    %3539 = vadd.xlane.f32.xlu0 %v3538
    %v3540 = vpop.xlane.xlu0 %3539
    %v3541 = vsel %vm524, %v3532, 0.0
    %3542 = vadd.xlane.f32.xlu0 %v3541
    %v3543 = vpop.xlane.xlu0 %3542
    %v3544 = vmul.f32 %v3537, %v534
    %v3545 = vmul.f32 %v3540, %v534
    %v3546 = vmul.f32 %v3543, %v534
    %v3547 = vsub.f32 %v3530, %v3544
    %v3548 = vsub.f32 %v3531, %v3545
    %v3549 = vsub.f32 %v3532, %v3546
    %v3550 = vmul.f32 %v3547, %v3547
    %v3551 = vmul.f32 %v3548, %v3548
    %v3552 = vmul.f32 %v3549, %v3549
    %v3553 = vsel %vm125, %v3550, 0.0
    %3554 = vadd.xlane.f32.xlu0 %v3553
    %v3555 = vpop.xlane.xlu0 %3554
    %v3556 = vsel %vm125, %v3551, 0.0
    %3557 = vadd.xlane.f32.xlu0 %v3556
    %v3558 = vpop.xlane.xlu0 %3557
    %v3559 = vsel %vm524, %v3552, 0.0
    %3560 = vadd.xlane.f32.xlu0 %v3559
    %v3561 = vpop.xlane.xlu0 %3560
    %v3562 = vmul.f32 %v3555, %v534
    %v3563 = vmul.f32 %v3558, %v534
    %v3564 = vmul.f32 %v3561, %v534
    %v3565 = vadd.f32 %v3562, 1e-05
    %v3566 = vadd.f32 %v3563, 1e-05
    %v3567 = vadd.f32 %v3564, 1e-05
    %v3568 = vrsqrt.pop %v3565
    %v3569 = vmul.f32 %v3568, %v3565
    %v3570 = vmul.f32 %v3569, %v3568
    %v3571 = vmul.f32 0.5, %v3570
    %v3572 = vsub.f32 1.5, %v3571
    %v3573 = vmul.f32 %v3568, %v3572
    %vm3574 = vweird.f32 %v3565
    %vm3575 = vweird.f32 %v3568
    %vm3576 = vmor %vm3574, %vm3575
    %v3577 = vsel %vm3576, %v3568, %v3573
    %v3578 = vrsqrt.pop %v3566
    %v3579 = vmul.f32 %v3578, %v3566
    %v3580 = vmul.f32 %v3579, %v3578
    %v3581 = vmul.f32 0.5, %v3580
    %v3582 = vsub.f32 1.5, %v3581
    %v3583 = vmul.f32 %v3578, %v3582
    %vm3584 = vweird.f32 %v3566
    %vm3585 = vweird.f32 %v3578
    %vm3586 = vmor %vm3584, %vm3585
    %v3587 = vsel %vm3586, %v3578, %v3583
    %v3588 = vrsqrt.pop %v3567
    %v3589 = vmul.f32 %v3588, %v3567
    %v3590 = vmul.f32 %v3589, %v3588
    %v3591 = vmul.f32 0.5, %v3590
    %v3592 = vsub.f32 1.5, %v3591
    %v3593 = vmul.f32 %v3588, %v3592
    %vm3594 = vweird.f32 %v3567
    %vm3595 = vweird.f32 %v3588
    %vm3596 = vmor %vm3594, %vm3595
    %v3597 = vsel %vm3596, %v3588, %v3593
    %v3598 = vmul.f32 %v3547, %v3577
    %v3599 = vmul.f32 %v3548, %v3587
    %v3600 = vmul.f32 %v3549, %v3597
    %v3601 = vperm.slane %v3533, 0
    %v3602 = vmul.f32 %v3598, %v3601
    %v3603 = vmul.f32 %v3599, %v3601
    %v3604 = vmul.f32 %v3600, %v3601
    %v3605 = vperm.slane %v3534, 0
    %v3606 = vadd.f32 %v3602, %v3605
    %v3607 = vadd.f32 %v3603, %v3605
    %v3608 = vadd.f32 %v3604, %v3605
    %v3609 = vld [vmem:[%s7 + $0x50] sm:$0xff]
    %v3610 = vld [vmem:[%s7 + $0x58] sm:$0xff]
    %v3611 = vld [vmem:[%s7 + $0x60] sm:$0xff]
    %v3612 = vld [vmem:[%s7 + $0x68] sm:$0xff]
    %v3613 = vld [vmem:[%s7 + $0x70] sm:$0x1]
    %v3614 = vld [vmem:[%s6 + $0x148] sm:$0xff]
    %v3615 = vld [vmem:[%s6 + $0x150] sm:$0xff]
    %v3616 = vld [vmem:[%s6 + $0x158] sm:$0xff]
    %v3617 = vld [vmem:[%s6 + $0x160] sm:$0xff]
    %v3618 = vld [vmem:[%s6 + $0x168] sm:$0xff]
    %v3619 = vld [vmem:[%s6 + $0x170] sm:$0xff]
    %v3620 = vld [vmem:[%s6 + $0x178] sm:$0xff]
    %v3621 = vld [vmem:[%s6 + $0x180] sm:$0xff]
    %v3622 = vld [vmem:[%s6 + $0x188] sm:$0x1]
    %v3623 = vpack.c.bf16 %v3607, %v3606
    %v3624 = vpack.c.bf16 %v3608, %v3608
    %v3625 = vpack.c.bf16 %v3610, %v3609
    %v3626 = vpack.c.bf16 %v3612, %v3611
    %v3627 = vperm.slane %v3613, 0
    %v3629 = vsel %vm125, %v3623, 0
    %v3632 = vsel %vm125, %v3624, 0
    %3634 = vmatpush.bf16.msra.mxu0 0
    %3635 = vmatpush.bf16.msra.mxu0 0
    %3636 = vmatpush.bf16.msra.mxu0 0
    %3637 = vmatpush.bf16.msra.mxu0 0
    %3638 = vmatpush.bf16.msra.mxu0 0
    %3639 = vmatpush.bf16.msra.mxu0 0
    %3640 = vmatpush.bf16.msra.mxu0 %v3626
    %3641 = vmatpush.bf16.msra.mxu0 %v3625
    %3642 = vmatmul.bf16.gmra.mxu0 %v3629
    %v3643 = vpop.f32.mrf.mxu0
    %v3644 = vadd.f32 %v3627, %v3643
    %v3645 = vpop.f32.mrf.mxu0
    %v3646 = vadd.f32 %v3627, %v3645
    %3647 = vmatmul.bf16.gmra.mxu0 %v3632
    %v3648 = vpop.f32.mrf.mxu0
    %v3649 = vadd.f32 %v3627, %v3648
    %v3650 = vpop.f32.mrf.mxu0
    %3651 = vdwg.mxu0
    %v3652 = vmax.f32 %v3644, 0.0
    %v3653 = vmax.f32 %v3646, 0.0
    %v3654 = vmax.f32 %v3649, 0.0
    %v3655 = vpack.c.bf16 %v3653, %v3652
    %v3656 = vpack.c.bf16 %v3654, %v3654
    %v3657 = vpack.c.bf16 %v3615, %v3614
    %v3658 = vpack.c.bf16 %v3617, %v3616
    %v3659 = vpack.c.bf16 %v3619, %v3618
    %v3660 = vpack.c.bf16 %v3621, %v3620
    %v3661 = vperm.slane %v3622, 0
    %v3663 = vsel %vm622, %v3655, 0
    %v3666 = vsel %vm622, %v3656, 0
    %3668 = vmatpush.bf16.msra.mxu0 0
    %3669 = vmatpush.bf16.msra.mxu0 0
    %3670 = vmatpush.bf16.msra.mxu0 0
    %3671 = vmatpush.bf16.msra.mxu0 0
    %3672 = vmatpush.bf16.msra.mxu0 %v3660
    %3673 = vmatpush.bf16.msra.mxu0 %v3659
    %3674 = vmatpush.bf16.msra.mxu0 %v3658
    %3675 = vmatpush.bf16.msra.mxu0 %v3657
    %3676 = vmatmul.bf16.gmra.mxu0 %v3663
    %v3677 = vpop.f32.mrf.mxu0
    %v3678 = vadd.f32 %v3661, %v3677
    %v3679 = vpop.f32.mrf.mxu0
    %v3680 = vadd.f32 %v3661, %v3679
    %3681 = vmatmul.bf16.gmra.mxu0 %v3666
    %v3682 = vpop.f32.mrf.mxu0
    %v3683 = vadd.f32 %v3661, %v3682
    %v3684 = vpop.f32.mrf.mxu0
    %3685 = vdwg.mxu0
    %v3686 = vadd.f32 %v3606, %v3678
    %v3687 = vadd.f32 %v3607, %v3680
    %v3688 = vadd.f32 %v3608, %v3683
    %v3689 = vld [vmem:[%s6 + $0x18b] sm:$0x1]
    %v3690 = vld [vmem:[%s6 + $0x18c] sm:$0x1]
    %v3691 = vsel %vm125, %v3686, 0.0
    %3692 = vadd.xlane.f32.xlu0 %v3691
    %v3693 = vpop.xlane.xlu0 %3692
    %v3694 = vsel %vm125, %v3687, 0.0
    %3695 = vadd.xlane.f32.xlu0 %v3694
    %v3696 = vpop.xlane.xlu0 %3695
    %v3697 = vsel %vm524, %v3688, 0.0
    %3698 = vadd.xlane.f32.xlu0 %v3697
    %v3699 = vpop.xlane.xlu0 %3698
    %v3700 = vmul.f32 %v3693, %v534
    %v3701 = vmul.f32 %v3696, %v534
    %v3702 = vmul.f32 %v3699, %v534
    %v3703 = vsub.f32 %v3686, %v3700
    %v3704 = vsub.f32 %v3687, %v3701
    %v3705 = vsub.f32 %v3688, %v3702
    %v3706 = vmul.f32 %v3703, %v3703
    %v3707 = vmul.f32 %v3704, %v3704
    %v3708 = vmul.f32 %v3705, %v3705
    %v3709 = vsel %vm125, %v3706, 0.0
    %3710 = vadd.xlane.f32.xlu0 %v3709
    %v3711 = vpop.xlane.xlu0 %3710
    %v3712 = vsel %vm125, %v3707, 0.0
    %3713 = vadd.xlane.f32.xlu0 %v3712
    %v3714 = vpop.xlane.xlu0 %3713
    %v3715 = vsel %vm524, %v3708, 0.0
    %3716 = vadd.xlane.f32.xlu0 %v3715
    %v3717 = vpop.xlane.xlu0 %3716
    %v3718 = vmul.f32 %v3711, %v534
    %v3719 = vmul.f32 %v3714, %v534
    %v3720 = vmul.f32 %v3717, %v534
    %v3721 = vadd.f32 %v3718, 1e-05
    %v3722 = vadd.f32 %v3719, 1e-05
    %v3723 = vadd.f32 %v3720, 1e-05
    %v3724 = vrsqrt.pop %v3721
    %v3725 = vmul.f32 %v3724, %v3721
    %v3726 = vmul.f32 %v3725, %v3724
    %v3727 = vmul.f32 0.5, %v3726
    %v3728 = vsub.f32 1.5, %v3727
    %v3729 = vmul.f32 %v3724, %v3728
    %vm3730 = vweird.f32 %v3721
    %vm3731 = vweird.f32 %v3724
    %vm3732 = vmor %vm3730, %vm3731
    %v3733 = vsel %vm3732, %v3724, %v3729
    %v3734 = vrsqrt.pop %v3722
    %v3735 = vmul.f32 %v3734, %v3722
    %v3736 = vmul.f32 %v3735, %v3734
    %v3737 = vmul.f32 0.5, %v3736
    %v3738 = vsub.f32 1.5, %v3737
    %v3739 = vmul.f32 %v3734, %v3738
    %vm3740 = vweird.f32 %v3722
    %vm3741 = vweird.f32 %v3734
    %vm3742 = vmor %vm3740, %vm3741
    %v3743 = vsel %vm3742, %v3734, %v3739
    %v3744 = vrsqrt.pop %v3723
    %v3745 = vmul.f32 %v3744, %v3723
    %v3746 = vmul.f32 %v3745, %v3744
    %v3747 = vmul.f32 0.5, %v3746
    %v3748 = vsub.f32 1.5, %v3747
    %v3749 = vmul.f32 %v3744, %v3748
    %vm3750 = vweird.f32 %v3723
    %vm3751 = vweird.f32 %v3744
    %vm3752 = vmor %vm3750, %vm3751
    %v3753 = vsel %vm3752, %v3744, %v3749
    %v3754 = vmul.f32 %v3703, %v3733
    %v3755 = vmul.f32 %v3704, %v3743
    %v3756 = vmul.f32 %v3705, %v3753
    %v3757 = vperm.slane %v3689, 0
    %v3758 = vmul.f32 %v3754, %v3757
    %v3759 = vmul.f32 %v3755, %v3757
    %v3760 = vmul.f32 %v3756, %v3757
    %v3761 = vperm.slane %v3690, 0
    %v3762 = vadd.f32 %v3758, %v3761
    %v3763 = vadd.f32 %v3759, %v3761
    %v3764 = vadd.f32 %v3760, %v3761
    %v3765 = vld [vmem:[%s6 + $0x18d] sm:$0x1]
    %v3766 = vperm.slane %v3765, 0
    %v3767 = vld [vmem:[%s6 + $0x1b0] sm:$0xff]
    %v3768 = vld [vmem:[%s6 + $0x1b8] sm:$0xff]
    %v3769 = vld [vmem:[%s6 + $0x1c0] sm:$0xff]
    %v3770 = vld [vmem:[%s6 + $0x1c8] sm:$0xff]
    %v3771 = vpack.c.bf16 %v3766, %v3766
    %v3772 = vpack.c.bf16 %v3768, %v3767
    %v3773 = vpack.c.bf16 %v3770, %v3769
    %v3774 = vld [vmem:[%s6 + $0x190] sm:$0xff]
    %v3776 = vsel %vm125, %v3771, 0
    %3778 = vmatpush.bf16.msra.mxu0 0
    %3779 = vmatpush.bf16.msra.mxu0 0
    %3780 = vmatpush.bf16.msra.mxu0 0
    %3781 = vmatpush.bf16.msra.mxu0 0
    %3782 = vmatpush.bf16.msra.mxu0 0
    %3783 = vmatpush.bf16.msra.mxu0 0
    %3784 = vmatpush.bf16.msra.mxu0 %v3773
    %3785 = vmatpush.bf16.msra.mxu0 %v3772
    %3786 = vmatmul.bf16.gmra.mxu0 %v3776
    %v3787 = vpop.f32.mrf.mxu0
    %v3788 = vadd.f32 %v3774, %v3787
    %v3789 = vpop.f32.mrf.mxu0
    %3790 = vdwg.mxu0
    %v3791 = vld [vmem:[%s7 + $0xa0] sm:$0xff]
    %v3792 = vld [vmem:[%s7 + $0xa8] sm:$0xff]
    %v3793 = vld [vmem:[%s7 + $0xb0] sm:$0xff]
    %v3794 = vld [vmem:[%s7 + $0xb8] sm:$0xff]
    %v3795 = vpack.c.bf16 %v3763, %v3762
    %v3796 = vpack.c.bf16 %v3764, %v3764
    %v3797 = vpack.c.bf16 %v3792, %v3791
    %v3798 = vpack.c.bf16 %v3794, %v3793
    %v3800 = vsel %vm125, %v3795, 0
    %v3803 = vsel %vm125, %v3796, 0
    %3805 = vmatpush.bf16.msra.mxu0 0
    %3806 = vmatpush.bf16.msra.mxu0 0
    %3807 = vmatpush.bf16.msra.mxu0 0
    %3808 = vmatpush.bf16.msra.mxu0 0
    %3809 = vmatpush.bf16.msra.mxu0 0
    %3810 = vmatpush.bf16.msra.mxu0 0
    %3811 = vmatpush.bf16.msra.mxu0 %v3798
    %3812 = vmatpush.bf16.msra.mxu0 %v3797
    %3813 = vmatmul.bf16.gmra.mxu0 %v3800
    %v3814 = vpop.f32.mrf.mxu0
    %v3815 = vadd.f32 0.0, %v3814
    %v3816 = vpop.f32.mrf.mxu0
    %v3817 = vadd.f32 0.0, %v3816
    %3818 = vmatmul.bf16.gmra.mxu0 %v3803
    %v3819 = vpop.f32.mrf.mxu0
    %v3820 = vadd.f32 0.0, %v3819
    %v3821 = vpop.f32.mrf.mxu0
    %3822 = vdwg.mxu0
    %v3823 = vld [vmem:[%s6 + $0x198] sm:$0xff]
    %v3824 = vld [vmem:[%s6 + $0x1a0] sm:$0xff]
    %v3825 = vld [vmem:[%s6 + $0x1a8] sm:$0x3]
    %v3826 = vadd.f32 %v3815, %v3823
    %v3827 = vadd.f32 %v3817, %v3824
    %v3828 = vadd.f32 %v3820, %v3825
    %v3829 = vld [vmem:[%s6 + $0x1aa] sm:$0x1]
    %v3830 = vperm.slane %v3829, 0
    %3832 = vrot.lane.b32.xlu0 %v3830, 32
    %v3833 = vpop.permute.xlu0 %3832
    %v3835 = vadd.f32 %v3815, %v3833
    %v3836 = vadd.f32 %v3817, %v3833
    %v3837 = vadd.f32 %v3820, %v3833
    %v3838 = vld [vmem:[%s6 + $0x1d0] sm:$0xff]
    %v3839 = vld [vmem:[%s6 + $0x1d8] sm:$0xff]
    %v3840 = vld [vmem:[%s6 + $0x1e0] sm:$0xff]
    %v3841 = vld [vmem:[%s6 + $0x1e8] sm:$0xff]
    %v3842 = vld [vmem:[%s6 + $0x1f0] sm:$0x1]
    %v3843 = vpack.c.bf16 %v3788, %v3788
    %v3844 = vpack.c.bf16 %v3827, %v3826
    %v3845 = vpack.c.bf16 %v3828, %v3828
    %v3847 = vsel %vm53, %v3843, 0
    %v3850 = vsel %vm53, %v3844, 0
    %v3853 = vsel %vm53, %v3845, 0
    %3855 = vmatpush.bf16.xpose.msra.mxu0 0
    %3856 = vmatpush.bf16.xpose.msra.mxu0 0
    %3857 = vmatpush.bf16.xpose.msra.mxu0 0
    %3858 = vmatpush.bf16.xpose.msra.mxu0 0
    %3859 = vmatpush.bf16.xpose.msra.mxu0 0
    %3860 = vmatpush.bf16.xpose.msra.mxu0 0
    %3861 = vmatpush.bf16.xpose.msra.mxu0 %v3853
    %3862 = vmatpush.bf16.xpose.msra.mxu0 %v3850
    %3863 = vmatmul.bf16.gmra.mxu0 %v3847
    %v3864 = vpop.f32.mrf.mxu0
    %v3865 = vadd.f32 0.0, %v3864
    %v3866 = vpop.f32.mrf.mxu0
    %3867 = vdwg.mxu0
    %v3868 = vmul.f32 %v3865, 0.35355338
    %v3869 = vsel %vm941, %v3868, -inf
    %3870 = vmax.xlane.f32.xlu0 %v3869
    %v3871 = vpop.xlane.xlu0 %3870
    %v3872 = vsub.f32 %v3868, %v3871
    %v3873 = vmul.f32 %v3872, 1.442695
    %v3874 = vpow.pop %v3873
    %v3875 = vsel %vm941, %v3874, 0.0
    %3876 = vadd.xlane.f32.xlu0 %v3875
    %v3877 = vpop.xlane.xlu0 %3876
    %v3878 = vrcp.pop %v3877
    %v3879 = vmul.f32 %v3874, %v3878
    %v3880 = vpack.c.bf16 %v3879, %v3879
    %v3881 = vpack.c.bf16 %v3836, %v3835
    %v3882 = vpack.c.bf16 %v3837, %v3837
    %3885 = vrot.lane.b32.xlu0 %v3881, 96
    %v3886 = vpop.permute.xlu0 %3885
    %3887 = vrot.lane.b32.xlu0 %v3882, 96
    %v3888 = vpop.permute.xlu0 %3887
    %v3891 = vsel %vm941, %v3880, 0
    %v3894 = vsel %vm104, %v3888, 0
    %3896 = vmatpush.bf16.msra.mxu0 0
    %3897 = vmatpush.bf16.msra.mxu0 0
    %3898 = vmatpush.bf16.msra.mxu0 0
    %3899 = vmatpush.bf16.msra.mxu0 0
    %3900 = vmatpush.bf16.msra.mxu0 0
    %3901 = vmatpush.bf16.msra.mxu0 0
    %3902 = vmatpush.bf16.msra.mxu0 %v3894
    %3903 = vmatpush.bf16.msra.mxu0 %v3886
    %3904 = vmatmul.bf16.gmra.mxu0 %v3891
    %v3905 = vpop.f32.mrf.mxu0
    %v3906 = vadd.f32 0.0, %v3905
    %v3907 = vpop.f32.mrf.mxu0
    %3908 = vdwg.mxu0
    %3910 = vrot.lane.b32.xlu0 %v3843, 120
    %v3911 = vpop.permute.xlu0 %3910
    %3914 = vrot.lane.b32.xlu0 %v3844, 120
    %v3915 = vpop.permute.xlu0 %3914
    %3916 = vrot.lane.b32.xlu0 %v3845, 120
    %v3917 = vpop.permute.xlu0 %3916
    %v3919 = vsel %vm53, %v3911, 0
    %v3922 = vsel %vm53, %v3915, 0
    %v3925 = vsel %vm53, %v3917, 0
    %3927 = vmatpush.bf16.xpose.msra.mxu0 0
    %3928 = vmatpush.bf16.xpose.msra.mxu0 0
    %3929 = vmatpush.bf16.xpose.msra.mxu0 0
    %3930 = vmatpush.bf16.xpose.msra.mxu0 0
    %3931 = vmatpush.bf16.xpose.msra.mxu0 0
    %3932 = vmatpush.bf16.xpose.msra.mxu0 0
    %3933 = vmatpush.bf16.xpose.msra.mxu0 %v3925
    %3934 = vmatpush.bf16.xpose.msra.mxu0 %v3922
    %3935 = vmatmul.bf16.gmra.mxu0 %v3919
    %v3936 = vpop.f32.mrf.mxu0
    %v3937 = vadd.f32 0.0, %v3936
    %v3938 = vpop.f32.mrf.mxu0
    %3939 = vdwg.mxu0
    %v3940 = vmul.f32 %v3937, 0.35355338
    %v3941 = vsel %vm941, %v3940, -inf
    %3942 = vmax.xlane.f32.xlu0 %v3941
    %v3943 = vpop.xlane.xlu0 %3942
    %v3944 = vsub.f32 %v3940, %v3943
    %v3945 = vmul.f32 %v3944, 1.442695
    %v3946 = vpow.pop %v3945
    %v3947 = vsel %vm941, %v3946, 0.0
    %3948 = vadd.xlane.f32.xlu0 %v3947
    %v3949 = vpop.xlane.xlu0 %3948
    %v3950 = vrcp.pop %v3949
    %v3951 = vmul.f32 %v3946, %v3950
    %v3952 = vpack.c.bf16 %v3951, %v3951
    %3953 = vrot.lane.b32.xlu0 %v3881, 88
    %v3954 = vpop.permute.xlu0 %3953
    %3955 = vrot.lane.b32.xlu0 %v3882, 88
    %v3956 = vpop.permute.xlu0 %3955
    %v3959 = vsel %vm941, %v3952, 0
    %v3962 = vsel %vm104, %v3956, 0
    %3964 = vmatpush.bf16.msra.mxu0 0
    %3965 = vmatpush.bf16.msra.mxu0 0
    %3966 = vmatpush.bf16.msra.mxu0 0
    %3967 = vmatpush.bf16.msra.mxu0 0
    %3968 = vmatpush.bf16.msra.mxu0 0
    %3969 = vmatpush.bf16.msra.mxu0 0
    %3970 = vmatpush.bf16.msra.mxu0 %v3962
    %3971 = vmatpush.bf16.msra.mxu0 %v3954
    %3972 = vmatmul.bf16.gmra.mxu0 %v3959
    %v3973 = vpop.f32.mrf.mxu0
    %v3974 = vadd.f32 0.0, %v3973
    %v3975 = vpop.f32.mrf.mxu0
    %3976 = vdwg.mxu0
    %3977 = vrot.lane.b32.xlu0 %v3843, 112
    %v3978 = vpop.permute.xlu0 %3977
    %3979 = vrot.lane.b32.xlu0 %v3844, 112
    %v3980 = vpop.permute.xlu0 %3979
    %3981 = vrot.lane.b32.xlu0 %v3845, 112
    %v3982 = vpop.permute.xlu0 %3981
    %v3984 = vsel %vm53, %v3978, 0
    %v3987 = vsel %vm53, %v3980, 0
    %v3990 = vsel %vm53, %v3982, 0
    %3992 = vmatpush.bf16.xpose.msra.mxu0 0
    %3993 = vmatpush.bf16.xpose.msra.mxu0 0
    %3994 = vmatpush.bf16.xpose.msra.mxu0 0
    %3995 = vmatpush.bf16.xpose.msra.mxu0 0
    %3996 = vmatpush.bf16.xpose.msra.mxu0 0
    %3997 = vmatpush.bf16.xpose.msra.mxu0 0
    %3998 = vmatpush.bf16.xpose.msra.mxu0 %v3990
    %3999 = vmatpush.bf16.xpose.msra.mxu0 %v3987
    %4000 = vmatmul.bf16.gmra.mxu0 %v3984
    %v4001 = vpop.f32.mrf.mxu0
    %v4002 = vadd.f32 0.0, %v4001
    %v4003 = vpop.f32.mrf.mxu0
    %4004 = vdwg.mxu0
    %v4005 = vmul.f32 %v4002, 0.35355338
    %v4006 = vsel %vm941, %v4005, -inf
    %4007 = vmax.xlane.f32.xlu0 %v4006
    %v4008 = vpop.xlane.xlu0 %4007
    %v4009 = vsub.f32 %v4005, %v4008
    %v4010 = vmul.f32 %v4009, 1.442695
    %v4011 = vpow.pop %v4010
    %v4012 = vsel %vm941, %v4011, 0.0
    %4013 = vadd.xlane.f32.xlu0 %v4012
    %v4014 = vpop.xlane.xlu0 %4013
    %v4015 = vrcp.pop %v4014
    %v4016 = vmul.f32 %v4011, %v4015
    %v4017 = vpack.c.bf16 %v4016, %v4016
    %4018 = vrot.lane.b32.xlu0 %v3881, 80
    %v4019 = vpop.permute.xlu0 %4018
    %4020 = vrot.lane.b32.xlu0 %v3882, 80
    %v4021 = vpop.permute.xlu0 %4020
    %v4024 = vsel %vm941, %v4017, 0
    %v4027 = vsel %vm104, %v4021, 0
    %4029 = vmatpush.bf16.msra.mxu0 0
    %4030 = vmatpush.bf16.msra.mxu0 0
    %4031 = vmatpush.bf16.msra.mxu0 0
    %4032 = vmatpush.bf16.msra.mxu0 0
    %4033 = vmatpush.bf16.msra.mxu0 0
    %4034 = vmatpush.bf16.msra.mxu0 0
    %4035 = vmatpush.bf16.msra.mxu0 %v4027
    %4036 = vmatpush.bf16.msra.mxu0 %v4019
    %4037 = vmatmul.bf16.gmra.mxu0 %v4024
    %v4038 = vpop.f32.mrf.mxu0
    %v4039 = vadd.f32 0.0, %v4038
    %v4040 = vpop.f32.mrf.mxu0
    %4041 = vdwg.mxu0
    %4042 = vrot.lane.b32.xlu0 %v3843, 104
    %v4043 = vpop.permute.xlu0 %4042
    %4044 = vrot.lane.b32.xlu0 %v3844, 104
    %v4045 = vpop.permute.xlu0 %4044
    %4046 = vrot.lane.b32.xlu0 %v3845, 104
    %v4047 = vpop.permute.xlu0 %4046
    %v4049 = vsel %vm53, %v4043, 0
    %v4052 = vsel %vm53, %v4045, 0
    %v4055 = vsel %vm53, %v4047, 0
    %4057 = vmatpush.bf16.xpose.msra.mxu0 0
    %4058 = vmatpush.bf16.xpose.msra.mxu0 0
    %4059 = vmatpush.bf16.xpose.msra.mxu0 0
    %4060 = vmatpush.bf16.xpose.msra.mxu0 0
    %4061 = vmatpush.bf16.xpose.msra.mxu0 0
    %4062 = vmatpush.bf16.xpose.msra.mxu0 0
    %4063 = vmatpush.bf16.xpose.msra.mxu0 %v4055
    %4064 = vmatpush.bf16.xpose.msra.mxu0 %v4052
    %4065 = vmatmul.bf16.gmra.mxu0 %v4049
    %v4066 = vpop.f32.mrf.mxu0
    %v4067 = vadd.f32 0.0, %v4066
    %v4068 = vpop.f32.mrf.mxu0
    %4069 = vdwg.mxu0
    %v4070 = vmul.f32 %v4067, 0.35355338
    %v4071 = vsel %vm941, %v4070, -inf
    %4072 = vmax.xlane.f32.xlu0 %v4071
    %v4073 = vpop.xlane.xlu0 %4072
    %v4074 = vsub.f32 %v4070, %v4073
    %v4075 = vmul.f32 %v4074, 1.442695
    %v4076 = vpow.pop %v4075
    %v4077 = vsel %vm941, %v4076, 0.0
    %4078 = vadd.xlane.f32.xlu0 %v4077
    %v4079 = vpop.xlane.xlu0 %4078
    %v4080 = vrcp.pop %v4079
    %v4081 = vmul.f32 %v4076, %v4080
    %v4082 = vpack.c.bf16 %v4081, %v4081
    %4083 = vrot.lane.b32.xlu0 %v3881, 72
    %v4084 = vpop.permute.xlu0 %4083
    %4085 = vrot.lane.b32.xlu0 %v3882, 72
    %v4086 = vpop.permute.xlu0 %4085
    %v4089 = vsel %vm941, %v4082, 0
    %v4092 = vsel %vm104, %v4086, 0
    %4094 = vmatpush.bf16.msra.mxu0 0
    %4095 = vmatpush.bf16.msra.mxu0 0
    %4096 = vmatpush.bf16.msra.mxu0 0
    %4097 = vmatpush.bf16.msra.mxu0 0
    %4098 = vmatpush.bf16.msra.mxu0 0
    %4099 = vmatpush.bf16.msra.mxu0 0
    %4100 = vmatpush.bf16.msra.mxu0 %v4092
    %4101 = vmatpush.bf16.msra.mxu0 %v4084
    %4102 = vmatmul.bf16.gmra.mxu0 %v4089
    %v4103 = vpop.f32.mrf.mxu0
    %v4104 = vadd.f32 0.0, %v4103
    %v4105 = vpop.f32.mrf.mxu0
    %4106 = vdwg.mxu0
    %4108 = vrot.lane.b32.xlu0 %v3974, 8
    %v4109 = vpop.permute.xlu0 %4108
    %4112 = vrot.lane.b32.xlu0 %v4039, 16
    %v4113 = vpop.permute.xlu0 %4112
    %4116 = vrot.lane.b32.xlu0 %v4104, 24
    %v4117 = vpop.permute.xlu0 %4116
    %v4119 = vsel %vm53, %v3906, %v4109
    %v4120 = vsel %vm490, %v4119, %v4113
    %v4121 = vsel %vm493, %v4120, %v4117
    %v4122 = vpack.c.bf16 %v4121, %v4121
    %v4123 = vpack.c.bf16 %v3839, %v3838
    %v4124 = vpack.c.bf16 %v3841, %v3840
    %v4125 = vperm.slane %v3842, 0
    %v4127 = vsel %vm125, %v4122, 0
    %4129 = vmatpush.bf16.msra.mxu0 0
    %4130 = vmatpush.bf16.msra.mxu0 0
    %4131 = vmatpush.bf16.msra.mxu0 0
    %4132 = vmatpush.bf16.msra.mxu0 0
    %4133 = vmatpush.bf16.msra.mxu0 0
    %4134 = vmatpush.bf16.msra.mxu0 0
    %4135 = vmatpush.bf16.msra.mxu0 %v4124
    %4136 = vmatpush.bf16.msra.mxu0 %v4123
    %4137 = vmatmul.bf16.gmra.mxu0 %v4127
    %v4138 = vpop.f32.mrf.mxu0
    %v4139 = vadd.f32 %v4125, %v4138
    %v4140 = vpop.f32.mrf.mxu0
    %4141 = vdwg.mxu0
    %v4142 = vadd.f32 %v3766, %v4139
    %v4143 = vld [vmem:[%s6 + $0x239] sm:$0x1]
    %v4144 = vld [vmem:[%s6 + $0x23a] sm:$0x1]
    %v4145 = vsel %vm125, %v4142, 0.0
    %4146 = vadd.xlane.f32.xlu0 %v4145
    %v4147 = vpop.xlane.xlu0 %4146
    %v4148 = vmul.f32 %v4147, %v534
    %v4149 = vsub.f32 %v4142, %v4148
    %v4150 = vmul.f32 %v4149, %v4149
    %v4151 = vsel %vm125, %v4150, 0.0
    %4152 = vadd.xlane.f32.xlu0 %v4151
    %v4153 = vpop.xlane.xlu0 %4152
    %v4154 = vmul.f32 %v4153, %v534
    %v4155 = vadd.f32 %v4154, 1e-05
    %v4156 = vrsqrt.pop %v4155
    %v4157 = vmul.f32 %v4156, %v4155
    %v4158 = vmul.f32 %v4157, %v4156
    %v4159 = vmul.f32 0.5, %v4158
    %v4160 = vsub.f32 1.5, %v4159
    %v4161 = vmul.f32 %v4156, %v4160
    %vm4162 = vweird.f32 %v4155
    %vm4163 = vweird.f32 %v4156
    %vm4164 = vmor %vm4162, %vm4163
    %v4165 = vsel %vm4164, %v4156, %v4161
    %v4166 = vmul.f32 %v4149, %v4165
    %v4167 = vperm.slane %v4143, 0
    %v4168 = vmul.f32 %v4166, %v4167
    %v4169 = vperm.slane %v4144, 0
    %v4170 = vadd.f32 %v4168, %v4169
    %v4171 = vld [vmem:[%s7 + $0x78] sm:$0xff]
    %v4172 = vld [vmem:[%s7 + $0x80] sm:$0xff]
    %v4173 = vld [vmem:[%s7 + $0x88] sm:$0xff]
    %v4174 = vld [vmem:[%s7 + $0x90] sm:$0xff]
    %v4175 = vld [vmem:[%s7 + $0x98] sm:$0x1]
    %v4176 = vld [vmem:[%s6 + $0x1f8] sm:$0xff]
    %v4177 = vld [vmem:[%s6 + $0x200] sm:$0xff]
    %v4178 = vld [vmem:[%s6 + $0x208] sm:$0xff]
    %v4179 = vld [vmem:[%s6 + $0x210] sm:$0xff]
    %v4180 = vld [vmem:[%s6 + $0x218] sm:$0xff]
    %v4181 = vld [vmem:[%s6 + $0x220] sm:$0xff]
    %v4182 = vld [vmem:[%s6 + $0x228] sm:$0xff]
    %v4183 = vld [vmem:[%s6 + $0x230] sm:$0xff]
    %v4184 = vld [vmem:[%s6 + $0x238] sm:$0x1]
    %v4185 = vpack.c.bf16 %v4170, %v4170
    %v4186 = vpack.c.bf16 %v4172, %v4171
    %v4187 = vpack.c.bf16 %v4174, %v4173
    %v4188 = vperm.slane %v4175, 0
    %v4190 = vsel %vm125, %v4185, 0
    %4192 = vmatpush.bf16.msra.mxu0 0
    %4193 = vmatpush.bf16.msra.mxu0 0
    %4194 = vmatpush.bf16.msra.mxu0 0
    %4195 = vmatpush.bf16.msra.mxu0 0
    %4196 = vmatpush.bf16.msra.mxu0 0
    %4197 = vmatpush.bf16.msra.mxu0 0
    %4198 = vmatpush.bf16.msra.mxu0 %v4187
    %4199 = vmatpush.bf16.msra.mxu0 %v4186
    %4200 = vmatmul.bf16.gmra.mxu0 %v4190
    %v4201 = vpop.f32.mrf.mxu0
    %v4202 = vadd.f32 %v4188, %v4201
    %v4203 = vpop.f32.mrf.mxu0
    %4204 = vdwg.mxu0
    %v4205 = vmax.f32 %v4202, 0.0
    %v4206 = vpack.c.bf16 %v4205, %v4205
    %v4207 = vpack.c.bf16 %v4177, %v4176
    %v4208 = vpack.c.bf16 %v4179, %v4178
    %v4209 = vpack.c.bf16 %v4181, %v4180
    %v4210 = vpack.c.bf16 %v4183, %v4182
    %v4211 = vperm.slane %v4184, 0
    %v4213 = vsel %vm622, %v4206, 0
    %4215 = vmatpush.bf16.msra.mxu0 0
    %4216 = vmatpush.bf16.msra.mxu0 0
    %4217 = vmatpush.bf16.msra.mxu0 0
    %4218 = vmatpush.bf16.msra.mxu0 0
    %4219 = vmatpush.bf16.msra.mxu0 %v4210
    %4220 = vmatpush.bf16.msra.mxu0 %v4209
    %4221 = vmatpush.bf16.msra.mxu0 %v4208
    %4222 = vmatpush.bf16.msra.mxu0 %v4207
    %4223 = vmatmul.bf16.gmra.mxu0 %v4213
    %v4224 = vpop.f32.mrf.mxu0
    %v4225 = vadd.f32 %v4211, %v4224
    %v4226 = vpop.f32.mrf.mxu0
    %4227 = vdwg.mxu0
    %v4228 = vadd.f32 %v4170, %v4225
    %v4229 = vld [vmem:[%s6 + $0x23b] sm:$0x1]
    %v4230 = vld [vmem:[%s6 + $0x23c] sm:$0x1]
    %v4231 = vsel %vm125, %v4228, 0.0
    %4232 = vadd.xlane.f32.xlu0 %v4231
    %v4233 = vpop.xlane.xlu0 %4232
    %v4234 = vmul.f32 %v4233, %v534
    %v4235 = vsub.f32 %v4228, %v4234
    %v4236 = vmul.f32 %v4235, %v4235
    %v4237 = vsel %vm125, %v4236, 0.0
    %4238 = vadd.xlane.f32.xlu0 %v4237
    %v4239 = vpop.xlane.xlu0 %4238
    %v4240 = vmul.f32 %v4239, %v534
    %v4241 = vadd.f32 %v4240, 1e-05
    %v4242 = vrsqrt.pop %v4241
    %v4243 = vmul.f32 %v4242, %v4241
    %v4244 = vmul.f32 %v4243, %v4242
    %v4245 = vmul.f32 0.5, %v4244
    %v4246 = vsub.f32 1.5, %v4245
    %v4247 = vmul.f32 %v4242, %v4246
    %vm4248 = vweird.f32 %v4241
    %vm4249 = vweird.f32 %v4242
    %vm4250 = vmor %vm4248, %vm4249
    %v4251 = vsel %vm4250, %v4242, %v4247
    %v4252 = vmul.f32 %v4235, %v4251
    %v4253 = vperm.slane %v4229, 0
    %v4254 = vmul.f32 %v4252, %v4253
    %v4255 = vperm.slane %v4230, 0
    %v4256 = vadd.f32 %v4254, %v4255
    %v4257 = vld [vmem:[%s6 + $0x240] sm:$0xff]
    %v4258 = vld [vmem:[%s6 + $0x248] sm:$0xff]
    %v4259 = vld [vmem:[%s6 + $0x250] sm:$0xff]
    %v4260 = vld [vmem:[%s6 + $0x258] sm:$0xff]
    %v4261 = vpack.c.bf16 %v4256, %v4256
    %v4262 = vpack.c.bf16 %v4258, %v4257
    %v4263 = vpack.c.bf16 %v4260, %v4259
    %v4264 = vld [vmem:[%s6 + $0x260] sm:$0x1]
    %v4265 = vperm.slane %v4264, 0
    %v4267 = vsel %vm125, %v4261, 0
    %4269 = vmatpush.bf16.msra.mxu0 0
    %4270 = vmatpush.bf16.msra.mxu0 0
    %4271 = vmatpush.bf16.msra.mxu0 0
    %4272 = vmatpush.bf16.msra.mxu0 0
    %4273 = vmatpush.bf16.msra.mxu0 0
    %4274 = vmatpush.bf16.msra.mxu0 0
    %4275 = vmatpush.bf16.msra.mxu0 %v4263
    %4276 = vmatpush.bf16.msra.mxu0 %v4262
    %4277 = vmatmul.bf16.gmra.mxu0 %v4267
    %v4278 = vpop.f32.mrf.mxu0
    %v4279 = vadd.f32 %v4265, %v4278
    %v4280 = vpop.f32.mrf.mxu0
    %4281 = vdwg.mxu0
    %s4282 = scalar_lea.vmem [#allocation2], 8
    %4283 = vst.msk [vmem:[%s4282] sm:$0xff] %vm53, %v4279
    %4285 = vrot.lane.b32.xlu0 %v4279, 120
    %v4286 = vpop.permute.xlu0 %4285
    %s4288 = scalar_lea.vmem %s10, 8
    %4289 = vst.msk [vmem:[%s4288] sm:$0xff] %vm2171, %v4286
    %s4290 = scalar_lea.vmem [#allocation4], 1
    %4291 = vst.msk [vmem:[%s4290] sm:$0x1] %vm2173, %v2812
    %4293 = vrot.lane.b32.xlu0 %v2812, 96
    %v4294 = vpop.permute.xlu0 %4293
    %s4296 = scalar_lea.vmem [#allocation6], 1
    %4297 = vst.msk [vmem:[%s4296] sm:$0x1] %vm2173, %v4294
    // Predicated region
    $region38: #{detrvae_forward.1} parent=1 // pred_check
      _
    $region39: #{detrvae_forward.1} parent=1 // pred_check_branch
      %4299 = sbr.rel (0) target = $region41
    $region40: #{detrvae_forward.1} parent=1 // pred_region
      %4301 = vsyncadd [#allocation3], 0
      %s4302 = sshll.u32 [#allocation2], 4
      %s4303 = int_to_ptr.vmem [resolvable:$true] %s4302
      %s4304 = sshll.u32 %s9, 4
      %s4305 = int_to_ptr.hbm [resolvable:$true] %s4304
      %4310 = dma.vmem_to_hbm [thread:$0]  %s4303, 256, %s4305, [#allocation3], 128, 128, 8
    $region41: #{detrvae_forward.1} parent=1 // pred_fallthru
      _
    // Predicated region
    $region42: #{detrvae_forward.1} parent=1 // pred_check
      _
    $region43: #{detrvae_forward.1} parent=1 // pred_check_branch
      %4312 = sbr.rel (0) target = $region45
    $region44: #{detrvae_forward.1} parent=1 // pred_region
      _
    $region45: #{detrvae_forward.1} parent=1 // pred_fallthru
      _
    // Predicated region
    $region46: #{detrvae_forward.1} parent=1 // pred_check
      _
    $region47: #{detrvae_forward.1} parent=1 // pred_check_branch
      %4314 = sbr.rel (0) target = $region49
    $region48: #{detrvae_forward.1} parent=1 // pred_region
      %4316 = vsyncadd [#allocation5], 0
      %s4317 = sshll.u32 [#allocation4], 4
      %s4318 = int_to_ptr.vmem [resolvable:$true] %s4317
      %s4319 = sshll.u32 %s11, 4
      %s4320 = int_to_ptr.hbm [resolvable:$true] %s4319
      %4325 = dma.vmem_to_hbm [thread:$0]  %s4318, 32, %s4320, [#allocation5], 16, 16, 1
    $region49: #{detrvae_forward.1} parent=1 // pred_fallthru
      _
    // Predicated region
    $region50: #{detrvae_forward.1} parent=1 // pred_check
      _
    $region51: #{detrvae_forward.1} parent=1 // pred_check_branch
      %4327 = sbr.rel (0) target = $region53
    $region52: #{detrvae_forward.1} parent=1 // pred_region
      %4329 = vsyncadd [#allocation5], 0
      %s4330 = sshll.u32 [#allocation6], 4
      %s4331 = int_to_ptr.vmem [resolvable:$true] %s4330
      %s4332 = sshll.u32 %s12, 4
      %s4333 = int_to_ptr.hbm [resolvable:$true] %s4332
      %4338 = dma.vmem_to_hbm [thread:$0]  %s4331, 32, %s4333, [#allocation5], 16, 16, 1
    $region53: #{detrvae_forward.1} parent=1 // pred_fallthru
      _
    // Predicated region
    $region54: #{detrvae_forward.1} parent=1 // pred_check
      _
    $region55: #{detrvae_forward.1} parent=1 // pred_check_branch
      %4340 = sbr.rel (0) target = $region57
    $region56: #{detrvae_forward.1} parent=1 // pred_region
      %4342 = dma.done [#allocation3], 256
    $region57: #{detrvae_forward.1} parent=1 // pred_fallthru
      _
    // Predicated region
    $region58: #{detrvae_forward.1} parent=1 // pred_check
      _
    $region59: #{detrvae_forward.1} parent=1 // pred_check_branch
      %4344 = sbr.rel (0) target = $region61
    $region60: #{detrvae_forward.1} parent=1 // pred_region
      _
    $region61: #{detrvae_forward.1} parent=1 // pred_fallthru
      _
    // Predicated region
    $region62: #{detrvae_forward.1} parent=1 // pred_check
      _
    $region63: #{detrvae_forward.1} parent=1 // pred_check_branch
      %4346 = sbr.rel (0) target = $region65
    $region64: #{detrvae_forward.1} parent=1 // pred_region
      %4348 = dma.done [#allocation5], 32
    $region65: #{detrvae_forward.1} parent=1 // pred_fallthru
      _
    // Predicated region
    $region66: #{detrvae_forward.1} parent=1 // pred_check
      _
    $region67: #{detrvae_forward.1} parent=1 // pred_check_branch
      %4350 = sbr.rel (0) target = $region69
    $region68: #{detrvae_forward.1} parent=1 // pred_region
      %4352 = dma.done [#allocation5], 32
    $region69: #{detrvae_forward.1} parent=1 // pred_fallthru
      _
    %4353 = vsyncpa [#allocation3], 1
    %4354 = vsyncpa [#allocation5], 1

</llo_original>
